<compile_context>
chip_gen: v7x
topology: tpu7x:2x2x1
jax: 0.10.0
libtpu: 0.0.40
codegen_flags: <defaults>
</compile_context>

<pallas_src>
import math
from functools import partial

import jax
import jax.numpy as jnp
from jax import lax
from jax.experimental import pallas as pl
from jax.experimental.pallas import tpu as pltpu

# ---------------- hyper-parameters (from the PyTorch __init__) ----------------
AFR_SIZE = 30                                # afr_reduced_cnn_size (standard SHHS config)
SE_REDUCTION = 16
SE_HID = max(AFR_SIZE // SE_REDUCTION, 1)    # = 1
assert SE_HID == 1, "fused SE kernel assumes channel // reduction == 1 (as in MRCNN_SHHS)"
BN_EPS = 1e-5

# features1: Conv(1->64,k50,s6,p24) BN GELU MaxPool(8,2,4) Drop
#            Conv(64->128,k8,s1,p4) BN GELU
#            Conv(128->128,k8,s1,p4) BN GELU MaxPool(4,4,2)
F1_CONVS = ((50, 6, 24), (8, 1, 4), (8, 1, 4))
F1_POOL1 = (8, 2, 4)
F1_POOL2 = (4, 4, 2)
# features2: Conv(1->64,k400,s50,p200) BN GELU MaxPool(4,2,2) Drop
#            Conv(64->128,k6,s1,p3) BN GELU
#            Conv(128->128,k6,s1,p3) BN GELU MaxPool(2,2,1)
F2_CONVS = ((400, 50, 200), (6, 1, 3), (6, 1, 3))
F2_POOL1 = (4, 2, 2)
F2_POOL2 = (2, 2, 1)


def _round_up(x, m):
    return ((x + m - 1) // m) * m


def _gelu_tanh(x):
    # TODO(synk): PyTorch F.gelu defaults to the exact erf form; the tanh approximation
    # is used here (and in the reference) because it lowers cleanly to the TPU EUP.
    c = math.sqrt(2.0 / math.pi)
    return 0.5 * x * (1.0 + jnp.tanh(c * (x + 0.044715 * x * x * x)))


# ---------------- Pallas kernels ----------------

def _matmul_bias_act_kernel(x_ref, w_ref, b_ref, o_ref, *, act):
    """Fused (im2col patches @ weight) + bias + activation for one row tile.

    BatchNorm is already folded into w/b, so this single MXU matmul implements
    Conv1d + BatchNorm1d + activation."""
    y = jnp.dot(x_ref[...], w_ref[...], preferred_element_type=jnp.float32)
    y = y + b_ref[...]
    if act == "gelu":
        y = _gelu_tanh(y)
    elif act == "relu":
        y = jnp.maximum(y, 0.0)
    o_ref[...] = y


def _afr_kernel(x_ref, w1_ref, b1_ref, w2_ref, b2_ref, wd_ref, bd_ref,
                wse1_ref, wse2_ref, avg_ref, exp_ref, o_ref):
    """Fully fused SEBasicBlock (AFR): 1x1 conv+BN+ReLU -> 1x1 conv+BN -> SE gate
    -> + downsample(x) residual -> ReLU.  avg_ref (B, B*T) / exp_ref (B*T, B) are
    constant 0/1 matrices that implement the per-batch time average and its
    broadcast as plain 2-D matmuls (keeps everything MXU friendly)."""
    x = x_ref[...]                                                           # (R, 128)
    h1 = jnp.dot(x, w1_ref[...], preferred_element_type=jnp.float32) + b1_ref[...]
    h1 = jnp.maximum(h1, 0.0)                                                # (R, C)
    h2 = jnp.dot(h1, w2_ref[...], preferred_element_type=jnp.float32) + b2_ref[...]
    # --- SE layer (squeeze-excite, hidden size 1) ---
    y = jnp.dot(avg_ref[...], h2, preferred_element_type=jnp.float32)        # (B, C)
    z = jnp.maximum(jnp.sum(y * wse1_ref[...], axis=-1, keepdims=True), 0.0)  # (B, 1)
    s = jax.nn.sigmoid(z * wse2_ref[...])                                    # (B, C)
    gate = jnp.dot(exp_ref[...], s, preferred_element_type=jnp.float32)      # (R, C)
    # --- downsample residual + final ReLU ---
    res = jnp.dot(x, wd_ref[...], preferred_element_type=jnp.float32) + bd_ref[...]
    o_ref[...] = jnp.maximum(h2 * gate + res, 0.0)


# ---------------- Pallas wrappers ----------------

def _fused_matmul(patches, w, b, act, tile_r=256):
    """Row-tiled fused matmul+bias+activation over (rows, K) x (K, C_out)."""
    R, kd = patches.shape
    co = w.shape[1]
    tile = min(tile_r, _round_up(R, 8))
    rp = _round_up(R, tile)
    if rp != R:
        patches = jnp.pad(patches, ((0, rp - R), (0, 0)))
    out = pl.pallas_call(
        partial(_matmul_bias_act_kernel, act=act),
        out_shape=jax.ShapeDtypeStruct((rp, co), jnp.float32),
        grid=(rp // tile,),
        in_specs=[
            pl.BlockSpec((tile, kd), lambda i: (i, 0)),
            pl.BlockSpec((kd, co), lambda i: (0, 0)),
            pl.BlockSpec((1, co), lambda i: (0, 0)),
        ],
        out_specs=pl.BlockSpec((tile, co), lambda i: (i, 0)),
        compiler_params=pltpu.CompilerParams(dimension_semantics=("parallel",)),
    )(patches, w, b)
    return out[:R]


def _afr_block(xt, p):
    """xt: (B, T, 128) time-major -> (B, T, AFR_SIZE)."""
    B, T, cin = xt.shape
    C = AFR_SIZE
    R = B * T
    x2 = xt.reshape(R, cin)
    # constant pooling / broadcast matrices (trace-time constants)
    avg = jnp.repeat(jnp.eye(B, dtype=jnp.float32), T, axis=1) * (1.0 / T)   # (B, R)
    expand = jnp.repeat(jnp.eye(B, dtype=jnp.float32), T, axis=0)            # (R, B)
    args = (x2, p["afr_w1"], p["afr_b1"], p["afr_w2"], p["afr_b2"],
            p["afr_wd"], p["afr_bd"], p["afr_wse1"], p["afr_wse2"], avg, expand)
    out = pl.pallas_call(
        _afr_kernel,
        out_shape=jax.ShapeDtypeStruct((R, C), jnp.float32),
        grid=(1,),
        in_specs=[pl.BlockSpec(a.shape, lambda i: (0, 0)) for a in args],
        out_specs=pl.BlockSpec((R, C), lambda i: (0, 0)),
    )(*args)
    return out.reshape(B, T, C)


# ---------------- JAX glue (im2col / maxpool / layout) ----------------

def _im2col_time_major(xt, k, stride, pad):
    """xt: (B, T_in, C) -> patches (B*T_out, k*C), flatten order (k, c)."""
    B, t_in, C = xt.shape
    xp = jnp.pad(xt, ((0, 0), (pad, pad), (0, 0)))
    t_out = (t_in + 2 * pad - k) // stride + 1
    idx = jnp.arange(t_out)[:, None] * stride + jnp.arange(k)[None, :]
    patches = xp[:, idx, :]                              # (B, T_out, k, C)
    return patches.reshape(B * t_out, k * C), t_out


def _maxpool_time_major(xt, k, stride, pad):
    """PyTorch MaxPool1d (floor mode, implicit -inf padding), time-major layout."""
    B, t_in, C = xt.shape
    xp = jnp.pad(xt, ((0, 0), (pad, pad), (0, 0)), constant_values=-jnp.inf)
    t_out = (t_in + 2 * pad - k) // stride + 1
    idx = jnp.arange(t_out)[:, None] * stride + jnp.arange(k)[None, :]
    return jnp.max(xp[:, idx, :], axis=2)                # (B, T_out, C)


def _feature_branch(x, p, prefix, convs, pool1, pool2):
    """x: (B, 1, L) -> (B, T_out, 128) time-major."""
    B = x.shape[0]
    h = jnp.transpose(x, (0, 2, 1))                      # (B, L, 1) time-major
    (k1, s1, p1), (k2, s2, p2), (k3, s3, p3) = convs
    patches, t = _im2col_time_major(h, k1, s1, p1)
    h = _fused_matmul(patches, p[f"{prefix}_w1"], p[f"{prefix}_b1"], "gelu").reshape(B, t, -1)
    h = _maxpool_time_major(h, *pool1)
    # Dropout -> identity (eval mode)
    patches, t = _im2col_time_major(h, k2, s2, p2)
    h = _fused_matmul(patches, p[f"{prefix}_w2"], p[f"{prefix}_b2"], "gelu").reshape(B, t, -1)
    patches, t = _im2col_time_major(h, k3, s3, p3)
    h = _fused_matmul(patches, p[f"{prefix}_w3"], p[f"{prefix}_b3"], "gelu").reshape(B, t, -1)
    h = _maxpool_time_major(h, *pool2)
    return h


# ---------------- parameter handling ----------------

def _fold_conv_bn(w, bias, gamma, beta, mean, var):
    """Fold Conv1d weight (C_out, C_in, K) + eval-mode BN into a matmul weight
    (K*C_in, C_out) and a (1, C_out) bias."""
    scale = gamma / jnp.sqrt(var + BN_EPS)
    shift = beta - mean * scale
    wm = jnp.transpose(w, (2, 1, 0)).reshape(-1, w.shape[0]) * scale[None, :]
    b = shift if bias is None else bias * scale + shift
    return wm, b.reshape(1, -1)


def fold_params(raw):
    p = {}
    bn = lambda n: (raw[f"{n}_gamma"], raw[f"{n}_beta"], raw[f"{n}_mean"], raw[f"{n}_var"])
    for br in ("f1", "f2"):
        for i in (1, 2, 3):
            p[f"{br}_w{i}"], p[f"{br}_b{i}"] = _fold_conv_bn(
                raw[f"{br}_conv{i}_w"], None, *bn(f"{br}_bn{i}"))
    p["afr_w1"], p["afr_b1"] = _fold_conv_bn(raw["afr_conv1_w"], raw["afr_conv1_b"], *bn("afr_bn1"))
    p["afr_w2"], p["afr_b2"] = _fold_conv_bn(raw["afr_conv2_w"], raw["afr_conv2_b"], *bn("afr_bn2"))
    p["afr_wd"], p["afr_bd"] = _fold_conv_bn(raw["afr_down_w"], None, *bn("afr_dbn"))
    p["afr_wse1"] = raw["afr_se_fc1_w"]          # (1, C)  Linear(C, 1, bias=False).weight
    p["afr_wse2"] = raw["afr_se_fc2_w"].T        # (1, C)  Linear(1, C, bias=False).weight.T
    return p


def init_raw_params(key):
    ks = iter(jax.random.split(key, 64))

    def conv_w(shape):
        fan_in = shape[1] * shape[2]
        return jax.random.normal(next(ks), shape, jnp.float32) / jnp.sqrt(fan_in)

    raw = {}

    def bn_params(c, name):
        raw[f"{name}_gamma"] = 1.0 + 0.1 * jax.random.normal(next(ks), (c,), jnp.float32)
        raw[f"{name}_beta"] = 0.1 * jax.random.normal(next(ks), (c,), jnp.float32)
        raw[f"{name}_mean"] = 0.05 * jax.random.normal(next(ks), (c,), jnp.float32)
        raw[f"{name}_var"] = jnp.abs(1.0 + 0.1 * jax.random.normal(next(ks), (c,), jnp.float32))

    raw["f1_conv1_w"] = conv_w((64, 1, 50));    bn_params(64, "f1_bn1")
    raw["f1_conv2_w"] = conv_w((128, 64, 8));   bn_params(128, "f1_bn2")
    raw["f1_conv3_w"] = conv_w((128, 128, 8));  bn_params(128, "f1_bn3")
    raw["f2_conv1_w"] = conv_w((64, 1, 400));   bn_params(64, "f2_bn1")
    raw["f2_conv2_w"] = conv_w((128, 64, 6));   bn_params(128, "f2_bn2")
    raw["f2_conv3_w"] = conv_w((128, 128, 6));  bn_params(128, "f2_bn3")
    # AFR SEBasicBlock(128 -> AFR_SIZE): 1x1 convs (with bias) + downsample (no bias)
    raw["afr_conv1_w"] = conv_w((AFR_SIZE, 128, 1))
    raw["afr_conv1_b"] = 0.01 * jax.random.normal(next(ks), (AFR_SIZE,), jnp.float32)
    bn_params(AFR_SIZE, "afr_bn1")
    raw["afr_conv2_w"] = conv_w((AFR_SIZE, AFR_SIZE, 1))
    raw["afr_conv2_b"] = 0.01 * jax.random.normal(next(ks), (AFR_SIZE,), jnp.float32)
    bn_params(AFR_SIZE, "afr_bn2")
    raw["afr_se_fc1_w"] = jax.random.normal(next(ks), (SE_HID, AFR_SIZE), jnp.float32) / jnp.sqrt(AFR_SIZE)
    raw["afr_se_fc2_w"] = 0.5 * jax.random.normal(next(ks), (AFR_SIZE, SE_HID), jnp.float32)
    raw["afr_down_w"] = conv_w((AFR_SIZE, 128, 1))
    bn_params(AFR_SIZE, "afr_dbn")
    return raw


# ---------------- forward passes ----------------

@jax.jit
def mrcnn_shhs_forward(x, raw):
    """x: (B, 1, L) float32 -> (B, AFR_SIZE, T_concat) float32 (PyTorch NCT layout)."""
    p = fold_params(raw)                                  # BN folded once at trace time
    x1 = _feature_branch(x, p, "f1", F1_CONVS, F1_POOL1, F1_POOL2)   # (B, T1, 128)
    x2 = _feature_branch(x, p, "f2", F2_CONVS, F2_POOL1, F2_POOL2)   # (B, T2, 128)
    xc = jnp.concatenate([x1, x2], axis=1)                # (B, T1+T2, 128) time-major
    # Dropout on the concat -> identity (eval mode)
    out = _afr_block(xc, p)                               # (B, T, AFR_SIZE)
    return jnp.transpose(out, (0, 2, 1))                  # back to (B, C, T)


def reference_forward(x, raw):
    """Pure-JAX reference mirroring the PyTorch forward (eval-mode BN, identity dropout)."""
    PH = lax.Precision.HIGHEST

    def conv1d(h, w, stride, pad, bias=None):
        y = lax.conv_general_dilated(h, w, window_strides=(stride,), padding=[(pad, pad)],
                                     dimension_numbers=("NCH", "OIH", "NCH"), precision=PH)
        return y if bias is None else y + bias[None, :, None]

    def bn(h, name):
        g, b, m, v = (raw[f"{name}_{s}"] for s in ("gamma", "beta", "mean", "var"))
        return (h - m[None, :, None]) * (g / jnp.sqrt(v + BN_EPS))[None, :, None] + b[None, :, None]

    def maxpool(h, k, s, p):
        return lax.reduce_window(h, -jnp.inf, lax.max, (1, 1, k), (1, 1, s),
                                 ((0, 0), (0, 0), (p, p)))

    def branch(h, br, convs, pool1, pool2):
        (_, s1, p1), (_, s2, p2), (_, s3, p3) = convs
        h = _gelu_tanh(bn(conv1d(h, raw[f"{br}_conv1_w"], s1, p1), f"{br}_bn1"))
        h = maxpool(h, *pool1)
        h = _gelu_tanh(bn(conv1d(h, raw[f"{br}_conv2_w"], s2, p2), f"{br}_bn2"))
        h = _gelu_tanh(bn(conv1d(h, raw[f"{br}_conv3_w"], s3, p3), f"{br}_bn3"))
        h = maxpool(h, *pool2)
        return h

    x1 = branch(x, "f1", F1_CONVS, F1_POOL1, F1_POOL2)
    x2 = branch(x, "f2", F2_CONVS, F2_POOL1, F2_POOL2)
    xc = jnp.concatenate([x1, x2], axis=2)                # (B, 128, T)

    # AFR SEBasicBlock
    h = jnp.maximum(bn(conv1d(xc, raw["afr_conv1_w"], 1, 0, raw["afr_conv1_b"]), "afr_bn1"), 0.0)
    h = bn(conv1d(h, raw["afr_conv2_w"], 1, 0, raw["afr_conv2_b"]), "afr_bn2")
    y = jnp.mean(h, axis=2)                               # (B, C)
    z = jnp.maximum(jnp.dot(y, raw["afr_se_fc1_w"].T, precision=PH), 0.0)
    s = jax.nn.sigmoid(jnp.dot(z, raw["afr_se_fc2_w"].T, precision=PH))
    h = h * s[:, :, None]
    res = bn(conv1d(xc, raw["afr_down_w"], 1, 0), "afr_dbn")
    return jnp.maximum(h + res, 0.0)                      # (B, C, T)


if __name__ == "__main__":
    key = jax.random.PRNGKey(0)
    kp, kx = jax.random.split(key)
    raw = init_raw_params(kp)

    B, L = 2, 3750                                        # one 30-s SHHS EEG epoch @ 125 Hz
    x = jax.random.normal(kx, (B, 1, L), jnp.float32)

    out = mrcnn_shhs_forward(x, raw)
    out = jax.block_until_ready(out)

    ref = reference_forward(x, raw)
    assert out.shape == ref.shape, (out.shape, ref.shape)
    assert out.shape[0] == B and out.shape[1] == AFR_SIZE
    assert jnp.allclose(out, ref, atol=1e-3, rtol=1e-3), (
        f"mismatch vs reference: max abs diff {jnp.max(jnp.abs(out - ref))}")
    print("KERNEL_OK")
</pallas_src>

<mosaic_0001>
module attributes {stable_mosaic.version = 11 : i64} {
  func.func @_matmul_bias_act_kernel(%arg0: i32, %arg1: memref<152x400xf32, #tpu.memory_space<vmem>>, %arg2: memref<400x64xf32, #tpu.memory_space<vmem>>, %arg3: memref<1x64xf32, #tpu.memory_space<vmem>>, %arg4: memref<152x64xf32, #tpu.memory_space<vmem>>) attributes {dimension_semantics = [#tpu.dimension_semantics<parallel>], iteration_bounds = array<i64: 1>, scalar_prefetch = 0 : i64, scratch_operands = 0 : i64, tpu.core_type = #tpu.core_type<tc>, window_params = [{transform_indices = @transform_0, window_bounds = array<i64: 152, 400>}, {pipeline_mode = #tpu.pipeline_mode<synchronous>, transform_indices = @transform_1, window_bounds = array<i64: 400, 64>}, {pipeline_mode = #tpu.pipeline_mode<synchronous>, transform_indices = @transform_2, window_bounds = array<i64: 1, 64>}, {transform_indices = @transform_3, window_bounds = array<i64: 152, 64>}]} {
    %c0 = arith.constant 0 : index
    %c0_0 = arith.constant 0 : index
    %0 = vector.load %arg1[%c0, %c0_0] : memref<152x400xf32, #tpu.memory_space<vmem>>, vector<152x400xf32>
    %c0_1 = arith.constant 0 : index
    %c0_2 = arith.constant 0 : index
    %1 = vector.load %arg2[%c0_1, %c0_2] : memref<400x64xf32, #tpu.memory_space<vmem>>, vector<400x64xf32>
    %cst = arith.constant dense<0.000000e+00> : vector<152x64xf32>
    %2 = tpu.matmul %0, %1, %cst {dimension_numbers = #tpu.dot_dimension_numbers<[1], [0], [0], [1], [0, 0, 1, 1], [], []>} : vector<152x400xf32>, vector<400x64xf32>, vector<152x64xf32> -> vector<152x64xf32>
    %c0_3 = arith.constant 0 : index
    %c0_4 = arith.constant 0 : index
    %3 = vector.load %arg3[%c0_3, %c0_4] : memref<1x64xf32, #tpu.memory_space<vmem>>, vector<1x64xf32>
    %4 = vector.broadcast %3 : vector<1x64xf32> to vector<152x64xf32>
    %5 = arith.addf %2, %4 : vector<152x64xf32>
    %cst_5 = arith.constant 5.000000e-01 : f32
    %6 = vector.broadcast %cst_5 : f32 to vector<152x64xf32>
    %7 = arith.mulf %6, %5 : vector<152x64xf32>
    %cst_6 = arith.constant 4.471500e-02 : f32
    %8 = vector.broadcast %cst_6 : f32 to vector<152x64xf32>
    %9 = arith.mulf %8, %5 : vector<152x64xf32>
    %10 = arith.mulf %9, %5 : vector<152x64xf32>
    %11 = arith.mulf %10, %5 : vector<152x64xf32>
    %12 = arith.addf %5, %11 : vector<152x64xf32>
    %cst_7 = arith.constant 0.797884583 : f32
    %13 = vector.broadcast %cst_7 : f32 to vector<152x64xf32>
    %14 = arith.mulf %13, %12 : vector<152x64xf32>
    %15 = math.tanh %14 : vector<152x64xf32>
    %cst_8 = arith.constant 1.000000e+00 : f32
    %16 = vector.broadcast %cst_8 : f32 to vector<152x64xf32>
    %17 = arith.addf %16, %15 : vector<152x64xf32>
    %18 = arith.mulf %7, %17 : vector<152x64xf32>
    %c0_9 = arith.constant 0 : index
    %c0_10 = arith.constant 0 : index
    %19 = vector.load %arg4[%c0_9, %c0_10] : memref<152x64xf32, #tpu.memory_space<vmem>>, vector<152x64xf32>
    tpu.vector_store %arg4[%c0_9, %c0_10], %18 {strides = array<i32>} : memref<152x64xf32, #tpu.memory_space<vmem>>, vector<152x64xf32>,
    return
  }
  func.func @transform_0(%arg0: i32) -> (i32, i32) {
    %c0_i32 = arith.constant 0 : i32
    %c0_i32_0 = arith.constant 0 : i32
    return %arg0, %c0_i32 : i32, i32
  }
  func.func @transform_1(%arg0: i32) -> (i32, i32) {
    %c0_i32 = arith.constant 0 : i32
    %c0_i32_0 = arith.constant 0 : i32
    %c0_i32_1 = arith.constant 0 : i32
    return %c0_i32, %c0_i32_0 : i32, i32
  }
  func.func @transform_2(%arg0: i32) -> (i32, i32) {
    %c0_i32 = arith.constant 0 : i32
    %c0_i32_0 = arith.constant 0 : i32
    %c0_i32_1 = arith.constant 0 : i32
    return %c0_i32, %c0_i32_0 : i32, i32
  }
  func.func @transform_3(%arg0: i32) -> (i32, i32) {
    %c0_i32 = arith.constant 0 : i32
    %c0_i32_0 = arith.constant 0 : i32
    return %arg0, %c0_i32 : i32, i32
  }
}

module attributes {stable_mosaic.version = 11 : i64} {
  func.func @_matmul_bias_act_kernel(%arg0: i32, %arg1: memref<80x384xf32, #tpu.memory_space<vmem>>, %arg2: memref<384x128xf32, #tpu.memory_space<vmem>>, %arg3: memref<1x128xf32, #tpu.memory_space<vmem>>, %arg4: memref<80x128xf32, #tpu.memory_space<vmem>>) attributes {dimension_semantics = [#tpu.dimension_semantics<parallel>], iteration_bounds = array<i64: 1>, scalar_prefetch = 0 : i64, scratch_operands = 0 : i64, tpu.core_type = #tpu.core_type<tc>, window_params = [{transform_indices = @transform_0, window_bounds = array<i64: 80, 384>}, {pipeline_mode = #tpu.pipeline_mode<synchronous>, transform_indices = @transform_1, window_bounds = array<i64: 384, 128>}, {pipeline_mode = #tpu.pipeline_mode<synchronous>, transform_indices = @transform_2, window_bounds = array<i64: 1, 128>}, {transform_indices = @transform_3, window_bounds = array<i64: 80, 128>}]} {
    %c0 = arith.constant 0 : index
    %c0_0 = arith.constant 0 : index
    %0 = vector.load %arg1[%c0, %c0_0] : memref<80x384xf32, #tpu.memory_space<vmem>>, vector<80x384xf32>
    %c0_1 = arith.constant 0 : index
    %c0_2 = arith.constant 0 : index
    %1 = vector.load %arg2[%c0_1, %c0_2] : memref<384x128xf32, #tpu.memory_space<vmem>>, vector<384x128xf32>
    %cst = arith.constant dense<0.000000e+00> : vector<80x128xf32>
    %2 = tpu.matmul %0, %1, %cst {dimension_numbers = #tpu.dot_dimension_numbers<[1], [0], [0], [1], [0, 0, 1, 1], [], []>} : vector<80x384xf32>, vector<384x128xf32>, vector<80x128xf32> -> vector<80x128xf32>
    %c0_3 = arith.constant 0 : index
    %c0_4 = arith.constant 0 : index
    %3 = vector.load %arg3[%c0_3, %c0_4] : memref<1x128xf32, #tpu.memory_space<vmem>>, vector<1x128xf32>
    %4 = vector.broadcast %3 : vector<1x128xf32> to vector<80x128xf32>
    %5 = arith.addf %2, %4 : vector<80x128xf32>
    %cst_5 = arith.constant 5.000000e-01 : f32
    %6 = vector.broadcast %cst_5 : f32 to vector<80x128xf32>
    %7 = arith.mulf %6, %5 : vector<80x128xf32>
    %cst_6 = arith.constant 4.471500e-02 : f32
    %8 = vector.broadcast %cst_6 : f32 to vector<80x128xf32>
    %9 = arith.mulf %8, %5 : vector<80x128xf32>
    %10 = arith.mulf %9, %5 : vector<80x128xf32>
    %11 = arith.mulf %10, %5 : vector<80x128xf32>
    %12 = arith.addf %5, %11 : vector<80x128xf32>
    %cst_7 = arith.constant 0.797884583 : f32
    %13 = vector.broadcast %cst_7 : f32 to vector<80x128xf32>
    %14 = arith.mulf %13, %12 : vector<80x128xf32>
    %15 = math.tanh %14 : vector<80x128xf32>
    %cst_8 = arith.constant 1.000000e+00 : f32
    %16 = vector.broadcast %cst_8 : f32 to vector<80x128xf32>
    %17 = arith.addf %16, %15 : vector<80x128xf32>
    %18 = arith.mulf %7, %17 : vector<80x128xf32>
    %c0_9 = arith.constant 0 : index
    %c0_10 = arith.constant 0 : index
    %19 = vector.load %arg4[%c0_9, %c0_10] : memref<80x128xf32, #tpu.memory_space<vmem>>, vector<80x128xf32>
    tpu.vector_store %arg4[%c0_9, %c0_10], %18 {strides = array<i32>} : memref<80x128xf32, #tpu.memory_space<vmem>>, vector<80x128xf32>,
    return
  }
  func.func @transform_0(%arg0: i32) -> (i32, i32) {
    %c0_i32 = arith.constant 0 : i32
    %c0_i32_0 = arith.constant 0 : i32
    return %arg0, %c0_i32 : i32, i32
  }
  func.func @transform_1(%arg0: i32) -> (i32, i32) {
    %c0_i32 = arith.constant 0 : i32
    %c0_i32_0 = arith.constant 0 : i32
    %c0_i32_1 = arith.constant 0 : i32
    return %c0_i32, %c0_i32_0 : i32, i32
  }
  func.func @transform_2(%arg0: i32) -> (i32, i32) {
    %c0_i32 = arith.constant 0 : i32
    %c0_i32_0 = arith.constant 0 : i32
    %c0_i32_1 = arith.constant 0 : i32
    return %c0_i32, %c0_i32_0 : i32, i32
  }
  func.func @transform_3(%arg0: i32) -> (i32, i32) {
    %c0_i32 = arith.constant 0 : i32
    %c0_i32_0 = arith.constant 0 : i32
    return %arg0, %c0_i32 : i32, i32
  }
}

module attributes {stable_mosaic.version = 11 : i64} {
  func.func @_matmul_bias_act_kernel(%arg0: i32, %arg1: memref<88x768xf32, #tpu.memory_space<vmem>>, %arg2: memref<768x128xf32, #tpu.memory_space<vmem>>, %arg3: memref<1x128xf32, #tpu.memory_space<vmem>>, %arg4: memref<88x128xf32, #tpu.memory_space<vmem>>) attributes {dimension_semantics = [#tpu.dimension_semantics<parallel>], iteration_bounds = array<i64: 1>, scalar_prefetch = 0 : i64, scratch_operands = 0 : i64, tpu.core_type = #tpu.core_type<tc>, window_params = [{transform_indices = @transform_0, window_bounds = array<i64: 88, 768>}, {pipeline_mode = #tpu.pipeline_mode<synchronous>, transform_indices = @transform_1, window_bounds = array<i64: 768, 128>}, {pipeline_mode = #tpu.pipeline_mode<synchronous>, transform_indices = @transform_2, window_bounds = array<i64: 1, 128>}, {transform_indices = @transform_3, window_bounds = array<i64: 88, 128>}]} {
    %c0 = arith.constant 0 : index
    %c0_0 = arith.constant 0 : index
    %0 = vector.load %arg1[%c0, %c0_0] : memref<88x768xf32, #tpu.memory_space<vmem>>, vector<88x768xf32>
    %c0_1 = arith.constant 0 : index
    %c0_2 = arith.constant 0 : index
    %1 = vector.load %arg2[%c0_1, %c0_2] : memref<768x128xf32, #tpu.memory_space<vmem>>, vector<768x128xf32>
    %cst = arith.constant dense<0.000000e+00> : vector<88x128xf32>
    %2 = tpu.matmul %0, %1, %cst {dimension_numbers = #tpu.dot_dimension_numbers<[1], [0], [0], [1], [0, 0, 1, 1], [], []>} : vector<88x768xf32>, vector<768x128xf32>, vector<88x128xf32> -> vector<88x128xf32>
    %c0_3 = arith.constant 0 : index
    %c0_4 = arith.constant 0 : index
    %3 = vector.load %arg3[%c0_3, %c0_4] : memref<1x128xf32, #tpu.memory_space<vmem>>, vector<1x128xf32>
    %4 = vector.broadcast %3 : vector<1x128xf32> to vector<88x128xf32>
    %5 = arith.addf %2, %4 : vector<88x128xf32>
    %cst_5 = arith.constant 5.000000e-01 : f32
    %6 = vector.broadcast %cst_5 : f32 to vector<88x128xf32>
    %7 = arith.mulf %6, %5 : vector<88x128xf32>
    %cst_6 = arith.constant 4.471500e-02 : f32
    %8 = vector.broadcast %cst_6 : f32 to vector<88x128xf32>
    %9 = arith.mulf %8, %5 : vector<88x128xf32>
    %10 = arith.mulf %9, %5 : vector<88x128xf32>
    %11 = arith.mulf %10, %5 : vector<88x128xf32>
    %12 = arith.addf %5, %11 : vector<88x128xf32>
    %cst_7 = arith.constant 0.797884583 : f32
    %13 = vector.broadcast %cst_7 : f32 to vector<88x128xf32>
    %14 = arith.mulf %13, %12 : vector<88x128xf32>
    %15 = math.tanh %14 : vector<88x128xf32>
    %cst_8 = arith.constant 1.000000e+00 : f32
    %16 = vector.broadcast %cst_8 : f32 to vector<88x128xf32>
    %17 = arith.addf %16, %15 : vector<88x128xf32>
    %18 = arith.mulf %7, %17 : vector<88x128xf32>
    %c0_9 = arith.constant 0 : index
    %c0_10 = arith.constant 0 : index
    %19 = vector.load %arg4[%c0_9, %c0_10] : memref<88x128xf32, #tpu.memory_space<vmem>>, vector<88x128xf32>
    tpu.vector_store %arg4[%c0_9, %c0_10], %18 {strides = array<i32>} : memref<88x128xf32, #tpu.memory_space<vmem>>, vector<88x128xf32>,
    return
  }
  func.func @transform_0(%arg0: i32) -> (i32, i32) {
    %c0_i32 = arith.constant 0 : i32
    %c0_i32_0 = arith.constant 0 : i32
    return %arg0, %c0_i32 : i32, i32
  }
  func.func @transform_1(%arg0: i32) -> (i32, i32) {
    %c0_i32 = arith.constant 0 : i32
    %c0_i32_0 = arith.constant 0 : i32
    %c0_i32_1 = arith.constant 0 : i32
    return %c0_i32, %c0_i32_0 : i32, i32
  }
  func.func @transform_2(%arg0: i32) -> (i32, i32) {
    %c0_i32 = arith.constant 0 : i32
    %c0_i32_0 = arith.constant 0 : i32
    %c0_i32_1 = arith.constant 0 : i32
    return %c0_i32, %c0_i32_0 : i32, i32
  }
  func.func @transform_3(%arg0: i32) -> (i32, i32) {
    %c0_i32 = arith.constant 0 : i32
    %c0_i32_0 = arith.constant 0 : i32
    return %arg0, %c0_i32 : i32, i32
  }
}

module attributes {stable_mosaic.version = 11 : i64} {
  func.func @_matmul_bias_act_kernel(%arg0: i32, %arg1: memref<256x50xf32, #tpu.memory_space<vmem>>, %arg2: memref<50x64xf32, #tpu.memory_space<vmem>>, %arg3: memref<1x64xf32, #tpu.memory_space<vmem>>, %arg4: memref<256x64xf32, #tpu.memory_space<vmem>>) attributes {dimension_semantics = [#tpu.dimension_semantics<parallel>], iteration_bounds = array<i64: 5>, scalar_prefetch = 0 : i64, scratch_operands = 0 : i64, tpu.core_type = #tpu.core_type<tc>, window_params = [{transform_indices = @transform_0, window_bounds = array<i64: 256, 50>}, {pipeline_mode = #tpu.pipeline_mode<synchronous>, transform_indices = @transform_1, window_bounds = array<i64: 50, 64>}, {pipeline_mode = #tpu.pipeline_mode<synchronous>, transform_indices = @transform_2, window_bounds = array<i64: 1, 64>}, {transform_indices = @transform_3, window_bounds = array<i64: 256, 64>}]} {
    %c0 = arith.constant 0 : index
    %c0_0 = arith.constant 0 : index
    %0 = vector.load %arg1[%c0, %c0_0] : memref<256x50xf32, #tpu.memory_space<vmem>>, vector<256x50xf32>
    %c0_1 = arith.constant 0 : index
    %c0_2 = arith.constant 0 : index
    %1 = vector.load %arg2[%c0_1, %c0_2] : memref<50x64xf32, #tpu.memory_space<vmem>>, vector<50x64xf32>
    %cst = arith.constant dense<0.000000e+00> : vector<256x64xf32>
    %2 = tpu.matmul %0, %1, %cst {dimension_numbers = #tpu.dot_dimension_numbers<[1], [0], [0], [1], [0, 0, 1, 1], [], []>} : vector<256x50xf32>, vector<50x64xf32>, vector<256x64xf32> -> vector<256x64xf32>
    %c0_3 = arith.constant 0 : index
    %c0_4 = arith.constant 0 : index
    %3 = vector.load %arg3[%c0_3, %c0_4] : memref<1x64xf32, #tpu.memory_space<vmem>>, vector<1x64xf32>
    %4 = vector.broadcast %3 : vector<1x64xf32> to vector<256x64xf32>
    %5 = arith.addf %2, %4 : vector<256x64xf32>
    %cst_5 = arith.constant 5.000000e-01 : f32
    %6 = vector.broadcast %cst_5 : f32 to vector<256x64xf32>
    %7 = arith.mulf %6, %5 : vector<256x64xf32>
    %cst_6 = arith.constant 4.471500e-02 : f32
    %8 = vector.broadcast %cst_6 : f32 to vector<256x64xf32>
    %9 = arith.mulf %8, %5 : vector<256x64xf32>
    %10 = arith.mulf %9, %5 : vector<256x64xf32>
    %11 = arith.mulf %10, %5 : vector<256x64xf32>
    %12 = arith.addf %5, %11 : vector<256x64xf32>
    %cst_7 = arith.constant 0.797884583 : f32
    %13 = vector.broadcast %cst_7 : f32 to vector<256x64xf32>
    %14 = arith.mulf %13, %12 : vector<256x64xf32>
    %15 = math.tanh %14 : vector<256x64xf32>
    %cst_8 = arith.constant 1.000000e+00 : f32
    %16 = vector.broadcast %cst_8 : f32 to vector<256x64xf32>
    %17 = arith.addf %16, %15 : vector<256x64xf32>
    %18 = arith.mulf %7, %17 : vector<256x64xf32>
    %c0_9 = arith.constant 0 : index
    %c0_10 = arith.constant 0 : index
    %19 = vector.load %arg4[%c0_9, %c0_10] : memref<256x64xf32, #tpu.memory_space<vmem>>, vector<256x64xf32>
    tpu.vector_store %arg4[%c0_9, %c0_10], %18 {strides = array<i32>} : memref<256x64xf32, #tpu.memory_space<vmem>>, vector<256x64xf32>,
    return
  }
  func.func @transform_0(%arg0: i32) -> (i32, i32) {
    %c0_i32 = arith.constant 0 : i32
    %c0_i32_0 = arith.constant 0 : i32
    return %arg0, %c0_i32 : i32, i32
  }
  func.func @transform_1(%arg0: i32) -> (i32, i32) {
    %c0_i32 = arith.constant 0 : i32
    %c0_i32_0 = arith.constant 0 : i32
    %c0_i32_1 = arith.constant 0 : i32
    return %c0_i32, %c0_i32_0 : i32, i32
  }
  func.func @transform_2(%arg0: i32) -> (i32, i32) {
    %c0_i32 = arith.constant 0 : i32
    %c0_i32_0 = arith.constant 0 : i32
    %c0_i32_1 = arith.constant 0 : i32
    return %c0_i32, %c0_i32_0 : i32, i32
  }
  func.func @transform_3(%arg0: i32) -> (i32, i32) {
    %c0_i32 = arith.constant 0 : i32
    %c0_i32_0 = arith.constant 0 : i32
    return %arg0, %c0_i32 : i32, i32
  }
}

module attributes {stable_mosaic.version = 11 : i64} {
  func.func @_matmul_bias_act_kernel(%arg0: i32, %arg1: memref<256x512xf32, #tpu.memory_space<vmem>>, %arg2: memref<512x128xf32, #tpu.memory_space<vmem>>, %arg3: memref<1x128xf32, #tpu.memory_space<vmem>>, %arg4: memref<256x128xf32, #tpu.memory_space<vmem>>) attributes {dimension_semantics = [#tpu.dimension_semantics<parallel>], iteration_bounds = array<i64: 3>, scalar_prefetch = 0 : i64, scratch_operands = 0 : i64, tpu.core_type = #tpu.core_type<tc>, window_params = [{transform_indices = @transform_0, window_bounds = array<i64: 256, 512>}, {pipeline_mode = #tpu.pipeline_mode<synchronous>, transform_indices = @transform_1, window_bounds = array<i64: 512, 128>}, {pipeline_mode = #tpu.pipeline_mode<synchronous>, transform_indices = @transform_2, window_bounds = array<i64: 1, 128>}, {transform_indices = @transform_3, window_bounds = array<i64: 256, 128>}]} {
    %c0 = arith.constant 0 : index
    %c0_0 = arith.constant 0 : index
    %0 = vector.load %arg1[%c0, %c0_0] : memref<256x512xf32, #tpu.memory_space<vmem>>, vector<256x512xf32>
    %c0_1 = arith.constant 0 : index
    %c0_2 = arith.constant 0 : index
    %1 = vector.load %arg2[%c0_1, %c0_2] : memref<512x128xf32, #tpu.memory_space<vmem>>, vector<512x128xf32>
    %cst = arith.constant dense<0.000000e+00> : vector<256x128xf32>
    %2 = tpu.matmul %0, %1, %cst {dimension_numbers = #tpu.dot_dimension_numbers<[1], [0], [0], [1], [0, 0, 1, 1], [], []>} : vector<256x512xf32>, vector<512x128xf32>, vector<256x128xf32> -> vector<256x128xf32>
    %c0_3 = arith.constant 0 : index
    %c0_4 = arith.constant 0 : index
    %3 = vector.load %arg3[%c0_3, %c0_4] : memref<1x128xf32, #tpu.memory_space<vmem>>, vector<1x128xf32>
    %4 = vector.broadcast %3 : vector<1x128xf32> to vector<256x128xf32>
    %5 = arith.addf %2, %4 : vector<256x128xf32>
    %cst_5 = arith.constant 5.000000e-01 : f32
    %6 = vector.broadcast %cst_5 : f32 to vector<256x128xf32>
    %7 = arith.mulf %6, %5 : vector<256x128xf32>
    %cst_6 = arith.constant 4.471500e-02 : f32
    %8 = vector.broadcast %cst_6 : f32 to vector<256x128xf32>
    %9 = arith.mulf %8, %5 : vector<256x128xf32>
    %10 = arith.mulf %9, %5 : vector<256x128xf32>
    %11 = arith.mulf %10, %5 : vector<256x128xf32>
    %12 = arith.addf %5, %11 : vector<256x128xf32>
    %cst_7 = arith.constant 0.797884583 : f32
    %13 = vector.broadcast %cst_7 : f32 to vector<256x128xf32>
    %14 = arith.mulf %13, %12 : vector<256x128xf32>
    %15 = math.tanh %14 : vector<256x128xf32>
    %cst_8 = arith.constant 1.000000e+00 : f32
    %16 = vector.broadcast %cst_8 : f32 to vector<256x128xf32>
    %17 = arith.addf %16, %15 : vector<256x128xf32>
    %18 = arith.mulf %7, %17 : vector<256x128xf32>
    %c0_9 = arith.constant 0 : index
    %c0_10 = arith.constant 0 : index
    %19 = vector.load %arg4[%c0_9, %c0_10] : memref<256x128xf32, #tpu.memory_space<vmem>>, vector<256x128xf32>
    tpu.vector_store %arg4[%c0_9, %c0_10], %18 {strides = array<i32>} : memref<256x128xf32, #tpu.memory_space<vmem>>, vector<256x128xf32>,
    return
  }
  func.func @transform_0(%arg0: i32) -> (i32, i32) {
    %c0_i32 = arith.constant 0 : i32
    %c0_i32_0 = arith.constant 0 : i32
    return %arg0, %c0_i32 : i32, i32
  }
  func.func @transform_1(%arg0: i32) -> (i32, i32) {
    %c0_i32 = arith.constant 0 : i32
    %c0_i32_0 = arith.constant 0 : i32
    %c0_i32_1 = arith.constant 0 : i32
    return %c0_i32, %c0_i32_0 : i32, i32
  }
  func.func @transform_2(%arg0: i32) -> (i32, i32) {
    %c0_i32 = arith.constant 0 : i32
    %c0_i32_0 = arith.constant 0 : i32
    %c0_i32_1 = arith.constant 0 : i32
    return %c0_i32, %c0_i32_0 : i32, i32
  }
  func.func @transform_3(%arg0: i32) -> (i32, i32) {
    %c0_i32 = arith.constant 0 : i32
    %c0_i32_0 = arith.constant 0 : i32
    return %arg0, %c0_i32 : i32, i32
  }
}

module attributes {stable_mosaic.version = 11 : i64} {
  func.func @_matmul_bias_act_kernel(%arg0: i32, %arg1: memref<256x1024xf32, #tpu.memory_space<vmem>>, %arg2: memref<1024x128xf32, #tpu.memory_space<vmem>>, %arg3: memref<1x128xf32, #tpu.memory_space<vmem>>, %arg4: memref<256x128xf32, #tpu.memory_space<vmem>>) attributes {dimension_semantics = [#tpu.dimension_semantics<parallel>], iteration_bounds = array<i64: 3>, scalar_prefetch = 0 : i64, scratch_operands = 0 : i64, tpu.core_type = #tpu.core_type<tc>, window_params = [{transform_indices = @transform_0, window_bounds = array<i64: 256, 1024>}, {pipeline_mode = #tpu.pipeline_mode<synchronous>, transform_indices = @transform_1, window_bounds = array<i64: 1024, 128>}, {pipeline_mode = #tpu.pipeline_mode<synchronous>, transform_indices = @transform_2, window_bounds = array<i64: 1, 128>}, {transform_indices = @transform_3, window_bounds = array<i64: 256, 128>}]} {
    %c0 = arith.constant 0 : index
    %c0_0 = arith.constant 0 : index
    %0 = vector.load %arg1[%c0, %c0_0] : memref<256x1024xf32, #tpu.memory_space<vmem>>, vector<256x1024xf32>
    %c0_1 = arith.constant 0 : index
    %c0_2 = arith.constant 0 : index
    %1 = vector.load %arg2[%c0_1, %c0_2] : memref<1024x128xf32, #tpu.memory_space<vmem>>, vector<1024x128xf32>
    %cst = arith.constant dense<0.000000e+00> : vector<256x128xf32>
    %2 = tpu.matmul %0, %1, %cst {dimension_numbers = #tpu.dot_dimension_numbers<[1], [0], [0], [1], [0, 0, 1, 1], [], []>} : vector<256x1024xf32>, vector<1024x128xf32>, vector<256x128xf32> -> vector<256x128xf32>
    %c0_3 = arith.constant 0 : index
    %c0_4 = arith.constant 0 : index
    %3 = vector.load %arg3[%c0_3, %c0_4] : memref<1x128xf32, #tpu.memory_space<vmem>>, vector<1x128xf32>
    %4 = vector.broadcast %3 : vector<1x128xf32> to vector<256x128xf32>
    %5 = arith.addf %2, %4 : vector<256x128xf32>
    %cst_5 = arith.constant 5.000000e-01 : f32
    %6 = vector.broadcast %cst_5 : f32 to vector<256x128xf32>
    %7 = arith.mulf %6, %5 : vector<256x128xf32>
    %cst_6 = arith.constant 4.471500e-02 : f32
    %8 = vector.broadcast %cst_6 : f32 to vector<256x128xf32>
    %9 = arith.mulf %8, %5 : vector<256x128xf32>
    %10 = arith.mulf %9, %5 : vector<256x128xf32>
    %11 = arith.mulf %10, %5 : vector<256x128xf32>
    %12 = arith.addf %5, %11 : vector<256x128xf32>
    %cst_7 = arith.constant 0.797884583 : f32
    %13 = vector.broadcast %cst_7 : f32 to vector<256x128xf32>
    %14 = arith.mulf %13, %12 : vector<256x128xf32>
    %15 = math.tanh %14 : vector<256x128xf32>
    %cst_8 = arith.constant 1.000000e+00 : f32
    %16 = vector.broadcast %cst_8 : f32 to vector<256x128xf32>
    %17 = arith.addf %16, %15 : vector<256x128xf32>
    %18 = arith.mulf %7, %17 : vector<256x128xf32>
    %c0_9 = arith.constant 0 : index
    %c0_10 = arith.constant 0 : index
    %19 = vector.load %arg4[%c0_9, %c0_10] : memref<256x128xf32, #tpu.memory_space<vmem>>, vector<256x128xf32>
    tpu.vector_store %arg4[%c0_9, %c0_10], %18 {strides = array<i32>} : memref<256x128xf32, #tpu.memory_space<vmem>>, vector<256x128xf32>,
    return
  }
  func.func @transform_0(%arg0: i32) -> (i32, i32) {
    %c0_i32 = arith.constant 0 : i32
    %c0_i32_0 = arith.constant 0 : i32
    return %arg0, %c0_i32 : i32, i32
  }
  func.func @transform_1(%arg0: i32) -> (i32, i32) {
    %c0_i32 = arith.constant 0 : i32
    %c0_i32_0 = arith.constant 0 : i32
    %c0_i32_1 = arith.constant 0 : i32
    return %c0_i32, %c0_i32_0 : i32, i32
  }
  func.func @transform_2(%arg0: i32) -> (i32, i32) {
    %c0_i32 = arith.constant 0 : i32
    %c0_i32_0 = arith.constant 0 : i32
    %c0_i32_1 = arith.constant 0 : i32
    return %c0_i32, %c0_i32_0 : i32, i32
  }
  func.func @transform_3(%arg0: i32) -> (i32, i32) {
    %c0_i32 = arith.constant 0 : i32
    %c0_i32_0 = arith.constant 0 : i32
    return %arg0, %c0_i32 : i32, i32
  }
}

module attributes {stable_mosaic.version = 11 : i64} {
  func.func @_afr_kernel(%arg0: i32, %arg1: memref<200x128xf32, #tpu.memory_space<vmem>>, %arg2: memref<128x30xf32, #tpu.memory_space<vmem>>, %arg3: memref<1x30xf32, #tpu.memory_space<vmem>>, %arg4: memref<30x30xf32, #tpu.memory_space<vmem>>, %arg5: memref<1x30xf32, #tpu.memory_space<vmem>>, %arg6: memref<128x30xf32, #tpu.memory_space<vmem>>, %arg7: memref<1x30xf32, #tpu.memory_space<vmem>>, %arg8: memref<1x30xf32, #tpu.memory_space<vmem>>, %arg9: memref<1x30xf32, #tpu.memory_space<vmem>>, %arg10: memref<2x200xf32, #tpu.memory_space<vmem>>, %arg11: memref<200x2xf32, #tpu.memory_space<vmem>>, %arg12: memref<200x30xf32, #tpu.memory_space<vmem>>) attributes {dimension_semantics = [#tpu.dimension_semantics<arbitrary>], iteration_bounds = array<i64: 1>, scalar_prefetch = 0 : i64, scratch_operands = 0 : i64, tpu.core_type = #tpu.core_type<tc>, window_params = [{pipeline_mode = #tpu.pipeline_mode<synchronous>, transform_indices = @transform_0, window_bounds = array<i64: 200, 128>}, {pipeline_mode = #tpu.pipeline_mode<synchronous>, transform_indices = @transform_1, window_bounds = array<i64: 128, 30>}, {pipeline_mode = #tpu.pipeline_mode<synchronous>, transform_indices = @transform_2, window_bounds = array<i64: 1, 30>}, {pipeline_mode = #tpu.pipeline_mode<synchronous>, transform_indices = @transform_3, window_bounds = array<i64: 30, 30>}, {pipeline_mode = #tpu.pipeline_mode<synchronous>, transform_indices = @transform_4, window_bounds = array<i64: 1, 30>}, {pipeline_mode = #tpu.pipeline_mode<synchronous>, transform_indices = @transform_5, window_bounds = array<i64: 128, 30>}, {pipeline_mode = #tpu.pipeline_mode<synchronous>, transform_indices = @transform_6, window_bounds = array<i64: 1, 30>}, {pipeline_mode = #tpu.pipeline_mode<synchronous>, transform_indices = @transform_7, window_bounds = array<i64: 1, 30>}, {pipeline_mode = #tpu.pipeline_mode<synchronous>, transform_indices = @transform_8, window_bounds = array<i64: 1, 30>}, {pipeline_mode = #tpu.pipeline_mode<synchronous>, transform_indices = @transform_9, window_bounds = array<i64: 2, 200>}, {pipeline_mode = #tpu.pipeline_mode<synchronous>, transform_indices = @transform_10, window_bounds = array<i64: 200, 2>}, {pipeline_mode = #tpu.pipeline_mode<synchronous>, transform_indices = @transform_11, window_bounds = array<i64: 200, 30>}]} {
    %c0 = arith.constant 0 : index
    %c0_0 = arith.constant 0 : index
    %0 = vector.load %arg1[%c0, %c0_0] : memref<200x128xf32, #tpu.memory_space<vmem>>, vector<200x128xf32>
    %c0_1 = arith.constant 0 : index
    %c0_2 = arith.constant 0 : index
    %1 = vector.load %arg2[%c0_1, %c0_2] : memref<128x30xf32, #tpu.memory_space<vmem>>, vector<128x30xf32>
    %cst = arith.constant dense<0.000000e+00> : vector<200x30xf32>
    %2 = tpu.matmul %0, %1, %cst {dimension_numbers = #tpu.dot_dimension_numbers<[1], [0], [0], [1], [0, 0, 1, 1], [], []>} : vector<200x128xf32>, vector<128x30xf32>, vector<200x30xf32> -> vector<200x30xf32>
    %c0_3 = arith.constant 0 : index
    %c0_4 = arith.constant 0 : index
    %3 = vector.load %arg3[%c0_3, %c0_4] : memref<1x30xf32, #tpu.memory_space<vmem>>, vector<1x30xf32>
    %4 = vector.broadcast %3 : vector<1x30xf32> to vector<200x30xf32>
    %5 = arith.addf %2, %4 : vector<200x30xf32>
    %cst_5 = arith.constant 0.000000e+00 : f32
    %6 = vector.broadcast %cst_5 : f32 to vector<200x30xf32>
    %7 = arith.maximumf %5, %6 : vector<200x30xf32>
    %c0_6 = arith.constant 0 : index
    %c0_7 = arith.constant 0 : index
    %8 = vector.load %arg4[%c0_6, %c0_7] : memref<30x30xf32, #tpu.memory_space<vmem>>, vector<30x30xf32>
    %cst_8 = arith.constant dense<0.000000e+00> : vector<200x30xf32>
    %9 = tpu.matmul %7, %8, %cst_8 {dimension_numbers = #tpu.dot_dimension_numbers<[1], [0], [0], [1], [0, 0, 1, 1], [], []>} : vector<200x30xf32>, vector<30x30xf32>, vector<200x30xf32> -> vector<200x30xf32>
    %c0_9 = arith.constant 0 : index
    %c0_10 = arith.constant 0 : index
    %10 = vector.load %arg5[%c0_9, %c0_10] : memref<1x30xf32, #tpu.memory_space<vmem>>, vector<1x30xf32>
    %11 = vector.broadcast %10 : vector<1x30xf32> to vector<200x30xf32>
    %12 = arith.addf %9, %11 : vector<200x30xf32>
    %c0_11 = arith.constant 0 : index
    %c0_12 = arith.constant 0 : index
    %13 = vector.load %arg10[%c0_11, %c0_12] : memref<2x200xf32, #tpu.memory_space<vmem>>, vector<2x200xf32>
    %cst_13 = arith.constant dense<0.000000e+00> : vector<2x30xf32>
    %14 = tpu.matmul %13, %12, %cst_13 {dimension_numbers = #tpu.dot_dimension_numbers<[1], [0], [0], [1], [0, 0, 1, 1], [], []>} : vector<2x200xf32>, vector<200x30xf32>, vector<2x30xf32> -> vector<2x30xf32>
    %c0_14 = arith.constant 0 : index
    %c0_15 = arith.constant 0 : index
    %15 = vector.load %arg8[%c0_14, %c0_15] : memref<1x30xf32, #tpu.memory_space<vmem>>, vector<1x30xf32>
    %16 = vector.broadcast %15 : vector<1x30xf32> to vector<2x30xf32>
    %17 = arith.mulf %14, %16 : vector<2x30xf32>
    %cst_16 = arith.constant dense<0.000000e+00> : vector<2xf32>
    %18 = vector.multi_reduction <add>, %17, %cst_16 [1] : vector<2x30xf32> to vector<2xf32>
    %19 = vector.shape_cast %18 : vector<2xf32> to vector<2x1xf32>
    %cst_17 = arith.constant 0.000000e+00 : f32
    %20 = vector.broadcast %cst_17 : f32 to vector<2x1xf32>
    %21 = arith.maximumf %19, %20 : vector<2x1xf32>
    %c0_18 = arith.constant 0 : index
    %c0_19 = arith.constant 0 : index
    %22 = vector.load %arg9[%c0_18, %c0_19] : memref<1x30xf32, #tpu.memory_space<vmem>>, vector<1x30xf32>
    %23 = vector.broadcast %21 : vector<2x1xf32> to vector<2x30xf32>
    %24 = vector.broadcast %22 : vector<1x30xf32> to vector<2x30xf32>
    %25 = arith.mulf %23, %24 : vector<2x30xf32>
    %26 = arith.negf %25 : vector<2x30xf32>
    %27 = math.exp %26 : vector<2x30xf32>
    %cst_20 = arith.constant 1.000000e+00 : f32
    %28 = vector.broadcast %cst_20 : f32 to vector<2x30xf32>
    %29 = arith.addf %28, %27 : vector<2x30xf32>
    %30 = arith.divf %28, %29 : vector<2x30xf32>
    %c0_21 = arith.constant 0 : index
    %c0_22 = arith.constant 0 : index
    %31 = vector.load %arg11[%c0_21, %c0_22] : memref<200x2xf32, #tpu.memory_space<vmem>>, vector<200x2xf32>
    %cst_23 = arith.constant dense<0.000000e+00> : vector<200x30xf32>
    %32 = tpu.matmul %31, %30, %cst_23 {dimension_numbers = #tpu.dot_dimension_numbers<[1], [0], [0], [1], [0, 0, 1, 1], [], []>} : vector<200x2xf32>, vector<2x30xf32>, vector<200x30xf32> -> vector<200x30xf32>
    %c0_24 = arith.constant 0 : index
    %c0_25 = arith.constant 0 : index
    %33 = vector.load %arg6[%c0_24, %c0_25] : memref<128x30xf32, #tpu.memory_space<vmem>>, vector<128x30xf32>
    %cst_26 = arith.constant dense<0.000000e+00> : vector<200x30xf32>
    %34 = tpu.matmul %0, %33, %cst_26 {dimension_numbers = #tpu.dot_dimension_numbers<[1], [0], [0], [1], [0, 0, 1, 1], [], []>} : vector<200x128xf32>, vector<128x30xf32>, vector<200x30xf32> -> vector<200x30xf32>
    %c0_27 = arith.constant 0 : index
    %c0_28 = arith.constant 0 : index
    %35 = vector.load %arg7[%c0_27, %c0_28] : memref<1x30xf32, #tpu.memory_space<vmem>>, vector<1x30xf32>
    %36 = vector.broadcast %35 : vector<1x30xf32> to vector<200x30xf32>
    %37 = arith.addf %34, %36 : vector<200x30xf32>
    %38 = arith.mulf %12, %32 : vector<200x30xf32>
    %39 = arith.addf %38, %37 : vector<200x30xf32>
    %cst_29 = arith.constant 0.000000e+00 : f32
    %40 = vector.broadcast %cst_29 : f32 to vector<200x30xf32>
    %41 = arith.maximumf %39, %40 : vector<200x30xf32>
    %c0_30 = arith.constant 0 : index
    %c0_31 = arith.constant 0 : index
    %42 = vector.load %arg12[%c0_30, %c0_31] : memref<200x30xf32, #tpu.memory_space<vmem>>, vector<200x30xf32>
    tpu.vector_store %arg12[%c0_30, %c0_31], %41 {strides = array<i32>} : memref<200x30xf32, #tpu.memory_space<vmem>>, vector<200x30xf32>,
    return
  }
  func.func @transform_0(%arg0: i32) -> (i32, i32) {
    %c0_i32 = arith.constant 0 : i32
    %c0_i32_0 = arith.constant 0 : i32
    %c0_i32_1 = arith.constant 0 : i32
    return %c0_i32, %c0_i32_0 : i32, i32
  }
  func.func @transform_1(%arg0: i32) -> (i32, i32) {
    %c0_i32 = arith.constant 0 : i32
    %c0_i32_0 = arith.constant 0 : i32
    %c0_i32_1 = arith.constant 0 : i32
    return %c0_i32, %c0_i32_0 : i32, i32
  }
  func.func @transform_2(%arg0: i32) -> (i32, i32) {
    %c0_i32 = arith.constant 0 : i32
    %c0_i32_0 = arith.constant 0 : i32
    %c0_i32_1 = arith.constant 0 : i32
    return %c0_i32, %c0_i32_0 : i32, i32
  }
  func.func @transform_3(%arg0: i32) -> (i32, i32) {
    %c0_i32 = arith.constant 0 : i32
    %c0_i32_0 = arith.constant 0 : i32
    %c0_i32_1 = arith.constant 0 : i32
    return %c0_i32, %c0_i32_0 : i32, i32
  }
  func.func @transform_4(%arg0: i32) -> (i32, i32) {
    %c0_i32 = arith.constant 0 : i32
    %c0_i32_0 = arith.constant 0 : i32
    %c0_i32_1 = arith.constant 0 : i32
    return %c0_i32, %c0_i32_0 : i32, i32
  }
  func.func @transform_5(%arg0: i32) -> (i32, i32) {
    %c0_i32 = arith.constant 0 : i32
    %c0_i32_0 = arith.constant 0 : i32
    %c0_i32_1 = arith.constant 0 : i32
    return %c0_i32, %c0_i32_0 : i32, i32
  }
  func.func @transform_6(%arg0: i32) -> (i32, i32) {
    %c0_i32 = arith.constant 0 : i32
    %c0_i32_0 = arith.constant 0 : i32
    %c0_i32_1 = arith.constant 0 : i32
    return %c0_i32, %c0_i32_0 : i32, i32
  }
  func.func @transform_7(%arg0: i32) -> (i32, i32) {
    %c0_i32 = arith.constant 0 : i32
    %c0_i32_0 = arith.constant 0 : i32
    %c0_i32_1 = arith.constant 0 : i32
    return %c0_i32, %c0_i32_0 : i32, i32
  }
  func.func @transform_8(%arg0: i32) -> (i32, i32) {
    %c0_i32 = arith.constant 0 : i32
    %c0_i32_0 = arith.constant 0 : i32
    %c0_i32_1 = arith.constant 0 : i32
    return %c0_i32, %c0_i32_0 : i32, i32
  }
  func.func @transform_9(%arg0: i32) -> (i32, i32) {
    %c0_i32 = arith.constant 0 : i32
    %c0_i32_0 = arith.constant 0 : i32
    %c0_i32_1 = arith.constant 0 : i32
    return %c0_i32, %c0_i32_0 : i32, i32
  }
  func.func @transform_10(%arg0: i32) -> (i32, i32) {
    %c0_i32 = arith.constant 0 : i32
    %c0_i32_0 = arith.constant 0 : i32
    %c0_i32_1 = arith.constant 0 : i32
    return %c0_i32, %c0_i32_0 : i32, i32
  }
  func.func @transform_11(%arg0: i32) -> (i32, i32) {
    %c0_i32 = arith.constant 0 : i32
    %c0_i32_0 = arith.constant 0 : i32
    %c0_i32_1 = arith.constant 0 : i32
    return %c0_i32, %c0_i32_0 : i32, i32
  }
}

</mosaic_0001>

<llo_original>
// kernel: mrcnn_shhs_forward.10
$region0: #{mrcnn_shhs_forward.10}
  #allocation0 [shape = 'u32[]', space=smem, size = 0x4, offset = 0x4, fixed_abs, tag = 'smem constant byte address 0x4 - core index']
  #allocation1 [shape = 'u32[144,128]{1,0:T(1,128)}', space=vmem, size = 0x12000, scoped, tag = 'internal scratch']
  %s0 = inlined_call_operand.vmem [shape: f32[152,400], index: 0, kind: input, shape index: {}]
  %s1 = inlined_call_operand.vmem [shape: f32[400,64], index: 1, kind: input, shape index: {}]
  %s2 = inlined_call_operand.vmem [shape: f32[1,64], index: 2, kind: input, shape index: {}]
  %s3 = inlined_call_operand.vmem [shape: f32[152,64], index: 3, kind: output, shape index: {}]
  %s4 = sld [smem:[#allocation0]]
  $region22: #{mrcnn_shhs_forward.10} parent=0
    _
  %s6 = ssub.s32 1, %s4
  %s7 = scalar_select 0, %s6, %s4
  // Predicated region
  $region2: #{mrcnn_shhs_forward.10} parent=0 // pred_check
    _
  $region3: #{mrcnn_shhs_forward.10} parent=0 // pred_check_branch
    %9 = sbr.rel (0) target = $region5
  $region4: #{mrcnn_shhs_forward.10} parent=0 // pred_region
    _
  $region5: #{mrcnn_shhs_forward.10} parent=0 // pred_fallthru
    _
  // Predicated region
  $region6: #{mrcnn_shhs_forward.10} parent=0 // pred_check
    _
  $region7: #{mrcnn_shhs_forward.10} parent=0 // pred_check_branch
    %11 = sbr.rel (0) target = $region9
  $region8: #{mrcnn_shhs_forward.10} parent=0 // pred_region
    _
  $region9: #{mrcnn_shhs_forward.10} parent=0 // pred_fallthru
    _
  // Predicated region
  $region10: #{mrcnn_shhs_forward.10} parent=0 // pred_check
    _
  $region11: #{mrcnn_shhs_forward.10} parent=0 // pred_check_branch
    %13 = sbr.rel (0) target = $region13
  $region12: #{mrcnn_shhs_forward.10} parent=0 // pred_region
    _
  $region13: #{mrcnn_shhs_forward.10} parent=0 // pred_fallthru
    _
  %v14 = vld [vmem:[%s0] sm:$0xff]
  %v15 = vld [vmem:[%s0 + $0x8] sm:$0xff]
  %v16 = vld [vmem:[%s0 + $0x10] sm:$0xff]
  %v17 = vld [vmem:[%s0 + $0x18] sm:$0xff]
  %v18 = vld [vmem:[%s0 + $0x20] sm:$0xff]
  %v19 = vld [vmem:[%s0 + $0x28] sm:$0xff]
  %v20 = vld [vmem:[%s0 + $0x30] sm:$0xff]
  %v21 = vld [vmem:[%s0 + $0x38] sm:$0xff]
  %v22 = vld [vmem:[%s0 + $0x40] sm:$0xff]
  %v23 = vld [vmem:[%s0 + $0x48] sm:$0xff]
  %v24 = vld [vmem:[%s0 + $0x50] sm:$0xff]
  %v25 = vld [vmem:[%s0 + $0x58] sm:$0xff]
  %v26 = vld [vmem:[%s0 + $0x60] sm:$0xff]
  %v27 = vld [vmem:[%s0 + $0x68] sm:$0xff]
  %v28 = vld [vmem:[%s0 + $0x70] sm:$0xff]
  %v29 = vld [vmem:[%s0 + $0x78] sm:$0xff]
  %v30 = vld [vmem:[%s0 + $0x80] sm:$0xff]
  %v31 = vld [vmem:[%s0 + $0x88] sm:$0xff]
  %v32 = vld [vmem:[%s0 + $0x90] sm:$0xff]
  %v33 = vld [vmem:[%s0 + $0x98] sm:$0xff]
  %v34 = vld [vmem:[%s0 + $0xa0] sm:$0xff]
  %v35 = vld [vmem:[%s0 + $0xa8] sm:$0xff]
  %v36 = vld [vmem:[%s0 + $0xb0] sm:$0xff]
  %v37 = vld [vmem:[%s0 + $0xb8] sm:$0xff]
  %v38 = vld [vmem:[%s0 + $0xc0] sm:$0xff]
  %v39 = vld [vmem:[%s0 + $0xc8] sm:$0xff]
  %v40 = vld [vmem:[%s0 + $0xd0] sm:$0xff]
  %v41 = vld [vmem:[%s0 + $0xd8] sm:$0xff]
  %v42 = vld [vmem:[%s0 + $0xe0] sm:$0xff]
  %v43 = vld [vmem:[%s0 + $0xe8] sm:$0xff]
  %v44 = vld [vmem:[%s0 + $0xf0] sm:$0xff]
  %v45 = vld [vmem:[%s0 + $0xf8] sm:$0xff]
  %v46 = vld [vmem:[%s0 + $0x100] sm:$0xff]
  %v47 = vld [vmem:[%s0 + $0x108] sm:$0xff]
  %v48 = vld [vmem:[%s0 + $0x110] sm:$0xff]
  %v49 = vld [vmem:[%s0 + $0x118] sm:$0xff]
  %v50 = vld [vmem:[%s0 + $0x120] sm:$0xff]
  %v51 = vld [vmem:[%s0 + $0x128] sm:$0xff]
  %v52 = vld [vmem:[%s0 + $0x130] sm:$0xff]
  %v53 = vld [vmem:[%s0 + $0x138] sm:$0xff]
  %v54 = vld [vmem:[%s0 + $0x140] sm:$0xff]
  %v55 = vld [vmem:[%s0 + $0x148] sm:$0xff]
  %v56 = vld [vmem:[%s0 + $0x150] sm:$0xff]
  %v57 = vld [vmem:[%s0 + $0x158] sm:$0xff]
  %v58 = vld [vmem:[%s0 + $0x160] sm:$0xff]
  %v59 = vld [vmem:[%s0 + $0x168] sm:$0xff]
  %v60 = vld [vmem:[%s0 + $0x170] sm:$0xff]
  %v61 = vld [vmem:[%s0 + $0x178] sm:$0xff]
  %v62 = vld [vmem:[%s0 + $0x180] sm:$0xff]
  %v63 = vld [vmem:[%s0 + $0x188] sm:$0xff]
  %v64 = vld [vmem:[%s0 + $0x190] sm:$0xff]
  %v65 = vld [vmem:[%s0 + $0x198] sm:$0xff]
  %v66 = vld [vmem:[%s0 + $0x1a0] sm:$0xff]
  %v67 = vld [vmem:[%s0 + $0x1a8] sm:$0xff]
  %v68 = vld [vmem:[%s0 + $0x1b0] sm:$0xff]
  %v69 = vld [vmem:[%s0 + $0x1b8] sm:$0xff]
  %v70 = vld [vmem:[%s0 + $0x1c0] sm:$0xff]
  %v71 = vld [vmem:[%s0 + $0x1c8] sm:$0xff]
  %v72 = vld [vmem:[%s0 + $0x1d0] sm:$0xff]
  %v73 = vld [vmem:[%s0 + $0x1d8] sm:$0xff]
  %v74 = vld [vmem:[%s0 + $0x1e0] sm:$0xff]
  %v75 = vld [vmem:[%s0 + $0x1e8] sm:$0xff]
  %v76 = vld [vmem:[%s0 + $0x1f0] sm:$0xff]
  %v77 = vld [vmem:[%s0 + $0x1f8] sm:$0xff]
  %v78 = vld [vmem:[%s0 + $0x200] sm:$0xff]
  %v79 = vld [vmem:[%s0 + $0x208] sm:$0xff]
  %v80 = vld [vmem:[%s0 + $0x210] sm:$0xff]
  %v81 = vld [vmem:[%s0 + $0x218] sm:$0xff]
  %v82 = vld [vmem:[%s0 + $0x220] sm:$0xff]
  %v83 = vld [vmem:[%s0 + $0x228] sm:$0xff]
  %v84 = vld [vmem:[%s0 + $0x230] sm:$0xff]
  %v85 = vld [vmem:[%s0 + $0x238] sm:$0xff]
  %v86 = vld [vmem:[%s0 + $0x240] sm:$0xff]
  %v87 = vld [vmem:[%s0 + $0x248] sm:$0xff]
  %v88 = vld [vmem:[%s0 + $0x250] sm:$0xff]
  %v89 = vld [vmem:[%s0 + $0x258] sm:$0xff]
  %v90 = vld [vmem:[%s1] sm:$0xff]
  %v91 = vld [vmem:[%s1 + $0x8] sm:$0xff]
  %v92 = vld [vmem:[%s1 + $0x10] sm:$0xff]
  %v93 = vld [vmem:[%s1 + $0x18] sm:$0xff]
  %v94 = vld [vmem:[%s1 + $0x20] sm:$0xff]
  %v95 = vld [vmem:[%s1 + $0x28] sm:$0xff]
  %v96 = vld [vmem:[%s1 + $0x30] sm:$0xff]
  %v97 = vld [vmem:[%s1 + $0x38] sm:$0xff]
  %v98 = vld [vmem:[%s1 + $0x40] sm:$0xff]
  %v99 = vld [vmem:[%s1 + $0x48] sm:$0xff]
  %v100 = vld [vmem:[%s1 + $0x50] sm:$0xff]
  %v101 = vld [vmem:[%s1 + $0x58] sm:$0xff]
  %v102 = vld [vmem:[%s1 + $0x60] sm:$0xff]
  %v103 = vld [vmem:[%s1 + $0x68] sm:$0xff]
  %v104 = vld [vmem:[%s1 + $0x70] sm:$0xff]
  %v105 = vld [vmem:[%s1 + $0x78] sm:$0xff]
  %v106 = vld [vmem:[%s1 + $0x80] sm:$0xff]
  %v107 = vld [vmem:[%s1 + $0x88] sm:$0xff]
  %v108 = vld [vmem:[%s1 + $0x90] sm:$0xff]
  %v109 = vld [vmem:[%s1 + $0x98] sm:$0xff]
  %v110 = vld [vmem:[%s1 + $0xa0] sm:$0xff]
  %v111 = vld [vmem:[%s1 + $0xa8] sm:$0xff]
  %v112 = vld [vmem:[%s1 + $0xb0] sm:$0xff]
  %v113 = vld [vmem:[%s1 + $0xb8] sm:$0xff]
  %v114 = vld [vmem:[%s1 + $0xc0] sm:$0xff]
  %v115 = vld [vmem:[%s1 + $0xc8] sm:$0xff]
  %v116 = vld [vmem:[%s1 + $0xd0] sm:$0xff]
  %v117 = vld [vmem:[%s1 + $0xd8] sm:$0xff]
  %v118 = vld [vmem:[%s1 + $0xe0] sm:$0xff]
  %v119 = vld [vmem:[%s1 + $0xe8] sm:$0xff]
  %v120 = vld [vmem:[%s1 + $0xf0] sm:$0xff]
  %v121 = vld [vmem:[%s1 + $0xf8] sm:$0xff]
  %v122 = vld [vmem:[%s1 + $0x100] sm:$0xff]
  %v123 = vld [vmem:[%s1 + $0x108] sm:$0xff]
  %v124 = vld [vmem:[%s1 + $0x110] sm:$0xff]
  %v125 = vld [vmem:[%s1 + $0x118] sm:$0xff]
  %v126 = vld [vmem:[%s1 + $0x120] sm:$0xff]
  %v127 = vld [vmem:[%s1 + $0x128] sm:$0xff]
  %v128 = vld [vmem:[%s1 + $0x130] sm:$0xff]
  %v129 = vld [vmem:[%s1 + $0x138] sm:$0xff]
  %v130 = vld [vmem:[%s1 + $0x140] sm:$0xff]
  %v131 = vld [vmem:[%s1 + $0x148] sm:$0xff]
  %v132 = vld [vmem:[%s1 + $0x150] sm:$0xff]
  %v133 = vld [vmem:[%s1 + $0x158] sm:$0xff]
  %v134 = vld [vmem:[%s1 + $0x160] sm:$0xff]
  %v135 = vld [vmem:[%s1 + $0x168] sm:$0xff]
  %v136 = vld [vmem:[%s1 + $0x170] sm:$0xff]
  %v137 = vld [vmem:[%s1 + $0x178] sm:$0xff]
  %v138 = vld [vmem:[%s1 + $0x180] sm:$0xff]
  %v139 = vld [vmem:[%s1 + $0x188] sm:$0xff]
  %v140 = vld [vmem:[%s2] sm:$0x1]
  %v142 = vlaneseq
  %v143 = vshrl.u32 %v142, 7
  %v144 = vsub.s32 0, %v143
  %v145 = vrot.slane %v140, %v144
  %vm147 = vcmask 130048
  %v149 = vsel %vm147, %v17, 0
  %v152 = vsel %vm147, %v21, 0
  %v155 = vsel %vm147, %v25, 0
  %v158 = vsel %vm147, %v29, 0
  %v161 = vsel %vm147, %v33, 0
  %v164 = vsel %vm147, %v37, 0
  %v167 = vsel %vm147, %v41, 0
  %v170 = vsel %vm147, %v45, 0
  %v173 = vsel %vm147, %v49, 0
  %v176 = vsel %vm147, %v53, 0
  %v179 = vsel %vm147, %v57, 0
  %v182 = vsel %vm147, %v61, 0
  %v185 = vsel %vm147, %v65, 0
  %v188 = vsel %vm147, %v69, 0
  %v191 = vsel %vm147, %v73, 0
  %v194 = vsel %vm147, %v77, 0
  %v197 = vsel %vm147, %v81, 0
  %v200 = vsel %vm147, %v85, 0
  %v203 = vsel %vm147, %v89, 0
  %205 = vmatprep.subr.mxu0 0.0
  %206 = vmatpush1.msra.mxu0 %v90
  %207 = vmatprep.subr.mxu0 0.0
  %208 = vmatpush1.msra.mxu0 %v91
  %209 = vmatprep.subr.mxu0 0.0
  %210 = vmatpush1.msra.mxu0 %v92
  %211 = vmatprep.subr.mxu0 0.0
  %212 = vmatpush1.msra.mxu0 %v93
  %213 = vmatprep.subr.mxu0 0.0
  %214 = vmatpush1.msra.mxu0 %v94
  %215 = vmatprep.subr.mxu0 0.0
  %216 = vmatpush1.msra.mxu0 %v95
  %217 = vmatprep.subr.mxu0 0.0
  %218 = vmatpush1.msra.mxu0 %v96
  %219 = vmatprep.subr.mxu0 0.0
  %220 = vmatpush1.msra.mxu0 %v97
  %221 = vmatprep.subr.mxu0 0.0
  %222 = vmatpush1.msra.mxu0 %v98
  %223 = vmatprep.subr.mxu0 0.0
  %224 = vmatpush1.msra.mxu0 %v99
  %225 = vmatprep.subr.mxu0 0.0
  %226 = vmatpush1.msra.mxu0 %v100
  %227 = vmatprep.subr.mxu0 0.0
  %228 = vmatpush1.msra.mxu0 %v101
  %229 = vmatprep.subr.mxu0 0.0
  %230 = vmatpush1.msra.mxu0 %v102
  %231 = vmatprep.subr.mxu0 0.0
  %232 = vmatpush1.msra.mxu0 %v103
  %233 = vmatprep.subr.mxu0 0.0
  %234 = vmatpush1.msra.mxu0 %v104
  %235 = vmatprep.subr.mxu0 0.0
  %236 = vmatpush1.msra.mxu0 %v105
  %237 = vmatprep.subr.mxu0 0.0
  %238 = vmatpush1.msra.mxu0 %v106
  %239 = vmatprep.subr.mxu0 0.0
  %240 = vmatpush1.msra.mxu0 %v107
  %241 = vmatprep.subr.mxu0 0.0
  %242 = vmatpush1.msra.mxu0 %v108
  %243 = vmatprep.subr.mxu0 0.0
  %244 = vmatpush1.msra.mxu0 %v109
  %245 = vmatprep.subr.mxu0 0.0
  %246 = vmatpush1.msra.mxu0 %v110
  %247 = vmatprep.subr.mxu0 0.0
  %248 = vmatpush1.msra.mxu0 %v111
  %249 = vmatprep.subr.mxu0 0.0
  %250 = vmatpush1.msra.mxu0 %v112
  %251 = vmatprep.subr.mxu0 0.0
  %252 = vmatpush1.msra.mxu0 %v113
  %253 = vmatprep.subr.mxu0 0.0
  %254 = vmatpush1.msra.mxu0 %v114
  %255 = vmatprep.subr.mxu0 0.0
  %256 = vmatpush1.msra.mxu0 %v115
  %257 = vmatprep.subr.mxu0 0.0
  %258 = vmatpush1.msra.mxu0 %v116
  %259 = vmatprep.subr.mxu0 0.0
  %260 = vmatpush1.msra.mxu0 %v117
  %261 = vmatprep.subr.mxu0 0.0
  %262 = vmatpush1.msra.mxu0 %v118
  %263 = vmatprep.subr.mxu0 0.0
  %264 = vmatpush1.msra.mxu0 %v119
  %265 = vmatprep.subr.mxu0 0.0
  %266 = vmatpush1.msra.mxu0 %v120
  %267 = vmatprep.subr.mxu0 0.0
  %268 = vmatpush1.msra.mxu0 %v121
  %269 = vmatprep.mubr.f32.mxu0 %v15
  %270 = vmatmul.mubr.f32.gmra.mrb[0].mxu0 %v14
  %v271 = vpop.f32.mrb[0].mxu0
  %v272 = vadd.f32 %v145, %v271
  %v273 = vpop.f32.mrb[0].mxu0
  %274 = vmatprep.mubr.f32.mxu0 %v19
  %275 = vmatmul.mubr.f32.gmra.mrb[0].mxu0 %v18
  %v276 = vpop.f32.mrb[0].mxu0
  %v277 = vadd.f32 %v145, %v276
  %v278 = vpop.f32.mrb[0].mxu0
  %279 = vmatprep.mubr.f32.mxu0 %v23
  %280 = vmatmul.mubr.f32.gmra.mrb[0].mxu0 %v22
  %v281 = vpop.f32.mrb[0].mxu0
  %v282 = vadd.f32 %v145, %v281
  %v283 = vpop.f32.mrb[0].mxu0
  %284 = vmatprep.mubr.f32.mxu0 %v27
  %285 = vmatmul.mubr.f32.gmra.mrb[0].mxu0 %v26
  %v286 = vpop.f32.mrb[0].mxu0
  %v287 = vadd.f32 %v145, %v286
  %v288 = vpop.f32.mrb[0].mxu0
  %289 = vmatprep.mubr.f32.mxu0 %v31
  %290 = vmatmul.mubr.f32.gmra.mrb[0].mxu0 %v30
  %v291 = vpop.f32.mrb[0].mxu0
  %v292 = vadd.f32 %v145, %v291
  %v293 = vpop.f32.mrb[0].mxu0
  %294 = vmatprep.mubr.f32.mxu0 %v35
  %295 = vmatmul.mubr.f32.gmra.mrb[0].mxu0 %v34
  %v296 = vpop.f32.mrb[0].mxu0
  %v297 = vadd.f32 %v145, %v296
  %v298 = vpop.f32.mrb[0].mxu0
  %299 = vmatprep.mubr.f32.mxu0 %v39
  %300 = vmatmul.mubr.f32.gmra.mrb[0].mxu0 %v38
  %v301 = vpop.f32.mrb[0].mxu0
  %v302 = vadd.f32 %v145, %v301
  %v303 = vpop.f32.mrb[0].mxu0
  %304 = vmatprep.mubr.f32.mxu0 %v43
  %305 = vmatmul.mubr.f32.gmra.mrb[0].mxu0 %v42
  %v306 = vpop.f32.mrb[0].mxu0
  %v307 = vadd.f32 %v145, %v306
  %v308 = vpop.f32.mrb[0].mxu0
  %309 = vmatprep.mubr.f32.mxu0 %v47
  %310 = vmatmul.mubr.f32.gmra.mrb[0].mxu0 %v46
  %v311 = vpop.f32.mrb[0].mxu0
  %v312 = vadd.f32 %v145, %v311
  %v313 = vpop.f32.mrb[0].mxu0
  %314 = vmatprep.mubr.f32.mxu0 %v51
  %315 = vmatmul.mubr.f32.gmra.mrb[0].mxu0 %v50
  %v316 = vpop.f32.mrb[0].mxu0
  %v317 = vadd.f32 %v145, %v316
  %v318 = vpop.f32.mrb[0].mxu0
  %319 = vmatprep.mubr.f32.mxu0 %v55
  %320 = vmatmul.mubr.f32.gmra.mrb[0].mxu0 %v54
  %v321 = vpop.f32.mrb[0].mxu0
  %v322 = vadd.f32 %v145, %v321
  %v323 = vpop.f32.mrb[0].mxu0
  %324 = vmatprep.mubr.f32.mxu0 %v59
  %325 = vmatmul.mubr.f32.gmra.mrb[0].mxu0 %v58
  %v326 = vpop.f32.mrb[0].mxu0
  %v327 = vadd.f32 %v145, %v326
  %v328 = vpop.f32.mrb[0].mxu0
  %329 = vmatprep.mubr.f32.mxu0 %v63
  %330 = vmatmul.mubr.f32.gmra.mrb[0].mxu0 %v62
  %v331 = vpop.f32.mrb[0].mxu0
  %v332 = vadd.f32 %v145, %v331
  %v333 = vpop.f32.mrb[0].mxu0
  %334 = vmatprep.mubr.f32.mxu0 %v67
  %335 = vmatmul.mubr.f32.gmra.mrb[0].mxu0 %v66
  %v336 = vpop.f32.mrb[0].mxu0
  %v337 = vadd.f32 %v145, %v336
  %v338 = vpop.f32.mrb[0].mxu0
  %339 = vmatprep.mubr.f32.mxu0 %v71
  %340 = vmatmul.mubr.f32.gmra.mrb[0].mxu0 %v70
  %v341 = vpop.f32.mrb[0].mxu0
  %v342 = vadd.f32 %v145, %v341
  %v343 = vpop.f32.mrb[0].mxu0
  %344 = vmatprep.mubr.f32.mxu0 %v75
  %345 = vmatmul.mubr.f32.gmra.mrb[0].mxu0 %v74
  %v346 = vpop.f32.mrb[0].mxu0
  %v347 = vadd.f32 %v145, %v346
  %v348 = vpop.f32.mrb[0].mxu0
  %349 = vmatprep.mubr.f32.mxu0 %v79
  %350 = vmatmul.mubr.f32.gmra.mrb[0].mxu0 %v78
  %v351 = vpop.f32.mrb[0].mxu0
  %v352 = vadd.f32 %v145, %v351
  %v353 = vpop.f32.mrb[0].mxu0
  %354 = vmatprep.mubr.f32.mxu0 %v83
  %355 = vmatmul.mubr.f32.gmra.mrb[0].mxu0 %v82
  %v356 = vpop.f32.mrb[0].mxu0
  %v357 = vadd.f32 %v145, %v356
  %v358 = vpop.f32.mrb[0].mxu0
  %359 = vmatprep.mubr.f32.mxu0 %v87
  %360 = vmatmul.mubr.f32.gmra.mrb[0].mxu0 %v86
  %v361 = vpop.f32.mrb[0].mxu0
  %v362 = vadd.f32 %v145, %v361
  %v363 = vpop.f32.mrb[0].mxu0
  %364 = vdwg.mxu0
  %365 = vmatprep.subr.mxu0 0.0
  %366 = vmatpush1.msra.mxu0 %v122
  %367 = vmatprep.subr.mxu0 0.0
  %368 = vmatpush1.msra.mxu0 %v123
  %369 = vmatprep.subr.mxu0 0.0
  %370 = vmatpush1.msra.mxu0 %v124
  %371 = vmatprep.subr.mxu0 0.0
  %372 = vmatpush1.msra.mxu0 %v125
  %373 = vmatprep.subr.mxu0 0.0
  %374 = vmatpush1.msra.mxu0 %v126
  %375 = vmatprep.subr.mxu0 0.0
  %376 = vmatpush1.msra.mxu0 %v127
  %377 = vmatprep.subr.mxu0 0.0
  %378 = vmatpush1.msra.mxu0 %v128
  %379 = vmatprep.subr.mxu0 0.0
  %380 = vmatpush1.msra.mxu0 %v129
  %381 = vmatprep.subr.mxu0 0.0
  %382 = vmatpush1.msra.mxu0 %v130
  %383 = vmatprep.subr.mxu0 0.0
  %384 = vmatpush1.msra.mxu0 %v131
  %385 = vmatprep.subr.mxu0 0.0
  %386 = vmatpush1.msra.mxu0 %v132
  %387 = vmatprep.subr.mxu0 0.0
  %388 = vmatpush1.msra.mxu0 %v133
  %389 = vmatprep.subr.mxu0 0.0
  %390 = vmatpush1.msra.mxu0 %v134
  %391 = vmatprep.subr.mxu0 0.0
  %392 = vmatpush1.msra.mxu0 %v135
  %393 = vmatprep.subr.mxu0 0.0
  %394 = vmatpush1.msra.mxu0 %v136
  %395 = vmatprep.subr.mxu0 0.0
  %396 = vmatpush1.msra.mxu0 %v137
  %397 = vmatprep.subr.mxu0 0.0
  %398 = vmatpush1.msra.mxu0 %v138
  %399 = vmatprep.subr.mxu0 0.0
  %400 = vmatpush1.msra.mxu0 %v139
  %401 = vmatprep.subr.mxu0 0.0
  %402 = vmatpush1.msra.mxu0 0.0
  %403 = vmatprep.subr.mxu0 0.0
  %404 = vmatpush1.msra.mxu0 0.0
  %405 = vmatprep.subr.mxu0 0.0
  %406 = vmatpush1.msra.mxu0 0.0
  %407 = vmatprep.subr.mxu0 0.0
  %408 = vmatpush1.msra.mxu0 0.0
  %409 = vmatprep.subr.mxu0 0.0
  %410 = vmatpush1.msra.mxu0 0.0
  %411 = vmatprep.subr.mxu0 0.0
  %412 = vmatpush1.msra.mxu0 0.0
  %413 = vmatprep.subr.mxu0 0.0
  %414 = vmatpush1.msra.mxu0 0.0
  %415 = vmatprep.subr.mxu0 0.0
  %416 = vmatpush1.msra.mxu0 0.0
  %417 = vmatprep.subr.mxu0 0.0
  %418 = vmatpush1.msra.mxu0 0.0
  %419 = vmatprep.subr.mxu0 0.0
  %420 = vmatpush1.msra.mxu0 0.0
  %421 = vmatprep.subr.mxu0 0.0
  %422 = vmatpush1.msra.mxu0 0.0
  %423 = vmatprep.subr.mxu0 0.0
  %424 = vmatpush1.msra.mxu0 0.0
  %425 = vmatprep.subr.mxu0 0.0
  %426 = vmatpush1.msra.mxu0 0.0
  %427 = vmatprep.subr.mxu0 0.0
  %428 = vmatpush1.msra.mxu0 0.0
  %429 = vmatprep.mubr.f32.mxu0 %v149
  %430 = vmatmul.mubr.f32.gmra.mrb[0].mxu0 %v16
  %v431 = vpop.f32.mrb[0].mxu0
  %v432 = vadd.f32 %v272, %v431
  %v433 = vpop.f32.mrb[0].mxu0
  %434 = vmatprep.mubr.f32.mxu0 %v152
  %435 = vmatmul.mubr.f32.gmra.mrb[0].mxu0 %v20
  %v436 = vpop.f32.mrb[0].mxu0
  %v437 = vadd.f32 %v277, %v436
  %v438 = vpop.f32.mrb[0].mxu0
  %439 = vmatprep.mubr.f32.mxu0 %v155
  %440 = vmatmul.mubr.f32.gmra.mrb[0].mxu0 %v24
  %v441 = vpop.f32.mrb[0].mxu0
  %v442 = vadd.f32 %v282, %v441
  %v443 = vpop.f32.mrb[0].mxu0
  %444 = vmatprep.mubr.f32.mxu0 %v158
  %445 = vmatmul.mubr.f32.gmra.mrb[0].mxu0 %v28
  %v446 = vpop.f32.mrb[0].mxu0
  %v447 = vadd.f32 %v287, %v446
  %v448 = vpop.f32.mrb[0].mxu0
  %449 = vmatprep.mubr.f32.mxu0 %v161
  %450 = vmatmul.mubr.f32.gmra.mrb[0].mxu0 %v32
  %v451 = vpop.f32.mrb[0].mxu0
  %v452 = vadd.f32 %v292, %v451
  %v453 = vpop.f32.mrb[0].mxu0
  %454 = vmatprep.mubr.f32.mxu0 %v164
  %455 = vmatmul.mubr.f32.gmra.mrb[0].mxu0 %v36
  %v456 = vpop.f32.mrb[0].mxu0
  %v457 = vadd.f32 %v297, %v456
  %v458 = vpop.f32.mrb[0].mxu0
  %459 = vmatprep.mubr.f32.mxu0 %v167
  %460 = vmatmul.mubr.f32.gmra.mrb[0].mxu0 %v40
  %v461 = vpop.f32.mrb[0].mxu0
  %v462 = vadd.f32 %v302, %v461
  %v463 = vpop.f32.mrb[0].mxu0
  %464 = vmatprep.mubr.f32.mxu0 %v170
  %465 = vmatmul.mubr.f32.gmra.mrb[0].mxu0 %v44
  %v466 = vpop.f32.mrb[0].mxu0
  %v467 = vadd.f32 %v307, %v466
  %v468 = vpop.f32.mrb[0].mxu0
  %469 = vmatprep.mubr.f32.mxu0 %v173
  %470 = vmatmul.mubr.f32.gmra.mrb[0].mxu0 %v48
  %v471 = vpop.f32.mrb[0].mxu0
  %v472 = vadd.f32 %v312, %v471
  %v473 = vpop.f32.mrb[0].mxu0
  %474 = vmatprep.mubr.f32.mxu0 %v176
  %475 = vmatmul.mubr.f32.gmra.mrb[0].mxu0 %v52
  %v476 = vpop.f32.mrb[0].mxu0
  %v477 = vadd.f32 %v317, %v476
  %v478 = vpop.f32.mrb[0].mxu0
  %479 = vmatprep.mubr.f32.mxu0 %v179
  %480 = vmatmul.mubr.f32.gmra.mrb[0].mxu0 %v56
  %v481 = vpop.f32.mrb[0].mxu0
  %v482 = vadd.f32 %v322, %v481
  %v483 = vpop.f32.mrb[0].mxu0
  %484 = vmatprep.mubr.f32.mxu0 %v182
  %485 = vmatmul.mubr.f32.gmra.mrb[0].mxu0 %v60
  %v486 = vpop.f32.mrb[0].mxu0
  %v487 = vadd.f32 %v327, %v486
  %v488 = vpop.f32.mrb[0].mxu0
  %489 = vmatprep.mubr.f32.mxu0 %v185
  %490 = vmatmul.mubr.f32.gmra.mrb[0].mxu0 %v64
  %v491 = vpop.f32.mrb[0].mxu0
  %v492 = vadd.f32 %v332, %v491
  %v493 = vpop.f32.mrb[0].mxu0
  %494 = vmatprep.mubr.f32.mxu0 %v188
  %495 = vmatmul.mubr.f32.gmra.mrb[0].mxu0 %v68
  %v496 = vpop.f32.mrb[0].mxu0
  %v497 = vadd.f32 %v337, %v496
  %v498 = vpop.f32.mrb[0].mxu0
  %499 = vmatprep.mubr.f32.mxu0 %v191
  %500 = vmatmul.mubr.f32.gmra.mrb[0].mxu0 %v72
  %v501 = vpop.f32.mrb[0].mxu0
  %v502 = vadd.f32 %v342, %v501
  %v503 = vpop.f32.mrb[0].mxu0
  %504 = vmatprep.mubr.f32.mxu0 %v194
  %505 = vmatmul.mubr.f32.gmra.mrb[0].mxu0 %v76
  %v506 = vpop.f32.mrb[0].mxu0
  %v507 = vadd.f32 %v347, %v506
  %v508 = vpop.f32.mrb[0].mxu0
  %509 = vmatprep.mubr.f32.mxu0 %v197
  %510 = vmatmul.mubr.f32.gmra.mrb[0].mxu0 %v80
  %v511 = vpop.f32.mrb[0].mxu0
  %v512 = vadd.f32 %v352, %v511
  %v513 = vpop.f32.mrb[0].mxu0
  %514 = vmatprep.mubr.f32.mxu0 %v200
  %515 = vmatmul.mubr.f32.gmra.mrb[0].mxu0 %v84
  %v516 = vpop.f32.mrb[0].mxu0
  %v517 = vadd.f32 %v357, %v516
  %v518 = vpop.f32.mrb[0].mxu0
  %519 = vmatprep.mubr.f32.mxu0 %v203
  %520 = vmatmul.mubr.f32.gmra.mrb[0].mxu0 %v88
  %v521 = vpop.f32.mrb[0].mxu0
  %v522 = vadd.f32 %v362, %v521
  %v523 = vpop.f32.mrb[0].mxu0
  %524 = vdwg.mxu0
  %v525 = vmul.f32 %v432, 0.5
  %v526 = vmul.f32 %v437, 0.5
  %v527 = vmul.f32 %v442, 0.5
  %v528 = vmul.f32 %v447, 0.5
  %v529 = vmul.f32 %v452, 0.5
  %v530 = vmul.f32 %v457, 0.5
  %v531 = vmul.f32 %v462, 0.5
  %v532 = vmul.f32 %v467, 0.5
  %v533 = vmul.f32 %v472, 0.5
  %v534 = vmul.f32 %v477, 0.5
  %v535 = vmul.f32 %v482, 0.5
  %v536 = vmul.f32 %v487, 0.5
  %v537 = vmul.f32 %v492, 0.5
  %v538 = vmul.f32 %v497, 0.5
  %v539 = vmul.f32 %v502, 0.5
  %v540 = vmul.f32 %v507, 0.5
  %v541 = vmul.f32 %v512, 0.5
  %v542 = vmul.f32 %v517, 0.5
  %v543 = vmul.f32 %v522, 0.5
  %v544 = vmul.f32 %v432, 0.044715
  %v545 = vmul.f32 %v437, 0.044715
  %v546 = vmul.f32 %v442, 0.044715
  %v547 = vmul.f32 %v447, 0.044715
  %v548 = vmul.f32 %v452, 0.044715
  %v549 = vmul.f32 %v457, 0.044715
  %v550 = vmul.f32 %v462, 0.044715
  %v551 = vmul.f32 %v467, 0.044715
  %v552 = vmul.f32 %v472, 0.044715
  %v553 = vmul.f32 %v477, 0.044715
  %v554 = vmul.f32 %v482, 0.044715
  %v555 = vmul.f32 %v487, 0.044715
  %v556 = vmul.f32 %v492, 0.044715
  %v557 = vmul.f32 %v497, 0.044715
  %v558 = vmul.f32 %v502, 0.044715
  %v559 = vmul.f32 %v507, 0.044715
  %v560 = vmul.f32 %v512, 0.044715
  %v561 = vmul.f32 %v517, 0.044715
  %v562 = vmul.f32 %v522, 0.044715
  %v563 = vmul.f32 %v544, %v432
  %v564 = vmul.f32 %v545, %v437
  %v565 = vmul.f32 %v546, %v442
  %v566 = vmul.f32 %v547, %v447
  %v567 = vmul.f32 %v548, %v452
  %v568 = vmul.f32 %v549, %v457
  %v569 = vmul.f32 %v550, %v462
  %v570 = vmul.f32 %v551, %v467
  %v571 = vmul.f32 %v552, %v472
  %v572 = vmul.f32 %v553, %v477
  %v573 = vmul.f32 %v554, %v482
  %v574 = vmul.f32 %v555, %v487
  %v575 = vmul.f32 %v556, %v492
  %v576 = vmul.f32 %v557, %v497
  %v577 = vmul.f32 %v558, %v502
  %v578 = vmul.f32 %v559, %v507
  %v579 = vmul.f32 %v560, %v512
  %v580 = vmul.f32 %v561, %v517
  %v581 = vmul.f32 %v562, %v522
  %v582 = vmul.f32 %v563, %v432
  %v583 = vmul.f32 %v564, %v437
  %v584 = vmul.f32 %v565, %v442
  %v585 = vmul.f32 %v566, %v447
  %v586 = vmul.f32 %v567, %v452
  %v587 = vmul.f32 %v568, %v457
  %v588 = vmul.f32 %v569, %v462
  %v589 = vmul.f32 %v570, %v467
  %v590 = vmul.f32 %v571, %v472
  %v591 = vmul.f32 %v572, %v477
  %v592 = vmul.f32 %v573, %v482
  %v593 = vmul.f32 %v574, %v487
  %v594 = vmul.f32 %v575, %v492
  %v595 = vmul.f32 %v576, %v497
  %v596 = vmul.f32 %v577, %v502
  %v597 = vmul.f32 %v578, %v507
  %v598 = vmul.f32 %v579, %v512
  %v599 = vmul.f32 %v580, %v517
  %v600 = vmul.f32 %v581, %v522
  %v601 = vadd.f32 %v432, %v582
  %v602 = vadd.f32 %v437, %v583
  %v603 = vadd.f32 %v442, %v584
  %v604 = vadd.f32 %v447, %v585
  %v605 = vadd.f32 %v452, %v586
  %v606 = vadd.f32 %v457, %v587
  %v607 = vadd.f32 %v462, %v588
  %v608 = vadd.f32 %v467, %v589
  %v609 = vadd.f32 %v472, %v590
  %v610 = vadd.f32 %v477, %v591
  %v611 = vadd.f32 %v482, %v592
  %v612 = vadd.f32 %v487, %v593
  %v613 = vadd.f32 %v492, %v594
  %v614 = vadd.f32 %v497, %v595
  %v615 = vadd.f32 %v502, %v596
  %v616 = vadd.f32 %v507, %v597
  %v617 = vadd.f32 %v512, %v598
  %v618 = vadd.f32 %v517, %v599
  %v619 = vadd.f32 %v522, %v600
  %v620 = vmul.f32 %v601, 0.7978846
  %v621 = vmul.f32 %v602, 0.7978846
  %v622 = vmul.f32 %v603, 0.7978846
  %v623 = vmul.f32 %v604, 0.7978846
  %v624 = vmul.f32 %v605, 0.7978846
  %v625 = vmul.f32 %v606, 0.7978846
  %v626 = vmul.f32 %v607, 0.7978846
  %v627 = vmul.f32 %v608, 0.7978846
  %v628 = vmul.f32 %v609, 0.7978846
  %v629 = vmul.f32 %v610, 0.7978846
  %v630 = vmul.f32 %v611, 0.7978846
  %v631 = vmul.f32 %v612, 0.7978846
  %v632 = vmul.f32 %v613, 0.7978846
  %v633 = vmul.f32 %v614, 0.7978846
  %v634 = vmul.f32 %v615, 0.7978846
  %v635 = vmul.f32 %v616, 0.7978846
  %v636 = vmul.f32 %v617, 0.7978846
  %v637 = vmul.f32 %v618, 0.7978846
  %v638 = vmul.f32 %v619, 0.7978846
  %v639 = vtanh.pop %v620
  %v640 = vtanh.pop %v621
  %v641 = vtanh.pop %v622
  %v642 = vtanh.pop %v623
  %v643 = vtanh.pop %v624
  %v644 = vtanh.pop %v625
  %v645 = vtanh.pop %v626
  %v646 = vtanh.pop %v627
  %v647 = vtanh.pop %v628
  %v648 = vtanh.pop %v629
  %v649 = vtanh.pop %v630
  %v650 = vtanh.pop %v631
  %v651 = vtanh.pop %v632
  %v652 = vtanh.pop %v633
  %v653 = vtanh.pop %v634
  %v654 = vtanh.pop %v635
  %v655 = vtanh.pop %v636
  %v656 = vtanh.pop %v637
  %v657 = vtanh.pop %v638
  %v658 = vadd.f32 %v639, 1.0
  %v659 = vadd.f32 %v640, 1.0
  %v660 = vadd.f32 %v641, 1.0
  %v661 = vadd.f32 %v642, 1.0
  %v662 = vadd.f32 %v643, 1.0
  %v663 = vadd.f32 %v644, 1.0
  %v664 = vadd.f32 %v645, 1.0
  %v665 = vadd.f32 %v646, 1.0
  %v666 = vadd.f32 %v647, 1.0
  %v667 = vadd.f32 %v648, 1.0
  %v668 = vadd.f32 %v649, 1.0
  %v669 = vadd.f32 %v650, 1.0
  %v670 = vadd.f32 %v651, 1.0
  %v671 = vadd.f32 %v652, 1.0
  %v672 = vadd.f32 %v653, 1.0
  %v673 = vadd.f32 %v654, 1.0
  %v674 = vadd.f32 %v655, 1.0
  %v675 = vadd.f32 %v656, 1.0
  %v676 = vadd.f32 %v657, 1.0
  %v677 = vmul.f32 %v525, %v658
  %v678 = vmul.f32 %v526, %v659
  %v679 = vmul.f32 %v527, %v660
  %v680 = vmul.f32 %v528, %v661
  %v681 = vmul.f32 %v529, %v662
  %v682 = vmul.f32 %v530, %v663
  %v683 = vmul.f32 %v531, %v664
  %v684 = vmul.f32 %v532, %v665
  %v685 = vmul.f32 %v533, %v666
  %v686 = vmul.f32 %v534, %v667
  %v687 = vmul.f32 %v535, %v668
  %v688 = vmul.f32 %v536, %v669
  %v689 = vmul.f32 %v537, %v670
  %v690 = vmul.f32 %v538, %v671
  %v691 = vmul.f32 %v539, %v672
  %v692 = vmul.f32 %v540, %v673
  %v693 = vmul.f32 %v541, %v674
  %v694 = vmul.f32 %v542, %v675
  %v695 = vmul.f32 %v543, %v676
  %vm696 = vcmask 523264
  %697 = vst.msk [vmem:[%s3] sm:$0xff] %vm696, %v677
  %698 = vst.msk [vmem:[%s3 + $0x8] sm:$0xff] %vm696, %v678
  %699 = vst.msk [vmem:[%s3 + $0x10] sm:$0xff] %vm696, %v679
  %700 = vst.msk [vmem:[%s3 + $0x18] sm:$0xff] %vm696, %v680
  %701 = vst.msk [vmem:[%s3 + $0x20] sm:$0xff] %vm696, %v681
  %702 = vst.msk [vmem:[%s3 + $0x28] sm:$0xff] %vm696, %v682
  %703 = vst.msk [vmem:[%s3 + $0x30] sm:$0xff] %vm696, %v683
  %704 = vst.msk [vmem:[%s3 + $0x38] sm:$0xff] %vm696, %v684
  %705 = vst.msk [vmem:[%s3 + $0x40] sm:$0xff] %vm696, %v685
  %706 = vst.msk [vmem:[%s3 + $0x48] sm:$0xff] %vm696, %v686
  %707 = vst.msk [vmem:[%s3 + $0x50] sm:$0xff] %vm696, %v687
  %708 = vst.msk [vmem:[%s3 + $0x58] sm:$0xff] %vm696, %v688
  %709 = vst.msk [vmem:[%s3 + $0x60] sm:$0xff] %vm696, %v689
  %710 = vst.msk [vmem:[%s3 + $0x68] sm:$0xff] %vm696, %v690
  %711 = vst.msk [vmem:[%s3 + $0x70] sm:$0xff] %vm696, %v691
  %712 = vst.msk [vmem:[%s3 + $0x78] sm:$0xff] %vm696, %v692
  %713 = vst.msk [vmem:[%s3 + $0x80] sm:$0xff] %vm696, %v693
  %714 = vst.msk [vmem:[%s3 + $0x88] sm:$0xff] %vm696, %v694
  %715 = vst.msk [vmem:[%s3 + $0x90] sm:$0xff] %vm696, %v695
  // Predicated region
  $region14: #{mrcnn_shhs_forward.10} parent=0 // pred_check
    _
  $region15: #{mrcnn_shhs_forward.10} parent=0 // pred_check_branch
    %717 = sbr.rel (0) target = $region17
  $region16: #{mrcnn_shhs_forward.10} parent=0 // pred_region
    _
  $region17: #{mrcnn_shhs_forward.10} parent=0 // pred_fallthru
    _
  // Predicated region
  $region18: #{mrcnn_shhs_forward.10} parent=0 // pred_check
    _
  $region19: #{mrcnn_shhs_forward.10} parent=0 // pred_check_branch
    %719 = sbr.rel (0) target = $region21
  $region20: #{mrcnn_shhs_forward.10} parent=0 // pred_region
    _
  $region21: #{mrcnn_shhs_forward.10} parent=0 // pred_fallthru
    _

// kernel: mrcnn_shhs_forward.11
$region0: #{mrcnn_shhs_forward.11}
  #allocation0 [shape = 'u32[]', space=smem, size = 0x4, offset = 0x4, fixed_abs, tag = 'smem constant byte address 0x4 - core index']
  #allocation1 [shape = 'u32[144,128]{1,0:T(1,128)}', space=vmem, size = 0x12000, scoped, tag = 'internal scratch']
  %s0 = inlined_call_operand.vmem [shape: f32[80,384], index: 0, kind: input, shape index: {}]
  %s1 = inlined_call_operand.vmem [shape: f32[384,128], index: 1, kind: input, shape index: {}]
  %s2 = inlined_call_operand.vmem [shape: f32[1,128], index: 2, kind: input, shape index: {}]
  %s3 = inlined_call_operand.vmem [shape: f32[80,128], index: 3, kind: output, shape index: {}]
  %s4 = sld [smem:[#allocation0]]
  $region22: #{mrcnn_shhs_forward.11} parent=0
    _
  %s6 = ssub.s32 1, %s4
  %s7 = scalar_select 0, %s6, %s4
  // Predicated region
  $region2: #{mrcnn_shhs_forward.11} parent=0 // pred_check
    _
  $region3: #{mrcnn_shhs_forward.11} parent=0 // pred_check_branch
    %9 = sbr.rel (0) target = $region5
  $region4: #{mrcnn_shhs_forward.11} parent=0 // pred_region
    _
  $region5: #{mrcnn_shhs_forward.11} parent=0 // pred_fallthru
    _
  // Predicated region
  $region6: #{mrcnn_shhs_forward.11} parent=0 // pred_check
    _
  $region7: #{mrcnn_shhs_forward.11} parent=0 // pred_check_branch
    %11 = sbr.rel (0) target = $region9
  $region8: #{mrcnn_shhs_forward.11} parent=0 // pred_region
    _
  $region9: #{mrcnn_shhs_forward.11} parent=0 // pred_fallthru
    _
  // Predicated region
  $region10: #{mrcnn_shhs_forward.11} parent=0 // pred_check
    _
  $region11: #{mrcnn_shhs_forward.11} parent=0 // pred_check_branch
    %13 = sbr.rel (0) target = $region13
  $region12: #{mrcnn_shhs_forward.11} parent=0 // pred_region
    _
  $region13: #{mrcnn_shhs_forward.11} parent=0 // pred_fallthru
    _
  %v14 = vld [vmem:[%s0] sm:$0xff]
  %v15 = vld [vmem:[%s0 + $0x8] sm:$0xff]
  %v16 = vld [vmem:[%s0 + $0x10] sm:$0xff]
  %v17 = vld [vmem:[%s0 + $0x18] sm:$0xff]
  %v18 = vld [vmem:[%s0 + $0x20] sm:$0xff]
  %v19 = vld [vmem:[%s0 + $0x28] sm:$0xff]
  %v20 = vld [vmem:[%s0 + $0x30] sm:$0xff]
  %v21 = vld [vmem:[%s0 + $0x38] sm:$0xff]
  %v22 = vld [vmem:[%s0 + $0x40] sm:$0xff]
  %v23 = vld [vmem:[%s0 + $0x48] sm:$0xff]
  %v24 = vld [vmem:[%s0 + $0x50] sm:$0xff]
  %v25 = vld [vmem:[%s0 + $0x58] sm:$0xff]
  %v26 = vld [vmem:[%s0 + $0x60] sm:$0xff]
  %v27 = vld [vmem:[%s0 + $0x68] sm:$0xff]
  %v28 = vld [vmem:[%s0 + $0x70] sm:$0xff]
  %v29 = vld [vmem:[%s0 + $0x78] sm:$0xff]
  %v30 = vld [vmem:[%s0 + $0x80] sm:$0xff]
  %v31 = vld [vmem:[%s0 + $0x88] sm:$0xff]
  %v32 = vld [vmem:[%s0 + $0x90] sm:$0xff]
  %v33 = vld [vmem:[%s0 + $0x98] sm:$0xff]
  %v34 = vld [vmem:[%s0 + $0xa0] sm:$0xff]
  %v35 = vld [vmem:[%s0 + $0xa8] sm:$0xff]
  %v36 = vld [vmem:[%s0 + $0xb0] sm:$0xff]
  %v37 = vld [vmem:[%s0 + $0xb8] sm:$0xff]
  %v38 = vld [vmem:[%s0 + $0xc0] sm:$0xff]
  %v39 = vld [vmem:[%s0 + $0xc8] sm:$0xff]
  %v40 = vld [vmem:[%s0 + $0xd0] sm:$0xff]
  %v41 = vld [vmem:[%s0 + $0xd8] sm:$0xff]
  %v42 = vld [vmem:[%s0 + $0xe0] sm:$0xff]
  %v43 = vld [vmem:[%s0 + $0xe8] sm:$0xff]
  %v44 = vld [vmem:[%s1] sm:$0xff]
  %v45 = vld [vmem:[%s1 + $0x8] sm:$0xff]
  %v46 = vld [vmem:[%s1 + $0x10] sm:$0xff]
  %v47 = vld [vmem:[%s1 + $0x18] sm:$0xff]
  %v48 = vld [vmem:[%s1 + $0x20] sm:$0xff]
  %v49 = vld [vmem:[%s1 + $0x28] sm:$0xff]
  %v50 = vld [vmem:[%s1 + $0x30] sm:$0xff]
  %v51 = vld [vmem:[%s1 + $0x38] sm:$0xff]
  %v52 = vld [vmem:[%s1 + $0x40] sm:$0xff]
  %v53 = vld [vmem:[%s1 + $0x48] sm:$0xff]
  %v54 = vld [vmem:[%s1 + $0x50] sm:$0xff]
  %v55 = vld [vmem:[%s1 + $0x58] sm:$0xff]
  %v56 = vld [vmem:[%s1 + $0x60] sm:$0xff]
  %v57 = vld [vmem:[%s1 + $0x68] sm:$0xff]
  %v58 = vld [vmem:[%s1 + $0x70] sm:$0xff]
  %v59 = vld [vmem:[%s1 + $0x78] sm:$0xff]
  %v60 = vld [vmem:[%s1 + $0x80] sm:$0xff]
  %v61 = vld [vmem:[%s1 + $0x88] sm:$0xff]
  %v62 = vld [vmem:[%s1 + $0x90] sm:$0xff]
  %v63 = vld [vmem:[%s1 + $0x98] sm:$0xff]
  %v64 = vld [vmem:[%s1 + $0xa0] sm:$0xff]
  %v65 = vld [vmem:[%s1 + $0xa8] sm:$0xff]
  %v66 = vld [vmem:[%s1 + $0xb0] sm:$0xff]
  %v67 = vld [vmem:[%s1 + $0xb8] sm:$0xff]
  %v68 = vld [vmem:[%s1 + $0xc0] sm:$0xff]
  %v69 = vld [vmem:[%s1 + $0xc8] sm:$0xff]
  %v70 = vld [vmem:[%s1 + $0xd0] sm:$0xff]
  %v71 = vld [vmem:[%s1 + $0xd8] sm:$0xff]
  %v72 = vld [vmem:[%s1 + $0xe0] sm:$0xff]
  %v73 = vld [vmem:[%s1 + $0xe8] sm:$0xff]
  %v74 = vld [vmem:[%s1 + $0xf0] sm:$0xff]
  %v75 = vld [vmem:[%s1 + $0xf8] sm:$0xff]
  %v76 = vld [vmem:[%s1 + $0x100] sm:$0xff]
  %v77 = vld [vmem:[%s1 + $0x108] sm:$0xff]
  %v78 = vld [vmem:[%s1 + $0x110] sm:$0xff]
  %v79 = vld [vmem:[%s1 + $0x118] sm:$0xff]
  %v80 = vld [vmem:[%s1 + $0x120] sm:$0xff]
  %v81 = vld [vmem:[%s1 + $0x128] sm:$0xff]
  %v82 = vld [vmem:[%s1 + $0x130] sm:$0xff]
  %v83 = vld [vmem:[%s1 + $0x138] sm:$0xff]
  %v84 = vld [vmem:[%s1 + $0x140] sm:$0xff]
  %v85 = vld [vmem:[%s1 + $0x148] sm:$0xff]
  %v86 = vld [vmem:[%s1 + $0x150] sm:$0xff]
  %v87 = vld [vmem:[%s1 + $0x158] sm:$0xff]
  %v88 = vld [vmem:[%s1 + $0x160] sm:$0xff]
  %v89 = vld [vmem:[%s1 + $0x168] sm:$0xff]
  %v90 = vld [vmem:[%s1 + $0x170] sm:$0xff]
  %v91 = vld [vmem:[%s1 + $0x178] sm:$0xff]
  %v92 = vld [vmem:[%s2] sm:$0x1]
  %v94 = vlaneseq
  %v95 = vshrl.u32 %v94, 7
  %v96 = vsub.s32 0, %v95
  %v97 = vrot.slane %v92, %v96
  %99 = vmatprep.subr.mxu0 0.0
  %100 = vmatpush1.msra.mxu0 %v44
  %101 = vmatprep.subr.mxu0 0.0
  %102 = vmatpush1.msra.mxu0 %v45
  %103 = vmatprep.subr.mxu0 0.0
  %104 = vmatpush1.msra.mxu0 %v46
  %105 = vmatprep.subr.mxu0 0.0
  %106 = vmatpush1.msra.mxu0 %v47
  %107 = vmatprep.subr.mxu0 0.0
  %108 = vmatpush1.msra.mxu0 %v48
  %109 = vmatprep.subr.mxu0 0.0
  %110 = vmatpush1.msra.mxu0 %v49
  %111 = vmatprep.subr.mxu0 0.0
  %112 = vmatpush1.msra.mxu0 %v50
  %113 = vmatprep.subr.mxu0 0.0
  %114 = vmatpush1.msra.mxu0 %v51
  %115 = vmatprep.subr.mxu0 0.0
  %116 = vmatpush1.msra.mxu0 %v52
  %117 = vmatprep.subr.mxu0 0.0
  %118 = vmatpush1.msra.mxu0 %v53
  %119 = vmatprep.subr.mxu0 0.0
  %120 = vmatpush1.msra.mxu0 %v54
  %121 = vmatprep.subr.mxu0 0.0
  %122 = vmatpush1.msra.mxu0 %v55
  %123 = vmatprep.subr.mxu0 0.0
  %124 = vmatpush1.msra.mxu0 %v56
  %125 = vmatprep.subr.mxu0 0.0
  %126 = vmatpush1.msra.mxu0 %v57
  %127 = vmatprep.subr.mxu0 0.0
  %128 = vmatpush1.msra.mxu0 %v58
  %129 = vmatprep.subr.mxu0 0.0
  %130 = vmatpush1.msra.mxu0 %v59
  %131 = vmatprep.subr.mxu0 0.0
  %132 = vmatpush1.msra.mxu0 %v60
  %133 = vmatprep.subr.mxu0 0.0
  %134 = vmatpush1.msra.mxu0 %v61
  %135 = vmatprep.subr.mxu0 0.0
  %136 = vmatpush1.msra.mxu0 %v62
  %137 = vmatprep.subr.mxu0 0.0
  %138 = vmatpush1.msra.mxu0 %v63
  %139 = vmatprep.subr.mxu0 0.0
  %140 = vmatpush1.msra.mxu0 %v64
  %141 = vmatprep.subr.mxu0 0.0
  %142 = vmatpush1.msra.mxu0 %v65
  %143 = vmatprep.subr.mxu0 0.0
  %144 = vmatpush1.msra.mxu0 %v66
  %145 = vmatprep.subr.mxu0 0.0
  %146 = vmatpush1.msra.mxu0 %v67
  %147 = vmatprep.subr.mxu0 0.0
  %148 = vmatpush1.msra.mxu0 %v68
  %149 = vmatprep.subr.mxu0 0.0
  %150 = vmatpush1.msra.mxu0 %v69
  %151 = vmatprep.subr.mxu0 0.0
  %152 = vmatpush1.msra.mxu0 %v70
  %153 = vmatprep.subr.mxu0 0.0
  %154 = vmatpush1.msra.mxu0 %v71
  %155 = vmatprep.subr.mxu0 0.0
  %156 = vmatpush1.msra.mxu0 %v72
  %157 = vmatprep.subr.mxu0 0.0
  %158 = vmatpush1.msra.mxu0 %v73
  %159 = vmatprep.subr.mxu0 0.0
  %160 = vmatpush1.msra.mxu0 %v74
  %161 = vmatprep.subr.mxu0 0.0
  %162 = vmatpush1.msra.mxu0 %v75
  %163 = vmatprep.mubr.f32.mxu0 %v15
  %164 = vmatmul.mubr.f32.gmra.mrb[0].mxu0 %v14
  %v165 = vpop.f32.mrb[0].mxu0
  %v166 = vadd.f32 %v97, %v165
  %v167 = vpop.f32.mrb[0].mxu0
  %168 = vmatprep.mubr.f32.mxu0 %v18
  %169 = vmatmul.mubr.f32.gmra.mrb[0].mxu0 %v17
  %v170 = vpop.f32.mrb[0].mxu0
  %v171 = vadd.f32 %v97, %v170
  %v172 = vpop.f32.mrb[0].mxu0
  %173 = vmatprep.mubr.f32.mxu0 %v21
  %174 = vmatmul.mubr.f32.gmra.mrb[0].mxu0 %v20
  %v175 = vpop.f32.mrb[0].mxu0
  %v176 = vadd.f32 %v97, %v175
  %v177 = vpop.f32.mrb[0].mxu0
  %178 = vmatprep.mubr.f32.mxu0 %v24
  %179 = vmatmul.mubr.f32.gmra.mrb[0].mxu0 %v23
  %v180 = vpop.f32.mrb[0].mxu0
  %v181 = vadd.f32 %v97, %v180
  %v182 = vpop.f32.mrb[0].mxu0
  %183 = vmatprep.mubr.f32.mxu0 %v27
  %184 = vmatmul.mubr.f32.gmra.mrb[0].mxu0 %v26
  %v185 = vpop.f32.mrb[0].mxu0
  %v186 = vadd.f32 %v97, %v185
  %v187 = vpop.f32.mrb[0].mxu0
  %188 = vmatprep.mubr.f32.mxu0 %v30
  %189 = vmatmul.mubr.f32.gmra.mrb[0].mxu0 %v29
  %v190 = vpop.f32.mrb[0].mxu0
  %v191 = vadd.f32 %v97, %v190
  %v192 = vpop.f32.mrb[0].mxu0
  %193 = vmatprep.mubr.f32.mxu0 %v33
  %194 = vmatmul.mubr.f32.gmra.mrb[0].mxu0 %v32
  %v195 = vpop.f32.mrb[0].mxu0
  %v196 = vadd.f32 %v97, %v195
  %v197 = vpop.f32.mrb[0].mxu0
  %198 = vmatprep.mubr.f32.mxu0 %v36
  %199 = vmatmul.mubr.f32.gmra.mrb[0].mxu0 %v35
  %v200 = vpop.f32.mrb[0].mxu0
  %v201 = vadd.f32 %v97, %v200
  %v202 = vpop.f32.mrb[0].mxu0
  %203 = vmatprep.mubr.f32.mxu0 %v39
  %204 = vmatmul.mubr.f32.gmra.mrb[0].mxu0 %v38
  %v205 = vpop.f32.mrb[0].mxu0
  %v206 = vadd.f32 %v97, %v205
  %v207 = vpop.f32.mrb[0].mxu0
  %208 = vmatprep.mubr.f32.mxu0 %v42
  %209 = vmatmul.mubr.f32.gmra.mrb[0].mxu0 %v41
  %v210 = vpop.f32.mrb[0].mxu0
  %v211 = vadd.f32 %v97, %v210
  %v212 = vpop.f32.mrb[0].mxu0
  %213 = vdwg.mxu0
  %214 = vmatprep.subr.mxu0 0.0
  %215 = vmatpush1.msra.mxu0 %v76
  %216 = vmatprep.subr.mxu0 0.0
  %217 = vmatpush1.msra.mxu0 %v77
  %218 = vmatprep.subr.mxu0 0.0
  %219 = vmatpush1.msra.mxu0 %v78
  %220 = vmatprep.subr.mxu0 0.0
  %221 = vmatpush1.msra.mxu0 %v79
  %222 = vmatprep.subr.mxu0 0.0
  %223 = vmatpush1.msra.mxu0 %v80
  %224 = vmatprep.subr.mxu0 0.0
  %225 = vmatpush1.msra.mxu0 %v81
  %226 = vmatprep.subr.mxu0 0.0
  %227 = vmatpush1.msra.mxu0 %v82
  %228 = vmatprep.subr.mxu0 0.0
  %229 = vmatpush1.msra.mxu0 %v83
  %230 = vmatprep.subr.mxu0 0.0
  %231 = vmatpush1.msra.mxu0 %v84
  %232 = vmatprep.subr.mxu0 0.0
  %233 = vmatpush1.msra.mxu0 %v85
  %234 = vmatprep.subr.mxu0 0.0
  %235 = vmatpush1.msra.mxu0 %v86
  %236 = vmatprep.subr.mxu0 0.0
  %237 = vmatpush1.msra.mxu0 %v87
  %238 = vmatprep.subr.mxu0 0.0
  %239 = vmatpush1.msra.mxu0 %v88
  %240 = vmatprep.subr.mxu0 0.0
  %241 = vmatpush1.msra.mxu0 %v89
  %242 = vmatprep.subr.mxu0 0.0
  %243 = vmatpush1.msra.mxu0 %v90
  %244 = vmatprep.subr.mxu0 0.0
  %245 = vmatpush1.msra.mxu0 %v91
  %246 = vmatprep.subr.mxu0 0.0
  %247 = vmatpush1.msra.mxu0 0.0
  %248 = vmatprep.subr.mxu0 0.0
  %249 = vmatpush1.msra.mxu0 0.0
  %250 = vmatprep.subr.mxu0 0.0
  %251 = vmatpush1.msra.mxu0 0.0
  %252 = vmatprep.subr.mxu0 0.0
  %253 = vmatpush1.msra.mxu0 0.0
  %254 = vmatprep.subr.mxu0 0.0
  %255 = vmatpush1.msra.mxu0 0.0
  %256 = vmatprep.subr.mxu0 0.0
  %257 = vmatpush1.msra.mxu0 0.0
  %258 = vmatprep.subr.mxu0 0.0
  %259 = vmatpush1.msra.mxu0 0.0
  %260 = vmatprep.subr.mxu0 0.0
  %261 = vmatpush1.msra.mxu0 0.0
  %262 = vmatprep.subr.mxu0 0.0
  %263 = vmatpush1.msra.mxu0 0.0
  %264 = vmatprep.subr.mxu0 0.0
  %265 = vmatpush1.msra.mxu0 0.0
  %266 = vmatprep.subr.mxu0 0.0
  %267 = vmatpush1.msra.mxu0 0.0
  %268 = vmatprep.subr.mxu0 0.0
  %269 = vmatpush1.msra.mxu0 0.0
  %270 = vmatprep.subr.mxu0 0.0
  %271 = vmatpush1.msra.mxu0 0.0
  %272 = vmatprep.subr.mxu0 0.0
  %273 = vmatpush1.msra.mxu0 0.0
  %274 = vmatprep.subr.mxu0 0.0
  %275 = vmatpush1.msra.mxu0 0.0
  %276 = vmatprep.subr.mxu0 0.0
  %277 = vmatpush1.msra.mxu0 0.0
  %278 = vmatprep.mubr.f32.mxu0 0.0
  %279 = vmatmul.mubr.f32.gmra.mrb[0].mxu0 %v16
  %v280 = vpop.f32.mrb[0].mxu0
  %v281 = vadd.f32 %v166, %v280
  %v282 = vpop.f32.mrb[0].mxu0
  %283 = vmatprep.mubr.f32.mxu0 0.0
  %284 = vmatmul.mubr.f32.gmra.mrb[0].mxu0 %v19
  %v285 = vpop.f32.mrb[0].mxu0
  %v286 = vadd.f32 %v171, %v285
  %v287 = vpop.f32.mrb[0].mxu0
  %288 = vmatprep.mubr.f32.mxu0 0.0
  %289 = vmatmul.mubr.f32.gmra.mrb[0].mxu0 %v22
  %v290 = vpop.f32.mrb[0].mxu0
  %v291 = vadd.f32 %v176, %v290
  %v292 = vpop.f32.mrb[0].mxu0
  %293 = vmatprep.mubr.f32.mxu0 0.0
  %294 = vmatmul.mubr.f32.gmra.mrb[0].mxu0 %v25
  %v295 = vpop.f32.mrb[0].mxu0
  %v296 = vadd.f32 %v181, %v295
  %v297 = vpop.f32.mrb[0].mxu0
  %298 = vmatprep.mubr.f32.mxu0 0.0
  %299 = vmatmul.mubr.f32.gmra.mrb[0].mxu0 %v28
  %v300 = vpop.f32.mrb[0].mxu0
  %v301 = vadd.f32 %v186, %v300
  %v302 = vpop.f32.mrb[0].mxu0
  %303 = vmatprep.mubr.f32.mxu0 0.0
  %304 = vmatmul.mubr.f32.gmra.mrb[0].mxu0 %v31
  %v305 = vpop.f32.mrb[0].mxu0
  %v306 = vadd.f32 %v191, %v305
  %v307 = vpop.f32.mrb[0].mxu0
  %308 = vmatprep.mubr.f32.mxu0 0.0
  %309 = vmatmul.mubr.f32.gmra.mrb[0].mxu0 %v34
  %v310 = vpop.f32.mrb[0].mxu0
  %v311 = vadd.f32 %v196, %v310
  %v312 = vpop.f32.mrb[0].mxu0
  %313 = vmatprep.mubr.f32.mxu0 0.0
  %314 = vmatmul.mubr.f32.gmra.mrb[0].mxu0 %v37
  %v315 = vpop.f32.mrb[0].mxu0
  %v316 = vadd.f32 %v201, %v315
  %v317 = vpop.f32.mrb[0].mxu0
  %318 = vmatprep.mubr.f32.mxu0 0.0
  %319 = vmatmul.mubr.f32.gmra.mrb[0].mxu0 %v40
  %v320 = vpop.f32.mrb[0].mxu0
  %v321 = vadd.f32 %v206, %v320
  %v322 = vpop.f32.mrb[0].mxu0
  %323 = vmatprep.mubr.f32.mxu0 0.0
  %324 = vmatmul.mubr.f32.gmra.mrb[0].mxu0 %v43
  %v325 = vpop.f32.mrb[0].mxu0
  %v326 = vadd.f32 %v211, %v325
  %v327 = vpop.f32.mrb[0].mxu0
  %328 = vdwg.mxu0
  %v329 = vmul.f32 %v281, 0.5
  %v330 = vmul.f32 %v286, 0.5
  %v331 = vmul.f32 %v291, 0.5
  %v332 = vmul.f32 %v296, 0.5
  %v333 = vmul.f32 %v301, 0.5
  %v334 = vmul.f32 %v306, 0.5
  %v335 = vmul.f32 %v311, 0.5
  %v336 = vmul.f32 %v316, 0.5
  %v337 = vmul.f32 %v321, 0.5
  %v338 = vmul.f32 %v326, 0.5
  %v339 = vmul.f32 %v281, 0.044715
  %v340 = vmul.f32 %v286, 0.044715
  %v341 = vmul.f32 %v291, 0.044715
  %v342 = vmul.f32 %v296, 0.044715
  %v343 = vmul.f32 %v301, 0.044715
  %v344 = vmul.f32 %v306, 0.044715
  %v345 = vmul.f32 %v311, 0.044715
  %v346 = vmul.f32 %v316, 0.044715
  %v347 = vmul.f32 %v321, 0.044715
  %v348 = vmul.f32 %v326, 0.044715
  %v349 = vmul.f32 %v339, %v281
  %v350 = vmul.f32 %v340, %v286
  %v351 = vmul.f32 %v341, %v291
  %v352 = vmul.f32 %v342, %v296
  %v353 = vmul.f32 %v343, %v301
  %v354 = vmul.f32 %v344, %v306
  %v355 = vmul.f32 %v345, %v311
  %v356 = vmul.f32 %v346, %v316
  %v357 = vmul.f32 %v347, %v321
  %v358 = vmul.f32 %v348, %v326
  %v359 = vmul.f32 %v349, %v281
  %v360 = vmul.f32 %v350, %v286
  %v361 = vmul.f32 %v351, %v291
  %v362 = vmul.f32 %v352, %v296
  %v363 = vmul.f32 %v353, %v301
  %v364 = vmul.f32 %v354, %v306
  %v365 = vmul.f32 %v355, %v311
  %v366 = vmul.f32 %v356, %v316
  %v367 = vmul.f32 %v357, %v321
  %v368 = vmul.f32 %v358, %v326
  %v369 = vadd.f32 %v281, %v359
  %v370 = vadd.f32 %v286, %v360
  %v371 = vadd.f32 %v291, %v361
  %v372 = vadd.f32 %v296, %v362
  %v373 = vadd.f32 %v301, %v363
  %v374 = vadd.f32 %v306, %v364
  %v375 = vadd.f32 %v311, %v365
  %v376 = vadd.f32 %v316, %v366
  %v377 = vadd.f32 %v321, %v367
  %v378 = vadd.f32 %v326, %v368
  %v379 = vmul.f32 %v369, 0.7978846
  %v380 = vmul.f32 %v370, 0.7978846
  %v381 = vmul.f32 %v371, 0.7978846
  %v382 = vmul.f32 %v372, 0.7978846
  %v383 = vmul.f32 %v373, 0.7978846
  %v384 = vmul.f32 %v374, 0.7978846
  %v385 = vmul.f32 %v375, 0.7978846
  %v386 = vmul.f32 %v376, 0.7978846
  %v387 = vmul.f32 %v377, 0.7978846
  %v388 = vmul.f32 %v378, 0.7978846
  %v389 = vtanh.pop %v379
  %v390 = vtanh.pop %v380
  %v391 = vtanh.pop %v381
  %v392 = vtanh.pop %v382
  %v393 = vtanh.pop %v383
  %v394 = vtanh.pop %v384
  %v395 = vtanh.pop %v385
  %v396 = vtanh.pop %v386
  %v397 = vtanh.pop %v387
  %v398 = vtanh.pop %v388
  %v399 = vadd.f32 %v389, 1.0
  %v400 = vadd.f32 %v390, 1.0
  %v401 = vadd.f32 %v391, 1.0
  %v402 = vadd.f32 %v392, 1.0
  %v403 = vadd.f32 %v393, 1.0
  %v404 = vadd.f32 %v394, 1.0
  %v405 = vadd.f32 %v395, 1.0
  %v406 = vadd.f32 %v396, 1.0
  %v407 = vadd.f32 %v397, 1.0
  %v408 = vadd.f32 %v398, 1.0
  %v409 = vmul.f32 %v329, %v399
  %v410 = vmul.f32 %v330, %v400
  %v411 = vmul.f32 %v331, %v401
  %v412 = vmul.f32 %v332, %v402
  %v413 = vmul.f32 %v333, %v403
  %v414 = vmul.f32 %v334, %v404
  %v415 = vmul.f32 %v335, %v405
  %v416 = vmul.f32 %v336, %v406
  %v417 = vmul.f32 %v337, %v407
  %v418 = vmul.f32 %v338, %v408
  %419 = vst [vmem:[%s3] sm:$0xff] %v409
  %420 = vst [vmem:[%s3 + $0x8] sm:$0xff] %v410
  %421 = vst [vmem:[%s3 + $0x10] sm:$0xff] %v411
  %422 = vst [vmem:[%s3 + $0x18] sm:$0xff] %v412
  %423 = vst [vmem:[%s3 + $0x20] sm:$0xff] %v413
  %424 = vst [vmem:[%s3 + $0x28] sm:$0xff] %v414
  %425 = vst [vmem:[%s3 + $0x30] sm:$0xff] %v415
  %426 = vst [vmem:[%s3 + $0x38] sm:$0xff] %v416
  %427 = vst [vmem:[%s3 + $0x40] sm:$0xff] %v417
  %428 = vst [vmem:[%s3 + $0x48] sm:$0xff] %v418
  // Predicated region
  $region14: #{mrcnn_shhs_forward.11} parent=0 // pred_check
    _
  $region15: #{mrcnn_shhs_forward.11} parent=0 // pred_check_branch
    %430 = sbr.rel (0) target = $region17
  $region16: #{mrcnn_shhs_forward.11} parent=0 // pred_region
    _
  $region17: #{mrcnn_shhs_forward.11} parent=0 // pred_fallthru
    _
  // Predicated region
  $region18: #{mrcnn_shhs_forward.11} parent=0 // pred_check
    _
  $region19: #{mrcnn_shhs_forward.11} parent=0 // pred_check_branch
    %432 = sbr.rel (0) target = $region21
  $region20: #{mrcnn_shhs_forward.11} parent=0 // pred_region
    _
  $region21: #{mrcnn_shhs_forward.11} parent=0 // pred_fallthru
    _

// kernel: mrcnn_shhs_forward.12
$region0: #{mrcnn_shhs_forward.12}
  #allocation0 [shape = 'u32[]', space=smem, size = 0x4, offset = 0x4, fixed_abs, tag = 'smem constant byte address 0x4 - core index']
  #allocation1 [shape = 'u32[144,128]{1,0:T(1,128)}', space=vmem, size = 0x12000, scoped, tag = 'internal scratch']
  %s0 = inlined_call_operand.vmem [shape: f32[88,768], index: 0, kind: input, shape index: {}]
  %s1 = inlined_call_operand.vmem [shape: f32[768,128], index: 1, kind: input, shape index: {}]
  %s2 = inlined_call_operand.vmem [shape: f32[1,128], index: 2, kind: input, shape index: {}]
  %s3 = inlined_call_operand.vmem [shape: f32[88,128], index: 3, kind: output, shape index: {}]
  %s4 = sld [smem:[#allocation0]]
  $region22: #{mrcnn_shhs_forward.12} parent=0
    _
  %s6 = ssub.s32 1, %s4
  %s7 = scalar_select 0, %s6, %s4
  // Predicated region
  $region2: #{mrcnn_shhs_forward.12} parent=0 // pred_check
    _
  $region3: #{mrcnn_shhs_forward.12} parent=0 // pred_check_branch
    %9 = sbr.rel (0) target = $region5
  $region4: #{mrcnn_shhs_forward.12} parent=0 // pred_region
    _
  $region5: #{mrcnn_shhs_forward.12} parent=0 // pred_fallthru
    _
  // Predicated region
  $region6: #{mrcnn_shhs_forward.12} parent=0 // pred_check
    _
  $region7: #{mrcnn_shhs_forward.12} parent=0 // pred_check_branch
    %11 = sbr.rel (0) target = $region9
  $region8: #{mrcnn_shhs_forward.12} parent=0 // pred_region
    _
  $region9: #{mrcnn_shhs_forward.12} parent=0 // pred_fallthru
    _
  // Predicated region
  $region10: #{mrcnn_shhs_forward.12} parent=0 // pred_check
    _
  $region11: #{mrcnn_shhs_forward.12} parent=0 // pred_check_branch
    %13 = sbr.rel (0) target = $region13
  $region12: #{mrcnn_shhs_forward.12} parent=0 // pred_region
    _
  $region13: #{mrcnn_shhs_forward.12} parent=0 // pred_fallthru
    _
  %v14 = vld [vmem:[%s0] sm:$0xff]
  %v15 = vld [vmem:[%s0 + $0x8] sm:$0xff]
  %v16 = vld [vmem:[%s0 + $0x10] sm:$0xff]
  %v17 = vld [vmem:[%s0 + $0x18] sm:$0xff]
  %v18 = vld [vmem:[%s0 + $0x20] sm:$0xff]
  %v19 = vld [vmem:[%s0 + $0x28] sm:$0xff]
  %v20 = vld [vmem:[%s0 + $0x30] sm:$0xff]
  %v21 = vld [vmem:[%s0 + $0x38] sm:$0xff]
  %v22 = vld [vmem:[%s0 + $0x40] sm:$0xff]
  %v23 = vld [vmem:[%s0 + $0x48] sm:$0xff]
  %v24 = vld [vmem:[%s0 + $0x50] sm:$0xff]
  %v25 = vld [vmem:[%s0 + $0x58] sm:$0xff]
  %v26 = vld [vmem:[%s0 + $0x60] sm:$0xff]
  %v27 = vld [vmem:[%s0 + $0x68] sm:$0xff]
  %v28 = vld [vmem:[%s0 + $0x70] sm:$0xff]
  %v29 = vld [vmem:[%s0 + $0x78] sm:$0xff]
  %v30 = vld [vmem:[%s0 + $0x80] sm:$0xff]
  %v31 = vld [vmem:[%s0 + $0x88] sm:$0xff]
  %v32 = vld [vmem:[%s0 + $0x90] sm:$0xff]
  %v33 = vld [vmem:[%s0 + $0x98] sm:$0xff]
  %v34 = vld [vmem:[%s0 + $0xa0] sm:$0xff]
  %v35 = vld [vmem:[%s0 + $0xa8] sm:$0xff]
  %v36 = vld [vmem:[%s0 + $0xb0] sm:$0xff]
  %v37 = vld [vmem:[%s0 + $0xb8] sm:$0xff]
  %v38 = vld [vmem:[%s0 + $0xc0] sm:$0xff]
  %v39 = vld [vmem:[%s0 + $0xc8] sm:$0xff]
  %v40 = vld [vmem:[%s0 + $0xd0] sm:$0xff]
  %v41 = vld [vmem:[%s0 + $0xd8] sm:$0xff]
  %v42 = vld [vmem:[%s0 + $0xe0] sm:$0xff]
  %v43 = vld [vmem:[%s0 + $0xe8] sm:$0xff]
  %v44 = vld [vmem:[%s0 + $0xf0] sm:$0xff]
  %v45 = vld [vmem:[%s0 + $0xf8] sm:$0xff]
  %v46 = vld [vmem:[%s0 + $0x100] sm:$0xff]
  %v47 = vld [vmem:[%s0 + $0x108] sm:$0xff]
  %v48 = vld [vmem:[%s0 + $0x110] sm:$0xff]
  %v49 = vld [vmem:[%s0 + $0x118] sm:$0xff]
  %v50 = vld [vmem:[%s0 + $0x120] sm:$0xff]
  %v51 = vld [vmem:[%s0 + $0x128] sm:$0xff]
  %v52 = vld [vmem:[%s0 + $0x130] sm:$0xff]
  %v53 = vld [vmem:[%s0 + $0x138] sm:$0xff]
  %v54 = vld [vmem:[%s0 + $0x140] sm:$0xff]
  %v55 = vld [vmem:[%s0 + $0x148] sm:$0xff]
  %v56 = vld [vmem:[%s0 + $0x150] sm:$0xff]
  %v57 = vld [vmem:[%s0 + $0x158] sm:$0xff]
  %v58 = vld [vmem:[%s0 + $0x160] sm:$0xff]
  %v59 = vld [vmem:[%s0 + $0x168] sm:$0xff]
  %v60 = vld [vmem:[%s0 + $0x170] sm:$0xff]
  %v61 = vld [vmem:[%s0 + $0x178] sm:$0xff]
  %v62 = vld [vmem:[%s0 + $0x180] sm:$0xff]
  %v63 = vld [vmem:[%s0 + $0x188] sm:$0xff]
  %v64 = vld [vmem:[%s0 + $0x190] sm:$0xff]
  %v65 = vld [vmem:[%s0 + $0x198] sm:$0xff]
  %v66 = vld [vmem:[%s0 + $0x1a0] sm:$0xff]
  %v67 = vld [vmem:[%s0 + $0x1a8] sm:$0xff]
  %v68 = vld [vmem:[%s0 + $0x1b0] sm:$0xff]
  %v69 = vld [vmem:[%s0 + $0x1b8] sm:$0xff]
  %v70 = vld [vmem:[%s0 + $0x1c0] sm:$0xff]
  %v71 = vld [vmem:[%s0 + $0x1c8] sm:$0xff]
  %v72 = vld [vmem:[%s0 + $0x1d0] sm:$0xff]
  %v73 = vld [vmem:[%s0 + $0x1d8] sm:$0xff]
  %v74 = vld [vmem:[%s0 + $0x1e0] sm:$0xff]
  %v75 = vld [vmem:[%s0 + $0x1e8] sm:$0xff]
  %v76 = vld [vmem:[%s0 + $0x1f0] sm:$0xff]
  %v77 = vld [vmem:[%s0 + $0x1f8] sm:$0xff]
  %v78 = vld [vmem:[%s0 + $0x200] sm:$0xff]
  %v79 = vld [vmem:[%s0 + $0x208] sm:$0xff]
  %v80 = vld [vmem:[%s1] sm:$0xff]
  %v81 = vld [vmem:[%s1 + $0x8] sm:$0xff]
  %v82 = vld [vmem:[%s1 + $0x10] sm:$0xff]
  %v83 = vld [vmem:[%s1 + $0x18] sm:$0xff]
  %v84 = vld [vmem:[%s1 + $0x20] sm:$0xff]
  %v85 = vld [vmem:[%s1 + $0x28] sm:$0xff]
  %v86 = vld [vmem:[%s1 + $0x30] sm:$0xff]
  %v87 = vld [vmem:[%s1 + $0x38] sm:$0xff]
  %v88 = vld [vmem:[%s1 + $0x40] sm:$0xff]
  %v89 = vld [vmem:[%s1 + $0x48] sm:$0xff]
  %v90 = vld [vmem:[%s1 + $0x50] sm:$0xff]
  %v91 = vld [vmem:[%s1 + $0x58] sm:$0xff]
  %v92 = vld [vmem:[%s1 + $0x60] sm:$0xff]
  %v93 = vld [vmem:[%s1 + $0x68] sm:$0xff]
  %v94 = vld [vmem:[%s1 + $0x70] sm:$0xff]
  %v95 = vld [vmem:[%s1 + $0x78] sm:$0xff]
  %v96 = vld [vmem:[%s1 + $0x80] sm:$0xff]
  %v97 = vld [vmem:[%s1 + $0x88] sm:$0xff]
  %v98 = vld [vmem:[%s1 + $0x90] sm:$0xff]
  %v99 = vld [vmem:[%s1 + $0x98] sm:$0xff]
  %v100 = vld [vmem:[%s1 + $0xa0] sm:$0xff]
  %v101 = vld [vmem:[%s1 + $0xa8] sm:$0xff]
  %v102 = vld [vmem:[%s1 + $0xb0] sm:$0xff]
  %v103 = vld [vmem:[%s1 + $0xb8] sm:$0xff]
  %v104 = vld [vmem:[%s1 + $0xc0] sm:$0xff]
  %v105 = vld [vmem:[%s1 + $0xc8] sm:$0xff]
  %v106 = vld [vmem:[%s1 + $0xd0] sm:$0xff]
  %v107 = vld [vmem:[%s1 + $0xd8] sm:$0xff]
  %v108 = vld [vmem:[%s1 + $0xe0] sm:$0xff]
  %v109 = vld [vmem:[%s1 + $0xe8] sm:$0xff]
  %v110 = vld [vmem:[%s1 + $0xf0] sm:$0xff]
  %v111 = vld [vmem:[%s1 + $0xf8] sm:$0xff]
  %v112 = vld [vmem:[%s1 + $0x100] sm:$0xff]
  %v113 = vld [vmem:[%s1 + $0x108] sm:$0xff]
  %v114 = vld [vmem:[%s1 + $0x110] sm:$0xff]
  %v115 = vld [vmem:[%s1 + $0x118] sm:$0xff]
  %v116 = vld [vmem:[%s1 + $0x120] sm:$0xff]
  %v117 = vld [vmem:[%s1 + $0x128] sm:$0xff]
  %v118 = vld [vmem:[%s1 + $0x130] sm:$0xff]
  %v119 = vld [vmem:[%s1 + $0x138] sm:$0xff]
  %v120 = vld [vmem:[%s1 + $0x140] sm:$0xff]
  %v121 = vld [vmem:[%s1 + $0x148] sm:$0xff]
  %v122 = vld [vmem:[%s1 + $0x150] sm:$0xff]
  %v123 = vld [vmem:[%s1 + $0x158] sm:$0xff]
  %v124 = vld [vmem:[%s1 + $0x160] sm:$0xff]
  %v125 = vld [vmem:[%s1 + $0x168] sm:$0xff]
  %v126 = vld [vmem:[%s1 + $0x170] sm:$0xff]
  %v127 = vld [vmem:[%s1 + $0x178] sm:$0xff]
  %v128 = vld [vmem:[%s1 + $0x180] sm:$0xff]
  %v129 = vld [vmem:[%s1 + $0x188] sm:$0xff]
  %v130 = vld [vmem:[%s1 + $0x190] sm:$0xff]
  %v131 = vld [vmem:[%s1 + $0x198] sm:$0xff]
  %v132 = vld [vmem:[%s1 + $0x1a0] sm:$0xff]
  %v133 = vld [vmem:[%s1 + $0x1a8] sm:$0xff]
  %v134 = vld [vmem:[%s1 + $0x1b0] sm:$0xff]
  %v135 = vld [vmem:[%s1 + $0x1b8] sm:$0xff]
  %v136 = vld [vmem:[%s1 + $0x1c0] sm:$0xff]
  %v137 = vld [vmem:[%s1 + $0x1c8] sm:$0xff]
  %v138 = vld [vmem:[%s1 + $0x1d0] sm:$0xff]
  %v139 = vld [vmem:[%s1 + $0x1d8] sm:$0xff]
  %v140 = vld [vmem:[%s1 + $0x1e0] sm:$0xff]
  %v141 = vld [vmem:[%s1 + $0x1e8] sm:$0xff]
  %v142 = vld [vmem:[%s1 + $0x1f0] sm:$0xff]
  %v143 = vld [vmem:[%s1 + $0x1f8] sm:$0xff]
  %v144 = vld [vmem:[%s1 + $0x200] sm:$0xff]
  %v145 = vld [vmem:[%s1 + $0x208] sm:$0xff]
  %v146 = vld [vmem:[%s1 + $0x210] sm:$0xff]
  %v147 = vld [vmem:[%s1 + $0x218] sm:$0xff]
  %v148 = vld [vmem:[%s1 + $0x220] sm:$0xff]
  %v149 = vld [vmem:[%s1 + $0x228] sm:$0xff]
  %v150 = vld [vmem:[%s1 + $0x230] sm:$0xff]
  %v151 = vld [vmem:[%s1 + $0x238] sm:$0xff]
  %v152 = vld [vmem:[%s1 + $0x240] sm:$0xff]
  %v153 = vld [vmem:[%s1 + $0x248] sm:$0xff]
  %v154 = vld [vmem:[%s1 + $0x250] sm:$0xff]
  %v155 = vld [vmem:[%s1 + $0x258] sm:$0xff]
  %v156 = vld [vmem:[%s1 + $0x260] sm:$0xff]
  %v157 = vld [vmem:[%s1 + $0x268] sm:$0xff]
  %v158 = vld [vmem:[%s1 + $0x270] sm:$0xff]
  %v159 = vld [vmem:[%s1 + $0x278] sm:$0xff]
  %v160 = vld [vmem:[%s1 + $0x280] sm:$0xff]
  %v161 = vld [vmem:[%s1 + $0x288] sm:$0xff]
  %v162 = vld [vmem:[%s1 + $0x290] sm:$0xff]
  %v163 = vld [vmem:[%s1 + $0x298] sm:$0xff]
  %v164 = vld [vmem:[%s1 + $0x2a0] sm:$0xff]
  %v165 = vld [vmem:[%s1 + $0x2a8] sm:$0xff]
  %v166 = vld [vmem:[%s1 + $0x2b0] sm:$0xff]
  %v167 = vld [vmem:[%s1 + $0x2b8] sm:$0xff]
  %v168 = vld [vmem:[%s1 + $0x2c0] sm:$0xff]
  %v169 = vld [vmem:[%s1 + $0x2c8] sm:$0xff]
  %v170 = vld [vmem:[%s1 + $0x2d0] sm:$0xff]
  %v171 = vld [vmem:[%s1 + $0x2d8] sm:$0xff]
  %v172 = vld [vmem:[%s1 + $0x2e0] sm:$0xff]
  %v173 = vld [vmem:[%s1 + $0x2e8] sm:$0xff]
  %v174 = vld [vmem:[%s1 + $0x2f0] sm:$0xff]
  %v175 = vld [vmem:[%s1 + $0x2f8] sm:$0xff]
  %v176 = vld [vmem:[%s2] sm:$0x1]
  %v178 = vlaneseq
  %v179 = vshrl.u32 %v178, 7
  %v180 = vsub.s32 0, %v179
  %v181 = vrot.slane %v176, %v180
  %183 = vmatprep.subr.mxu0 0.0
  %184 = vmatpush1.msra.mxu0 %v80
  %185 = vmatprep.subr.mxu0 0.0
  %186 = vmatpush1.msra.mxu0 %v81
  %187 = vmatprep.subr.mxu0 0.0
  %188 = vmatpush1.msra.mxu0 %v82
  %189 = vmatprep.subr.mxu0 0.0
  %190 = vmatpush1.msra.mxu0 %v83
  %191 = vmatprep.subr.mxu0 0.0
  %192 = vmatpush1.msra.mxu0 %v84
  %193 = vmatprep.subr.mxu0 0.0
  %194 = vmatpush1.msra.mxu0 %v85
  %195 = vmatprep.subr.mxu0 0.0
  %196 = vmatpush1.msra.mxu0 %v86
  %197 = vmatprep.subr.mxu0 0.0
  %198 = vmatpush1.msra.mxu0 %v87
  %199 = vmatprep.subr.mxu0 0.0
  %200 = vmatpush1.msra.mxu0 %v88
  %201 = vmatprep.subr.mxu0 0.0
  %202 = vmatpush1.msra.mxu0 %v89
  %203 = vmatprep.subr.mxu0 0.0
  %204 = vmatpush1.msra.mxu0 %v90
  %205 = vmatprep.subr.mxu0 0.0
  %206 = vmatpush1.msra.mxu0 %v91
  %207 = vmatprep.subr.mxu0 0.0
  %208 = vmatpush1.msra.mxu0 %v92
  %209 = vmatprep.subr.mxu0 0.0
  %210 = vmatpush1.msra.mxu0 %v93
  %211 = vmatprep.subr.mxu0 0.0
  %212 = vmatpush1.msra.mxu0 %v94
  %213 = vmatprep.subr.mxu0 0.0
  %214 = vmatpush1.msra.mxu0 %v95
  %215 = vmatprep.subr.mxu0 0.0
  %216 = vmatpush1.msra.mxu0 %v96
  %217 = vmatprep.subr.mxu0 0.0
  %218 = vmatpush1.msra.mxu0 %v97
  %219 = vmatprep.subr.mxu0 0.0
  %220 = vmatpush1.msra.mxu0 %v98
  %221 = vmatprep.subr.mxu0 0.0
  %222 = vmatpush1.msra.mxu0 %v99
  %223 = vmatprep.subr.mxu0 0.0
  %224 = vmatpush1.msra.mxu0 %v100
  %225 = vmatprep.subr.mxu0 0.0
  %226 = vmatpush1.msra.mxu0 %v101
  %227 = vmatprep.subr.mxu0 0.0
  %228 = vmatpush1.msra.mxu0 %v102
  %229 = vmatprep.subr.mxu0 0.0
  %230 = vmatpush1.msra.mxu0 %v103
  %231 = vmatprep.subr.mxu0 0.0
  %232 = vmatpush1.msra.mxu0 %v104
  %233 = vmatprep.subr.mxu0 0.0
  %234 = vmatpush1.msra.mxu0 %v105
  %235 = vmatprep.subr.mxu0 0.0
  %236 = vmatpush1.msra.mxu0 %v106
  %237 = vmatprep.subr.mxu0 0.0
  %238 = vmatpush1.msra.mxu0 %v107
  %239 = vmatprep.subr.mxu0 0.0
  %240 = vmatpush1.msra.mxu0 %v108
  %241 = vmatprep.subr.mxu0 0.0
  %242 = vmatpush1.msra.mxu0 %v109
  %243 = vmatprep.subr.mxu0 0.0
  %244 = vmatpush1.msra.mxu0 %v110
  %245 = vmatprep.subr.mxu0 0.0
  %246 = vmatpush1.msra.mxu0 %v111
  %247 = vmatprep.mubr.f32.mxu0 %v15
  %248 = vmatmul.mubr.f32.gmra.mrb[0].mxu0 %v14
  %v249 = vpop.f32.mrb[0].mxu0
  %v250 = vadd.f32 %v181, %v249
  %v251 = vpop.f32.mrb[0].mxu0
  %252 = vmatprep.mubr.f32.mxu0 %v21
  %253 = vmatmul.mubr.f32.gmra.mrb[0].mxu0 %v20
  %v254 = vpop.f32.mrb[0].mxu0
  %v255 = vadd.f32 %v181, %v254
  %v256 = vpop.f32.mrb[0].mxu0
  %257 = vmatprep.mubr.f32.mxu0 %v27
  %258 = vmatmul.mubr.f32.gmra.mrb[0].mxu0 %v26
  %v259 = vpop.f32.mrb[0].mxu0
  %v260 = vadd.f32 %v181, %v259
  %v261 = vpop.f32.mrb[0].mxu0
  %262 = vmatprep.mubr.f32.mxu0 %v33
  %263 = vmatmul.mubr.f32.gmra.mrb[0].mxu0 %v32
  %v264 = vpop.f32.mrb[0].mxu0
  %v265 = vadd.f32 %v181, %v264
  %v266 = vpop.f32.mrb[0].mxu0
  %267 = vmatprep.mubr.f32.mxu0 %v39
  %268 = vmatmul.mubr.f32.gmra.mrb[0].mxu0 %v38
  %v269 = vpop.f32.mrb[0].mxu0
  %v270 = vadd.f32 %v181, %v269
  %v271 = vpop.f32.mrb[0].mxu0
  %272 = vmatprep.mubr.f32.mxu0 %v45
  %273 = vmatmul.mubr.f32.gmra.mrb[0].mxu0 %v44
  %v274 = vpop.f32.mrb[0].mxu0
  %v275 = vadd.f32 %v181, %v274
  %v276 = vpop.f32.mrb[0].mxu0
  %277 = vmatprep.mubr.f32.mxu0 %v51
  %278 = vmatmul.mubr.f32.gmra.mrb[0].mxu0 %v50
  %v279 = vpop.f32.mrb[0].mxu0
  %v280 = vadd.f32 %v181, %v279
  %v281 = vpop.f32.mrb[0].mxu0
  %282 = vmatprep.mubr.f32.mxu0 %v57
  %283 = vmatmul.mubr.f32.gmra.mrb[0].mxu0 %v56
  %v284 = vpop.f32.mrb[0].mxu0
  %v285 = vadd.f32 %v181, %v284
  %v286 = vpop.f32.mrb[0].mxu0
  %287 = vmatprep.mubr.f32.mxu0 %v63
  %288 = vmatmul.mubr.f32.gmra.mrb[0].mxu0 %v62
  %v289 = vpop.f32.mrb[0].mxu0
  %v290 = vadd.f32 %v181, %v289
  %v291 = vpop.f32.mrb[0].mxu0
  %292 = vmatprep.mubr.f32.mxu0 %v69
  %293 = vmatmul.mubr.f32.gmra.mrb[0].mxu0 %v68
  %v294 = vpop.f32.mrb[0].mxu0
  %v295 = vadd.f32 %v181, %v294
  %v296 = vpop.f32.mrb[0].mxu0
  %297 = vmatprep.mubr.f32.mxu0 %v75
  %298 = vmatmul.mubr.f32.gmra.mrb[0].mxu0 %v74
  %v299 = vpop.f32.mrb[0].mxu0
  %v300 = vadd.f32 %v181, %v299
  %v301 = vpop.f32.mrb[0].mxu0
  %302 = vdwg.mxu0
  %303 = vmatprep.subr.mxu0 0.0
  %304 = vmatpush1.msra.mxu0 %v112
  %305 = vmatprep.subr.mxu0 0.0
  %306 = vmatpush1.msra.mxu0 %v113
  %307 = vmatprep.subr.mxu0 0.0
  %308 = vmatpush1.msra.mxu0 %v114
  %309 = vmatprep.subr.mxu0 0.0
  %310 = vmatpush1.msra.mxu0 %v115
  %311 = vmatprep.subr.mxu0 0.0
  %312 = vmatpush1.msra.mxu0 %v116
  %313 = vmatprep.subr.mxu0 0.0
  %314 = vmatpush1.msra.mxu0 %v117
  %315 = vmatprep.subr.mxu0 0.0
  %316 = vmatpush1.msra.mxu0 %v118
  %317 = vmatprep.subr.mxu0 0.0
  %318 = vmatpush1.msra.mxu0 %v119
  %319 = vmatprep.subr.mxu0 0.0
  %320 = vmatpush1.msra.mxu0 %v120
  %321 = vmatprep.subr.mxu0 0.0
  %322 = vmatpush1.msra.mxu0 %v121
  %323 = vmatprep.subr.mxu0 0.0
  %324 = vmatpush1.msra.mxu0 %v122
  %325 = vmatprep.subr.mxu0 0.0
  %326 = vmatpush1.msra.mxu0 %v123
  %327 = vmatprep.subr.mxu0 0.0
  %328 = vmatpush1.msra.mxu0 %v124
  %329 = vmatprep.subr.mxu0 0.0
  %330 = vmatpush1.msra.mxu0 %v125
  %331 = vmatprep.subr.mxu0 0.0
  %332 = vmatpush1.msra.mxu0 %v126
  %333 = vmatprep.subr.mxu0 0.0
  %334 = vmatpush1.msra.mxu0 %v127
  %335 = vmatprep.subr.mxu0 0.0
  %336 = vmatpush1.msra.mxu0 %v128
  %337 = vmatprep.subr.mxu0 0.0
  %338 = vmatpush1.msra.mxu0 %v129
  %339 = vmatprep.subr.mxu0 0.0
  %340 = vmatpush1.msra.mxu0 %v130
  %341 = vmatprep.subr.mxu0 0.0
  %342 = vmatpush1.msra.mxu0 %v131
  %343 = vmatprep.subr.mxu0 0.0
  %344 = vmatpush1.msra.mxu0 %v132
  %345 = vmatprep.subr.mxu0 0.0
  %346 = vmatpush1.msra.mxu0 %v133
  %347 = vmatprep.subr.mxu0 0.0
  %348 = vmatpush1.msra.mxu0 %v134
  %349 = vmatprep.subr.mxu0 0.0
  %350 = vmatpush1.msra.mxu0 %v135
  %351 = vmatprep.subr.mxu0 0.0
  %352 = vmatpush1.msra.mxu0 %v136
  %353 = vmatprep.subr.mxu0 0.0
  %354 = vmatpush1.msra.mxu0 %v137
  %355 = vmatprep.subr.mxu0 0.0
  %356 = vmatpush1.msra.mxu0 %v138
  %357 = vmatprep.subr.mxu0 0.0
  %358 = vmatpush1.msra.mxu0 %v139
  %359 = vmatprep.subr.mxu0 0.0
  %360 = vmatpush1.msra.mxu0 %v140
  %361 = vmatprep.subr.mxu0 0.0
  %362 = vmatpush1.msra.mxu0 %v141
  %363 = vmatprep.subr.mxu0 0.0
  %364 = vmatpush1.msra.mxu0 %v142
  %365 = vmatprep.subr.mxu0 0.0
  %366 = vmatpush1.msra.mxu0 %v143
  %367 = vmatprep.mubr.f32.mxu0 %v17
  %368 = vmatmul.mubr.f32.gmra.mrb[0].mxu0 %v16
  %v369 = vpop.f32.mrb[0].mxu0
  %v370 = vadd.f32 %v250, %v369
  %v371 = vpop.f32.mrb[0].mxu0
  %372 = vmatprep.mubr.f32.mxu0 %v23
  %373 = vmatmul.mubr.f32.gmra.mrb[0].mxu0 %v22
  %v374 = vpop.f32.mrb[0].mxu0
  %v375 = vadd.f32 %v255, %v374
  %v376 = vpop.f32.mrb[0].mxu0
  %377 = vmatprep.mubr.f32.mxu0 %v29
  %378 = vmatmul.mubr.f32.gmra.mrb[0].mxu0 %v28
  %v379 = vpop.f32.mrb[0].mxu0
  %v380 = vadd.f32 %v260, %v379
  %v381 = vpop.f32.mrb[0].mxu0
  %382 = vmatprep.mubr.f32.mxu0 %v35
  %383 = vmatmul.mubr.f32.gmra.mrb[0].mxu0 %v34
  %v384 = vpop.f32.mrb[0].mxu0
  %v385 = vadd.f32 %v265, %v384
  %v386 = vpop.f32.mrb[0].mxu0
  %387 = vmatprep.mubr.f32.mxu0 %v41
  %388 = vmatmul.mubr.f32.gmra.mrb[0].mxu0 %v40
  %v389 = vpop.f32.mrb[0].mxu0
  %v390 = vadd.f32 %v270, %v389
  %v391 = vpop.f32.mrb[0].mxu0
  %392 = vmatprep.mubr.f32.mxu0 %v47
  %393 = vmatmul.mubr.f32.gmra.mrb[0].mxu0 %v46
  %v394 = vpop.f32.mrb[0].mxu0
  %v395 = vadd.f32 %v275, %v394
  %v396 = vpop.f32.mrb[0].mxu0
  %397 = vmatprep.mubr.f32.mxu0 %v53
  %398 = vmatmul.mubr.f32.gmra.mrb[0].mxu0 %v52
  %v399 = vpop.f32.mrb[0].mxu0
  %v400 = vadd.f32 %v280, %v399
  %v401 = vpop.f32.mrb[0].mxu0
  %402 = vmatprep.mubr.f32.mxu0 %v59
  %403 = vmatmul.mubr.f32.gmra.mrb[0].mxu0 %v58
  %v404 = vpop.f32.mrb[0].mxu0
  %v405 = vadd.f32 %v285, %v404
  %v406 = vpop.f32.mrb[0].mxu0
  %407 = vmatprep.mubr.f32.mxu0 %v65
  %408 = vmatmul.mubr.f32.gmra.mrb[0].mxu0 %v64
  %v409 = vpop.f32.mrb[0].mxu0
  %v410 = vadd.f32 %v290, %v409
  %v411 = vpop.f32.mrb[0].mxu0
  %412 = vmatprep.mubr.f32.mxu0 %v71
  %413 = vmatmul.mubr.f32.gmra.mrb[0].mxu0 %v70
  %v414 = vpop.f32.mrb[0].mxu0
  %v415 = vadd.f32 %v295, %v414
  %v416 = vpop.f32.mrb[0].mxu0
  %417 = vmatprep.mubr.f32.mxu0 %v77
  %418 = vmatmul.mubr.f32.gmra.mrb[0].mxu0 %v76
  %v419 = vpop.f32.mrb[0].mxu0
  %v420 = vadd.f32 %v300, %v419
  %v421 = vpop.f32.mrb[0].mxu0
  %422 = vdwg.mxu0
  %423 = vmatprep.subr.mxu0 0.0
  %424 = vmatpush1.msra.mxu0 %v144
  %425 = vmatprep.subr.mxu0 0.0
  %426 = vmatpush1.msra.mxu0 %v145
  %427 = vmatprep.subr.mxu0 0.0
  %428 = vmatpush1.msra.mxu0 %v146
  %429 = vmatprep.subr.mxu0 0.0
  %430 = vmatpush1.msra.mxu0 %v147
  %431 = vmatprep.subr.mxu0 0.0
  %432 = vmatpush1.msra.mxu0 %v148
  %433 = vmatprep.subr.mxu0 0.0
  %434 = vmatpush1.msra.mxu0 %v149
  %435 = vmatprep.subr.mxu0 0.0
  %436 = vmatpush1.msra.mxu0 %v150
  %437 = vmatprep.subr.mxu0 0.0
  %438 = vmatpush1.msra.mxu0 %v151
  %439 = vmatprep.subr.mxu0 0.0
  %440 = vmatpush1.msra.mxu0 %v152
  %441 = vmatprep.subr.mxu0 0.0
  %442 = vmatpush1.msra.mxu0 %v153
  %443 = vmatprep.subr.mxu0 0.0
  %444 = vmatpush1.msra.mxu0 %v154
  %445 = vmatprep.subr.mxu0 0.0
  %446 = vmatpush1.msra.mxu0 %v155
  %447 = vmatprep.subr.mxu0 0.0
  %448 = vmatpush1.msra.mxu0 %v156
  %449 = vmatprep.subr.mxu0 0.0
  %450 = vmatpush1.msra.mxu0 %v157
  %451 = vmatprep.subr.mxu0 0.0
  %452 = vmatpush1.msra.mxu0 %v158
  %453 = vmatprep.subr.mxu0 0.0
  %454 = vmatpush1.msra.mxu0 %v159
  %455 = vmatprep.subr.mxu0 0.0
  %456 = vmatpush1.msra.mxu0 %v160
  %457 = vmatprep.subr.mxu0 0.0
  %458 = vmatpush1.msra.mxu0 %v161
  %459 = vmatprep.subr.mxu0 0.0
  %460 = vmatpush1.msra.mxu0 %v162
  %461 = vmatprep.subr.mxu0 0.0
  %462 = vmatpush1.msra.mxu0 %v163
  %463 = vmatprep.subr.mxu0 0.0
  %464 = vmatpush1.msra.mxu0 %v164
  %465 = vmatprep.subr.mxu0 0.0
  %466 = vmatpush1.msra.mxu0 %v165
  %467 = vmatprep.subr.mxu0 0.0
  %468 = vmatpush1.msra.mxu0 %v166
  %469 = vmatprep.subr.mxu0 0.0
  %470 = vmatpush1.msra.mxu0 %v167
  %471 = vmatprep.subr.mxu0 0.0
  %472 = vmatpush1.msra.mxu0 %v168
  %473 = vmatprep.subr.mxu0 0.0
  %474 = vmatpush1.msra.mxu0 %v169
  %475 = vmatprep.subr.mxu0 0.0
  %476 = vmatpush1.msra.mxu0 %v170
  %477 = vmatprep.subr.mxu0 0.0
  %478 = vmatpush1.msra.mxu0 %v171
  %479 = vmatprep.subr.mxu0 0.0
  %480 = vmatpush1.msra.mxu0 %v172
  %481 = vmatprep.subr.mxu0 0.0
  %482 = vmatpush1.msra.mxu0 %v173
  %483 = vmatprep.subr.mxu0 0.0
  %484 = vmatpush1.msra.mxu0 %v174
  %485 = vmatprep.subr.mxu0 0.0
  %486 = vmatpush1.msra.mxu0 %v175
  %487 = vmatprep.mubr.f32.mxu0 %v19
  %488 = vmatmul.mubr.f32.gmra.mrb[0].mxu0 %v18
  %v489 = vpop.f32.mrb[0].mxu0
  %v490 = vadd.f32 %v370, %v489
  %v491 = vpop.f32.mrb[0].mxu0
  %492 = vmatprep.mubr.f32.mxu0 %v25
  %493 = vmatmul.mubr.f32.gmra.mrb[0].mxu0 %v24
  %v494 = vpop.f32.mrb[0].mxu0
  %v495 = vadd.f32 %v375, %v494
  %v496 = vpop.f32.mrb[0].mxu0
  %497 = vmatprep.mubr.f32.mxu0 %v31
  %498 = vmatmul.mubr.f32.gmra.mrb[0].mxu0 %v30
  %v499 = vpop.f32.mrb[0].mxu0
  %v500 = vadd.f32 %v380, %v499
  %v501 = vpop.f32.mrb[0].mxu0
  %502 = vmatprep.mubr.f32.mxu0 %v37
  %503 = vmatmul.mubr.f32.gmra.mrb[0].mxu0 %v36
  %v504 = vpop.f32.mrb[0].mxu0
  %v505 = vadd.f32 %v385, %v504
  %v506 = vpop.f32.mrb[0].mxu0
  %507 = vmatprep.mubr.f32.mxu0 %v43
  %508 = vmatmul.mubr.f32.gmra.mrb[0].mxu0 %v42
  %v509 = vpop.f32.mrb[0].mxu0
  %v510 = vadd.f32 %v390, %v509
  %v511 = vpop.f32.mrb[0].mxu0
  %512 = vmatprep.mubr.f32.mxu0 %v49
  %513 = vmatmul.mubr.f32.gmra.mrb[0].mxu0 %v48
  %v514 = vpop.f32.mrb[0].mxu0
  %v515 = vadd.f32 %v395, %v514
  %v516 = vpop.f32.mrb[0].mxu0
  %517 = vmatprep.mubr.f32.mxu0 %v55
  %518 = vmatmul.mubr.f32.gmra.mrb[0].mxu0 %v54
  %v519 = vpop.f32.mrb[0].mxu0
  %v520 = vadd.f32 %v400, %v519
  %v521 = vpop.f32.mrb[0].mxu0
  %522 = vmatprep.mubr.f32.mxu0 %v61
  %523 = vmatmul.mubr.f32.gmra.mrb[0].mxu0 %v60
  %v524 = vpop.f32.mrb[0].mxu0
  %v525 = vadd.f32 %v405, %v524
  %v526 = vpop.f32.mrb[0].mxu0
  %527 = vmatprep.mubr.f32.mxu0 %v67
  %528 = vmatmul.mubr.f32.gmra.mrb[0].mxu0 %v66
  %v529 = vpop.f32.mrb[0].mxu0
  %v530 = vadd.f32 %v410, %v529
  %v531 = vpop.f32.mrb[0].mxu0
  %532 = vmatprep.mubr.f32.mxu0 %v73
  %533 = vmatmul.mubr.f32.gmra.mrb[0].mxu0 %v72
  %v534 = vpop.f32.mrb[0].mxu0
  %v535 = vadd.f32 %v415, %v534
  %v536 = vpop.f32.mrb[0].mxu0
  %537 = vmatprep.mubr.f32.mxu0 %v79
  %538 = vmatmul.mubr.f32.gmra.mrb[0].mxu0 %v78
  %v539 = vpop.f32.mrb[0].mxu0
  %v540 = vadd.f32 %v420, %v539
  %v541 = vpop.f32.mrb[0].mxu0
  %542 = vdwg.mxu0
  %v543 = vmul.f32 %v490, 0.5
  %v544 = vmul.f32 %v495, 0.5
  %v545 = vmul.f32 %v500, 0.5
  %v546 = vmul.f32 %v505, 0.5
  %v547 = vmul.f32 %v510, 0.5
  %v548 = vmul.f32 %v515, 0.5
  %v549 = vmul.f32 %v520, 0.5
  %v550 = vmul.f32 %v525, 0.5
  %v551 = vmul.f32 %v530, 0.5
  %v552 = vmul.f32 %v535, 0.5
  %v553 = vmul.f32 %v540, 0.5
  %v554 = vmul.f32 %v490, 0.044715
  %v555 = vmul.f32 %v495, 0.044715
  %v556 = vmul.f32 %v500, 0.044715
  %v557 = vmul.f32 %v505, 0.044715
  %v558 = vmul.f32 %v510, 0.044715
  %v559 = vmul.f32 %v515, 0.044715
  %v560 = vmul.f32 %v520, 0.044715
  %v561 = vmul.f32 %v525, 0.044715
  %v562 = vmul.f32 %v530, 0.044715
  %v563 = vmul.f32 %v535, 0.044715
  %v564 = vmul.f32 %v540, 0.044715
  %v565 = vmul.f32 %v554, %v490
  %v566 = vmul.f32 %v555, %v495
  %v567 = vmul.f32 %v556, %v500
  %v568 = vmul.f32 %v557, %v505
  %v569 = vmul.f32 %v558, %v510
  %v570 = vmul.f32 %v559, %v515
  %v571 = vmul.f32 %v560, %v520
  %v572 = vmul.f32 %v561, %v525
  %v573 = vmul.f32 %v562, %v530
  %v574 = vmul.f32 %v563, %v535
  %v575 = vmul.f32 %v564, %v540
  %v576 = vmul.f32 %v565, %v490
  %v577 = vmul.f32 %v566, %v495
  %v578 = vmul.f32 %v567, %v500
  %v579 = vmul.f32 %v568, %v505
  %v580 = vmul.f32 %v569, %v510
  %v581 = vmul.f32 %v570, %v515
  %v582 = vmul.f32 %v571, %v520
  %v583 = vmul.f32 %v572, %v525
  %v584 = vmul.f32 %v573, %v530
  %v585 = vmul.f32 %v574, %v535
  %v586 = vmul.f32 %v575, %v540
  %v587 = vadd.f32 %v490, %v576
  %v588 = vadd.f32 %v495, %v577
  %v589 = vadd.f32 %v500, %v578
  %v590 = vadd.f32 %v505, %v579
  %v591 = vadd.f32 %v510, %v580
  %v592 = vadd.f32 %v515, %v581
  %v593 = vadd.f32 %v520, %v582
  %v594 = vadd.f32 %v525, %v583
  %v595 = vadd.f32 %v530, %v584
  %v596 = vadd.f32 %v535, %v585
  %v597 = vadd.f32 %v540, %v586
  %v598 = vmul.f32 %v587, 0.7978846
  %v599 = vmul.f32 %v588, 0.7978846
  %v600 = vmul.f32 %v589, 0.7978846
  %v601 = vmul.f32 %v590, 0.7978846
  %v602 = vmul.f32 %v591, 0.7978846
  %v603 = vmul.f32 %v592, 0.7978846
  %v604 = vmul.f32 %v593, 0.7978846
  %v605 = vmul.f32 %v594, 0.7978846
  %v606 = vmul.f32 %v595, 0.7978846
  %v607 = vmul.f32 %v596, 0.7978846
  %v608 = vmul.f32 %v597, 0.7978846
  %v609 = vtanh.pop %v598
  %v610 = vtanh.pop %v599
  %v611 = vtanh.pop %v600
  %v612 = vtanh.pop %v601
  %v613 = vtanh.pop %v602
  %v614 = vtanh.pop %v603
  %v615 = vtanh.pop %v604
  %v616 = vtanh.pop %v605
  %v617 = vtanh.pop %v606
  %v618 = vtanh.pop %v607
  %v619 = vtanh.pop %v608
  %v620 = vadd.f32 %v609, 1.0
  %v621 = vadd.f32 %v610, 1.0
  %v622 = vadd.f32 %v611, 1.0
  %v623 = vadd.f32 %v612, 1.0
  %v624 = vadd.f32 %v613, 1.0
  %v625 = vadd.f32 %v614, 1.0
  %v626 = vadd.f32 %v615, 1.0
  %v627 = vadd.f32 %v616, 1.0
  %v628 = vadd.f32 %v617, 1.0
  %v629 = vadd.f32 %v618, 1.0
  %v630 = vadd.f32 %v619, 1.0
  %v631 = vmul.f32 %v543, %v620
  %v632 = vmul.f32 %v544, %v621
  %v633 = vmul.f32 %v545, %v622
  %v634 = vmul.f32 %v546, %v623
  %v635 = vmul.f32 %v547, %v624
  %v636 = vmul.f32 %v548, %v625
  %v637 = vmul.f32 %v549, %v626
  %v638 = vmul.f32 %v550, %v627
  %v639 = vmul.f32 %v551, %v628
  %v640 = vmul.f32 %v552, %v629
  %v641 = vmul.f32 %v553, %v630
  %642 = vst [vmem:[%s3] sm:$0xff] %v631
  %643 = vst [vmem:[%s3 + $0x8] sm:$0xff] %v632
  %644 = vst [vmem:[%s3 + $0x10] sm:$0xff] %v633
  %645 = vst [vmem:[%s3 + $0x18] sm:$0xff] %v634
  %646 = vst [vmem:[%s3 + $0x20] sm:$0xff] %v635
  %647 = vst [vmem:[%s3 + $0x28] sm:$0xff] %v636
  %648 = vst [vmem:[%s3 + $0x30] sm:$0xff] %v637
  %649 = vst [vmem:[%s3 + $0x38] sm:$0xff] %v638
  %650 = vst [vmem:[%s3 + $0x40] sm:$0xff] %v639
  %651 = vst [vmem:[%s3 + $0x48] sm:$0xff] %v640
  %652 = vst [vmem:[%s3 + $0x50] sm:$0xff] %v641
  // Predicated region
  $region14: #{mrcnn_shhs_forward.12} parent=0 // pred_check
    _
  $region15: #{mrcnn_shhs_forward.12} parent=0 // pred_check_branch
    %654 = sbr.rel (0) target = $region17
  $region16: #{mrcnn_shhs_forward.12} parent=0 // pred_region
    _
  $region17: #{mrcnn_shhs_forward.12} parent=0 // pred_fallthru
    _
  // Predicated region
  $region18: #{mrcnn_shhs_forward.12} parent=0 // pred_check
    _
  $region19: #{mrcnn_shhs_forward.12} parent=0 // pred_check_branch
    %656 = sbr.rel (0) target = $region21
  $region20: #{mrcnn_shhs_forward.12} parent=0 // pred_region
    _
  $region21: #{mrcnn_shhs_forward.12} parent=0 // pred_fallthru
    _

// kernel: mrcnn_shhs_forward.7
$region0: #{mrcnn_shhs_forward.7}
  #allocation0 [shape = 'u32[]', space=smem, size = 0x4, offset = 0x4, fixed_abs, tag = 'smem constant byte address 0x4 - core index']
  #allocation1 [shape = 'u32[144,128]{1,0:T(1,128)}', space=vmem, size = 0x12000, scoped, tag = 'internal scratch']
  %s0 = inlined_call_operand.vmem [shape: f32[1280,50], index: 0, kind: input, shape index: {}]
  %s1 = inlined_call_operand.vmem [shape: f32[50,64], index: 1, kind: input, shape index: {}]
  %s2 = inlined_call_operand.vmem [shape: f32[1,64], index: 2, kind: input, shape index: {}]
  %s3 = inlined_call_operand.vmem [shape: f32[1280,64], index: 3, kind: output, shape index: {}]
  %s4 = sld [smem:[#allocation0]]
  $region45: #{mrcnn_shhs_forward.7} parent=0
    _
  %s6 = ssub.s32 1, %s4
  %s7 = scalar_select 0, %s6, %s4
  loop: start=0, step=1, limit=7
  $region2: #{mrcnn_shhs_forward.7} parent=0 // loop_pre_header
    _
  $region3: #{mrcnn_shhs_forward.7} parent=0 // loop_header
    %s9 = sphi 0, %s13
    %p10 = scmp.ge.s32.totalorder %s9, 7
    %s19 = sphi 0, %s21
    %s22 = sphi 0, %s19
    %s23 = sphi 0, %s22
    %s39 = sphi 0, %s23
    %s43 = sphi 0, %s43
    %s45 = sphi 0, %s43
    %s46 = sphi 0, %s45
    %s60 = sphi 0, %s46
    %s64 = sphi 0, %s64
    %s66 = sphi 0, %s64
    %s67 = sphi 0, %s66
    %s81 = sphi 0, %s67
    %s87 = sphi 0, %s89
    %s90 = sphi 0, %s87
    %s91 = sphi 0, %s90
    %s107 = sphi 0, %s91
  $region4: #{mrcnn_shhs_forward.7} parent=0 // loop_header_branch
    %12 = sbr.rel (%p10) target = $region8
  $region5: #{mrcnn_shhs_forward.7} parent=0 // loop_body
    %s14 = ssub.s32 %s9, 1
    %s15 = ssub.s32 %s9, 2
    %s16 = sadd.s32 %s9, 1
    %s17 = ssub.s32 %s9, %s16
    %p18 = scmp.eq.s32.totalorder %s17, 0
    %s20 = sadd.s32 %s19, 1
    %s21 = scalar_select %p18, %s19, %s20
    %p24 = pneg %p18
    %p25 = scmp.eq.s32.totalorder %s9, 4
    %p26 = por %p24, %p25
    %p27 = scmp.ne.s32.totalorder %s19, %s22
    %p28 = scmp.eq.s32.totalorder %s9, 0
    %p29 = por %p27, %p28
    %p30 = scmp.ne.s32.totalorder %s19, %s22
    %p31 = scmp.eq.s32.totalorder %s14, 4
    %p32 = por %p30, %p31
    %p33 = scmp.ne.s32.totalorder %s22, %s23
    %p34 = scmp.eq.s32.totalorder %s14, 0
    %p35 = por %p33, %p34
    %p36 = scmp.ne.s32.totalorder %s22, %s23
    %p37 = scmp.eq.s32.totalorder %s15, 4
    %p38 = por %p36, %p37
    %p40 = scmp.ne.s32.totalorder %s23, %s39
    %p41 = scmp.eq.s32.totalorder %s15, 0
    %p42 = por %p40, %p41
    %s44 = sadd.s32 %s43, 1
    %p47 = scmp.eq.s32.totalorder %s9, 4
    %p48 = scmp.ne.s32.totalorder %s43, %s45
    %p49 = scmp.eq.s32.totalorder %s9, 0
    %p50 = por %p48, %p49
    %p51 = scmp.ne.s32.totalorder %s43, %s45
    %p52 = scmp.eq.s32.totalorder %s14, 4
    %p53 = por %p51, %p52
    %p54 = scmp.ne.s32.totalorder %s45, %s46
    %p55 = scmp.eq.s32.totalorder %s14, 0
    %p56 = por %p54, %p55
    %p57 = scmp.ne.s32.totalorder %s45, %s46
    %p58 = scmp.eq.s32.totalorder %s15, 4
    %p59 = por %p57, %p58
    %p61 = scmp.ne.s32.totalorder %s46, %s60
    %p62 = scmp.eq.s32.totalorder %s15, 0
    %p63 = por %p61, %p62
    %s65 = sadd.s32 %s64, 1
    %p68 = scmp.eq.s32.totalorder %s9, 4
    %p69 = scmp.ne.s32.totalorder %s64, %s66
    %p70 = scmp.eq.s32.totalorder %s9, 0
    %p71 = por %p69, %p70
    %p72 = scmp.ne.s32.totalorder %s64, %s66
    %p73 = scmp.eq.s32.totalorder %s14, 4
    %p74 = por %p72, %p73
    %p75 = scmp.ne.s32.totalorder %s66, %s67
    %p76 = scmp.eq.s32.totalorder %s14, 0
    %p77 = por %p75, %p76
    %p78 = scmp.ne.s32.totalorder %s66, %s67
    %p79 = scmp.eq.s32.totalorder %s15, 4
    %p80 = por %p78, %p79
    %p82 = scmp.ne.s32.totalorder %s67, %s81
    %p83 = scmp.eq.s32.totalorder %s15, 0
    %p84 = por %p82, %p83
    %s85 = ssub.s32 %s9, %s16
    %p86 = scmp.eq.s32.totalorder %s85, 0
    %s88 = sadd.s32 %s87, 1
    %s89 = scalar_select %p86, %s87, %s88
    %p92 = pneg %p86
    %p93 = scmp.eq.s32.totalorder %s9, 4
    %p94 = por %p92, %p93
    %p95 = scmp.ne.s32.totalorder %s87, %s90
    %p96 = scmp.eq.s32.totalorder %s9, 0
    %p97 = por %p95, %p96
    %p98 = scmp.ne.s32.totalorder %s87, %s90
    %p99 = scmp.eq.s32.totalorder %s14, 4
    %p100 = por %p98, %p99
    %p101 = scmp.ne.s32.totalorder %s90, %s91
    %p102 = scmp.eq.s32.totalorder %s14, 0
    %p103 = por %p101, %p102
    %p104 = scmp.ne.s32.totalorder %s90, %s91
    %p105 = scmp.eq.s32.totalorder %s15, 4
    %p106 = por %p104, %p105
    %p108 = scmp.ne.s32.totalorder %s91, %s107
    %p109 = scmp.eq.s32.totalorder %s15, 0
    %p110 = por %p108, %p109
    %p111 = scmp.le.s32.totalorder 1, %s9
    %p112 = scmp.lt.s32.totalorder %s9, 6
    %p113 = pnand %p111, %p112
    %p114 = pneg %p113
    // Predicated region
    $region9: #{mrcnn_shhs_forward.7} parent=5 // pred_check
      _
    $region10: #{mrcnn_shhs_forward.7} parent=5 // pred_check_branch
      %116 = sbr.rel (%p113) target = $region12
    $region11: #{mrcnn_shhs_forward.7} parent=5 // pred_region
      %s117 = ssub.s32 %s9, 1
      // Predicated region
      $region13: #{mrcnn_shhs_forward.7} parent=11 // pred_check
        %p118 = pneg %p56
      $region14: #{mrcnn_shhs_forward.7} parent=11 // pred_check_branch
        %120 = sbr.rel (%p118) target = $region16
      $region15: #{mrcnn_shhs_forward.7} parent=11 // pred_region
        _
      $region16: #{mrcnn_shhs_forward.7} parent=11 // pred_fallthru
        _
      // Predicated region
      $region17: #{mrcnn_shhs_forward.7} parent=11 // pred_check
        %p121 = pneg %p77
      $region18: #{mrcnn_shhs_forward.7} parent=11 // pred_check_branch
        %123 = sbr.rel (%p121) target = $region20
      $region19: #{mrcnn_shhs_forward.7} parent=11 // pred_region
        _
      $region20: #{mrcnn_shhs_forward.7} parent=11 // pred_fallthru
        _
    $region12: #{mrcnn_shhs_forward.7} parent=5 // pred_fallthru
      _
    %p124 = scmp.lt.s32.totalorder %s9, 5
    // Predicated region
    $region21: #{mrcnn_shhs_forward.7} parent=5 // pred_check
      %p125 = pneg %p124
    $region22: #{mrcnn_shhs_forward.7} parent=5 // pred_check_branch
      %127 = sbr.rel (%p125) target = $region24
    $region23: #{mrcnn_shhs_forward.7} parent=5 // pred_region
      // Predicated region
      $region25: #{mrcnn_shhs_forward.7} parent=23 // pred_check
        %p128 = pneg %p29
      $region26: #{mrcnn_shhs_forward.7} parent=23 // pred_check_branch
        %130 = sbr.rel (%p128) target = $region28
      $region27: #{mrcnn_shhs_forward.7} parent=23 // pred_region
        %s131 = smul.u32 32, %s9
        %p132 = scmp.lt.s32.totalorder %s131, 159
        %s133 = scalar_select %p132, %s131, 159
        %s134 = smul.addr %s133, 8
        %s135 = scalar_lea.vmem %s0, %s134
        %s136 = smul.u32 32, %s9
      $region28: #{mrcnn_shhs_forward.7} parent=23 // pred_fallthru
        _
    $region24: #{mrcnn_shhs_forward.7} parent=5 // pred_fallthru
      _
    %p137 = scmp.le.s32.totalorder 1, %s9
    %p138 = scmp.lt.s32.totalorder %s9, 6
    %p139 = pnand %p137, %p138
    %p140 = pneg %p139
    // Predicated region
    $region29: #{mrcnn_shhs_forward.7} parent=5 // pred_check
      _
    $region30: #{mrcnn_shhs_forward.7} parent=5 // pred_check_branch
      %142 = sbr.rel (%p139) target = $region32
    $region31: #{mrcnn_shhs_forward.7} parent=5 // pred_region
      %s143 = ssub.s32 %s9, 1
      %s144 = smul.u32 32, %s14
      %p145 = scmp.lt.s32.totalorder %s144, 159
      %s146 = scalar_select %p145, %s144, 159
      %s147 = smul.addr %s146, 8
      %s148 = scalar_lea.vmem %s0, %s147
      %p149 = pneg %p35
      %p150 = pneg %p32
      %p151 = pneg %p56
      %p152 = pneg %p53
      %p153 = pneg %p77
      %p154 = pneg %p74
      %p155 = pneg %p103
      %p156 = pneg %p100
      %s157 = smul.u32 32, %s14
      %p158 = scmp.lt.s32.totalorder %s157, 159
      %s159 = scalar_select %p158, %s157, 159
      %s160 = smul.addr %s159, 8
      %s161 = scalar_lea.vmem %s3, %s160
      %s162 = smul.u32 32, %s14
      %p163 = scmp.lt.s32.totalorder %s162, 159
      %s164 = scalar_select %p163, %s162, 159
      %s165 = smul.addr %s164, 8
      %s166 = scalar_lea.vmem %s0, %s165
      %s167 = smul.u32 32, %s14
      %s168 = smul.u32 32, %s14
      %p169 = scmp.lt.s32.totalorder %s168, 159
      %s170 = scalar_select %p169, %s168, 159
      %s171 = smul.addr %s170, 8
      %s172 = scalar_lea.vmem %s3, %s171
      %s173 = smul.u32 32, %s14
      %v174 = vld [vmem:[%s166] sm:$0xff]
      %v175 = vld [vmem:[%s166 + $0x8] sm:$0xff]
      %v176 = vld [vmem:[%s166 + $0x10] sm:$0xff]
      %v177 = vld [vmem:[%s166 + $0x18] sm:$0xff]
      %v178 = vld [vmem:[%s166 + $0x20] sm:$0xff]
      %v179 = vld [vmem:[%s166 + $0x28] sm:$0xff]
      %v180 = vld [vmem:[%s166 + $0x30] sm:$0xff]
      %v181 = vld [vmem:[%s166 + $0x38] sm:$0xff]
      %v182 = vld [vmem:[%s166 + $0x40] sm:$0xff]
      %v183 = vld [vmem:[%s166 + $0x48] sm:$0xff]
      %v184 = vld [vmem:[%s166 + $0x50] sm:$0xff]
      %v185 = vld [vmem:[%s166 + $0x58] sm:$0xff]
      %v186 = vld [vmem:[%s166 + $0x60] sm:$0xff]
      %v187 = vld [vmem:[%s166 + $0x68] sm:$0xff]
      %v188 = vld [vmem:[%s166 + $0x70] sm:$0xff]
      %v189 = vld [vmem:[%s166 + $0x78] sm:$0xff]
      %v190 = vld [vmem:[%s166 + $0x80] sm:$0xff]
      %v191 = vld [vmem:[%s166 + $0x88] sm:$0xff]
      %v192 = vld [vmem:[%s166 + $0x90] sm:$0xff]
      %v193 = vld [vmem:[%s166 + $0x98] sm:$0xff]
      %v194 = vld [vmem:[%s166 + $0xa0] sm:$0xff]
      %v195 = vld [vmem:[%s166 + $0xa8] sm:$0xff]
      %v196 = vld [vmem:[%s166 + $0xb0] sm:$0xff]
      %v197 = vld [vmem:[%s166 + $0xb8] sm:$0xff]
      %v198 = vld [vmem:[%s166 + $0xc0] sm:$0xff]
      %v199 = vld [vmem:[%s166 + $0xc8] sm:$0xff]
      %v200 = vld [vmem:[%s166 + $0xd0] sm:$0xff]
      %v201 = vld [vmem:[%s166 + $0xd8] sm:$0xff]
      %v202 = vld [vmem:[%s166 + $0xe0] sm:$0xff]
      %v203 = vld [vmem:[%s166 + $0xe8] sm:$0xff]
      %v204 = vld [vmem:[%s166 + $0xf0] sm:$0xff]
      %v205 = vld [vmem:[%s166 + $0xf8] sm:$0xff]
      %v206 = vld [vmem:[%s1] sm:$0xff]
      %v207 = vld [vmem:[%s1 + $0x8] sm:$0xff]
      %v208 = vld [vmem:[%s1 + $0x10] sm:$0xff]
      %v209 = vld [vmem:[%s1 + $0x18] sm:$0xff]
      %v210 = vld [vmem:[%s1 + $0x20] sm:$0xff]
      %v211 = vld [vmem:[%s1 + $0x28] sm:$0xff]
      %v212 = vld [vmem:[%s1 + $0x30] sm:$0x3]
      %v213 = vld [vmem:[%s2] sm:$0x1]
      %v215 = vlaneseq
      %v216 = vshrl.u32 %v215, 7
      %v217 = vsub.s32 0, %v216
      %v218 = vrot.slane %v213, %v217
      %vm220 = vcmask 408576
      %v222 = vsel %vm220, %v174, 0
      %v225 = vsel %vm220, %v175, 0
      %v228 = vsel %vm220, %v176, 0
      %v231 = vsel %vm220, %v177, 0
      %v234 = vsel %vm220, %v178, 0
      %v237 = vsel %vm220, %v179, 0
      %v240 = vsel %vm220, %v180, 0
      %v243 = vsel %vm220, %v181, 0
      %v246 = vsel %vm220, %v182, 0
      %v249 = vsel %vm220, %v183, 0
      %v252 = vsel %vm220, %v184, 0
      %v255 = vsel %vm220, %v185, 0
      %v258 = vsel %vm220, %v186, 0
      %v261 = vsel %vm220, %v187, 0
      %v264 = vsel %vm220, %v188, 0
      %v267 = vsel %vm220, %v189, 0
      %v270 = vsel %vm220, %v190, 0
      %v273 = vsel %vm220, %v191, 0
      %v276 = vsel %vm220, %v192, 0
      %v279 = vsel %vm220, %v193, 0
      %v282 = vsel %vm220, %v194, 0
      %v285 = vsel %vm220, %v195, 0
      %v288 = vsel %vm220, %v196, 0
      %v291 = vsel %vm220, %v197, 0
      %v294 = vsel %vm220, %v198, 0
      %v297 = vsel %vm220, %v199, 0
      %v300 = vsel %vm220, %v200, 0
      %v303 = vsel %vm220, %v201, 0
      %v306 = vsel %vm220, %v202, 0
      %v309 = vsel %vm220, %v203, 0
      %v312 = vsel %vm220, %v204, 0
      %v315 = vsel %vm220, %v205, 0
      %vm317 = vcmask 1041408
      %v319 = vsel %vm317, %v212, 0
      %321 = vmatprep.subr.mxu0 0.0
      %322 = vmatpush1.msra.mxu0 %v206
      %323 = vmatprep.subr.mxu0 0.0
      %324 = vmatpush1.msra.mxu0 %v207
      %325 = vmatprep.subr.mxu0 0.0
      %326 = vmatpush1.msra.mxu0 %v208
      %327 = vmatprep.subr.mxu0 0.0
      %328 = vmatpush1.msra.mxu0 %v209
      %329 = vmatprep.subr.mxu0 0.0
      %330 = vmatpush1.msra.mxu0 %v210
      %331 = vmatprep.subr.mxu0 0.0
      %332 = vmatpush1.msra.mxu0 %v211
      %333 = vmatprep.subr.mxu0 0.0
      %334 = vmatpush1.msra.mxu0 %v319
      %335 = vmatprep.subr.mxu0 0.0
      %336 = vmatpush1.msra.mxu0 0.0
      %337 = vmatprep.subr.mxu0 0.0
      %338 = vmatpush1.msra.mxu0 0.0
      %339 = vmatprep.subr.mxu0 0.0
      %340 = vmatpush1.msra.mxu0 0.0
      %341 = vmatprep.subr.mxu0 0.0
      %342 = vmatpush1.msra.mxu0 0.0
      %343 = vmatprep.subr.mxu0 0.0
      %344 = vmatpush1.msra.mxu0 0.0
      %345 = vmatprep.subr.mxu0 0.0
      %346 = vmatpush1.msra.mxu0 0.0
      %347 = vmatprep.subr.mxu0 0.0
      %348 = vmatpush1.msra.mxu0 0.0
      %349 = vmatprep.subr.mxu0 0.0
      %350 = vmatpush1.msra.mxu0 0.0
      %351 = vmatprep.subr.mxu0 0.0
      %352 = vmatpush1.msra.mxu0 0.0
      %353 = vmatprep.subr.mxu0 0.0
      %354 = vmatpush1.msra.mxu0 0.0
      %355 = vmatprep.subr.mxu0 0.0
      %356 = vmatpush1.msra.mxu0 0.0
      %357 = vmatprep.subr.mxu0 0.0
      %358 = vmatpush1.msra.mxu0 0.0
      %359 = vmatprep.subr.mxu0 0.0
      %360 = vmatpush1.msra.mxu0 0.0
      %361 = vmatprep.subr.mxu0 0.0
      %362 = vmatpush1.msra.mxu0 0.0
      %363 = vmatprep.subr.mxu0 0.0
      %364 = vmatpush1.msra.mxu0 0.0
      %365 = vmatprep.subr.mxu0 0.0
      %366 = vmatpush1.msra.mxu0 0.0
      %367 = vmatprep.subr.mxu0 0.0
      %368 = vmatpush1.msra.mxu0 0.0
      %369 = vmatprep.subr.mxu0 0.0
      %370 = vmatpush1.msra.mxu0 0.0
      %371 = vmatprep.subr.mxu0 0.0
      %372 = vmatpush1.msra.mxu0 0.0
      %373 = vmatprep.subr.mxu0 0.0
      %374 = vmatpush1.msra.mxu0 0.0
      %375 = vmatprep.subr.mxu0 0.0
      %376 = vmatpush1.msra.mxu0 0.0
      %377 = vmatprep.subr.mxu0 0.0
      %378 = vmatpush1.msra.mxu0 0.0
      %379 = vmatprep.subr.mxu0 0.0
      %380 = vmatpush1.msra.mxu0 0.0
      %381 = vmatprep.subr.mxu0 0.0
      %382 = vmatpush1.msra.mxu0 0.0
      %383 = vmatprep.subr.mxu0 0.0
      %384 = vmatpush1.msra.mxu0 0.0
      %385 = vmatprep.mubr.f32.mxu0 0.0
      %386 = vmatmul.mubr.f32.gmra.mrb[0].mxu0 %v222
      %v387 = vpop.f32.mrb[0].mxu0
      %v388 = vadd.f32 %v218, %v387
      %v389 = vpop.f32.mrb[0].mxu0
      %390 = vmatprep.mubr.f32.mxu0 0.0
      %391 = vmatmul.mubr.f32.gmra.mrb[0].mxu0 %v225
      %v392 = vpop.f32.mrb[0].mxu0
      %v393 = vadd.f32 %v218, %v392
      %v394 = vpop.f32.mrb[0].mxu0
      %395 = vmatprep.mubr.f32.mxu0 0.0
      %396 = vmatmul.mubr.f32.gmra.mrb[0].mxu0 %v228
      %v397 = vpop.f32.mrb[0].mxu0
      %v398 = vadd.f32 %v218, %v397
      %v399 = vpop.f32.mrb[0].mxu0
      %400 = vmatprep.mubr.f32.mxu0 0.0
      %401 = vmatmul.mubr.f32.gmra.mrb[0].mxu0 %v231
      %v402 = vpop.f32.mrb[0].mxu0
      %v403 = vadd.f32 %v218, %v402
      %v404 = vpop.f32.mrb[0].mxu0
      %405 = vmatprep.mubr.f32.mxu0 0.0
      %406 = vmatmul.mubr.f32.gmra.mrb[0].mxu0 %v234
      %v407 = vpop.f32.mrb[0].mxu0
      %v408 = vadd.f32 %v218, %v407
      %v409 = vpop.f32.mrb[0].mxu0
      %410 = vmatprep.mubr.f32.mxu0 0.0
      %411 = vmatmul.mubr.f32.gmra.mrb[0].mxu0 %v237
      %v412 = vpop.f32.mrb[0].mxu0
      %v413 = vadd.f32 %v218, %v412
      %v414 = vpop.f32.mrb[0].mxu0
      %415 = vmatprep.mubr.f32.mxu0 0.0
      %416 = vmatmul.mubr.f32.gmra.mrb[0].mxu0 %v240
      %v417 = vpop.f32.mrb[0].mxu0
      %v418 = vadd.f32 %v218, %v417
      %v419 = vpop.f32.mrb[0].mxu0
      %420 = vmatprep.mubr.f32.mxu0 0.0
      %421 = vmatmul.mubr.f32.gmra.mrb[0].mxu0 %v243
      %v422 = vpop.f32.mrb[0].mxu0
      %v423 = vadd.f32 %v218, %v422
      %v424 = vpop.f32.mrb[0].mxu0
      %425 = vmatprep.mubr.f32.mxu0 0.0
      %426 = vmatmul.mubr.f32.gmra.mrb[0].mxu0 %v246
      %v427 = vpop.f32.mrb[0].mxu0
      %v428 = vadd.f32 %v218, %v427
      %v429 = vpop.f32.mrb[0].mxu0
      %430 = vmatprep.mubr.f32.mxu0 0.0
      %431 = vmatmul.mubr.f32.gmra.mrb[0].mxu0 %v249
      %v432 = vpop.f32.mrb[0].mxu0
      %v433 = vadd.f32 %v218, %v432
      %v434 = vpop.f32.mrb[0].mxu0
      %435 = vmatprep.mubr.f32.mxu0 0.0
      %436 = vmatmul.mubr.f32.gmra.mrb[0].mxu0 %v252
      %v437 = vpop.f32.mrb[0].mxu0
      %v438 = vadd.f32 %v218, %v437
      %v439 = vpop.f32.mrb[0].mxu0
      %440 = vmatprep.mubr.f32.mxu0 0.0
      %441 = vmatmul.mubr.f32.gmra.mrb[0].mxu0 %v255
      %v442 = vpop.f32.mrb[0].mxu0
      %v443 = vadd.f32 %v218, %v442
      %v444 = vpop.f32.mrb[0].mxu0
      %445 = vmatprep.mubr.f32.mxu0 0.0
      %446 = vmatmul.mubr.f32.gmra.mrb[0].mxu0 %v258
      %v447 = vpop.f32.mrb[0].mxu0
      %v448 = vadd.f32 %v218, %v447
      %v449 = vpop.f32.mrb[0].mxu0
      %450 = vmatprep.mubr.f32.mxu0 0.0
      %451 = vmatmul.mubr.f32.gmra.mrb[0].mxu0 %v261
      %v452 = vpop.f32.mrb[0].mxu0
      %v453 = vadd.f32 %v218, %v452
      %v454 = vpop.f32.mrb[0].mxu0
      %455 = vmatprep.mubr.f32.mxu0 0.0
      %456 = vmatmul.mubr.f32.gmra.mrb[0].mxu0 %v264
      %v457 = vpop.f32.mrb[0].mxu0
      %v458 = vadd.f32 %v218, %v457
      %v459 = vpop.f32.mrb[0].mxu0
      %460 = vmatprep.mubr.f32.mxu0 0.0
      %461 = vmatmul.mubr.f32.gmra.mrb[0].mxu0 %v267
      %v462 = vpop.f32.mrb[0].mxu0
      %v463 = vadd.f32 %v218, %v462
      %v464 = vpop.f32.mrb[0].mxu0
      %465 = vmatprep.mubr.f32.mxu0 0.0
      %466 = vmatmul.mubr.f32.gmra.mrb[0].mxu0 %v270
      %v467 = vpop.f32.mrb[0].mxu0
      %v468 = vadd.f32 %v218, %v467
      %v469 = vpop.f32.mrb[0].mxu0
      %470 = vmatprep.mubr.f32.mxu0 0.0
      %471 = vmatmul.mubr.f32.gmra.mrb[0].mxu0 %v273
      %v472 = vpop.f32.mrb[0].mxu0
      %v473 = vadd.f32 %v218, %v472
      %v474 = vpop.f32.mrb[0].mxu0
      %475 = vmatprep.mubr.f32.mxu0 0.0
      %476 = vmatmul.mubr.f32.gmra.mrb[0].mxu0 %v276
      %v477 = vpop.f32.mrb[0].mxu0
      %v478 = vadd.f32 %v218, %v477
      %v479 = vpop.f32.mrb[0].mxu0
      %480 = vmatprep.mubr.f32.mxu0 0.0
      %481 = vmatmul.mubr.f32.gmra.mrb[0].mxu0 %v279
      %v482 = vpop.f32.mrb[0].mxu0
      %v483 = vadd.f32 %v218, %v482
      %v484 = vpop.f32.mrb[0].mxu0
      %485 = vmatprep.mubr.f32.mxu0 0.0
      %486 = vmatmul.mubr.f32.gmra.mrb[0].mxu0 %v282
      %v487 = vpop.f32.mrb[0].mxu0
      %v488 = vadd.f32 %v218, %v487
      %v489 = vpop.f32.mrb[0].mxu0
      %490 = vmatprep.mubr.f32.mxu0 0.0
      %491 = vmatmul.mubr.f32.gmra.mrb[0].mxu0 %v285
      %v492 = vpop.f32.mrb[0].mxu0
      %v493 = vadd.f32 %v218, %v492
      %v494 = vpop.f32.mrb[0].mxu0
      %495 = vmatprep.mubr.f32.mxu0 0.0
      %496 = vmatmul.mubr.f32.gmra.mrb[0].mxu0 %v288
      %v497 = vpop.f32.mrb[0].mxu0
      %v498 = vadd.f32 %v218, %v497
      %v499 = vpop.f32.mrb[0].mxu0
      %500 = vmatprep.mubr.f32.mxu0 0.0
      %501 = vmatmul.mubr.f32.gmra.mrb[0].mxu0 %v291
      %v502 = vpop.f32.mrb[0].mxu0
      %v503 = vadd.f32 %v218, %v502
      %v504 = vpop.f32.mrb[0].mxu0
      %505 = vmatprep.mubr.f32.mxu0 0.0
      %506 = vmatmul.mubr.f32.gmra.mrb[0].mxu0 %v294
      %v507 = vpop.f32.mrb[0].mxu0
      %v508 = vadd.f32 %v218, %v507
      %v509 = vpop.f32.mrb[0].mxu0
      %510 = vmatprep.mubr.f32.mxu0 0.0
      %511 = vmatmul.mubr.f32.gmra.mrb[0].mxu0 %v297
      %v512 = vpop.f32.mrb[0].mxu0
      %v513 = vadd.f32 %v218, %v512
      %v514 = vpop.f32.mrb[0].mxu0
      %515 = vmatprep.mubr.f32.mxu0 0.0
      %516 = vmatmul.mubr.f32.gmra.mrb[0].mxu0 %v300
      %v517 = vpop.f32.mrb[0].mxu0
      %v518 = vadd.f32 %v218, %v517
      %v519 = vpop.f32.mrb[0].mxu0
      %520 = vmatprep.mubr.f32.mxu0 0.0
      %521 = vmatmul.mubr.f32.gmra.mrb[0].mxu0 %v303
      %v522 = vpop.f32.mrb[0].mxu0
      %v523 = vadd.f32 %v218, %v522
      %v524 = vpop.f32.mrb[0].mxu0
      %525 = vmatprep.mubr.f32.mxu0 0.0
      %526 = vmatmul.mubr.f32.gmra.mrb[0].mxu0 %v306
      %v527 = vpop.f32.mrb[0].mxu0
      %v528 = vadd.f32 %v218, %v527
      %v529 = vpop.f32.mrb[0].mxu0
      %530 = vmatprep.mubr.f32.mxu0 0.0
      %531 = vmatmul.mubr.f32.gmra.mrb[0].mxu0 %v309
      %v532 = vpop.f32.mrb[0].mxu0
      %v533 = vadd.f32 %v218, %v532
      %v534 = vpop.f32.mrb[0].mxu0
      %535 = vmatprep.mubr.f32.mxu0 0.0
      %536 = vmatmul.mubr.f32.gmra.mrb[0].mxu0 %v312
      %v537 = vpop.f32.mrb[0].mxu0
      %v538 = vadd.f32 %v218, %v537
      %v539 = vpop.f32.mrb[0].mxu0
      %540 = vmatprep.mubr.f32.mxu0 0.0
      %541 = vmatmul.mubr.f32.gmra.mrb[0].mxu0 %v315
      %v542 = vpop.f32.mrb[0].mxu0
      %v543 = vadd.f32 %v218, %v542
      %v544 = vpop.f32.mrb[0].mxu0
      %545 = vdwg.mxu0
      %v546 = vmul.f32 %v388, 0.5
      %v547 = vmul.f32 %v393, 0.5
      %v548 = vmul.f32 %v398, 0.5
      %v549 = vmul.f32 %v403, 0.5
      %v550 = vmul.f32 %v408, 0.5
      %v551 = vmul.f32 %v413, 0.5
      %v552 = vmul.f32 %v418, 0.5
      %v553 = vmul.f32 %v423, 0.5
      %v554 = vmul.f32 %v428, 0.5
      %v555 = vmul.f32 %v433, 0.5
      %v556 = vmul.f32 %v438, 0.5
      %v557 = vmul.f32 %v443, 0.5
      %v558 = vmul.f32 %v448, 0.5
      %v559 = vmul.f32 %v453, 0.5
      %v560 = vmul.f32 %v458, 0.5
      %v561 = vmul.f32 %v463, 0.5
      %v562 = vmul.f32 %v468, 0.5
      %v563 = vmul.f32 %v473, 0.5
      %v564 = vmul.f32 %v478, 0.5
      %v565 = vmul.f32 %v483, 0.5
      %v566 = vmul.f32 %v488, 0.5
      %v567 = vmul.f32 %v493, 0.5
      %v568 = vmul.f32 %v498, 0.5
      %v569 = vmul.f32 %v503, 0.5
      %v570 = vmul.f32 %v508, 0.5
      %v571 = vmul.f32 %v513, 0.5
      %v572 = vmul.f32 %v518, 0.5
      %v573 = vmul.f32 %v523, 0.5
      %v574 = vmul.f32 %v528, 0.5
      %v575 = vmul.f32 %v533, 0.5
      %v576 = vmul.f32 %v538, 0.5
      %v577 = vmul.f32 %v543, 0.5
      %v578 = vmul.f32 %v388, 0.044715
      %v579 = vmul.f32 %v393, 0.044715
      %v580 = vmul.f32 %v398, 0.044715
      %v581 = vmul.f32 %v403, 0.044715
      %v582 = vmul.f32 %v408, 0.044715
      %v583 = vmul.f32 %v413, 0.044715
      %v584 = vmul.f32 %v418, 0.044715
      %v585 = vmul.f32 %v423, 0.044715
      %v586 = vmul.f32 %v428, 0.044715
      %v587 = vmul.f32 %v433, 0.044715
      %v588 = vmul.f32 %v438, 0.044715
      %v589 = vmul.f32 %v443, 0.044715
      %v590 = vmul.f32 %v448, 0.044715
      %v591 = vmul.f32 %v453, 0.044715
      %v592 = vmul.f32 %v458, 0.044715
      %v593 = vmul.f32 %v463, 0.044715
      %v594 = vmul.f32 %v468, 0.044715
      %v595 = vmul.f32 %v473, 0.044715
      %v596 = vmul.f32 %v478, 0.044715
      %v597 = vmul.f32 %v483, 0.044715
      %v598 = vmul.f32 %v488, 0.044715
      %v599 = vmul.f32 %v493, 0.044715
      %v600 = vmul.f32 %v498, 0.044715
      %v601 = vmul.f32 %v503, 0.044715
      %v602 = vmul.f32 %v508, 0.044715
      %v603 = vmul.f32 %v513, 0.044715
      %v604 = vmul.f32 %v518, 0.044715
      %v605 = vmul.f32 %v523, 0.044715
      %v606 = vmul.f32 %v528, 0.044715
      %v607 = vmul.f32 %v533, 0.044715
      %v608 = vmul.f32 %v538, 0.044715
      %v609 = vmul.f32 %v543, 0.044715
      %v610 = vmul.f32 %v578, %v388
      %v611 = vmul.f32 %v579, %v393
      %v612 = vmul.f32 %v580, %v398
      %v613 = vmul.f32 %v581, %v403
      %v614 = vmul.f32 %v582, %v408
      %v615 = vmul.f32 %v583, %v413
      %v616 = vmul.f32 %v584, %v418
      %v617 = vmul.f32 %v585, %v423
      %v618 = vmul.f32 %v586, %v428
      %v619 = vmul.f32 %v587, %v433
      %v620 = vmul.f32 %v588, %v438
      %v621 = vmul.f32 %v589, %v443
      %v622 = vmul.f32 %v590, %v448
      %v623 = vmul.f32 %v591, %v453
      %v624 = vmul.f32 %v592, %v458
      %v625 = vmul.f32 %v593, %v463
      %v626 = vmul.f32 %v594, %v468
      %v627 = vmul.f32 %v595, %v473
      %v628 = vmul.f32 %v596, %v478
      %v629 = vmul.f32 %v597, %v483
      %v630 = vmul.f32 %v598, %v488
      %v631 = vmul.f32 %v599, %v493
      %v632 = vmul.f32 %v600, %v498
      %v633 = vmul.f32 %v601, %v503
      %v634 = vmul.f32 %v602, %v508
      %v635 = vmul.f32 %v603, %v513
      %v636 = vmul.f32 %v604, %v518
      %v637 = vmul.f32 %v605, %v523
      %v638 = vmul.f32 %v606, %v528
      %v639 = vmul.f32 %v607, %v533
      %v640 = vmul.f32 %v608, %v538
      %v641 = vmul.f32 %v609, %v543
      %v642 = vmul.f32 %v610, %v388
      %v643 = vmul.f32 %v611, %v393
      %v644 = vmul.f32 %v612, %v398
      %v645 = vmul.f32 %v613, %v403
      %v646 = vmul.f32 %v614, %v408
      %v647 = vmul.f32 %v615, %v413
      %v648 = vmul.f32 %v616, %v418
      %v649 = vmul.f32 %v617, %v423
      %v650 = vmul.f32 %v618, %v428
      %v651 = vmul.f32 %v619, %v433
      %v652 = vmul.f32 %v620, %v438
      %v653 = vmul.f32 %v621, %v443
      %v654 = vmul.f32 %v622, %v448
      %v655 = vmul.f32 %v623, %v453
      %v656 = vmul.f32 %v624, %v458
      %v657 = vmul.f32 %v625, %v463
      %v658 = vmul.f32 %v626, %v468
      %v659 = vmul.f32 %v627, %v473
      %v660 = vmul.f32 %v628, %v478
      %v661 = vmul.f32 %v629, %v483
      %v662 = vmul.f32 %v630, %v488
      %v663 = vmul.f32 %v631, %v493
      %v664 = vmul.f32 %v632, %v498
      %v665 = vmul.f32 %v633, %v503
      %v666 = vmul.f32 %v634, %v508
      %v667 = vmul.f32 %v635, %v513
      %v668 = vmul.f32 %v636, %v518
      %v669 = vmul.f32 %v637, %v523
      %v670 = vmul.f32 %v638, %v528
      %v671 = vmul.f32 %v639, %v533
      %v672 = vmul.f32 %v640, %v538
      %v673 = vmul.f32 %v641, %v543
      %v674 = vadd.f32 %v388, %v642
      %v675 = vadd.f32 %v393, %v643
      %v676 = vadd.f32 %v398, %v644
      %v677 = vadd.f32 %v403, %v645
      %v678 = vadd.f32 %v408, %v646
      %v679 = vadd.f32 %v413, %v647
      %v680 = vadd.f32 %v418, %v648
      %v681 = vadd.f32 %v423, %v649
      %v682 = vadd.f32 %v428, %v650
      %v683 = vadd.f32 %v433, %v651
      %v684 = vadd.f32 %v438, %v652
      %v685 = vadd.f32 %v443, %v653
      %v686 = vadd.f32 %v448, %v654
      %v687 = vadd.f32 %v453, %v655
      %v688 = vadd.f32 %v458, %v656
      %v689 = vadd.f32 %v463, %v657
      %v690 = vadd.f32 %v468, %v658
      %v691 = vadd.f32 %v473, %v659
      %v692 = vadd.f32 %v478, %v660
      %v693 = vadd.f32 %v483, %v661
      %v694 = vadd.f32 %v488, %v662
      %v695 = vadd.f32 %v493, %v663
      %v696 = vadd.f32 %v498, %v664
      %v697 = vadd.f32 %v503, %v665
      %v698 = vadd.f32 %v508, %v666
      %v699 = vadd.f32 %v513, %v667
      %v700 = vadd.f32 %v518, %v668
      %v701 = vadd.f32 %v523, %v669
      %v702 = vadd.f32 %v528, %v670
      %v703 = vadd.f32 %v533, %v671
      %v704 = vadd.f32 %v538, %v672
      %v705 = vadd.f32 %v543, %v673
      %v706 = vmul.f32 %v674, 0.7978846
      %v707 = vmul.f32 %v675, 0.7978846
      %v708 = vmul.f32 %v676, 0.7978846
      %v709 = vmul.f32 %v677, 0.7978846
      %v710 = vmul.f32 %v678, 0.7978846
      %v711 = vmul.f32 %v679, 0.7978846
      %v712 = vmul.f32 %v680, 0.7978846
      %v713 = vmul.f32 %v681, 0.7978846
      %v714 = vmul.f32 %v682, 0.7978846
      %v715 = vmul.f32 %v683, 0.7978846
      %v716 = vmul.f32 %v684, 0.7978846
      %v717 = vmul.f32 %v685, 0.7978846
      %v718 = vmul.f32 %v686, 0.7978846
      %v719 = vmul.f32 %v687, 0.7978846
      %v720 = vmul.f32 %v688, 0.7978846
      %v721 = vmul.f32 %v689, 0.7978846
      %v722 = vmul.f32 %v690, 0.7978846
      %v723 = vmul.f32 %v691, 0.7978846
      %v724 = vmul.f32 %v692, 0.7978846
      %v725 = vmul.f32 %v693, 0.7978846
      %v726 = vmul.f32 %v694, 0.7978846
      %v727 = vmul.f32 %v695, 0.7978846
      %v728 = vmul.f32 %v696, 0.7978846
      %v729 = vmul.f32 %v697, 0.7978846
      %v730 = vmul.f32 %v698, 0.7978846
      %v731 = vmul.f32 %v699, 0.7978846
      %v732 = vmul.f32 %v700, 0.7978846
      %v733 = vmul.f32 %v701, 0.7978846
      %v734 = vmul.f32 %v702, 0.7978846
      %v735 = vmul.f32 %v703, 0.7978846
      %v736 = vmul.f32 %v704, 0.7978846
      %v737 = vmul.f32 %v705, 0.7978846
      %v738 = vtanh.pop %v706
      %v739 = vtanh.pop %v707
      %v740 = vtanh.pop %v708
      %v741 = vtanh.pop %v709
      %v742 = vtanh.pop %v710
      %v743 = vtanh.pop %v711
      %v744 = vtanh.pop %v712
      %v745 = vtanh.pop %v713
      %v746 = vtanh.pop %v714
      %v747 = vtanh.pop %v715
      %v748 = vtanh.pop %v716
      %v749 = vtanh.pop %v717
      %v750 = vtanh.pop %v718
      %v751 = vtanh.pop %v719
      %v752 = vtanh.pop %v720
      %v753 = vtanh.pop %v721
      %v754 = vtanh.pop %v722
      %v755 = vtanh.pop %v723
      %v756 = vtanh.pop %v724
      %v757 = vtanh.pop %v725
      %v758 = vtanh.pop %v726
      %v759 = vtanh.pop %v727
      %v760 = vtanh.pop %v728
      %v761 = vtanh.pop %v729
      %v762 = vtanh.pop %v730
      %v763 = vtanh.pop %v731
      %v764 = vtanh.pop %v732
      %v765 = vtanh.pop %v733
      %v766 = vtanh.pop %v734
      %v767 = vtanh.pop %v735
      %v768 = vtanh.pop %v736
      %v769 = vtanh.pop %v737
      %v770 = vadd.f32 %v738, 1.0
      %v771 = vadd.f32 %v739, 1.0
      %v772 = vadd.f32 %v740, 1.0
      %v773 = vadd.f32 %v741, 1.0
      %v774 = vadd.f32 %v742, 1.0
      %v775 = vadd.f32 %v743, 1.0
      %v776 = vadd.f32 %v744, 1.0
      %v777 = vadd.f32 %v745, 1.0
      %v778 = vadd.f32 %v746, 1.0
      %v779 = vadd.f32 %v747, 1.0
      %v780 = vadd.f32 %v748, 1.0
      %v781 = vadd.f32 %v749, 1.0
      %v782 = vadd.f32 %v750, 1.0
      %v783 = vadd.f32 %v751, 1.0
      %v784 = vadd.f32 %v752, 1.0
      %v785 = vadd.f32 %v753, 1.0
      %v786 = vadd.f32 %v754, 1.0
      %v787 = vadd.f32 %v755, 1.0
      %v788 = vadd.f32 %v756, 1.0
      %v789 = vadd.f32 %v757, 1.0
      %v790 = vadd.f32 %v758, 1.0
      %v791 = vadd.f32 %v759, 1.0
      %v792 = vadd.f32 %v760, 1.0
      %v793 = vadd.f32 %v761, 1.0
      %v794 = vadd.f32 %v762, 1.0
      %v795 = vadd.f32 %v763, 1.0
      %v796 = vadd.f32 %v764, 1.0
      %v797 = vadd.f32 %v765, 1.0
      %v798 = vadd.f32 %v766, 1.0
      %v799 = vadd.f32 %v767, 1.0
      %v800 = vadd.f32 %v768, 1.0
      %v801 = vadd.f32 %v769, 1.0
      %v802 = vmul.f32 %v546, %v770
      %v803 = vmul.f32 %v547, %v771
      %v804 = vmul.f32 %v548, %v772
      %v805 = vmul.f32 %v549, %v773
      %v806 = vmul.f32 %v550, %v774
      %v807 = vmul.f32 %v551, %v775
      %v808 = vmul.f32 %v552, %v776
      %v809 = vmul.f32 %v553, %v777
      %v810 = vmul.f32 %v554, %v778
      %v811 = vmul.f32 %v555, %v779
      %v812 = vmul.f32 %v556, %v780
      %v813 = vmul.f32 %v557, %v781
      %v814 = vmul.f32 %v558, %v782
      %v815 = vmul.f32 %v559, %v783
      %v816 = vmul.f32 %v560, %v784
      %v817 = vmul.f32 %v561, %v785
      %v818 = vmul.f32 %v562, %v786
      %v819 = vmul.f32 %v563, %v787
      %v820 = vmul.f32 %v564, %v788
      %v821 = vmul.f32 %v565, %v789
      %v822 = vmul.f32 %v566, %v790
      %v823 = vmul.f32 %v567, %v791
      %v824 = vmul.f32 %v568, %v792
      %v825 = vmul.f32 %v569, %v793
      %v826 = vmul.f32 %v570, %v794
      %v827 = vmul.f32 %v571, %v795
      %v828 = vmul.f32 %v572, %v796
      %v829 = vmul.f32 %v573, %v797
      %v830 = vmul.f32 %v574, %v798
      %v831 = vmul.f32 %v575, %v799
      %v832 = vmul.f32 %v576, %v800
      %v833 = vmul.f32 %v577, %v801
      %vm834 = vcmask 523264
      %835 = vst.msk [vmem:[%s172] sm:$0xff] %vm834, %v802
      %836 = vst.msk [vmem:[%s172 + $0x8] sm:$0xff] %vm834, %v803
      %837 = vst.msk [vmem:[%s172 + $0x10] sm:$0xff] %vm834, %v804
      %838 = vst.msk [vmem:[%s172 + $0x18] sm:$0xff] %vm834, %v805
      %839 = vst.msk [vmem:[%s172 + $0x20] sm:$0xff] %vm834, %v806
      %840 = vst.msk [vmem:[%s172 + $0x28] sm:$0xff] %vm834, %v807
      %841 = vst.msk [vmem:[%s172 + $0x30] sm:$0xff] %vm834, %v808
      %842 = vst.msk [vmem:[%s172 + $0x38] sm:$0xff] %vm834, %v809
      %843 = vst.msk [vmem:[%s172 + $0x40] sm:$0xff] %vm834, %v810
      %844 = vst.msk [vmem:[%s172 + $0x48] sm:$0xff] %vm834, %v811
      %845 = vst.msk [vmem:[%s172 + $0x50] sm:$0xff] %vm834, %v812
      %846 = vst.msk [vmem:[%s172 + $0x58] sm:$0xff] %vm834, %v813
      %847 = vst.msk [vmem:[%s172 + $0x60] sm:$0xff] %vm834, %v814
      %848 = vst.msk [vmem:[%s172 + $0x68] sm:$0xff] %vm834, %v815
      %849 = vst.msk [vmem:[%s172 + $0x70] sm:$0xff] %vm834, %v816
      %850 = vst.msk [vmem:[%s172 + $0x78] sm:$0xff] %vm834, %v817
      %851 = vst.msk [vmem:[%s172 + $0x80] sm:$0xff] %vm834, %v818
      %852 = vst.msk [vmem:[%s172 + $0x88] sm:$0xff] %vm834, %v819
      %853 = vst.msk [vmem:[%s172 + $0x90] sm:$0xff] %vm834, %v820
      %854 = vst.msk [vmem:[%s172 + $0x98] sm:$0xff] %vm834, %v821
      %855 = vst.msk [vmem:[%s172 + $0xa0] sm:$0xff] %vm834, %v822
      %856 = vst.msk [vmem:[%s172 + $0xa8] sm:$0xff] %vm834, %v823
      %857 = vst.msk [vmem:[%s172 + $0xb0] sm:$0xff] %vm834, %v824
      %858 = vst.msk [vmem:[%s172 + $0xb8] sm:$0xff] %vm834, %v825
      %859 = vst.msk [vmem:[%s172 + $0xc0] sm:$0xff] %vm834, %v826
      %860 = vst.msk [vmem:[%s172 + $0xc8] sm:$0xff] %vm834, %v827
      %861 = vst.msk [vmem:[%s172 + $0xd0] sm:$0xff] %vm834, %v828
      %862 = vst.msk [vmem:[%s172 + $0xd8] sm:$0xff] %vm834, %v829
      %863 = vst.msk [vmem:[%s172 + $0xe0] sm:$0xff] %vm834, %v830
      %864 = vst.msk [vmem:[%s172 + $0xe8] sm:$0xff] %vm834, %v831
      %865 = vst.msk [vmem:[%s172 + $0xf0] sm:$0xff] %vm834, %v832
      %866 = vst.msk [vmem:[%s172 + $0xf8] sm:$0xff] %vm834, %v833
      %s867 = smul.u32 32, %s14
      %p868 = scmp.lt.s32.totalorder %s867, 159
      %s869 = scalar_select %p868, %s867, 159
      %s870 = smul.addr %s869, 8
      %s871 = scalar_lea.vmem %s3, %s870
      // Predicated region
      $region33: #{mrcnn_shhs_forward.7} parent=31 // pred_check
        %p872 = pneg %p100
      $region34: #{mrcnn_shhs_forward.7} parent=31 // pred_check_branch
        %874 = sbr.rel (%p872) target = $region36
      $region35: #{mrcnn_shhs_forward.7} parent=31 // pred_region
        %s875 = smul.u32 32, %s14
      $region36: #{mrcnn_shhs_forward.7} parent=31 // pred_fallthru
        _
    $region32: #{mrcnn_shhs_forward.7} parent=5 // pred_fallthru
      _
    %p876 = scmp.le.s32.totalorder 2, %s9
    // Predicated region
    $region37: #{mrcnn_shhs_forward.7} parent=5 // pred_check
      %p877 = pneg %p876
    $region38: #{mrcnn_shhs_forward.7} parent=5 // pred_check_branch
      %879 = sbr.rel (%p877) target = $region40
    $region39: #{mrcnn_shhs_forward.7} parent=5 // pred_region
      %s880 = ssub.s32 %s9, 2
      // Predicated region
      $region41: #{mrcnn_shhs_forward.7} parent=39 // pred_check
        %p881 = pneg %p106
      $region42: #{mrcnn_shhs_forward.7} parent=39 // pred_check_branch
        %883 = sbr.rel (%p881) target = $region44
      $region43: #{mrcnn_shhs_forward.7} parent=39 // pred_region
        %s884 = smul.u32 32, %s15
        %p885 = scmp.lt.s32.totalorder %s884, 159
        %s886 = scalar_select %p885, %s884, 159
        %s887 = smul.addr %s886, 8
        %s888 = scalar_lea.vmem %s3, %s887
      $region44: #{mrcnn_shhs_forward.7} parent=39 // pred_fallthru
        _
    $region40: #{mrcnn_shhs_forward.7} parent=5 // pred_fallthru
      _
  $region6: #{mrcnn_shhs_forward.7} parent=0 // loop_footer
    %s13 = sadd.s32 1, %s9
  $region7: #{mrcnn_shhs_forward.7} parent=0 // loop_footer_branch
    %8 = sbr.rel target = $region3
  $region8: #{mrcnn_shhs_forward.7} parent=0 // loop_exit
    _

// kernel: mrcnn_shhs_forward.8
$region0: #{mrcnn_shhs_forward.8}
  #allocation0 [shape = 'u32[]', space=smem, size = 0x4, offset = 0x4, fixed_abs, tag = 'smem constant byte address 0x4 - core index']
  #allocation1 [shape = 'u32[144,128]{1,0:T(1,128)}', space=vmem, size = 0x12000, scoped, tag = 'internal scratch']
  %s0 = inlined_call_operand.vmem [shape: f32[768,512], index: 0, kind: input, shape index: {}]
  %s1 = inlined_call_operand.vmem [shape: f32[512,128], index: 1, kind: input, shape index: {}]
  %s2 = inlined_call_operand.vmem [shape: f32[1,128], index: 2, kind: input, shape index: {}]
  %s3 = inlined_call_operand.vmem [shape: f32[768,128], index: 3, kind: output, shape index: {}]
  %s4 = sld [smem:[#allocation0]]
  $region45: #{mrcnn_shhs_forward.8} parent=0
    _
  %s6 = ssub.s32 1, %s4
  %s7 = scalar_select 0, %s6, %s4
  loop: start=0, step=1, limit=5
  $region2: #{mrcnn_shhs_forward.8} parent=0 // loop_pre_header
    _
  $region3: #{mrcnn_shhs_forward.8} parent=0 // loop_header
    %s9 = sphi 0, %s13
    %p10 = scmp.ge.s32.totalorder %s9, 5
    %s19 = sphi 0, %s21
    %s22 = sphi 0, %s19
    %s23 = sphi 0, %s22
    %s39 = sphi 0, %s23
    %s43 = sphi 0, %s43
    %s45 = sphi 0, %s43
    %s46 = sphi 0, %s45
    %s60 = sphi 0, %s46
    %s64 = sphi 0, %s64
    %s66 = sphi 0, %s64
    %s67 = sphi 0, %s66
    %s81 = sphi 0, %s67
    %s87 = sphi 0, %s89
    %s90 = sphi 0, %s87
    %s91 = sphi 0, %s90
    %s107 = sphi 0, %s91
  $region4: #{mrcnn_shhs_forward.8} parent=0 // loop_header_branch
    %12 = sbr.rel (%p10) target = $region8
  $region5: #{mrcnn_shhs_forward.8} parent=0 // loop_body
    %s14 = ssub.s32 %s9, 1
    %s15 = ssub.s32 %s9, 2
    %s16 = sadd.s32 %s9, 1
    %s17 = ssub.s32 %s9, %s16
    %p18 = scmp.eq.s32.totalorder %s17, 0
    %s20 = sadd.s32 %s19, 1
    %s21 = scalar_select %p18, %s19, %s20
    %p24 = pneg %p18
    %p25 = scmp.eq.s32.totalorder %s9, 2
    %p26 = por %p24, %p25
    %p27 = scmp.ne.s32.totalorder %s19, %s22
    %p28 = scmp.eq.s32.totalorder %s9, 0
    %p29 = por %p27, %p28
    %p30 = scmp.ne.s32.totalorder %s19, %s22
    %p31 = scmp.eq.s32.totalorder %s14, 2
    %p32 = por %p30, %p31
    %p33 = scmp.ne.s32.totalorder %s22, %s23
    %p34 = scmp.eq.s32.totalorder %s14, 0
    %p35 = por %p33, %p34
    %p36 = scmp.ne.s32.totalorder %s22, %s23
    %p37 = scmp.eq.s32.totalorder %s15, 2
    %p38 = por %p36, %p37
    %p40 = scmp.ne.s32.totalorder %s23, %s39
    %p41 = scmp.eq.s32.totalorder %s15, 0
    %p42 = por %p40, %p41
    %s44 = sadd.s32 %s43, 1
    %p47 = scmp.eq.s32.totalorder %s9, 2
    %p48 = scmp.ne.s32.totalorder %s43, %s45
    %p49 = scmp.eq.s32.totalorder %s9, 0
    %p50 = por %p48, %p49
    %p51 = scmp.ne.s32.totalorder %s43, %s45
    %p52 = scmp.eq.s32.totalorder %s14, 2
    %p53 = por %p51, %p52
    %p54 = scmp.ne.s32.totalorder %s45, %s46
    %p55 = scmp.eq.s32.totalorder %s14, 0
    %p56 = por %p54, %p55
    %p57 = scmp.ne.s32.totalorder %s45, %s46
    %p58 = scmp.eq.s32.totalorder %s15, 2
    %p59 = por %p57, %p58
    %p61 = scmp.ne.s32.totalorder %s46, %s60
    %p62 = scmp.eq.s32.totalorder %s15, 0
    %p63 = por %p61, %p62
    %s65 = sadd.s32 %s64, 1
    %p68 = scmp.eq.s32.totalorder %s9, 2
    %p69 = scmp.ne.s32.totalorder %s64, %s66
    %p70 = scmp.eq.s32.totalorder %s9, 0
    %p71 = por %p69, %p70
    %p72 = scmp.ne.s32.totalorder %s64, %s66
    %p73 = scmp.eq.s32.totalorder %s14, 2
    %p74 = por %p72, %p73
    %p75 = scmp.ne.s32.totalorder %s66, %s67
    %p76 = scmp.eq.s32.totalorder %s14, 0
    %p77 = por %p75, %p76
    %p78 = scmp.ne.s32.totalorder %s66, %s67
    %p79 = scmp.eq.s32.totalorder %s15, 2
    %p80 = por %p78, %p79
    %p82 = scmp.ne.s32.totalorder %s67, %s81
    %p83 = scmp.eq.s32.totalorder %s15, 0
    %p84 = por %p82, %p83
    %s85 = ssub.s32 %s9, %s16
    %p86 = scmp.eq.s32.totalorder %s85, 0
    %s88 = sadd.s32 %s87, 1
    %s89 = scalar_select %p86, %s87, %s88
    %p92 = pneg %p86
    %p93 = scmp.eq.s32.totalorder %s9, 2
    %p94 = por %p92, %p93
    %p95 = scmp.ne.s32.totalorder %s87, %s90
    %p96 = scmp.eq.s32.totalorder %s9, 0
    %p97 = por %p95, %p96
    %p98 = scmp.ne.s32.totalorder %s87, %s90
    %p99 = scmp.eq.s32.totalorder %s14, 2
    %p100 = por %p98, %p99
    %p101 = scmp.ne.s32.totalorder %s90, %s91
    %p102 = scmp.eq.s32.totalorder %s14, 0
    %p103 = por %p101, %p102
    %p104 = scmp.ne.s32.totalorder %s90, %s91
    %p105 = scmp.eq.s32.totalorder %s15, 2
    %p106 = por %p104, %p105
    %p108 = scmp.ne.s32.totalorder %s91, %s107
    %p109 = scmp.eq.s32.totalorder %s15, 0
    %p110 = por %p108, %p109
    %p111 = scmp.le.s32.totalorder 1, %s9
    %p112 = scmp.lt.s32.totalorder %s9, 4
    %p113 = pnand %p111, %p112
    %p114 = pneg %p113
    // Predicated region
    $region9: #{mrcnn_shhs_forward.8} parent=5 // pred_check
      _
    $region10: #{mrcnn_shhs_forward.8} parent=5 // pred_check_branch
      %116 = sbr.rel (%p113) target = $region12
    $region11: #{mrcnn_shhs_forward.8} parent=5 // pred_region
      %s117 = ssub.s32 %s9, 1
      // Predicated region
      $region13: #{mrcnn_shhs_forward.8} parent=11 // pred_check
        %p118 = pneg %p56
      $region14: #{mrcnn_shhs_forward.8} parent=11 // pred_check_branch
        %120 = sbr.rel (%p118) target = $region16
      $region15: #{mrcnn_shhs_forward.8} parent=11 // pred_region
        _
      $region16: #{mrcnn_shhs_forward.8} parent=11 // pred_fallthru
        _
      // Predicated region
      $region17: #{mrcnn_shhs_forward.8} parent=11 // pred_check
        %p121 = pneg %p77
      $region18: #{mrcnn_shhs_forward.8} parent=11 // pred_check_branch
        %123 = sbr.rel (%p121) target = $region20
      $region19: #{mrcnn_shhs_forward.8} parent=11 // pred_region
        _
      $region20: #{mrcnn_shhs_forward.8} parent=11 // pred_fallthru
        _
    $region12: #{mrcnn_shhs_forward.8} parent=5 // pred_fallthru
      _
    %p124 = scmp.lt.s32.totalorder %s9, 3
    // Predicated region
    $region21: #{mrcnn_shhs_forward.8} parent=5 // pred_check
      %p125 = pneg %p124
    $region22: #{mrcnn_shhs_forward.8} parent=5 // pred_check_branch
      %127 = sbr.rel (%p125) target = $region24
    $region23: #{mrcnn_shhs_forward.8} parent=5 // pred_region
      // Predicated region
      $region25: #{mrcnn_shhs_forward.8} parent=23 // pred_check
        %p128 = pneg %p29
      $region26: #{mrcnn_shhs_forward.8} parent=23 // pred_check_branch
        %130 = sbr.rel (%p128) target = $region28
      $region27: #{mrcnn_shhs_forward.8} parent=23 // pred_region
        %s131 = smul.u32 32, %s9
        %p132 = scmp.lt.s32.totalorder %s131, 95
        %s133 = scalar_select %p132, %s131, 95
        %s134 = smul.addr %s133, 4
        %s135 = smul.addr %s134, 8
        %s136 = scalar_lea.vmem %s0, %s135
        %s137 = smul.u32 32, %s9
      $region28: #{mrcnn_shhs_forward.8} parent=23 // pred_fallthru
        _
    $region24: #{mrcnn_shhs_forward.8} parent=5 // pred_fallthru
      _
    %p138 = scmp.le.s32.totalorder 1, %s9
    %p139 = scmp.lt.s32.totalorder %s9, 4
    %p140 = pnand %p138, %p139
    %p141 = pneg %p140
    // Predicated region
    $region29: #{mrcnn_shhs_forward.8} parent=5 // pred_check
      _
    $region30: #{mrcnn_shhs_forward.8} parent=5 // pred_check_branch
      %143 = sbr.rel (%p140) target = $region32
    $region31: #{mrcnn_shhs_forward.8} parent=5 // pred_region
      %s144 = ssub.s32 %s9, 1
      %s145 = smul.u32 32, %s14
      %p146 = scmp.lt.s32.totalorder %s145, 95
      %s147 = scalar_select %p146, %s145, 95
      %s148 = smul.addr %s147, 4
      %s149 = smul.addr %s148, 8
      %s150 = scalar_lea.vmem %s0, %s149
      %p151 = pneg %p35
      %p152 = pneg %p32
      %p153 = pneg %p56
      %p154 = pneg %p53
      %p155 = pneg %p77
      %p156 = pneg %p74
      %p157 = pneg %p103
      %p158 = pneg %p100
      %s159 = smul.u32 32, %s14
      %p160 = scmp.lt.s32.totalorder %s159, 95
      %s161 = scalar_select %p160, %s159, 95
      %s162 = smul.addr %s161, 8
      %s163 = scalar_lea.vmem %s3, %s162
      %s164 = smul.u32 32, %s14
      %p165 = scmp.lt.s32.totalorder %s164, 95
      %s166 = scalar_select %p165, %s164, 95
      %s167 = smul.addr %s166, 4
      %s168 = smul.addr %s167, 8
      %s169 = scalar_lea.vmem %s0, %s168
      %s170 = smul.u32 32, %s14
      %s171 = smul.u32 32, %s14
      %p172 = scmp.lt.s32.totalorder %s171, 95
      %s173 = scalar_select %p172, %s171, 95
      %s174 = smul.addr %s173, 8
      %s175 = scalar_lea.vmem %s3, %s174
      %s176 = smul.u32 32, %s14
      %v177 = vld [vmem:[%s169] sm:$0xff]
      %v178 = vld [vmem:[%s169 + $0x8] sm:$0xff]
      %v179 = vld [vmem:[%s169 + $0x10] sm:$0xff]
      %v180 = vld [vmem:[%s169 + $0x18] sm:$0xff]
      %v181 = vld [vmem:[%s169 + $0x20] sm:$0xff]
      %v182 = vld [vmem:[%s169 + $0x28] sm:$0xff]
      %v183 = vld [vmem:[%s169 + $0x30] sm:$0xff]
      %v184 = vld [vmem:[%s169 + $0x38] sm:$0xff]
      %v185 = vld [vmem:[%s169 + $0x40] sm:$0xff]
      %v186 = vld [vmem:[%s169 + $0x48] sm:$0xff]
      %v187 = vld [vmem:[%s169 + $0x50] sm:$0xff]
      %v188 = vld [vmem:[%s169 + $0x58] sm:$0xff]
      %v189 = vld [vmem:[%s169 + $0x60] sm:$0xff]
      %v190 = vld [vmem:[%s169 + $0x68] sm:$0xff]
      %v191 = vld [vmem:[%s169 + $0x70] sm:$0xff]
      %v192 = vld [vmem:[%s169 + $0x78] sm:$0xff]
      %v193 = vld [vmem:[%s169 + $0x80] sm:$0xff]
      %v194 = vld [vmem:[%s169 + $0x88] sm:$0xff]
      %v195 = vld [vmem:[%s169 + $0x90] sm:$0xff]
      %v196 = vld [vmem:[%s169 + $0x98] sm:$0xff]
      %v197 = vld [vmem:[%s169 + $0xa0] sm:$0xff]
      %v198 = vld [vmem:[%s169 + $0xa8] sm:$0xff]
      %v199 = vld [vmem:[%s169 + $0xb0] sm:$0xff]
      %v200 = vld [vmem:[%s169 + $0xb8] sm:$0xff]
      %v201 = vld [vmem:[%s169 + $0xc0] sm:$0xff]
      %v202 = vld [vmem:[%s169 + $0xc8] sm:$0xff]
      %v203 = vld [vmem:[%s169 + $0xd0] sm:$0xff]
      %v204 = vld [vmem:[%s169 + $0xd8] sm:$0xff]
      %v205 = vld [vmem:[%s169 + $0xe0] sm:$0xff]
      %v206 = vld [vmem:[%s169 + $0xe8] sm:$0xff]
      %v207 = vld [vmem:[%s169 + $0xf0] sm:$0xff]
      %v208 = vld [vmem:[%s169 + $0xf8] sm:$0xff]
      %v209 = vld [vmem:[%s169 + $0x100] sm:$0xff]
      %v210 = vld [vmem:[%s169 + $0x108] sm:$0xff]
      %v211 = vld [vmem:[%s169 + $0x110] sm:$0xff]
      %v212 = vld [vmem:[%s169 + $0x118] sm:$0xff]
      %v213 = vld [vmem:[%s169 + $0x120] sm:$0xff]
      %v214 = vld [vmem:[%s169 + $0x128] sm:$0xff]
      %v215 = vld [vmem:[%s169 + $0x130] sm:$0xff]
      %v216 = vld [vmem:[%s169 + $0x138] sm:$0xff]
      %v217 = vld [vmem:[%s169 + $0x140] sm:$0xff]
      %v218 = vld [vmem:[%s169 + $0x148] sm:$0xff]
      %v219 = vld [vmem:[%s169 + $0x150] sm:$0xff]
      %v220 = vld [vmem:[%s169 + $0x158] sm:$0xff]
      %v221 = vld [vmem:[%s169 + $0x160] sm:$0xff]
      %v222 = vld [vmem:[%s169 + $0x168] sm:$0xff]
      %v223 = vld [vmem:[%s169 + $0x170] sm:$0xff]
      %v224 = vld [vmem:[%s169 + $0x178] sm:$0xff]
      %v225 = vld [vmem:[%s169 + $0x180] sm:$0xff]
      %v226 = vld [vmem:[%s169 + $0x188] sm:$0xff]
      %v227 = vld [vmem:[%s169 + $0x190] sm:$0xff]
      %v228 = vld [vmem:[%s169 + $0x198] sm:$0xff]
      %v229 = vld [vmem:[%s169 + $0x1a0] sm:$0xff]
      %v230 = vld [vmem:[%s169 + $0x1a8] sm:$0xff]
      %v231 = vld [vmem:[%s169 + $0x1b0] sm:$0xff]
      %v232 = vld [vmem:[%s169 + $0x1b8] sm:$0xff]
      %v233 = vld [vmem:[%s169 + $0x1c0] sm:$0xff]
      %v234 = vld [vmem:[%s169 + $0x1c8] sm:$0xff]
      %v235 = vld [vmem:[%s169 + $0x1d0] sm:$0xff]
      %v236 = vld [vmem:[%s169 + $0x1d8] sm:$0xff]
      %v237 = vld [vmem:[%s169 + $0x1e0] sm:$0xff]
      %v238 = vld [vmem:[%s169 + $0x1e8] sm:$0xff]
      %v239 = vld [vmem:[%s169 + $0x1f0] sm:$0xff]
      %v240 = vld [vmem:[%s169 + $0x1f8] sm:$0xff]
      %v241 = vld [vmem:[%s169 + $0x200] sm:$0xff]
      %v242 = vld [vmem:[%s169 + $0x208] sm:$0xff]
      %v243 = vld [vmem:[%s169 + $0x210] sm:$0xff]
      %v244 = vld [vmem:[%s169 + $0x218] sm:$0xff]
      %v245 = vld [vmem:[%s169 + $0x220] sm:$0xff]
      %v246 = vld [vmem:[%s169 + $0x228] sm:$0xff]
      %v247 = vld [vmem:[%s169 + $0x230] sm:$0xff]
      %v248 = vld [vmem:[%s169 + $0x238] sm:$0xff]
      %v249 = vld [vmem:[%s169 + $0x240] sm:$0xff]
      %v250 = vld [vmem:[%s169 + $0x248] sm:$0xff]
      %v251 = vld [vmem:[%s169 + $0x250] sm:$0xff]
      %v252 = vld [vmem:[%s169 + $0x258] sm:$0xff]
      %v253 = vld [vmem:[%s169 + $0x260] sm:$0xff]
      %v254 = vld [vmem:[%s169 + $0x268] sm:$0xff]
      %v255 = vld [vmem:[%s169 + $0x270] sm:$0xff]
      %v256 = vld [vmem:[%s169 + $0x278] sm:$0xff]
      %v257 = vld [vmem:[%s169 + $0x280] sm:$0xff]
      %v258 = vld [vmem:[%s169 + $0x288] sm:$0xff]
      %v259 = vld [vmem:[%s169 + $0x290] sm:$0xff]
      %v260 = vld [vmem:[%s169 + $0x298] sm:$0xff]
      %v261 = vld [vmem:[%s169 + $0x2a0] sm:$0xff]
      %v262 = vld [vmem:[%s169 + $0x2a8] sm:$0xff]
      %v263 = vld [vmem:[%s169 + $0x2b0] sm:$0xff]
      %v264 = vld [vmem:[%s169 + $0x2b8] sm:$0xff]
      %v265 = vld [vmem:[%s169 + $0x2c0] sm:$0xff]
      %v266 = vld [vmem:[%s169 + $0x2c8] sm:$0xff]
      %v267 = vld [vmem:[%s169 + $0x2d0] sm:$0xff]
      %v268 = vld [vmem:[%s169 + $0x2d8] sm:$0xff]
      %v269 = vld [vmem:[%s169 + $0x2e0] sm:$0xff]
      %v270 = vld [vmem:[%s169 + $0x2e8] sm:$0xff]
      %v271 = vld [vmem:[%s169 + $0x2f0] sm:$0xff]
      %v272 = vld [vmem:[%s169 + $0x2f8] sm:$0xff]
      %v273 = vld [vmem:[%s169 + $0x300] sm:$0xff]
      %v274 = vld [vmem:[%s169 + $0x308] sm:$0xff]
      %v275 = vld [vmem:[%s169 + $0x310] sm:$0xff]
      %v276 = vld [vmem:[%s169 + $0x318] sm:$0xff]
      %v277 = vld [vmem:[%s169 + $0x320] sm:$0xff]
      %v278 = vld [vmem:[%s169 + $0x328] sm:$0xff]
      %v279 = vld [vmem:[%s169 + $0x330] sm:$0xff]
      %v280 = vld [vmem:[%s169 + $0x338] sm:$0xff]
      %v281 = vld [vmem:[%s169 + $0x340] sm:$0xff]
      %v282 = vld [vmem:[%s169 + $0x348] sm:$0xff]
      %v283 = vld [vmem:[%s169 + $0x350] sm:$0xff]
      %v284 = vld [vmem:[%s169 + $0x358] sm:$0xff]
      %v285 = vld [vmem:[%s169 + $0x360] sm:$0xff]
      %v286 = vld [vmem:[%s169 + $0x368] sm:$0xff]
      %v287 = vld [vmem:[%s169 + $0x370] sm:$0xff]
      %v288 = vld [vmem:[%s169 + $0x378] sm:$0xff]
      %v289 = vld [vmem:[%s169 + $0x380] sm:$0xff]
      %v290 = vld [vmem:[%s169 + $0x388] sm:$0xff]
      %v291 = vld [vmem:[%s169 + $0x390] sm:$0xff]
      %v292 = vld [vmem:[%s169 + $0x398] sm:$0xff]
      %v293 = vld [vmem:[%s169 + $0x3a0] sm:$0xff]
      %v294 = vld [vmem:[%s169 + $0x3a8] sm:$0xff]
      %v295 = vld [vmem:[%s169 + $0x3b0] sm:$0xff]
      %v296 = vld [vmem:[%s169 + $0x3b8] sm:$0xff]
      %v297 = vld [vmem:[%s169 + $0x3c0] sm:$0xff]
      %v298 = vld [vmem:[%s169 + $0x3c8] sm:$0xff]
      %v299 = vld [vmem:[%s169 + $0x3d0] sm:$0xff]
      %v300 = vld [vmem:[%s169 + $0x3d8] sm:$0xff]
      %v301 = vld [vmem:[%s169 + $0x3e0] sm:$0xff]
      %v302 = vld [vmem:[%s169 + $0x3e8] sm:$0xff]
      %v303 = vld [vmem:[%s169 + $0x3f0] sm:$0xff]
      %v304 = vld [vmem:[%s169 + $0x3f8] sm:$0xff]
      %v305 = vld [vmem:[%s1] sm:$0xff]
      %v306 = vld [vmem:[%s1 + $0x8] sm:$0xff]
      %v307 = vld [vmem:[%s1 + $0x10] sm:$0xff]
      %v308 = vld [vmem:[%s1 + $0x18] sm:$0xff]
      %v309 = vld [vmem:[%s1 + $0x20] sm:$0xff]
      %v310 = vld [vmem:[%s1 + $0x28] sm:$0xff]
      %v311 = vld [vmem:[%s1 + $0x30] sm:$0xff]
      %v312 = vld [vmem:[%s1 + $0x38] sm:$0xff]
      %v313 = vld [vmem:[%s1 + $0x40] sm:$0xff]
      %v314 = vld [vmem:[%s1 + $0x48] sm:$0xff]
      %v315 = vld [vmem:[%s1 + $0x50] sm:$0xff]
      %v316 = vld [vmem:[%s1 + $0x58] sm:$0xff]
      %v317 = vld [vmem:[%s1 + $0x60] sm:$0xff]
      %v318 = vld [vmem:[%s1 + $0x68] sm:$0xff]
      %v319 = vld [vmem:[%s1 + $0x70] sm:$0xff]
      %v320 = vld [vmem:[%s1 + $0x78] sm:$0xff]
      %v321 = vld [vmem:[%s1 + $0x80] sm:$0xff]
      %v322 = vld [vmem:[%s1 + $0x88] sm:$0xff]
      %v323 = vld [vmem:[%s1 + $0x90] sm:$0xff]
      %v324 = vld [vmem:[%s1 + $0x98] sm:$0xff]
      %v325 = vld [vmem:[%s1 + $0xa0] sm:$0xff]
      %v326 = vld [vmem:[%s1 + $0xa8] sm:$0xff]
      %v327 = vld [vmem:[%s1 + $0xb0] sm:$0xff]
      %v328 = vld [vmem:[%s1 + $0xb8] sm:$0xff]
      %v329 = vld [vmem:[%s1 + $0xc0] sm:$0xff]
      %v330 = vld [vmem:[%s1 + $0xc8] sm:$0xff]
      %v331 = vld [vmem:[%s1 + $0xd0] sm:$0xff]
      %v332 = vld [vmem:[%s1 + $0xd8] sm:$0xff]
      %v333 = vld [vmem:[%s1 + $0xe0] sm:$0xff]
      %v334 = vld [vmem:[%s1 + $0xe8] sm:$0xff]
      %v335 = vld [vmem:[%s1 + $0xf0] sm:$0xff]
      %v336 = vld [vmem:[%s1 + $0xf8] sm:$0xff]
      %v337 = vld [vmem:[%s1 + $0x100] sm:$0xff]
      %v338 = vld [vmem:[%s1 + $0x108] sm:$0xff]
      %v339 = vld [vmem:[%s1 + $0x110] sm:$0xff]
      %v340 = vld [vmem:[%s1 + $0x118] sm:$0xff]
      %v341 = vld [vmem:[%s1 + $0x120] sm:$0xff]
      %v342 = vld [vmem:[%s1 + $0x128] sm:$0xff]
      %v343 = vld [vmem:[%s1 + $0x130] sm:$0xff]
      %v344 = vld [vmem:[%s1 + $0x138] sm:$0xff]
      %v345 = vld [vmem:[%s1 + $0x140] sm:$0xff]
      %v346 = vld [vmem:[%s1 + $0x148] sm:$0xff]
      %v347 = vld [vmem:[%s1 + $0x150] sm:$0xff]
      %v348 = vld [vmem:[%s1 + $0x158] sm:$0xff]
      %v349 = vld [vmem:[%s1 + $0x160] sm:$0xff]
      %v350 = vld [vmem:[%s1 + $0x168] sm:$0xff]
      %v351 = vld [vmem:[%s1 + $0x170] sm:$0xff]
      %v352 = vld [vmem:[%s1 + $0x178] sm:$0xff]
      %v353 = vld [vmem:[%s1 + $0x180] sm:$0xff]
      %v354 = vld [vmem:[%s1 + $0x188] sm:$0xff]
      %v355 = vld [vmem:[%s1 + $0x190] sm:$0xff]
      %v356 = vld [vmem:[%s1 + $0x198] sm:$0xff]
      %v357 = vld [vmem:[%s1 + $0x1a0] sm:$0xff]
      %v358 = vld [vmem:[%s1 + $0x1a8] sm:$0xff]
      %v359 = vld [vmem:[%s1 + $0x1b0] sm:$0xff]
      %v360 = vld [vmem:[%s1 + $0x1b8] sm:$0xff]
      %v361 = vld [vmem:[%s1 + $0x1c0] sm:$0xff]
      %v362 = vld [vmem:[%s1 + $0x1c8] sm:$0xff]
      %v363 = vld [vmem:[%s1 + $0x1d0] sm:$0xff]
      %v364 = vld [vmem:[%s1 + $0x1d8] sm:$0xff]
      %v365 = vld [vmem:[%s1 + $0x1e0] sm:$0xff]
      %v366 = vld [vmem:[%s1 + $0x1e8] sm:$0xff]
      %v367 = vld [vmem:[%s1 + $0x1f0] sm:$0xff]
      %v368 = vld [vmem:[%s1 + $0x1f8] sm:$0xff]
      %v369 = vld [vmem:[%s2] sm:$0x1]
      %v371 = vlaneseq
      %v372 = vshrl.u32 %v371, 7
      %v373 = vsub.s32 0, %v372
      %v374 = vrot.slane %v369, %v373
      %376 = vmatprep.subr.mxu0 0.0
      %377 = vmatpush1.msra.mxu0 %v305
      %378 = vmatprep.subr.mxu0 0.0
      %379 = vmatpush1.msra.mxu0 %v306
      %380 = vmatprep.subr.mxu0 0.0
      %381 = vmatpush1.msra.mxu0 %v307
      %382 = vmatprep.subr.mxu0 0.0
      %383 = vmatpush1.msra.mxu0 %v308
      %384 = vmatprep.subr.mxu0 0.0
      %385 = vmatpush1.msra.mxu0 %v309
      %386 = vmatprep.subr.mxu0 0.0
      %387 = vmatpush1.msra.mxu0 %v310
      %388 = vmatprep.subr.mxu0 0.0
      %389 = vmatpush1.msra.mxu0 %v311
      %390 = vmatprep.subr.mxu0 0.0
      %391 = vmatpush1.msra.mxu0 %v312
      %392 = vmatprep.subr.mxu0 0.0
      %393 = vmatpush1.msra.mxu0 %v313
      %394 = vmatprep.subr.mxu0 0.0
      %395 = vmatpush1.msra.mxu0 %v314
      %396 = vmatprep.subr.mxu0 0.0
      %397 = vmatpush1.msra.mxu0 %v315
      %398 = vmatprep.subr.mxu0 0.0
      %399 = vmatpush1.msra.mxu0 %v316
      %400 = vmatprep.subr.mxu0 0.0
      %401 = vmatpush1.msra.mxu0 %v317
      %402 = vmatprep.subr.mxu0 0.0
      %403 = vmatpush1.msra.mxu0 %v318
      %404 = vmatprep.subr.mxu0 0.0
      %405 = vmatpush1.msra.mxu0 %v319
      %406 = vmatprep.subr.mxu0 0.0
      %407 = vmatpush1.msra.mxu0 %v320
      %408 = vmatprep.subr.mxu0 0.0
      %409 = vmatpush1.msra.mxu0 %v321
      %410 = vmatprep.subr.mxu0 0.0
      %411 = vmatpush1.msra.mxu0 %v322
      %412 = vmatprep.subr.mxu0 0.0
      %413 = vmatpush1.msra.mxu0 %v323
      %414 = vmatprep.subr.mxu0 0.0
      %415 = vmatpush1.msra.mxu0 %v324
      %416 = vmatprep.subr.mxu0 0.0
      %417 = vmatpush1.msra.mxu0 %v325
      %418 = vmatprep.subr.mxu0 0.0
      %419 = vmatpush1.msra.mxu0 %v326
      %420 = vmatprep.subr.mxu0 0.0
      %421 = vmatpush1.msra.mxu0 %v327
      %422 = vmatprep.subr.mxu0 0.0
      %423 = vmatpush1.msra.mxu0 %v328
      %424 = vmatprep.subr.mxu0 0.0
      %425 = vmatpush1.msra.mxu0 %v329
      %426 = vmatprep.subr.mxu0 0.0
      %427 = vmatpush1.msra.mxu0 %v330
      %428 = vmatprep.subr.mxu0 0.0
      %429 = vmatpush1.msra.mxu0 %v331
      %430 = vmatprep.subr.mxu0 0.0
      %431 = vmatpush1.msra.mxu0 %v332
      %432 = vmatprep.subr.mxu0 0.0
      %433 = vmatpush1.msra.mxu0 %v333
      %434 = vmatprep.subr.mxu0 0.0
      %435 = vmatpush1.msra.mxu0 %v334
      %436 = vmatprep.subr.mxu0 0.0
      %437 = vmatpush1.msra.mxu0 %v335
      %438 = vmatprep.subr.mxu0 0.0
      %439 = vmatpush1.msra.mxu0 %v336
      %440 = vmatprep.mubr.f32.mxu0 %v178
      %441 = vmatmul.mubr.f32.gmra.mrb[0].mxu0 %v177
      %v442 = vpop.f32.mrb[0].mxu0
      %v443 = vadd.f32 %v374, %v442
      %v444 = vpop.f32.mrb[0].mxu0
      %445 = vmatprep.mubr.f32.mxu0 %v182
      %446 = vmatmul.mubr.f32.gmra.mrb[0].mxu0 %v181
      %v447 = vpop.f32.mrb[0].mxu0
      %v448 = vadd.f32 %v374, %v447
      %v449 = vpop.f32.mrb[0].mxu0
      %450 = vmatprep.mubr.f32.mxu0 %v186
      %451 = vmatmul.mubr.f32.gmra.mrb[0].mxu0 %v185
      %v452 = vpop.f32.mrb[0].mxu0
      %v453 = vadd.f32 %v374, %v452
      %v454 = vpop.f32.mrb[0].mxu0
      %455 = vmatprep.mubr.f32.mxu0 %v190
      %456 = vmatmul.mubr.f32.gmra.mrb[0].mxu0 %v189
      %v457 = vpop.f32.mrb[0].mxu0
      %v458 = vadd.f32 %v374, %v457
      %v459 = vpop.f32.mrb[0].mxu0
      %460 = vmatprep.mubr.f32.mxu0 %v194
      %461 = vmatmul.mubr.f32.gmra.mrb[0].mxu0 %v193
      %v462 = vpop.f32.mrb[0].mxu0
      %v463 = vadd.f32 %v374, %v462
      %v464 = vpop.f32.mrb[0].mxu0
      %465 = vmatprep.mubr.f32.mxu0 %v198
      %466 = vmatmul.mubr.f32.gmra.mrb[0].mxu0 %v197
      %v467 = vpop.f32.mrb[0].mxu0
      %v468 = vadd.f32 %v374, %v467
      %v469 = vpop.f32.mrb[0].mxu0
      %470 = vmatprep.mubr.f32.mxu0 %v202
      %471 = vmatmul.mubr.f32.gmra.mrb[0].mxu0 %v201
      %v472 = vpop.f32.mrb[0].mxu0
      %v473 = vadd.f32 %v374, %v472
      %v474 = vpop.f32.mrb[0].mxu0
      %475 = vmatprep.mubr.f32.mxu0 %v206
      %476 = vmatmul.mubr.f32.gmra.mrb[0].mxu0 %v205
      %v477 = vpop.f32.mrb[0].mxu0
      %v478 = vadd.f32 %v374, %v477
      %v479 = vpop.f32.mrb[0].mxu0
      %480 = vmatprep.mubr.f32.mxu0 %v210
      %481 = vmatmul.mubr.f32.gmra.mrb[0].mxu0 %v209
      %v482 = vpop.f32.mrb[0].mxu0
      %v483 = vadd.f32 %v374, %v482
      %v484 = vpop.f32.mrb[0].mxu0
      %485 = vmatprep.mubr.f32.mxu0 %v214
      %486 = vmatmul.mubr.f32.gmra.mrb[0].mxu0 %v213
      %v487 = vpop.f32.mrb[0].mxu0
      %v488 = vadd.f32 %v374, %v487
      %v489 = vpop.f32.mrb[0].mxu0
      %490 = vmatprep.mubr.f32.mxu0 %v218
      %491 = vmatmul.mubr.f32.gmra.mrb[0].mxu0 %v217
      %v492 = vpop.f32.mrb[0].mxu0
      %v493 = vadd.f32 %v374, %v492
      %v494 = vpop.f32.mrb[0].mxu0
      %495 = vmatprep.mubr.f32.mxu0 %v222
      %496 = vmatmul.mubr.f32.gmra.mrb[0].mxu0 %v221
      %v497 = vpop.f32.mrb[0].mxu0
      %v498 = vadd.f32 %v374, %v497
      %v499 = vpop.f32.mrb[0].mxu0
      %500 = vmatprep.mubr.f32.mxu0 %v226
      %501 = vmatmul.mubr.f32.gmra.mrb[0].mxu0 %v225
      %v502 = vpop.f32.mrb[0].mxu0
      %v503 = vadd.f32 %v374, %v502
      %v504 = vpop.f32.mrb[0].mxu0
      %505 = vmatprep.mubr.f32.mxu0 %v230
      %506 = vmatmul.mubr.f32.gmra.mrb[0].mxu0 %v229
      %v507 = vpop.f32.mrb[0].mxu0
      %v508 = vadd.f32 %v374, %v507
      %v509 = vpop.f32.mrb[0].mxu0
      %510 = vmatprep.mubr.f32.mxu0 %v234
      %511 = vmatmul.mubr.f32.gmra.mrb[0].mxu0 %v233
      %v512 = vpop.f32.mrb[0].mxu0
      %v513 = vadd.f32 %v374, %v512
      %v514 = vpop.f32.mrb[0].mxu0
      %515 = vmatprep.mubr.f32.mxu0 %v238
      %516 = vmatmul.mubr.f32.gmra.mrb[0].mxu0 %v237
      %v517 = vpop.f32.mrb[0].mxu0
      %v518 = vadd.f32 %v374, %v517
      %v519 = vpop.f32.mrb[0].mxu0
      %520 = vmatprep.mubr.f32.mxu0 %v242
      %521 = vmatmul.mubr.f32.gmra.mrb[0].mxu0 %v241
      %v522 = vpop.f32.mrb[0].mxu0
      %v523 = vadd.f32 %v374, %v522
      %v524 = vpop.f32.mrb[0].mxu0
      %525 = vmatprep.mubr.f32.mxu0 %v246
      %526 = vmatmul.mubr.f32.gmra.mrb[0].mxu0 %v245
      %v527 = vpop.f32.mrb[0].mxu0
      %v528 = vadd.f32 %v374, %v527
      %v529 = vpop.f32.mrb[0].mxu0
      %530 = vmatprep.mubr.f32.mxu0 %v250
      %531 = vmatmul.mubr.f32.gmra.mrb[0].mxu0 %v249
      %v532 = vpop.f32.mrb[0].mxu0
      %v533 = vadd.f32 %v374, %v532
      %v534 = vpop.f32.mrb[0].mxu0
      %535 = vmatprep.mubr.f32.mxu0 %v254
      %536 = vmatmul.mubr.f32.gmra.mrb[0].mxu0 %v253
      %v537 = vpop.f32.mrb[0].mxu0
      %v538 = vadd.f32 %v374, %v537
      %v539 = vpop.f32.mrb[0].mxu0
      %540 = vmatprep.mubr.f32.mxu0 %v258
      %541 = vmatmul.mubr.f32.gmra.mrb[0].mxu0 %v257
      %v542 = vpop.f32.mrb[0].mxu0
      %v543 = vadd.f32 %v374, %v542
      %v544 = vpop.f32.mrb[0].mxu0
      %545 = vmatprep.mubr.f32.mxu0 %v262
      %546 = vmatmul.mubr.f32.gmra.mrb[0].mxu0 %v261
      %v547 = vpop.f32.mrb[0].mxu0
      %v548 = vadd.f32 %v374, %v547
      %v549 = vpop.f32.mrb[0].mxu0
      %550 = vmatprep.mubr.f32.mxu0 %v266
      %551 = vmatmul.mubr.f32.gmra.mrb[0].mxu0 %v265
      %v552 = vpop.f32.mrb[0].mxu0
      %v553 = vadd.f32 %v374, %v552
      %v554 = vpop.f32.mrb[0].mxu0
      %555 = vmatprep.mubr.f32.mxu0 %v270
      %556 = vmatmul.mubr.f32.gmra.mrb[0].mxu0 %v269
      %v557 = vpop.f32.mrb[0].mxu0
      %v558 = vadd.f32 %v374, %v557
      %v559 = vpop.f32.mrb[0].mxu0
      %560 = vmatprep.mubr.f32.mxu0 %v274
      %561 = vmatmul.mubr.f32.gmra.mrb[0].mxu0 %v273
      %v562 = vpop.f32.mrb[0].mxu0
      %v563 = vadd.f32 %v374, %v562
      %v564 = vpop.f32.mrb[0].mxu0
      %565 = vmatprep.mubr.f32.mxu0 %v278
      %566 = vmatmul.mubr.f32.gmra.mrb[0].mxu0 %v277
      %v567 = vpop.f32.mrb[0].mxu0
      %v568 = vadd.f32 %v374, %v567
      %v569 = vpop.f32.mrb[0].mxu0
      %570 = vmatprep.mubr.f32.mxu0 %v282
      %571 = vmatmul.mubr.f32.gmra.mrb[0].mxu0 %v281
      %v572 = vpop.f32.mrb[0].mxu0
      %v573 = vadd.f32 %v374, %v572
      %v574 = vpop.f32.mrb[0].mxu0
      %575 = vmatprep.mubr.f32.mxu0 %v286
      %576 = vmatmul.mubr.f32.gmra.mrb[0].mxu0 %v285
      %v577 = vpop.f32.mrb[0].mxu0
      %v578 = vadd.f32 %v374, %v577
      %v579 = vpop.f32.mrb[0].mxu0
      %580 = vmatprep.mubr.f32.mxu0 %v290
      %581 = vmatmul.mubr.f32.gmra.mrb[0].mxu0 %v289
      %v582 = vpop.f32.mrb[0].mxu0
      %v583 = vadd.f32 %v374, %v582
      %v584 = vpop.f32.mrb[0].mxu0
      %585 = vmatprep.mubr.f32.mxu0 %v294
      %586 = vmatmul.mubr.f32.gmra.mrb[0].mxu0 %v293
      %v587 = vpop.f32.mrb[0].mxu0
      %v588 = vadd.f32 %v374, %v587
      %v589 = vpop.f32.mrb[0].mxu0
      %590 = vmatprep.mubr.f32.mxu0 %v298
      %591 = vmatmul.mubr.f32.gmra.mrb[0].mxu0 %v297
      %v592 = vpop.f32.mrb[0].mxu0
      %v593 = vadd.f32 %v374, %v592
      %v594 = vpop.f32.mrb[0].mxu0
      %595 = vmatprep.mubr.f32.mxu0 %v302
      %596 = vmatmul.mubr.f32.gmra.mrb[0].mxu0 %v301
      %v597 = vpop.f32.mrb[0].mxu0
      %v598 = vadd.f32 %v374, %v597
      %v599 = vpop.f32.mrb[0].mxu0
      %600 = vdwg.mxu0
      %601 = vmatprep.subr.mxu0 0.0
      %602 = vmatpush1.msra.mxu0 %v337
      %603 = vmatprep.subr.mxu0 0.0
      %604 = vmatpush1.msra.mxu0 %v338
      %605 = vmatprep.subr.mxu0 0.0
      %606 = vmatpush1.msra.mxu0 %v339
      %607 = vmatprep.subr.mxu0 0.0
      %608 = vmatpush1.msra.mxu0 %v340
      %609 = vmatprep.subr.mxu0 0.0
      %610 = vmatpush1.msra.mxu0 %v341
      %611 = vmatprep.subr.mxu0 0.0
      %612 = vmatpush1.msra.mxu0 %v342
      %613 = vmatprep.subr.mxu0 0.0
      %614 = vmatpush1.msra.mxu0 %v343
      %615 = vmatprep.subr.mxu0 0.0
      %616 = vmatpush1.msra.mxu0 %v344
      %617 = vmatprep.subr.mxu0 0.0
      %618 = vmatpush1.msra.mxu0 %v345
      %619 = vmatprep.subr.mxu0 0.0
      %620 = vmatpush1.msra.mxu0 %v346
      %621 = vmatprep.subr.mxu0 0.0
      %622 = vmatpush1.msra.mxu0 %v347
      %623 = vmatprep.subr.mxu0 0.0
      %624 = vmatpush1.msra.mxu0 %v348
      %625 = vmatprep.subr.mxu0 0.0
      %626 = vmatpush1.msra.mxu0 %v349
      %627 = vmatprep.subr.mxu0 0.0
      %628 = vmatpush1.msra.mxu0 %v350
      %629 = vmatprep.subr.mxu0 0.0
      %630 = vmatpush1.msra.mxu0 %v351
      %631 = vmatprep.subr.mxu0 0.0
      %632 = vmatpush1.msra.mxu0 %v352
      %633 = vmatprep.subr.mxu0 0.0
      %634 = vmatpush1.msra.mxu0 %v353
      %635 = vmatprep.subr.mxu0 0.0
      %636 = vmatpush1.msra.mxu0 %v354
      %637 = vmatprep.subr.mxu0 0.0
      %638 = vmatpush1.msra.mxu0 %v355
      %639 = vmatprep.subr.mxu0 0.0
      %640 = vmatpush1.msra.mxu0 %v356
      %641 = vmatprep.subr.mxu0 0.0
      %642 = vmatpush1.msra.mxu0 %v357
      %643 = vmatprep.subr.mxu0 0.0
      %644 = vmatpush1.msra.mxu0 %v358
      %645 = vmatprep.subr.mxu0 0.0
      %646 = vmatpush1.msra.mxu0 %v359
      %647 = vmatprep.subr.mxu0 0.0
      %648 = vmatpush1.msra.mxu0 %v360
      %649 = vmatprep.subr.mxu0 0.0
      %650 = vmatpush1.msra.mxu0 %v361
      %651 = vmatprep.subr.mxu0 0.0
      %652 = vmatpush1.msra.mxu0 %v362
      %653 = vmatprep.subr.mxu0 0.0
      %654 = vmatpush1.msra.mxu0 %v363
      %655 = vmatprep.subr.mxu0 0.0
      %656 = vmatpush1.msra.mxu0 %v364
      %657 = vmatprep.subr.mxu0 0.0
      %658 = vmatpush1.msra.mxu0 %v365
      %659 = vmatprep.subr.mxu0 0.0
      %660 = vmatpush1.msra.mxu0 %v366
      %661 = vmatprep.subr.mxu0 0.0
      %662 = vmatpush1.msra.mxu0 %v367
      %663 = vmatprep.subr.mxu0 0.0
      %664 = vmatpush1.msra.mxu0 %v368
      %665 = vmatprep.mubr.f32.mxu0 %v180
      %666 = vmatmul.mubr.f32.gmra.mrb[0].mxu0 %v179
      %v667 = vpop.f32.mrb[0].mxu0
      %v668 = vadd.f32 %v443, %v667
      %v669 = vpop.f32.mrb[0].mxu0
      %670 = vmatprep.mubr.f32.mxu0 %v184
      %671 = vmatmul.mubr.f32.gmra.mrb[0].mxu0 %v183
      %v672 = vpop.f32.mrb[0].mxu0
      %v673 = vadd.f32 %v448, %v672
      %v674 = vpop.f32.mrb[0].mxu0
      %675 = vmatprep.mubr.f32.mxu0 %v188
      %676 = vmatmul.mubr.f32.gmra.mrb[0].mxu0 %v187
      %v677 = vpop.f32.mrb[0].mxu0
      %v678 = vadd.f32 %v453, %v677
      %v679 = vpop.f32.mrb[0].mxu0
      %680 = vmatprep.mubr.f32.mxu0 %v192
      %681 = vmatmul.mubr.f32.gmra.mrb[0].mxu0 %v191
      %v682 = vpop.f32.mrb[0].mxu0
      %v683 = vadd.f32 %v458, %v682
      %v684 = vpop.f32.mrb[0].mxu0
      %685 = vmatprep.mubr.f32.mxu0 %v196
      %686 = vmatmul.mubr.f32.gmra.mrb[0].mxu0 %v195
      %v687 = vpop.f32.mrb[0].mxu0
      %v688 = vadd.f32 %v463, %v687
      %v689 = vpop.f32.mrb[0].mxu0
      %690 = vmatprep.mubr.f32.mxu0 %v200
      %691 = vmatmul.mubr.f32.gmra.mrb[0].mxu0 %v199
      %v692 = vpop.f32.mrb[0].mxu0
      %v693 = vadd.f32 %v468, %v692
      %v694 = vpop.f32.mrb[0].mxu0
      %695 = vmatprep.mubr.f32.mxu0 %v204
      %696 = vmatmul.mubr.f32.gmra.mrb[0].mxu0 %v203
      %v697 = vpop.f32.mrb[0].mxu0
      %v698 = vadd.f32 %v473, %v697
      %v699 = vpop.f32.mrb[0].mxu0
      %700 = vmatprep.mubr.f32.mxu0 %v208
      %701 = vmatmul.mubr.f32.gmra.mrb[0].mxu0 %v207
      %v702 = vpop.f32.mrb[0].mxu0
      %v703 = vadd.f32 %v478, %v702
      %v704 = vpop.f32.mrb[0].mxu0
      %705 = vmatprep.mubr.f32.mxu0 %v212
      %706 = vmatmul.mubr.f32.gmra.mrb[0].mxu0 %v211
      %v707 = vpop.f32.mrb[0].mxu0
      %v708 = vadd.f32 %v483, %v707
      %v709 = vpop.f32.mrb[0].mxu0
      %710 = vmatprep.mubr.f32.mxu0 %v216
      %711 = vmatmul.mubr.f32.gmra.mrb[0].mxu0 %v215
      %v712 = vpop.f32.mrb[0].mxu0
      %v713 = vadd.f32 %v488, %v712
      %v714 = vpop.f32.mrb[0].mxu0
      %715 = vmatprep.mubr.f32.mxu0 %v220
      %716 = vmatmul.mubr.f32.gmra.mrb[0].mxu0 %v219
      %v717 = vpop.f32.mrb[0].mxu0
      %v718 = vadd.f32 %v493, %v717
      %v719 = vpop.f32.mrb[0].mxu0
      %720 = vmatprep.mubr.f32.mxu0 %v224
      %721 = vmatmul.mubr.f32.gmra.mrb[0].mxu0 %v223
      %v722 = vpop.f32.mrb[0].mxu0
      %v723 = vadd.f32 %v498, %v722
      %v724 = vpop.f32.mrb[0].mxu0
      %725 = vmatprep.mubr.f32.mxu0 %v228
      %726 = vmatmul.mubr.f32.gmra.mrb[0].mxu0 %v227
      %v727 = vpop.f32.mrb[0].mxu0
      %v728 = vadd.f32 %v503, %v727
      %v729 = vpop.f32.mrb[0].mxu0
      %730 = vmatprep.mubr.f32.mxu0 %v232
      %731 = vmatmul.mubr.f32.gmra.mrb[0].mxu0 %v231
      %v732 = vpop.f32.mrb[0].mxu0
      %v733 = vadd.f32 %v508, %v732
      %v734 = vpop.f32.mrb[0].mxu0
      %735 = vmatprep.mubr.f32.mxu0 %v236
      %736 = vmatmul.mubr.f32.gmra.mrb[0].mxu0 %v235
      %v737 = vpop.f32.mrb[0].mxu0
      %v738 = vadd.f32 %v513, %v737
      %v739 = vpop.f32.mrb[0].mxu0
      %740 = vmatprep.mubr.f32.mxu0 %v240
      %741 = vmatmul.mubr.f32.gmra.mrb[0].mxu0 %v239
      %v742 = vpop.f32.mrb[0].mxu0
      %v743 = vadd.f32 %v518, %v742
      %v744 = vpop.f32.mrb[0].mxu0
      %745 = vmatprep.mubr.f32.mxu0 %v244
      %746 = vmatmul.mubr.f32.gmra.mrb[0].mxu0 %v243
      %v747 = vpop.f32.mrb[0].mxu0
      %v748 = vadd.f32 %v523, %v747
      %v749 = vpop.f32.mrb[0].mxu0
      %750 = vmatprep.mubr.f32.mxu0 %v248
      %751 = vmatmul.mubr.f32.gmra.mrb[0].mxu0 %v247
      %v752 = vpop.f32.mrb[0].mxu0
      %v753 = vadd.f32 %v528, %v752
      %v754 = vpop.f32.mrb[0].mxu0
      %755 = vmatprep.mubr.f32.mxu0 %v252
      %756 = vmatmul.mubr.f32.gmra.mrb[0].mxu0 %v251
      %v757 = vpop.f32.mrb[0].mxu0
      %v758 = vadd.f32 %v533, %v757
      %v759 = vpop.f32.mrb[0].mxu0
      %760 = vmatprep.mubr.f32.mxu0 %v256
      %761 = vmatmul.mubr.f32.gmra.mrb[0].mxu0 %v255
      %v762 = vpop.f32.mrb[0].mxu0
      %v763 = vadd.f32 %v538, %v762
      %v764 = vpop.f32.mrb[0].mxu0
      %765 = vmatprep.mubr.f32.mxu0 %v260
      %766 = vmatmul.mubr.f32.gmra.mrb[0].mxu0 %v259
      %v767 = vpop.f32.mrb[0].mxu0
      %v768 = vadd.f32 %v543, %v767
      %v769 = vpop.f32.mrb[0].mxu0
      %770 = vmatprep.mubr.f32.mxu0 %v264
      %771 = vmatmul.mubr.f32.gmra.mrb[0].mxu0 %v263
      %v772 = vpop.f32.mrb[0].mxu0
      %v773 = vadd.f32 %v548, %v772
      %v774 = vpop.f32.mrb[0].mxu0
      %775 = vmatprep.mubr.f32.mxu0 %v268
      %776 = vmatmul.mubr.f32.gmra.mrb[0].mxu0 %v267
      %v777 = vpop.f32.mrb[0].mxu0
      %v778 = vadd.f32 %v553, %v777
      %v779 = vpop.f32.mrb[0].mxu0
      %780 = vmatprep.mubr.f32.mxu0 %v272
      %781 = vmatmul.mubr.f32.gmra.mrb[0].mxu0 %v271
      %v782 = vpop.f32.mrb[0].mxu0
      %v783 = vadd.f32 %v558, %v782
      %v784 = vpop.f32.mrb[0].mxu0
      %785 = vmatprep.mubr.f32.mxu0 %v276
      %786 = vmatmul.mubr.f32.gmra.mrb[0].mxu0 %v275
      %v787 = vpop.f32.mrb[0].mxu0
      %v788 = vadd.f32 %v563, %v787
      %v789 = vpop.f32.mrb[0].mxu0
      %790 = vmatprep.mubr.f32.mxu0 %v280
      %791 = vmatmul.mubr.f32.gmra.mrb[0].mxu0 %v279
      %v792 = vpop.f32.mrb[0].mxu0
      %v793 = vadd.f32 %v568, %v792
      %v794 = vpop.f32.mrb[0].mxu0
      %795 = vmatprep.mubr.f32.mxu0 %v284
      %796 = vmatmul.mubr.f32.gmra.mrb[0].mxu0 %v283
      %v797 = vpop.f32.mrb[0].mxu0
      %v798 = vadd.f32 %v573, %v797
      %v799 = vpop.f32.mrb[0].mxu0
      %800 = vmatprep.mubr.f32.mxu0 %v288
      %801 = vmatmul.mubr.f32.gmra.mrb[0].mxu0 %v287
      %v802 = vpop.f32.mrb[0].mxu0
      %v803 = vadd.f32 %v578, %v802
      %v804 = vpop.f32.mrb[0].mxu0
      %805 = vmatprep.mubr.f32.mxu0 %v292
      %806 = vmatmul.mubr.f32.gmra.mrb[0].mxu0 %v291
      %v807 = vpop.f32.mrb[0].mxu0
      %v808 = vadd.f32 %v583, %v807
      %v809 = vpop.f32.mrb[0].mxu0
      %810 = vmatprep.mubr.f32.mxu0 %v296
      %811 = vmatmul.mubr.f32.gmra.mrb[0].mxu0 %v295
      %v812 = vpop.f32.mrb[0].mxu0
      %v813 = vadd.f32 %v588, %v812
      %v814 = vpop.f32.mrb[0].mxu0
      %815 = vmatprep.mubr.f32.mxu0 %v300
      %816 = vmatmul.mubr.f32.gmra.mrb[0].mxu0 %v299
      %v817 = vpop.f32.mrb[0].mxu0
      %v818 = vadd.f32 %v593, %v817
      %v819 = vpop.f32.mrb[0].mxu0
      %820 = vmatprep.mubr.f32.mxu0 %v304
      %821 = vmatmul.mubr.f32.gmra.mrb[0].mxu0 %v303
      %v822 = vpop.f32.mrb[0].mxu0
      %v823 = vadd.f32 %v598, %v822
      %v824 = vpop.f32.mrb[0].mxu0
      %825 = vdwg.mxu0
      %v826 = vmul.f32 %v668, 0.5
      %v827 = vmul.f32 %v673, 0.5
      %v828 = vmul.f32 %v678, 0.5
      %v829 = vmul.f32 %v683, 0.5
      %v830 = vmul.f32 %v688, 0.5
      %v831 = vmul.f32 %v693, 0.5
      %v832 = vmul.f32 %v698, 0.5
      %v833 = vmul.f32 %v703, 0.5
      %v834 = vmul.f32 %v708, 0.5
      %v835 = vmul.f32 %v713, 0.5
      %v836 = vmul.f32 %v718, 0.5
      %v837 = vmul.f32 %v723, 0.5
      %v838 = vmul.f32 %v728, 0.5
      %v839 = vmul.f32 %v733, 0.5
      %v840 = vmul.f32 %v738, 0.5
      %v841 = vmul.f32 %v743, 0.5
      %v842 = vmul.f32 %v748, 0.5
      %v843 = vmul.f32 %v753, 0.5
      %v844 = vmul.f32 %v758, 0.5
      %v845 = vmul.f32 %v763, 0.5
      %v846 = vmul.f32 %v768, 0.5
      %v847 = vmul.f32 %v773, 0.5
      %v848 = vmul.f32 %v778, 0.5
      %v849 = vmul.f32 %v783, 0.5
      %v850 = vmul.f32 %v788, 0.5
      %v851 = vmul.f32 %v793, 0.5
      %v852 = vmul.f32 %v798, 0.5
      %v853 = vmul.f32 %v803, 0.5
      %v854 = vmul.f32 %v808, 0.5
      %v855 = vmul.f32 %v813, 0.5
      %v856 = vmul.f32 %v818, 0.5
      %v857 = vmul.f32 %v823, 0.5
      %v858 = vmul.f32 %v668, 0.044715
      %v859 = vmul.f32 %v673, 0.044715
      %v860 = vmul.f32 %v678, 0.044715
      %v861 = vmul.f32 %v683, 0.044715
      %v862 = vmul.f32 %v688, 0.044715
      %v863 = vmul.f32 %v693, 0.044715
      %v864 = vmul.f32 %v698, 0.044715
      %v865 = vmul.f32 %v703, 0.044715
      %v866 = vmul.f32 %v708, 0.044715
      %v867 = vmul.f32 %v713, 0.044715
      %v868 = vmul.f32 %v718, 0.044715
      %v869 = vmul.f32 %v723, 0.044715
      %v870 = vmul.f32 %v728, 0.044715
      %v871 = vmul.f32 %v733, 0.044715
      %v872 = vmul.f32 %v738, 0.044715
      %v873 = vmul.f32 %v743, 0.044715
      %v874 = vmul.f32 %v748, 0.044715
      %v875 = vmul.f32 %v753, 0.044715
      %v876 = vmul.f32 %v758, 0.044715
      %v877 = vmul.f32 %v763, 0.044715
      %v878 = vmul.f32 %v768, 0.044715
      %v879 = vmul.f32 %v773, 0.044715
      %v880 = vmul.f32 %v778, 0.044715
      %v881 = vmul.f32 %v783, 0.044715
      %v882 = vmul.f32 %v788, 0.044715
      %v883 = vmul.f32 %v793, 0.044715
      %v884 = vmul.f32 %v798, 0.044715
      %v885 = vmul.f32 %v803, 0.044715
      %v886 = vmul.f32 %v808, 0.044715
      %v887 = vmul.f32 %v813, 0.044715
      %v888 = vmul.f32 %v818, 0.044715
      %v889 = vmul.f32 %v823, 0.044715
      %v890 = vmul.f32 %v858, %v668
      %v891 = vmul.f32 %v859, %v673
      %v892 = vmul.f32 %v860, %v678
      %v893 = vmul.f32 %v861, %v683
      %v894 = vmul.f32 %v862, %v688
      %v895 = vmul.f32 %v863, %v693
      %v896 = vmul.f32 %v864, %v698
      %v897 = vmul.f32 %v865, %v703
      %v898 = vmul.f32 %v866, %v708
      %v899 = vmul.f32 %v867, %v713
      %v900 = vmul.f32 %v868, %v718
      %v901 = vmul.f32 %v869, %v723
      %v902 = vmul.f32 %v870, %v728
      %v903 = vmul.f32 %v871, %v733
      %v904 = vmul.f32 %v872, %v738
      %v905 = vmul.f32 %v873, %v743
      %v906 = vmul.f32 %v874, %v748
      %v907 = vmul.f32 %v875, %v753
      %v908 = vmul.f32 %v876, %v758
      %v909 = vmul.f32 %v877, %v763
      %v910 = vmul.f32 %v878, %v768
      %v911 = vmul.f32 %v879, %v773
      %v912 = vmul.f32 %v880, %v778
      %v913 = vmul.f32 %v881, %v783
      %v914 = vmul.f32 %v882, %v788
      %v915 = vmul.f32 %v883, %v793
      %v916 = vmul.f32 %v884, %v798
      %v917 = vmul.f32 %v885, %v803
      %v918 = vmul.f32 %v886, %v808
      %v919 = vmul.f32 %v887, %v813
      %v920 = vmul.f32 %v888, %v818
      %v921 = vmul.f32 %v889, %v823
      %v922 = vmul.f32 %v890, %v668
      %v923 = vmul.f32 %v891, %v673
      %v924 = vmul.f32 %v892, %v678
      %v925 = vmul.f32 %v893, %v683
      %v926 = vmul.f32 %v894, %v688
      %v927 = vmul.f32 %v895, %v693
      %v928 = vmul.f32 %v896, %v698
      %v929 = vmul.f32 %v897, %v703
      %v930 = vmul.f32 %v898, %v708
      %v931 = vmul.f32 %v899, %v713
      %v932 = vmul.f32 %v900, %v718
      %v933 = vmul.f32 %v901, %v723
      %v934 = vmul.f32 %v902, %v728
      %v935 = vmul.f32 %v903, %v733
      %v936 = vmul.f32 %v904, %v738
      %v937 = vmul.f32 %v905, %v743
      %v938 = vmul.f32 %v906, %v748
      %v939 = vmul.f32 %v907, %v753
      %v940 = vmul.f32 %v908, %v758
      %v941 = vmul.f32 %v909, %v763
      %v942 = vmul.f32 %v910, %v768
      %v943 = vmul.f32 %v911, %v773
      %v944 = vmul.f32 %v912, %v778
      %v945 = vmul.f32 %v913, %v783
      %v946 = vmul.f32 %v914, %v788
      %v947 = vmul.f32 %v915, %v793
      %v948 = vmul.f32 %v916, %v798
      %v949 = vmul.f32 %v917, %v803
      %v950 = vmul.f32 %v918, %v808
      %v951 = vmul.f32 %v919, %v813
      %v952 = vmul.f32 %v920, %v818
      %v953 = vmul.f32 %v921, %v823
      %v954 = vadd.f32 %v668, %v922
      %v955 = vadd.f32 %v673, %v923
      %v956 = vadd.f32 %v678, %v924
      %v957 = vadd.f32 %v683, %v925
      %v958 = vadd.f32 %v688, %v926
      %v959 = vadd.f32 %v693, %v927
      %v960 = vadd.f32 %v698, %v928
      %v961 = vadd.f32 %v703, %v929
      %v962 = vadd.f32 %v708, %v930
      %v963 = vadd.f32 %v713, %v931
      %v964 = vadd.f32 %v718, %v932
      %v965 = vadd.f32 %v723, %v933
      %v966 = vadd.f32 %v728, %v934
      %v967 = vadd.f32 %v733, %v935
      %v968 = vadd.f32 %v738, %v936
      %v969 = vadd.f32 %v743, %v937
      %v970 = vadd.f32 %v748, %v938
      %v971 = vadd.f32 %v753, %v939
      %v972 = vadd.f32 %v758, %v940
      %v973 = vadd.f32 %v763, %v941
      %v974 = vadd.f32 %v768, %v942
      %v975 = vadd.f32 %v773, %v943
      %v976 = vadd.f32 %v778, %v944
      %v977 = vadd.f32 %v783, %v945
      %v978 = vadd.f32 %v788, %v946
      %v979 = vadd.f32 %v793, %v947
      %v980 = vadd.f32 %v798, %v948
      %v981 = vadd.f32 %v803, %v949
      %v982 = vadd.f32 %v808, %v950
      %v983 = vadd.f32 %v813, %v951
      %v984 = vadd.f32 %v818, %v952
      %v985 = vadd.f32 %v823, %v953
      %v986 = vmul.f32 %v954, 0.7978846
      %v987 = vmul.f32 %v955, 0.7978846
      %v988 = vmul.f32 %v956, 0.7978846
      %v989 = vmul.f32 %v957, 0.7978846
      %v990 = vmul.f32 %v958, 0.7978846
      %v991 = vmul.f32 %v959, 0.7978846
      %v992 = vmul.f32 %v960, 0.7978846
      %v993 = vmul.f32 %v961, 0.7978846
      %v994 = vmul.f32 %v962, 0.7978846
      %v995 = vmul.f32 %v963, 0.7978846
      %v996 = vmul.f32 %v964, 0.7978846
      %v997 = vmul.f32 %v965, 0.7978846
      %v998 = vmul.f32 %v966, 0.7978846
      %v999 = vmul.f32 %v967, 0.7978846
      %v1000 = vmul.f32 %v968, 0.7978846
      %v1001 = vmul.f32 %v969, 0.7978846
      %v1002 = vmul.f32 %v970, 0.7978846
      %v1003 = vmul.f32 %v971, 0.7978846
      %v1004 = vmul.f32 %v972, 0.7978846
      %v1005 = vmul.f32 %v973, 0.7978846
      %v1006 = vmul.f32 %v974, 0.7978846
      %v1007 = vmul.f32 %v975, 0.7978846
      %v1008 = vmul.f32 %v976, 0.7978846
      %v1009 = vmul.f32 %v977, 0.7978846
      %v1010 = vmul.f32 %v978, 0.7978846
      %v1011 = vmul.f32 %v979, 0.7978846
      %v1012 = vmul.f32 %v980, 0.7978846
      %v1013 = vmul.f32 %v981, 0.7978846
      %v1014 = vmul.f32 %v982, 0.7978846
      %v1015 = vmul.f32 %v983, 0.7978846
      %v1016 = vmul.f32 %v984, 0.7978846
      %v1017 = vmul.f32 %v985, 0.7978846
      %v1018 = vtanh.pop %v986
      %v1019 = vtanh.pop %v987
      %v1020 = vtanh.pop %v988
      %v1021 = vtanh.pop %v989
      %v1022 = vtanh.pop %v990
      %v1023 = vtanh.pop %v991
      %v1024 = vtanh.pop %v992
      %v1025 = vtanh.pop %v993
      %v1026 = vtanh.pop %v994
      %v1027 = vtanh.pop %v995
      %v1028 = vtanh.pop %v996
      %v1029 = vtanh.pop %v997
      %v1030 = vtanh.pop %v998
      %v1031 = vtanh.pop %v999
      %v1032 = vtanh.pop %v1000
      %v1033 = vtanh.pop %v1001
      %v1034 = vtanh.pop %v1002
      %v1035 = vtanh.pop %v1003
      %v1036 = vtanh.pop %v1004
      %v1037 = vtanh.pop %v1005
      %v1038 = vtanh.pop %v1006
      %v1039 = vtanh.pop %v1007
      %v1040 = vtanh.pop %v1008
      %v1041 = vtanh.pop %v1009
      %v1042 = vtanh.pop %v1010
      %v1043 = vtanh.pop %v1011
      %v1044 = vtanh.pop %v1012
      %v1045 = vtanh.pop %v1013
      %v1046 = vtanh.pop %v1014
      %v1047 = vtanh.pop %v1015
      %v1048 = vtanh.pop %v1016
      %v1049 = vtanh.pop %v1017
      %v1050 = vadd.f32 %v1018, 1.0
      %v1051 = vadd.f32 %v1019, 1.0
      %v1052 = vadd.f32 %v1020, 1.0
      %v1053 = vadd.f32 %v1021, 1.0
      %v1054 = vadd.f32 %v1022, 1.0
      %v1055 = vadd.f32 %v1023, 1.0
      %v1056 = vadd.f32 %v1024, 1.0
      %v1057 = vadd.f32 %v1025, 1.0
      %v1058 = vadd.f32 %v1026, 1.0
      %v1059 = vadd.f32 %v1027, 1.0
      %v1060 = vadd.f32 %v1028, 1.0
      %v1061 = vadd.f32 %v1029, 1.0
      %v1062 = vadd.f32 %v1030, 1.0
      %v1063 = vadd.f32 %v1031, 1.0
      %v1064 = vadd.f32 %v1032, 1.0
      %v1065 = vadd.f32 %v1033, 1.0
      %v1066 = vadd.f32 %v1034, 1.0
      %v1067 = vadd.f32 %v1035, 1.0
      %v1068 = vadd.f32 %v1036, 1.0
      %v1069 = vadd.f32 %v1037, 1.0
      %v1070 = vadd.f32 %v1038, 1.0
      %v1071 = vadd.f32 %v1039, 1.0
      %v1072 = vadd.f32 %v1040, 1.0
      %v1073 = vadd.f32 %v1041, 1.0
      %v1074 = vadd.f32 %v1042, 1.0
      %v1075 = vadd.f32 %v1043, 1.0
      %v1076 = vadd.f32 %v1044, 1.0
      %v1077 = vadd.f32 %v1045, 1.0
      %v1078 = vadd.f32 %v1046, 1.0
      %v1079 = vadd.f32 %v1047, 1.0
      %v1080 = vadd.f32 %v1048, 1.0
      %v1081 = vadd.f32 %v1049, 1.0
      %v1082 = vmul.f32 %v826, %v1050
      %v1083 = vmul.f32 %v827, %v1051
      %v1084 = vmul.f32 %v828, %v1052
      %v1085 = vmul.f32 %v829, %v1053
      %v1086 = vmul.f32 %v830, %v1054
      %v1087 = vmul.f32 %v831, %v1055
      %v1088 = vmul.f32 %v832, %v1056
      %v1089 = vmul.f32 %v833, %v1057
      %v1090 = vmul.f32 %v834, %v1058
      %v1091 = vmul.f32 %v835, %v1059
      %v1092 = vmul.f32 %v836, %v1060
      %v1093 = vmul.f32 %v837, %v1061
      %v1094 = vmul.f32 %v838, %v1062
      %v1095 = vmul.f32 %v839, %v1063
      %v1096 = vmul.f32 %v840, %v1064
      %v1097 = vmul.f32 %v841, %v1065
      %v1098 = vmul.f32 %v842, %v1066
      %v1099 = vmul.f32 %v843, %v1067
      %v1100 = vmul.f32 %v844, %v1068
      %v1101 = vmul.f32 %v845, %v1069
      %v1102 = vmul.f32 %v846, %v1070
      %v1103 = vmul.f32 %v847, %v1071
      %v1104 = vmul.f32 %v848, %v1072
      %v1105 = vmul.f32 %v849, %v1073
      %v1106 = vmul.f32 %v850, %v1074
      %v1107 = vmul.f32 %v851, %v1075
      %v1108 = vmul.f32 %v852, %v1076
      %v1109 = vmul.f32 %v853, %v1077
      %v1110 = vmul.f32 %v854, %v1078
      %v1111 = vmul.f32 %v855, %v1079
      %v1112 = vmul.f32 %v856, %v1080
      %v1113 = vmul.f32 %v857, %v1081
      %1114 = vst [vmem:[%s175] sm:$0xff] %v1082
      %1115 = vst [vmem:[%s175 + $0x8] sm:$0xff] %v1083
      %1116 = vst [vmem:[%s175 + $0x10] sm:$0xff] %v1084
      %1117 = vst [vmem:[%s175 + $0x18] sm:$0xff] %v1085
      %1118 = vst [vmem:[%s175 + $0x20] sm:$0xff] %v1086
      %1119 = vst [vmem:[%s175 + $0x28] sm:$0xff] %v1087
      %1120 = vst [vmem:[%s175 + $0x30] sm:$0xff] %v1088
      %1121 = vst [vmem:[%s175 + $0x38] sm:$0xff] %v1089
      %1122 = vst [vmem:[%s175 + $0x40] sm:$0xff] %v1090
      %1123 = vst [vmem:[%s175 + $0x48] sm:$0xff] %v1091
      %1124 = vst [vmem:[%s175 + $0x50] sm:$0xff] %v1092
      %1125 = vst [vmem:[%s175 + $0x58] sm:$0xff] %v1093
      %1126 = vst [vmem:[%s175 + $0x60] sm:$0xff] %v1094
      %1127 = vst [vmem:[%s175 + $0x68] sm:$0xff] %v1095
      %1128 = vst [vmem:[%s175 + $0x70] sm:$0xff] %v1096
      %1129 = vst [vmem:[%s175 + $0x78] sm:$0xff] %v1097
      %1130 = vst [vmem:[%s175 + $0x80] sm:$0xff] %v1098
      %1131 = vst [vmem:[%s175 + $0x88] sm:$0xff] %v1099
      %1132 = vst [vmem:[%s175 + $0x90] sm:$0xff] %v1100
      %1133 = vst [vmem:[%s175 + $0x98] sm:$0xff] %v1101
      %1134 = vst [vmem:[%s175 + $0xa0] sm:$0xff] %v1102
      %1135 = vst [vmem:[%s175 + $0xa8] sm:$0xff] %v1103
      %1136 = vst [vmem:[%s175 + $0xb0] sm:$0xff] %v1104
      %1137 = vst [vmem:[%s175 + $0xb8] sm:$0xff] %v1105
      %1138 = vst [vmem:[%s175 + $0xc0] sm:$0xff] %v1106
      %1139 = vst [vmem:[%s175 + $0xc8] sm:$0xff] %v1107
      %1140 = vst [vmem:[%s175 + $0xd0] sm:$0xff] %v1108
      %1141 = vst [vmem:[%s175 + $0xd8] sm:$0xff] %v1109
      %1142 = vst [vmem:[%s175 + $0xe0] sm:$0xff] %v1110
      %1143 = vst [vmem:[%s175 + $0xe8] sm:$0xff] %v1111
      %1144 = vst [vmem:[%s175 + $0xf0] sm:$0xff] %v1112
      %1145 = vst [vmem:[%s175 + $0xf8] sm:$0xff] %v1113
      %s1146 = smul.u32 32, %s14
      %p1147 = scmp.lt.s32.totalorder %s1146, 95
      %s1148 = scalar_select %p1147, %s1146, 95
      %s1149 = smul.addr %s1148, 8
      %s1150 = scalar_lea.vmem %s3, %s1149
      // Predicated region
      $region33: #{mrcnn_shhs_forward.8} parent=31 // pred_check
        %p1151 = pneg %p100
      $region34: #{mrcnn_shhs_forward.8} parent=31 // pred_check_branch
        %1153 = sbr.rel (%p1151) target = $region36
      $region35: #{mrcnn_shhs_forward.8} parent=31 // pred_region
        %s1154 = smul.u32 32, %s14
      $region36: #{mrcnn_shhs_forward.8} parent=31 // pred_fallthru
        _
    $region32: #{mrcnn_shhs_forward.8} parent=5 // pred_fallthru
      _
    %p1155 = scmp.le.s32.totalorder 2, %s9
    // Predicated region
    $region37: #{mrcnn_shhs_forward.8} parent=5 // pred_check
      %p1156 = pneg %p1155
    $region38: #{mrcnn_shhs_forward.8} parent=5 // pred_check_branch
      %1158 = sbr.rel (%p1156) target = $region40
    $region39: #{mrcnn_shhs_forward.8} parent=5 // pred_region
      %s1159 = ssub.s32 %s9, 2
      // Predicated region
      $region41: #{mrcnn_shhs_forward.8} parent=39 // pred_check
        %p1160 = pneg %p106
      $region42: #{mrcnn_shhs_forward.8} parent=39 // pred_check_branch
        %1162 = sbr.rel (%p1160) target = $region44
      $region43: #{mrcnn_shhs_forward.8} parent=39 // pred_region
        %s1163 = smul.u32 32, %s15
        %p1164 = scmp.lt.s32.totalorder %s1163, 95
        %s1165 = scalar_select %p1164, %s1163, 95
        %s1166 = smul.addr %s1165, 8
        %s1167 = scalar_lea.vmem %s3, %s1166
      $region44: #{mrcnn_shhs_forward.8} parent=39 // pred_fallthru
        _
    $region40: #{mrcnn_shhs_forward.8} parent=5 // pred_fallthru
      _
  $region6: #{mrcnn_shhs_forward.8} parent=0 // loop_footer
    %s13 = sadd.s32 1, %s9
  $region7: #{mrcnn_shhs_forward.8} parent=0 // loop_footer_branch
    %8 = sbr.rel target = $region3
  $region8: #{mrcnn_shhs_forward.8} parent=0 // loop_exit
    _

// kernel: mrcnn_shhs_forward.9
$region0: #{mrcnn_shhs_forward.9}
  #allocation0 [shape = 'u32[]', space=smem, size = 0x4, offset = 0x4, fixed_abs, tag = 'smem constant byte address 0x4 - core index']
  #allocation1 [shape = 'u32[144,128]{1,0:T(1,128)}', space=vmem, size = 0x12000, scoped, tag = 'internal scratch']
  %s0 = inlined_call_operand.vmem [shape: f32[768,1024], index: 0, kind: input, shape index: {}]
  %s1 = inlined_call_operand.vmem [shape: f32[1024,128], index: 1, kind: input, shape index: {}]
  %s2 = inlined_call_operand.vmem [shape: f32[1,128], index: 2, kind: input, shape index: {}]
  %s3 = inlined_call_operand.vmem [shape: f32[768,128], index: 3, kind: output, shape index: {}]
  %s4 = sld [smem:[#allocation0]]
  $region45: #{mrcnn_shhs_forward.9} parent=0
    _
  %s6 = ssub.s32 1, %s4
  %s7 = scalar_select 0, %s6, %s4
  loop: start=0, step=1, limit=5
  $region2: #{mrcnn_shhs_forward.9} parent=0 // loop_pre_header
    _
  $region3: #{mrcnn_shhs_forward.9} parent=0 // loop_header
    %s9 = sphi 0, %s13
    %p10 = scmp.ge.s32.totalorder %s9, 5
    %s19 = sphi 0, %s21
    %s22 = sphi 0, %s19
    %s23 = sphi 0, %s22
    %s39 = sphi 0, %s23
    %s43 = sphi 0, %s43
    %s45 = sphi 0, %s43
    %s46 = sphi 0, %s45
    %s60 = sphi 0, %s46
    %s64 = sphi 0, %s64
    %s66 = sphi 0, %s64
    %s67 = sphi 0, %s66
    %s81 = sphi 0, %s67
    %s87 = sphi 0, %s89
    %s90 = sphi 0, %s87
    %s91 = sphi 0, %s90
    %s107 = sphi 0, %s91
  $region4: #{mrcnn_shhs_forward.9} parent=0 // loop_header_branch
    %12 = sbr.rel (%p10) target = $region8
  $region5: #{mrcnn_shhs_forward.9} parent=0 // loop_body
    %s14 = ssub.s32 %s9, 1
    %s15 = ssub.s32 %s9, 2
    %s16 = sadd.s32 %s9, 1
    %s17 = ssub.s32 %s9, %s16
    %p18 = scmp.eq.s32.totalorder %s17, 0
    %s20 = sadd.s32 %s19, 1
    %s21 = scalar_select %p18, %s19, %s20
    %p24 = pneg %p18
    %p25 = scmp.eq.s32.totalorder %s9, 2
    %p26 = por %p24, %p25
    %p27 = scmp.ne.s32.totalorder %s19, %s22
    %p28 = scmp.eq.s32.totalorder %s9, 0
    %p29 = por %p27, %p28
    %p30 = scmp.ne.s32.totalorder %s19, %s22
    %p31 = scmp.eq.s32.totalorder %s14, 2
    %p32 = por %p30, %p31
    %p33 = scmp.ne.s32.totalorder %s22, %s23
    %p34 = scmp.eq.s32.totalorder %s14, 0
    %p35 = por %p33, %p34
    %p36 = scmp.ne.s32.totalorder %s22, %s23
    %p37 = scmp.eq.s32.totalorder %s15, 2
    %p38 = por %p36, %p37
    %p40 = scmp.ne.s32.totalorder %s23, %s39
    %p41 = scmp.eq.s32.totalorder %s15, 0
    %p42 = por %p40, %p41
    %s44 = sadd.s32 %s43, 1
    %p47 = scmp.eq.s32.totalorder %s9, 2
    %p48 = scmp.ne.s32.totalorder %s43, %s45
    %p49 = scmp.eq.s32.totalorder %s9, 0
    %p50 = por %p48, %p49
    %p51 = scmp.ne.s32.totalorder %s43, %s45
    %p52 = scmp.eq.s32.totalorder %s14, 2
    %p53 = por %p51, %p52
    %p54 = scmp.ne.s32.totalorder %s45, %s46
    %p55 = scmp.eq.s32.totalorder %s14, 0
    %p56 = por %p54, %p55
    %p57 = scmp.ne.s32.totalorder %s45, %s46
    %p58 = scmp.eq.s32.totalorder %s15, 2
    %p59 = por %p57, %p58
    %p61 = scmp.ne.s32.totalorder %s46, %s60
    %p62 = scmp.eq.s32.totalorder %s15, 0
    %p63 = por %p61, %p62
    %s65 = sadd.s32 %s64, 1
    %p68 = scmp.eq.s32.totalorder %s9, 2
    %p69 = scmp.ne.s32.totalorder %s64, %s66
    %p70 = scmp.eq.s32.totalorder %s9, 0
    %p71 = por %p69, %p70
    %p72 = scmp.ne.s32.totalorder %s64, %s66
    %p73 = scmp.eq.s32.totalorder %s14, 2
    %p74 = por %p72, %p73
    %p75 = scmp.ne.s32.totalorder %s66, %s67
    %p76 = scmp.eq.s32.totalorder %s14, 0
    %p77 = por %p75, %p76
    %p78 = scmp.ne.s32.totalorder %s66, %s67
    %p79 = scmp.eq.s32.totalorder %s15, 2
    %p80 = por %p78, %p79
    %p82 = scmp.ne.s32.totalorder %s67, %s81
    %p83 = scmp.eq.s32.totalorder %s15, 0
    %p84 = por %p82, %p83
    %s85 = ssub.s32 %s9, %s16
    %p86 = scmp.eq.s32.totalorder %s85, 0
    %s88 = sadd.s32 %s87, 1
    %s89 = scalar_select %p86, %s87, %s88
    %p92 = pneg %p86
    %p93 = scmp.eq.s32.totalorder %s9, 2
    %p94 = por %p92, %p93
    %p95 = scmp.ne.s32.totalorder %s87, %s90
    %p96 = scmp.eq.s32.totalorder %s9, 0
    %p97 = por %p95, %p96
    %p98 = scmp.ne.s32.totalorder %s87, %s90
    %p99 = scmp.eq.s32.totalorder %s14, 2
    %p100 = por %p98, %p99
    %p101 = scmp.ne.s32.totalorder %s90, %s91
    %p102 = scmp.eq.s32.totalorder %s14, 0
    %p103 = por %p101, %p102
    %p104 = scmp.ne.s32.totalorder %s90, %s91
    %p105 = scmp.eq.s32.totalorder %s15, 2
    %p106 = por %p104, %p105
    %p108 = scmp.ne.s32.totalorder %s91, %s107
    %p109 = scmp.eq.s32.totalorder %s15, 0
    %p110 = por %p108, %p109
    %p111 = scmp.le.s32.totalorder 1, %s9
    %p112 = scmp.lt.s32.totalorder %s9, 4
    %p113 = pnand %p111, %p112
    %p114 = pneg %p113
    // Predicated region
    $region9: #{mrcnn_shhs_forward.9} parent=5 // pred_check
      _
    $region10: #{mrcnn_shhs_forward.9} parent=5 // pred_check_branch
      %116 = sbr.rel (%p113) target = $region12
    $region11: #{mrcnn_shhs_forward.9} parent=5 // pred_region
      %s117 = ssub.s32 %s9, 1
      // Predicated region
      $region13: #{mrcnn_shhs_forward.9} parent=11 // pred_check
        %p118 = pneg %p56
      $region14: #{mrcnn_shhs_forward.9} parent=11 // pred_check_branch
        %120 = sbr.rel (%p118) target = $region16
      $region15: #{mrcnn_shhs_forward.9} parent=11 // pred_region
        _
      $region16: #{mrcnn_shhs_forward.9} parent=11 // pred_fallthru
        _
      // Predicated region
      $region17: #{mrcnn_shhs_forward.9} parent=11 // pred_check
        %p121 = pneg %p77
      $region18: #{mrcnn_shhs_forward.9} parent=11 // pred_check_branch
        %123 = sbr.rel (%p121) target = $region20
      $region19: #{mrcnn_shhs_forward.9} parent=11 // pred_region
        _
      $region20: #{mrcnn_shhs_forward.9} parent=11 // pred_fallthru
        _
    $region12: #{mrcnn_shhs_forward.9} parent=5 // pred_fallthru
      _
    %p124 = scmp.lt.s32.totalorder %s9, 3
    // Predicated region
    $region21: #{mrcnn_shhs_forward.9} parent=5 // pred_check
      %p125 = pneg %p124
    $region22: #{mrcnn_shhs_forward.9} parent=5 // pred_check_branch
      %127 = sbr.rel (%p125) target = $region24
    $region23: #{mrcnn_shhs_forward.9} parent=5 // pred_region
      // Predicated region
      $region25: #{mrcnn_shhs_forward.9} parent=23 // pred_check
        %p128 = pneg %p29
      $region26: #{mrcnn_shhs_forward.9} parent=23 // pred_check_branch
        %130 = sbr.rel (%p128) target = $region28
      $region27: #{mrcnn_shhs_forward.9} parent=23 // pred_region
        %s131 = smul.u32 32, %s9
        %p132 = scmp.lt.s32.totalorder %s131, 95
        %s133 = scalar_select %p132, %s131, 95
        %s134 = smul.addr %s133, 8
        %s135 = smul.addr %s134, 8
        %s136 = scalar_lea.vmem %s0, %s135
        %s137 = smul.u32 32, %s9
      $region28: #{mrcnn_shhs_forward.9} parent=23 // pred_fallthru
        _
    $region24: #{mrcnn_shhs_forward.9} parent=5 // pred_fallthru
      _
    %p138 = scmp.le.s32.totalorder 1, %s9
    %p139 = scmp.lt.s32.totalorder %s9, 4
    %p140 = pnand %p138, %p139
    %p141 = pneg %p140
    // Predicated region
    $region29: #{mrcnn_shhs_forward.9} parent=5 // pred_check
      _
    $region30: #{mrcnn_shhs_forward.9} parent=5 // pred_check_branch
      %143 = sbr.rel (%p140) target = $region32
    $region31: #{mrcnn_shhs_forward.9} parent=5 // pred_region
      %s144 = ssub.s32 %s9, 1
      %s145 = smul.u32 32, %s14
      %p146 = scmp.lt.s32.totalorder %s145, 95
      %s147 = scalar_select %p146, %s145, 95
      %s148 = smul.addr %s147, 8
      %s149 = smul.addr %s148, 8
      %s150 = scalar_lea.vmem %s0, %s149
      %p151 = pneg %p35
      %p152 = pneg %p32
      %p153 = pneg %p56
      %p154 = pneg %p53
      %p155 = pneg %p77
      %p156 = pneg %p74
      %p157 = pneg %p103
      %p158 = pneg %p100
      %s159 = smul.u32 32, %s14
      %p160 = scmp.lt.s32.totalorder %s159, 95
      %s161 = scalar_select %p160, %s159, 95
      %s162 = smul.addr %s161, 8
      %s163 = scalar_lea.vmem %s3, %s162
      %s164 = smul.u32 32, %s14
      %p165 = scmp.lt.s32.totalorder %s164, 95
      %s166 = scalar_select %p165, %s164, 95
      %s167 = smul.addr %s166, 8
      %s168 = smul.addr %s167, 8
      %s169 = scalar_lea.vmem %s0, %s168
      %s170 = smul.u32 32, %s14
      %s171 = smul.u32 32, %s14
      %p172 = scmp.lt.s32.totalorder %s171, 95
      %s173 = scalar_select %p172, %s171, 95
      %s174 = smul.addr %s173, 8
      %s175 = scalar_lea.vmem %s3, %s174
      %s176 = smul.u32 32, %s14
      %v177 = vld [vmem:[%s169] sm:$0xff]
      %v178 = vld [vmem:[%s169 + $0x8] sm:$0xff]
      %v179 = vld [vmem:[%s169 + $0x10] sm:$0xff]
      %v180 = vld [vmem:[%s169 + $0x18] sm:$0xff]
      %v181 = vld [vmem:[%s169 + $0x20] sm:$0xff]
      %v182 = vld [vmem:[%s169 + $0x28] sm:$0xff]
      %v183 = vld [vmem:[%s169 + $0x30] sm:$0xff]
      %v184 = vld [vmem:[%s169 + $0x38] sm:$0xff]
      %v185 = vld [vmem:[%s169 + $0x40] sm:$0xff]
      %v186 = vld [vmem:[%s169 + $0x48] sm:$0xff]
      %v187 = vld [vmem:[%s169 + $0x50] sm:$0xff]
      %v188 = vld [vmem:[%s169 + $0x58] sm:$0xff]
      %v189 = vld [vmem:[%s169 + $0x60] sm:$0xff]
      %v190 = vld [vmem:[%s169 + $0x68] sm:$0xff]
      %v191 = vld [vmem:[%s169 + $0x70] sm:$0xff]
      %v192 = vld [vmem:[%s169 + $0x78] sm:$0xff]
      %v193 = vld [vmem:[%s169 + $0x80] sm:$0xff]
      %v194 = vld [vmem:[%s169 + $0x88] sm:$0xff]
      %v195 = vld [vmem:[%s169 + $0x90] sm:$0xff]
      %v196 = vld [vmem:[%s169 + $0x98] sm:$0xff]
      %v197 = vld [vmem:[%s169 + $0xa0] sm:$0xff]
      %v198 = vld [vmem:[%s169 + $0xa8] sm:$0xff]
      %v199 = vld [vmem:[%s169 + $0xb0] sm:$0xff]
      %v200 = vld [vmem:[%s169 + $0xb8] sm:$0xff]
      %v201 = vld [vmem:[%s169 + $0xc0] sm:$0xff]
      %v202 = vld [vmem:[%s169 + $0xc8] sm:$0xff]
      %v203 = vld [vmem:[%s169 + $0xd0] sm:$0xff]
      %v204 = vld [vmem:[%s169 + $0xd8] sm:$0xff]
      %v205 = vld [vmem:[%s169 + $0xe0] sm:$0xff]
      %v206 = vld [vmem:[%s169 + $0xe8] sm:$0xff]
      %v207 = vld [vmem:[%s169 + $0xf0] sm:$0xff]
      %v208 = vld [vmem:[%s169 + $0xf8] sm:$0xff]
      %v209 = vld [vmem:[%s169 + $0x100] sm:$0xff]
      %v210 = vld [vmem:[%s169 + $0x108] sm:$0xff]
      %v211 = vld [vmem:[%s169 + $0x110] sm:$0xff]
      %v212 = vld [vmem:[%s169 + $0x118] sm:$0xff]
      %v213 = vld [vmem:[%s169 + $0x120] sm:$0xff]
      %v214 = vld [vmem:[%s169 + $0x128] sm:$0xff]
      %v215 = vld [vmem:[%s169 + $0x130] sm:$0xff]
      %v216 = vld [vmem:[%s169 + $0x138] sm:$0xff]
      %v217 = vld [vmem:[%s169 + $0x140] sm:$0xff]
      %v218 = vld [vmem:[%s169 + $0x148] sm:$0xff]
      %v219 = vld [vmem:[%s169 + $0x150] sm:$0xff]
      %v220 = vld [vmem:[%s169 + $0x158] sm:$0xff]
      %v221 = vld [vmem:[%s169 + $0x160] sm:$0xff]
      %v222 = vld [vmem:[%s169 + $0x168] sm:$0xff]
      %v223 = vld [vmem:[%s169 + $0x170] sm:$0xff]
      %v224 = vld [vmem:[%s169 + $0x178] sm:$0xff]
      %v225 = vld [vmem:[%s169 + $0x180] sm:$0xff]
      %v226 = vld [vmem:[%s169 + $0x188] sm:$0xff]
      %v227 = vld [vmem:[%s169 + $0x190] sm:$0xff]
      %v228 = vld [vmem:[%s169 + $0x198] sm:$0xff]
      %v229 = vld [vmem:[%s169 + $0x1a0] sm:$0xff]
      %v230 = vld [vmem:[%s169 + $0x1a8] sm:$0xff]
      %v231 = vld [vmem:[%s169 + $0x1b0] sm:$0xff]
      %v232 = vld [vmem:[%s169 + $0x1b8] sm:$0xff]
      %v233 = vld [vmem:[%s169 + $0x1c0] sm:$0xff]
      %v234 = vld [vmem:[%s169 + $0x1c8] sm:$0xff]
      %v235 = vld [vmem:[%s169 + $0x1d0] sm:$0xff]
      %v236 = vld [vmem:[%s169 + $0x1d8] sm:$0xff]
      %v237 = vld [vmem:[%s169 + $0x1e0] sm:$0xff]
      %v238 = vld [vmem:[%s169 + $0x1e8] sm:$0xff]
      %v239 = vld [vmem:[%s169 + $0x1f0] sm:$0xff]
      %v240 = vld [vmem:[%s169 + $0x1f8] sm:$0xff]
      %v241 = vld [vmem:[%s169 + $0x200] sm:$0xff]
      %v242 = vld [vmem:[%s169 + $0x208] sm:$0xff]
      %v243 = vld [vmem:[%s169 + $0x210] sm:$0xff]
      %v244 = vld [vmem:[%s169 + $0x218] sm:$0xff]
      %v245 = vld [vmem:[%s169 + $0x220] sm:$0xff]
      %v246 = vld [vmem:[%s169 + $0x228] sm:$0xff]
      %v247 = vld [vmem:[%s169 + $0x230] sm:$0xff]
      %v248 = vld [vmem:[%s169 + $0x238] sm:$0xff]
      %v249 = vld [vmem:[%s169 + $0x240] sm:$0xff]
      %v250 = vld [vmem:[%s169 + $0x248] sm:$0xff]
      %v251 = vld [vmem:[%s169 + $0x250] sm:$0xff]
      %v252 = vld [vmem:[%s169 + $0x258] sm:$0xff]
      %v253 = vld [vmem:[%s169 + $0x260] sm:$0xff]
      %v254 = vld [vmem:[%s169 + $0x268] sm:$0xff]
      %v255 = vld [vmem:[%s169 + $0x270] sm:$0xff]
      %v256 = vld [vmem:[%s169 + $0x278] sm:$0xff]
      %v257 = vld [vmem:[%s169 + $0x280] sm:$0xff]
      %v258 = vld [vmem:[%s169 + $0x288] sm:$0xff]
      %v259 = vld [vmem:[%s169 + $0x290] sm:$0xff]
      %v260 = vld [vmem:[%s169 + $0x298] sm:$0xff]
      %v261 = vld [vmem:[%s169 + $0x2a0] sm:$0xff]
      %v262 = vld [vmem:[%s169 + $0x2a8] sm:$0xff]
      %v263 = vld [vmem:[%s169 + $0x2b0] sm:$0xff]
      %v264 = vld [vmem:[%s169 + $0x2b8] sm:$0xff]
      %v265 = vld [vmem:[%s169 + $0x2c0] sm:$0xff]
      %v266 = vld [vmem:[%s169 + $0x2c8] sm:$0xff]
      %v267 = vld [vmem:[%s169 + $0x2d0] sm:$0xff]
      %v268 = vld [vmem:[%s169 + $0x2d8] sm:$0xff]
      %v269 = vld [vmem:[%s169 + $0x2e0] sm:$0xff]
      %v270 = vld [vmem:[%s169 + $0x2e8] sm:$0xff]
      %v271 = vld [vmem:[%s169 + $0x2f0] sm:$0xff]
      %v272 = vld [vmem:[%s169 + $0x2f8] sm:$0xff]
      %v273 = vld [vmem:[%s169 + $0x300] sm:$0xff]
      %v274 = vld [vmem:[%s169 + $0x308] sm:$0xff]
      %v275 = vld [vmem:[%s169 + $0x310] sm:$0xff]
      %v276 = vld [vmem:[%s169 + $0x318] sm:$0xff]
      %v277 = vld [vmem:[%s169 + $0x320] sm:$0xff]
      %v278 = vld [vmem:[%s169 + $0x328] sm:$0xff]
      %v279 = vld [vmem:[%s169 + $0x330] sm:$0xff]
      %v280 = vld [vmem:[%s169 + $0x338] sm:$0xff]
      %v281 = vld [vmem:[%s169 + $0x340] sm:$0xff]
      %v282 = vld [vmem:[%s169 + $0x348] sm:$0xff]
      %v283 = vld [vmem:[%s169 + $0x350] sm:$0xff]
      %v284 = vld [vmem:[%s169 + $0x358] sm:$0xff]
      %v285 = vld [vmem:[%s169 + $0x360] sm:$0xff]
      %v286 = vld [vmem:[%s169 + $0x368] sm:$0xff]
      %v287 = vld [vmem:[%s169 + $0x370] sm:$0xff]
      %v288 = vld [vmem:[%s169 + $0x378] sm:$0xff]
      %v289 = vld [vmem:[%s169 + $0x380] sm:$0xff]
      %v290 = vld [vmem:[%s169 + $0x388] sm:$0xff]
      %v291 = vld [vmem:[%s169 + $0x390] sm:$0xff]
      %v292 = vld [vmem:[%s169 + $0x398] sm:$0xff]
      %v293 = vld [vmem:[%s169 + $0x3a0] sm:$0xff]
      %v294 = vld [vmem:[%s169 + $0x3a8] sm:$0xff]
      %v295 = vld [vmem:[%s169 + $0x3b0] sm:$0xff]
      %v296 = vld [vmem:[%s169 + $0x3b8] sm:$0xff]
      %v297 = vld [vmem:[%s169 + $0x3c0] sm:$0xff]
      %v298 = vld [vmem:[%s169 + $0x3c8] sm:$0xff]
      %v299 = vld [vmem:[%s169 + $0x3d0] sm:$0xff]
      %v300 = vld [vmem:[%s169 + $0x3d8] sm:$0xff]
      %v301 = vld [vmem:[%s169 + $0x3e0] sm:$0xff]
      %v302 = vld [vmem:[%s169 + $0x3e8] sm:$0xff]
      %v303 = vld [vmem:[%s169 + $0x3f0] sm:$0xff]
      %v304 = vld [vmem:[%s169 + $0x3f8] sm:$0xff]
      %v305 = vld [vmem:[%s169 + $0x400] sm:$0xff]
      %v306 = vld [vmem:[%s169 + $0x408] sm:$0xff]
      %v307 = vld [vmem:[%s169 + $0x410] sm:$0xff]
      %v308 = vld [vmem:[%s169 + $0x418] sm:$0xff]
      %v309 = vld [vmem:[%s169 + $0x420] sm:$0xff]
      %v310 = vld [vmem:[%s169 + $0x428] sm:$0xff]
      %v311 = vld [vmem:[%s169 + $0x430] sm:$0xff]
      %v312 = vld [vmem:[%s169 + $0x438] sm:$0xff]
      %v313 = vld [vmem:[%s169 + $0x440] sm:$0xff]
      %v314 = vld [vmem:[%s169 + $0x448] sm:$0xff]
      %v315 = vld [vmem:[%s169 + $0x450] sm:$0xff]
      %v316 = vld [vmem:[%s169 + $0x458] sm:$0xff]
      %v317 = vld [vmem:[%s169 + $0x460] sm:$0xff]
      %v318 = vld [vmem:[%s169 + $0x468] sm:$0xff]
      %v319 = vld [vmem:[%s169 + $0x470] sm:$0xff]
      %v320 = vld [vmem:[%s169 + $0x478] sm:$0xff]
      %v321 = vld [vmem:[%s169 + $0x480] sm:$0xff]
      %v322 = vld [vmem:[%s169 + $0x488] sm:$0xff]
      %v323 = vld [vmem:[%s169 + $0x490] sm:$0xff]
      %v324 = vld [vmem:[%s169 + $0x498] sm:$0xff]
      %v325 = vld [vmem:[%s169 + $0x4a0] sm:$0xff]
      %v326 = vld [vmem:[%s169 + $0x4a8] sm:$0xff]
      %v327 = vld [vmem:[%s169 + $0x4b0] sm:$0xff]
      %v328 = vld [vmem:[%s169 + $0x4b8] sm:$0xff]
      %v329 = vld [vmem:[%s169 + $0x4c0] sm:$0xff]
      %v330 = vld [vmem:[%s169 + $0x4c8] sm:$0xff]
      %v331 = vld [vmem:[%s169 + $0x4d0] sm:$0xff]
      %v332 = vld [vmem:[%s169 + $0x4d8] sm:$0xff]
      %v333 = vld [vmem:[%s169 + $0x4e0] sm:$0xff]
      %v334 = vld [vmem:[%s169 + $0x4e8] sm:$0xff]
      %v335 = vld [vmem:[%s169 + $0x4f0] sm:$0xff]
      %v336 = vld [vmem:[%s169 + $0x4f8] sm:$0xff]
      %v337 = vld [vmem:[%s169 + $0x500] sm:$0xff]
      %v338 = vld [vmem:[%s169 + $0x508] sm:$0xff]
      %v339 = vld [vmem:[%s169 + $0x510] sm:$0xff]
      %v340 = vld [vmem:[%s169 + $0x518] sm:$0xff]
      %v341 = vld [vmem:[%s169 + $0x520] sm:$0xff]
      %v342 = vld [vmem:[%s169 + $0x528] sm:$0xff]
      %v343 = vld [vmem:[%s169 + $0x530] sm:$0xff]
      %v344 = vld [vmem:[%s169 + $0x538] sm:$0xff]
      %v345 = vld [vmem:[%s169 + $0x540] sm:$0xff]
      %v346 = vld [vmem:[%s169 + $0x548] sm:$0xff]
      %v347 = vld [vmem:[%s169 + $0x550] sm:$0xff]
      %v348 = vld [vmem:[%s169 + $0x558] sm:$0xff]
      %v349 = vld [vmem:[%s169 + $0x560] sm:$0xff]
      %v350 = vld [vmem:[%s169 + $0x568] sm:$0xff]
      %v351 = vld [vmem:[%s169 + $0x570] sm:$0xff]
      %v352 = vld [vmem:[%s169 + $0x578] sm:$0xff]
      %v353 = vld [vmem:[%s169 + $0x580] sm:$0xff]
      %v354 = vld [vmem:[%s169 + $0x588] sm:$0xff]
      %v355 = vld [vmem:[%s169 + $0x590] sm:$0xff]
      %v356 = vld [vmem:[%s169 + $0x598] sm:$0xff]
      %v357 = vld [vmem:[%s169 + $0x5a0] sm:$0xff]
      %v358 = vld [vmem:[%s169 + $0x5a8] sm:$0xff]
      %v359 = vld [vmem:[%s169 + $0x5b0] sm:$0xff]
      %v360 = vld [vmem:[%s169 + $0x5b8] sm:$0xff]
      %v361 = vld [vmem:[%s169 + $0x5c0] sm:$0xff]
      %v362 = vld [vmem:[%s169 + $0x5c8] sm:$0xff]
      %v363 = vld [vmem:[%s169 + $0x5d0] sm:$0xff]
      %v364 = vld [vmem:[%s169 + $0x5d8] sm:$0xff]
      %v365 = vld [vmem:[%s169 + $0x5e0] sm:$0xff]
      %v366 = vld [vmem:[%s169 + $0x5e8] sm:$0xff]
      %v367 = vld [vmem:[%s169 + $0x5f0] sm:$0xff]
      %v368 = vld [vmem:[%s169 + $0x5f8] sm:$0xff]
      %v369 = vld [vmem:[%s169 + $0x600] sm:$0xff]
      %v370 = vld [vmem:[%s169 + $0x608] sm:$0xff]
      %v371 = vld [vmem:[%s169 + $0x610] sm:$0xff]
      %v372 = vld [vmem:[%s169 + $0x618] sm:$0xff]
      %v373 = vld [vmem:[%s169 + $0x620] sm:$0xff]
      %v374 = vld [vmem:[%s169 + $0x628] sm:$0xff]
      %v375 = vld [vmem:[%s169 + $0x630] sm:$0xff]
      %v376 = vld [vmem:[%s169 + $0x638] sm:$0xff]
      %v377 = vld [vmem:[%s169 + $0x640] sm:$0xff]
      %v378 = vld [vmem:[%s169 + $0x648] sm:$0xff]
      %v379 = vld [vmem:[%s169 + $0x650] sm:$0xff]
      %v380 = vld [vmem:[%s169 + $0x658] sm:$0xff]
      %v381 = vld [vmem:[%s169 + $0x660] sm:$0xff]
      %v382 = vld [vmem:[%s169 + $0x668] sm:$0xff]
      %v383 = vld [vmem:[%s169 + $0x670] sm:$0xff]
      %v384 = vld [vmem:[%s169 + $0x678] sm:$0xff]
      %v385 = vld [vmem:[%s169 + $0x680] sm:$0xff]
      %v386 = vld [vmem:[%s169 + $0x688] sm:$0xff]
      %v387 = vld [vmem:[%s169 + $0x690] sm:$0xff]
      %v388 = vld [vmem:[%s169 + $0x698] sm:$0xff]
      %v389 = vld [vmem:[%s169 + $0x6a0] sm:$0xff]
      %v390 = vld [vmem:[%s169 + $0x6a8] sm:$0xff]
      %v391 = vld [vmem:[%s169 + $0x6b0] sm:$0xff]
      %v392 = vld [vmem:[%s169 + $0x6b8] sm:$0xff]
      %v393 = vld [vmem:[%s169 + $0x6c0] sm:$0xff]
      %v394 = vld [vmem:[%s169 + $0x6c8] sm:$0xff]
      %v395 = vld [vmem:[%s169 + $0x6d0] sm:$0xff]
      %v396 = vld [vmem:[%s169 + $0x6d8] sm:$0xff]
      %v397 = vld [vmem:[%s169 + $0x6e0] sm:$0xff]
      %v398 = vld [vmem:[%s169 + $0x6e8] sm:$0xff]
      %v399 = vld [vmem:[%s169 + $0x6f0] sm:$0xff]
      %v400 = vld [vmem:[%s169 + $0x6f8] sm:$0xff]
      %v401 = vld [vmem:[%s169 + $0x700] sm:$0xff]
      %v402 = vld [vmem:[%s169 + $0x708] sm:$0xff]
      %v403 = vld [vmem:[%s169 + $0x710] sm:$0xff]
      %v404 = vld [vmem:[%s169 + $0x718] sm:$0xff]
      %v405 = vld [vmem:[%s169 + $0x720] sm:$0xff]
      %v406 = vld [vmem:[%s169 + $0x728] sm:$0xff]
      %v407 = vld [vmem:[%s169 + $0x730] sm:$0xff]
      %v408 = vld [vmem:[%s169 + $0x738] sm:$0xff]
      %v409 = vld [vmem:[%s169 + $0x740] sm:$0xff]
      %v410 = vld [vmem:[%s169 + $0x748] sm:$0xff]
      %v411 = vld [vmem:[%s169 + $0x750] sm:$0xff]
      %v412 = vld [vmem:[%s169 + $0x758] sm:$0xff]
      %v413 = vld [vmem:[%s169 + $0x760] sm:$0xff]
      %v414 = vld [vmem:[%s169 + $0x768] sm:$0xff]
      %v415 = vld [vmem:[%s169 + $0x770] sm:$0xff]
      %v416 = vld [vmem:[%s169 + $0x778] sm:$0xff]
      %v417 = vld [vmem:[%s169 + $0x780] sm:$0xff]
      %v418 = vld [vmem:[%s169 + $0x788] sm:$0xff]
      %v419 = vld [vmem:[%s169 + $0x790] sm:$0xff]
      %v420 = vld [vmem:[%s169 + $0x798] sm:$0xff]
      %v421 = vld [vmem:[%s169 + $0x7a0] sm:$0xff]
      %v422 = vld [vmem:[%s169 + $0x7a8] sm:$0xff]
      %v423 = vld [vmem:[%s169 + $0x7b0] sm:$0xff]
      %v424 = vld [vmem:[%s169 + $0x7b8] sm:$0xff]
      %v425 = vld [vmem:[%s169 + $0x7c0] sm:$0xff]
      %v426 = vld [vmem:[%s169 + $0x7c8] sm:$0xff]
      %v427 = vld [vmem:[%s169 + $0x7d0] sm:$0xff]
      %v428 = vld [vmem:[%s169 + $0x7d8] sm:$0xff]
      %v429 = vld [vmem:[%s169 + $0x7e0] sm:$0xff]
      %v430 = vld [vmem:[%s169 + $0x7e8] sm:$0xff]
      %v431 = vld [vmem:[%s169 + $0x7f0] sm:$0xff]
      %v432 = vld [vmem:[%s169 + $0x7f8] sm:$0xff]
      %v433 = vld [vmem:[%s1] sm:$0xff]
      %v434 = vld [vmem:[%s1 + $0x8] sm:$0xff]
      %v435 = vld [vmem:[%s1 + $0x10] sm:$0xff]
      %v436 = vld [vmem:[%s1 + $0x18] sm:$0xff]
      %v437 = vld [vmem:[%s1 + $0x20] sm:$0xff]
      %v438 = vld [vmem:[%s1 + $0x28] sm:$0xff]
      %v439 = vld [vmem:[%s1 + $0x30] sm:$0xff]
      %v440 = vld [vmem:[%s1 + $0x38] sm:$0xff]
      %v441 = vld [vmem:[%s1 + $0x40] sm:$0xff]
      %v442 = vld [vmem:[%s1 + $0x48] sm:$0xff]
      %v443 = vld [vmem:[%s1 + $0x50] sm:$0xff]
      %v444 = vld [vmem:[%s1 + $0x58] sm:$0xff]
      %v445 = vld [vmem:[%s1 + $0x60] sm:$0xff]
      %v446 = vld [vmem:[%s1 + $0x68] sm:$0xff]
      %v447 = vld [vmem:[%s1 + $0x70] sm:$0xff]
      %v448 = vld [vmem:[%s1 + $0x78] sm:$0xff]
      %v449 = vld [vmem:[%s1 + $0x80] sm:$0xff]
      %v450 = vld [vmem:[%s1 + $0x88] sm:$0xff]
      %v451 = vld [vmem:[%s1 + $0x90] sm:$0xff]
      %v452 = vld [vmem:[%s1 + $0x98] sm:$0xff]
      %v453 = vld [vmem:[%s1 + $0xa0] sm:$0xff]
      %v454 = vld [vmem:[%s1 + $0xa8] sm:$0xff]
      %v455 = vld [vmem:[%s1 + $0xb0] sm:$0xff]
      %v456 = vld [vmem:[%s1 + $0xb8] sm:$0xff]
      %v457 = vld [vmem:[%s1 + $0xc0] sm:$0xff]
      %v458 = vld [vmem:[%s1 + $0xc8] sm:$0xff]
      %v459 = vld [vmem:[%s1 + $0xd0] sm:$0xff]
      %v460 = vld [vmem:[%s1 + $0xd8] sm:$0xff]
      %v461 = vld [vmem:[%s1 + $0xe0] sm:$0xff]
      %v462 = vld [vmem:[%s1 + $0xe8] sm:$0xff]
      %v463 = vld [vmem:[%s1 + $0xf0] sm:$0xff]
      %v464 = vld [vmem:[%s1 + $0xf8] sm:$0xff]
      %v465 = vld [vmem:[%s1 + $0x100] sm:$0xff]
      %v466 = vld [vmem:[%s1 + $0x108] sm:$0xff]
      %v467 = vld [vmem:[%s1 + $0x110] sm:$0xff]
      %v468 = vld [vmem:[%s1 + $0x118] sm:$0xff]
      %v469 = vld [vmem:[%s1 + $0x120] sm:$0xff]
      %v470 = vld [vmem:[%s1 + $0x128] sm:$0xff]
      %v471 = vld [vmem:[%s1 + $0x130] sm:$0xff]
      %v472 = vld [vmem:[%s1 + $0x138] sm:$0xff]
      %v473 = vld [vmem:[%s1 + $0x140] sm:$0xff]
      %v474 = vld [vmem:[%s1 + $0x148] sm:$0xff]
      %v475 = vld [vmem:[%s1 + $0x150] sm:$0xff]
      %v476 = vld [vmem:[%s1 + $0x158] sm:$0xff]
      %v477 = vld [vmem:[%s1 + $0x160] sm:$0xff]
      %v478 = vld [vmem:[%s1 + $0x168] sm:$0xff]
      %v479 = vld [vmem:[%s1 + $0x170] sm:$0xff]
      %v480 = vld [vmem:[%s1 + $0x178] sm:$0xff]
      %v481 = vld [vmem:[%s1 + $0x180] sm:$0xff]
      %v482 = vld [vmem:[%s1 + $0x188] sm:$0xff]
      %v483 = vld [vmem:[%s1 + $0x190] sm:$0xff]
      %v484 = vld [vmem:[%s1 + $0x198] sm:$0xff]
      %v485 = vld [vmem:[%s1 + $0x1a0] sm:$0xff]
      %v486 = vld [vmem:[%s1 + $0x1a8] sm:$0xff]
      %v487 = vld [vmem:[%s1 + $0x1b0] sm:$0xff]
      %v488 = vld [vmem:[%s1 + $0x1b8] sm:$0xff]
      %v489 = vld [vmem:[%s1 + $0x1c0] sm:$0xff]
      %v490 = vld [vmem:[%s1 + $0x1c8] sm:$0xff]
      %v491 = vld [vmem:[%s1 + $0x1d0] sm:$0xff]
      %v492 = vld [vmem:[%s1 + $0x1d8] sm:$0xff]
      %v493 = vld [vmem:[%s1 + $0x1e0] sm:$0xff]
      %v494 = vld [vmem:[%s1 + $0x1e8] sm:$0xff]
      %v495 = vld [vmem:[%s1 + $0x1f0] sm:$0xff]
      %v496 = vld [vmem:[%s1 + $0x1f8] sm:$0xff]
      %v497 = vld [vmem:[%s1 + $0x200] sm:$0xff]
      %v498 = vld [vmem:[%s1 + $0x208] sm:$0xff]
      %v499 = vld [vmem:[%s1 + $0x210] sm:$0xff]
      %v500 = vld [vmem:[%s1 + $0x218] sm:$0xff]
      %v501 = vld [vmem:[%s1 + $0x220] sm:$0xff]
      %v502 = vld [vmem:[%s1 + $0x228] sm:$0xff]
      %v503 = vld [vmem:[%s1 + $0x230] sm:$0xff]
      %v504 = vld [vmem:[%s1 + $0x238] sm:$0xff]
      %v505 = vld [vmem:[%s1 + $0x240] sm:$0xff]
      %v506 = vld [vmem:[%s1 + $0x248] sm:$0xff]
      %v507 = vld [vmem:[%s1 + $0x250] sm:$0xff]
      %v508 = vld [vmem:[%s1 + $0x258] sm:$0xff]
      %v509 = vld [vmem:[%s1 + $0x260] sm:$0xff]
      %v510 = vld [vmem:[%s1 + $0x268] sm:$0xff]
      %v511 = vld [vmem:[%s1 + $0x270] sm:$0xff]
      %v512 = vld [vmem:[%s1 + $0x278] sm:$0xff]
      %v513 = vld [vmem:[%s1 + $0x280] sm:$0xff]
      %v514 = vld [vmem:[%s1 + $0x288] sm:$0xff]
      %v515 = vld [vmem:[%s1 + $0x290] sm:$0xff]
      %v516 = vld [vmem:[%s1 + $0x298] sm:$0xff]
      %v517 = vld [vmem:[%s1 + $0x2a0] sm:$0xff]
      %v518 = vld [vmem:[%s1 + $0x2a8] sm:$0xff]
      %v519 = vld [vmem:[%s1 + $0x2b0] sm:$0xff]
      %v520 = vld [vmem:[%s1 + $0x2b8] sm:$0xff]
      %v521 = vld [vmem:[%s1 + $0x2c0] sm:$0xff]
      %v522 = vld [vmem:[%s1 + $0x2c8] sm:$0xff]
      %v523 = vld [vmem:[%s1 + $0x2d0] sm:$0xff]
      %v524 = vld [vmem:[%s1 + $0x2d8] sm:$0xff]
      %v525 = vld [vmem:[%s1 + $0x2e0] sm:$0xff]
      %v526 = vld [vmem:[%s1 + $0x2e8] sm:$0xff]
      %v527 = vld [vmem:[%s1 + $0x2f0] sm:$0xff]
      %v528 = vld [vmem:[%s1 + $0x2f8] sm:$0xff]
      %v529 = vld [vmem:[%s1 + $0x300] sm:$0xff]
      %v530 = vld [vmem:[%s1 + $0x308] sm:$0xff]
      %v531 = vld [vmem:[%s1 + $0x310] sm:$0xff]
      %v532 = vld [vmem:[%s1 + $0x318] sm:$0xff]
      %v533 = vld [vmem:[%s1 + $0x320] sm:$0xff]
      %v534 = vld [vmem:[%s1 + $0x328] sm:$0xff]
      %v535 = vld [vmem:[%s1 + $0x330] sm:$0xff]
      %v536 = vld [vmem:[%s1 + $0x338] sm:$0xff]
      %v537 = vld [vmem:[%s1 + $0x340] sm:$0xff]
      %v538 = vld [vmem:[%s1 + $0x348] sm:$0xff]
      %v539 = vld [vmem:[%s1 + $0x350] sm:$0xff]
      %v540 = vld [vmem:[%s1 + $0x358] sm:$0xff]
      %v541 = vld [vmem:[%s1 + $0x360] sm:$0xff]
      %v542 = vld [vmem:[%s1 + $0x368] sm:$0xff]
      %v543 = vld [vmem:[%s1 + $0x370] sm:$0xff]
      %v544 = vld [vmem:[%s1 + $0x378] sm:$0xff]
      %v545 = vld [vmem:[%s1 + $0x380] sm:$0xff]
      %v546 = vld [vmem:[%s1 + $0x388] sm:$0xff]
      %v547 = vld [vmem:[%s1 + $0x390] sm:$0xff]
      %v548 = vld [vmem:[%s1 + $0x398] sm:$0xff]
      %v549 = vld [vmem:[%s1 + $0x3a0] sm:$0xff]
      %v550 = vld [vmem:[%s1 + $0x3a8] sm:$0xff]
      %v551 = vld [vmem:[%s1 + $0x3b0] sm:$0xff]
      %v552 = vld [vmem:[%s1 + $0x3b8] sm:$0xff]
      %v553 = vld [vmem:[%s1 + $0x3c0] sm:$0xff]
      %v554 = vld [vmem:[%s1 + $0x3c8] sm:$0xff]
      %v555 = vld [vmem:[%s1 + $0x3d0] sm:$0xff]
      %v556 = vld [vmem:[%s1 + $0x3d8] sm:$0xff]
      %v557 = vld [vmem:[%s1 + $0x3e0] sm:$0xff]
      %v558 = vld [vmem:[%s1 + $0x3e8] sm:$0xff]
      %v559 = vld [vmem:[%s1 + $0x3f0] sm:$0xff]
      %v560 = vld [vmem:[%s1 + $0x3f8] sm:$0xff]
      %v561 = vld [vmem:[%s2] sm:$0x1]
      %v563 = vlaneseq
      %v564 = vshrl.u32 %v563, 7
      %v565 = vsub.s32 0, %v564
      %v566 = vrot.slane %v561, %v565
      %568 = vmatprep.subr.mxu0 0.0
      %569 = vmatpush1.msra.mxu0 %v433
      %570 = vmatprep.subr.mxu0 0.0
      %571 = vmatpush1.msra.mxu0 %v434
      %572 = vmatprep.subr.mxu0 0.0
      %573 = vmatpush1.msra.mxu0 %v435
      %574 = vmatprep.subr.mxu0 0.0
      %575 = vmatpush1.msra.mxu0 %v436
      %576 = vmatprep.subr.mxu0 0.0
      %577 = vmatpush1.msra.mxu0 %v437
      %578 = vmatprep.subr.mxu0 0.0
      %579 = vmatpush1.msra.mxu0 %v438
      %580 = vmatprep.subr.mxu0 0.0
      %581 = vmatpush1.msra.mxu0 %v439
      %582 = vmatprep.subr.mxu0 0.0
      %583 = vmatpush1.msra.mxu0 %v440
      %584 = vmatprep.subr.mxu0 0.0
      %585 = vmatpush1.msra.mxu0 %v441
      %586 = vmatprep.subr.mxu0 0.0
      %587 = vmatpush1.msra.mxu0 %v442
      %588 = vmatprep.subr.mxu0 0.0
      %589 = vmatpush1.msra.mxu0 %v443
      %590 = vmatprep.subr.mxu0 0.0
      %591 = vmatpush1.msra.mxu0 %v444
      %592 = vmatprep.subr.mxu0 0.0
      %593 = vmatpush1.msra.mxu0 %v445
      %594 = vmatprep.subr.mxu0 0.0
      %595 = vmatpush1.msra.mxu0 %v446
      %596 = vmatprep.subr.mxu0 0.0
      %597 = vmatpush1.msra.mxu0 %v447
      %598 = vmatprep.subr.mxu0 0.0
      %599 = vmatpush1.msra.mxu0 %v448
      %600 = vmatprep.subr.mxu0 0.0
      %601 = vmatpush1.msra.mxu0 %v449
      %602 = vmatprep.subr.mxu0 0.0
      %603 = vmatpush1.msra.mxu0 %v450
      %604 = vmatprep.subr.mxu0 0.0
      %605 = vmatpush1.msra.mxu0 %v451
      %606 = vmatprep.subr.mxu0 0.0
      %607 = vmatpush1.msra.mxu0 %v452
      %608 = vmatprep.subr.mxu0 0.0
      %609 = vmatpush1.msra.mxu0 %v453
      %610 = vmatprep.subr.mxu0 0.0
      %611 = vmatpush1.msra.mxu0 %v454
      %612 = vmatprep.subr.mxu0 0.0
      %613 = vmatpush1.msra.mxu0 %v455
      %614 = vmatprep.subr.mxu0 0.0
      %615 = vmatpush1.msra.mxu0 %v456
      %616 = vmatprep.subr.mxu0 0.0
      %617 = vmatpush1.msra.mxu0 %v457
      %618 = vmatprep.subr.mxu0 0.0
      %619 = vmatpush1.msra.mxu0 %v458
      %620 = vmatprep.subr.mxu0 0.0
      %621 = vmatpush1.msra.mxu0 %v459
      %622 = vmatprep.subr.mxu0 0.0
      %623 = vmatpush1.msra.mxu0 %v460
      %624 = vmatprep.subr.mxu0 0.0
      %625 = vmatpush1.msra.mxu0 %v461
      %626 = vmatprep.subr.mxu0 0.0
      %627 = vmatpush1.msra.mxu0 %v462
      %628 = vmatprep.subr.mxu0 0.0
      %629 = vmatpush1.msra.mxu0 %v463
      %630 = vmatprep.subr.mxu0 0.0
      %631 = vmatpush1.msra.mxu0 %v464
      %632 = vmatprep.mubr.f32.mxu0 %v178
      %633 = vmatmul.mubr.f32.gmra.mrb[0].mxu0 %v177
      %v634 = vpop.f32.mrb[0].mxu0
      %v635 = vadd.f32 %v566, %v634
      %v636 = vpop.f32.mrb[0].mxu0
      %637 = vmatprep.mubr.f32.mxu0 %v186
      %638 = vmatmul.mubr.f32.gmra.mrb[0].mxu0 %v185
      %v639 = vpop.f32.mrb[0].mxu0
      %v640 = vadd.f32 %v566, %v639
      %v641 = vpop.f32.mrb[0].mxu0
      %642 = vmatprep.mubr.f32.mxu0 %v194
      %643 = vmatmul.mubr.f32.gmra.mrb[0].mxu0 %v193
      %v644 = vpop.f32.mrb[0].mxu0
      %v645 = vadd.f32 %v566, %v644
      %v646 = vpop.f32.mrb[0].mxu0
      %647 = vmatprep.mubr.f32.mxu0 %v202
      %648 = vmatmul.mubr.f32.gmra.mrb[0].mxu0 %v201
      %v649 = vpop.f32.mrb[0].mxu0
      %v650 = vadd.f32 %v566, %v649
      %v651 = vpop.f32.mrb[0].mxu0
      %652 = vmatprep.mubr.f32.mxu0 %v210
      %653 = vmatmul.mubr.f32.gmra.mrb[0].mxu0 %v209
      %v654 = vpop.f32.mrb[0].mxu0
      %v655 = vadd.f32 %v566, %v654
      %v656 = vpop.f32.mrb[0].mxu0
      %657 = vmatprep.mubr.f32.mxu0 %v218
      %658 = vmatmul.mubr.f32.gmra.mrb[0].mxu0 %v217
      %v659 = vpop.f32.mrb[0].mxu0
      %v660 = vadd.f32 %v566, %v659
      %v661 = vpop.f32.mrb[0].mxu0
      %662 = vmatprep.mubr.f32.mxu0 %v226
      %663 = vmatmul.mubr.f32.gmra.mrb[0].mxu0 %v225
      %v664 = vpop.f32.mrb[0].mxu0
      %v665 = vadd.f32 %v566, %v664
      %v666 = vpop.f32.mrb[0].mxu0
      %667 = vmatprep.mubr.f32.mxu0 %v234
      %668 = vmatmul.mubr.f32.gmra.mrb[0].mxu0 %v233
      %v669 = vpop.f32.mrb[0].mxu0
      %v670 = vadd.f32 %v566, %v669
      %v671 = vpop.f32.mrb[0].mxu0
      %672 = vmatprep.mubr.f32.mxu0 %v242
      %673 = vmatmul.mubr.f32.gmra.mrb[0].mxu0 %v241
      %v674 = vpop.f32.mrb[0].mxu0
      %v675 = vadd.f32 %v566, %v674
      %v676 = vpop.f32.mrb[0].mxu0
      %677 = vmatprep.mubr.f32.mxu0 %v250
      %678 = vmatmul.mubr.f32.gmra.mrb[0].mxu0 %v249
      %v679 = vpop.f32.mrb[0].mxu0
      %v680 = vadd.f32 %v566, %v679
      %v681 = vpop.f32.mrb[0].mxu0
      %682 = vmatprep.mubr.f32.mxu0 %v258
      %683 = vmatmul.mubr.f32.gmra.mrb[0].mxu0 %v257
      %v684 = vpop.f32.mrb[0].mxu0
      %v685 = vadd.f32 %v566, %v684
      %v686 = vpop.f32.mrb[0].mxu0
      %687 = vmatprep.mubr.f32.mxu0 %v266
      %688 = vmatmul.mubr.f32.gmra.mrb[0].mxu0 %v265
      %v689 = vpop.f32.mrb[0].mxu0
      %v690 = vadd.f32 %v566, %v689
      %v691 = vpop.f32.mrb[0].mxu0
      %692 = vmatprep.mubr.f32.mxu0 %v274
      %693 = vmatmul.mubr.f32.gmra.mrb[0].mxu0 %v273
      %v694 = vpop.f32.mrb[0].mxu0
      %v695 = vadd.f32 %v566, %v694
      %v696 = vpop.f32.mrb[0].mxu0
      %697 = vmatprep.mubr.f32.mxu0 %v282
      %698 = vmatmul.mubr.f32.gmra.mrb[0].mxu0 %v281
      %v699 = vpop.f32.mrb[0].mxu0
      %v700 = vadd.f32 %v566, %v699
      %v701 = vpop.f32.mrb[0].mxu0
      %702 = vmatprep.mubr.f32.mxu0 %v290
      %703 = vmatmul.mubr.f32.gmra.mrb[0].mxu0 %v289
      %v704 = vpop.f32.mrb[0].mxu0
      %v705 = vadd.f32 %v566, %v704
      %v706 = vpop.f32.mrb[0].mxu0
      %707 = vmatprep.mubr.f32.mxu0 %v298
      %708 = vmatmul.mubr.f32.gmra.mrb[0].mxu0 %v297
      %v709 = vpop.f32.mrb[0].mxu0
      %v710 = vadd.f32 %v566, %v709
      %v711 = vpop.f32.mrb[0].mxu0
      %712 = vmatprep.mubr.f32.mxu0 %v306
      %713 = vmatmul.mubr.f32.gmra.mrb[0].mxu0 %v305
      %v714 = vpop.f32.mrb[0].mxu0
      %v715 = vadd.f32 %v566, %v714
      %v716 = vpop.f32.mrb[0].mxu0
      %717 = vmatprep.mubr.f32.mxu0 %v314
      %718 = vmatmul.mubr.f32.gmra.mrb[0].mxu0 %v313
      %v719 = vpop.f32.mrb[0].mxu0
      %v720 = vadd.f32 %v566, %v719
      %v721 = vpop.f32.mrb[0].mxu0
      %722 = vmatprep.mubr.f32.mxu0 %v322
      %723 = vmatmul.mubr.f32.gmra.mrb[0].mxu0 %v321
      %v724 = vpop.f32.mrb[0].mxu0
      %v725 = vadd.f32 %v566, %v724
      %v726 = vpop.f32.mrb[0].mxu0
      %727 = vmatprep.mubr.f32.mxu0 %v330
      %728 = vmatmul.mubr.f32.gmra.mrb[0].mxu0 %v329
      %v729 = vpop.f32.mrb[0].mxu0
      %v730 = vadd.f32 %v566, %v729
      %v731 = vpop.f32.mrb[0].mxu0
      %732 = vmatprep.mubr.f32.mxu0 %v338
      %733 = vmatmul.mubr.f32.gmra.mrb[0].mxu0 %v337
      %v734 = vpop.f32.mrb[0].mxu0
      %v735 = vadd.f32 %v566, %v734
      %v736 = vpop.f32.mrb[0].mxu0
      %737 = vmatprep.mubr.f32.mxu0 %v346
      %738 = vmatmul.mubr.f32.gmra.mrb[0].mxu0 %v345
      %v739 = vpop.f32.mrb[0].mxu0
      %v740 = vadd.f32 %v566, %v739
      %v741 = vpop.f32.mrb[0].mxu0
      %742 = vmatprep.mubr.f32.mxu0 %v354
      %743 = vmatmul.mubr.f32.gmra.mrb[0].mxu0 %v353
      %v744 = vpop.f32.mrb[0].mxu0
      %v745 = vadd.f32 %v566, %v744
      %v746 = vpop.f32.mrb[0].mxu0
      %747 = vmatprep.mubr.f32.mxu0 %v362
      %748 = vmatmul.mubr.f32.gmra.mrb[0].mxu0 %v361
      %v749 = vpop.f32.mrb[0].mxu0
      %v750 = vadd.f32 %v566, %v749
      %v751 = vpop.f32.mrb[0].mxu0
      %752 = vmatprep.mubr.f32.mxu0 %v370
      %753 = vmatmul.mubr.f32.gmra.mrb[0].mxu0 %v369
      %v754 = vpop.f32.mrb[0].mxu0
      %v755 = vadd.f32 %v566, %v754
      %v756 = vpop.f32.mrb[0].mxu0
      %757 = vmatprep.mubr.f32.mxu0 %v378
      %758 = vmatmul.mubr.f32.gmra.mrb[0].mxu0 %v377
      %v759 = vpop.f32.mrb[0].mxu0
      %v760 = vadd.f32 %v566, %v759
      %v761 = vpop.f32.mrb[0].mxu0
      %762 = vmatprep.mubr.f32.mxu0 %v386
      %763 = vmatmul.mubr.f32.gmra.mrb[0].mxu0 %v385
      %v764 = vpop.f32.mrb[0].mxu0
      %v765 = vadd.f32 %v566, %v764
      %v766 = vpop.f32.mrb[0].mxu0
      %767 = vmatprep.mubr.f32.mxu0 %v394
      %768 = vmatmul.mubr.f32.gmra.mrb[0].mxu0 %v393
      %v769 = vpop.f32.mrb[0].mxu0
      %v770 = vadd.f32 %v566, %v769
      %v771 = vpop.f32.mrb[0].mxu0
      %772 = vmatprep.mubr.f32.mxu0 %v402
      %773 = vmatmul.mubr.f32.gmra.mrb[0].mxu0 %v401
      %v774 = vpop.f32.mrb[0].mxu0
      %v775 = vadd.f32 %v566, %v774
      %v776 = vpop.f32.mrb[0].mxu0
      %777 = vmatprep.mubr.f32.mxu0 %v410
      %778 = vmatmul.mubr.f32.gmra.mrb[0].mxu0 %v409
      %v779 = vpop.f32.mrb[0].mxu0
      %v780 = vadd.f32 %v566, %v779
      %v781 = vpop.f32.mrb[0].mxu0
      %782 = vmatprep.mubr.f32.mxu0 %v418
      %783 = vmatmul.mubr.f32.gmra.mrb[0].mxu0 %v417
      %v784 = vpop.f32.mrb[0].mxu0
      %v785 = vadd.f32 %v566, %v784
      %v786 = vpop.f32.mrb[0].mxu0
      %787 = vmatprep.mubr.f32.mxu0 %v426
      %788 = vmatmul.mubr.f32.gmra.mrb[0].mxu0 %v425
      %v789 = vpop.f32.mrb[0].mxu0
      %v790 = vadd.f32 %v566, %v789
      %v791 = vpop.f32.mrb[0].mxu0
      %792 = vdwg.mxu0
      %793 = vmatprep.subr.mxu0 0.0
      %794 = vmatpush1.msra.mxu0 %v465
      %795 = vmatprep.subr.mxu0 0.0
      %796 = vmatpush1.msra.mxu0 %v466
      %797 = vmatprep.subr.mxu0 0.0
      %798 = vmatpush1.msra.mxu0 %v467
      %799 = vmatprep.subr.mxu0 0.0
      %800 = vmatpush1.msra.mxu0 %v468
      %801 = vmatprep.subr.mxu0 0.0
      %802 = vmatpush1.msra.mxu0 %v469
      %803 = vmatprep.subr.mxu0 0.0
      %804 = vmatpush1.msra.mxu0 %v470
      %805 = vmatprep.subr.mxu0 0.0
      %806 = vmatpush1.msra.mxu0 %v471
      %807 = vmatprep.subr.mxu0 0.0
      %808 = vmatpush1.msra.mxu0 %v472
      %809 = vmatprep.subr.mxu0 0.0
      %810 = vmatpush1.msra.mxu0 %v473
      %811 = vmatprep.subr.mxu0 0.0
      %812 = vmatpush1.msra.mxu0 %v474
      %813 = vmatprep.subr.mxu0 0.0
      %814 = vmatpush1.msra.mxu0 %v475
      %815 = vmatprep.subr.mxu0 0.0
      %816 = vmatpush1.msra.mxu0 %v476
      %817 = vmatprep.subr.mxu0 0.0
      %818 = vmatpush1.msra.mxu0 %v477
      %819 = vmatprep.subr.mxu0 0.0
      %820 = vmatpush1.msra.mxu0 %v478
      %821 = vmatprep.subr.mxu0 0.0
      %822 = vmatpush1.msra.mxu0 %v479
      %823 = vmatprep.subr.mxu0 0.0
      %824 = vmatpush1.msra.mxu0 %v480
      %825 = vmatprep.subr.mxu0 0.0
      %826 = vmatpush1.msra.mxu0 %v481
      %827 = vmatprep.subr.mxu0 0.0
      %828 = vmatpush1.msra.mxu0 %v482
      %829 = vmatprep.subr.mxu0 0.0
      %830 = vmatpush1.msra.mxu0 %v483
      %831 = vmatprep.subr.mxu0 0.0
      %832 = vmatpush1.msra.mxu0 %v484
      %833 = vmatprep.subr.mxu0 0.0
      %834 = vmatpush1.msra.mxu0 %v485
      %835 = vmatprep.subr.mxu0 0.0
      %836 = vmatpush1.msra.mxu0 %v486
      %837 = vmatprep.subr.mxu0 0.0
      %838 = vmatpush1.msra.mxu0 %v487
      %839 = vmatprep.subr.mxu0 0.0
      %840 = vmatpush1.msra.mxu0 %v488
      %841 = vmatprep.subr.mxu0 0.0
      %842 = vmatpush1.msra.mxu0 %v489
      %843 = vmatprep.subr.mxu0 0.0
      %844 = vmatpush1.msra.mxu0 %v490
      %845 = vmatprep.subr.mxu0 0.0
      %846 = vmatpush1.msra.mxu0 %v491
      %847 = vmatprep.subr.mxu0 0.0
      %848 = vmatpush1.msra.mxu0 %v492
      %849 = vmatprep.subr.mxu0 0.0
      %850 = vmatpush1.msra.mxu0 %v493
      %851 = vmatprep.subr.mxu0 0.0
      %852 = vmatpush1.msra.mxu0 %v494
      %853 = vmatprep.subr.mxu0 0.0
      %854 = vmatpush1.msra.mxu0 %v495
      %855 = vmatprep.subr.mxu0 0.0
      %856 = vmatpush1.msra.mxu0 %v496
      %857 = vmatprep.mubr.f32.mxu0 %v180
      %858 = vmatmul.mubr.f32.gmra.mrb[0].mxu0 %v179
      %v859 = vpop.f32.mrb[0].mxu0
      %v860 = vadd.f32 %v635, %v859
      %v861 = vpop.f32.mrb[0].mxu0
      %862 = vmatprep.mubr.f32.mxu0 %v188
      %863 = vmatmul.mubr.f32.gmra.mrb[0].mxu0 %v187
      %v864 = vpop.f32.mrb[0].mxu0
      %v865 = vadd.f32 %v640, %v864
      %v866 = vpop.f32.mrb[0].mxu0
      %867 = vmatprep.mubr.f32.mxu0 %v196
      %868 = vmatmul.mubr.f32.gmra.mrb[0].mxu0 %v195
      %v869 = vpop.f32.mrb[0].mxu0
      %v870 = vadd.f32 %v645, %v869
      %v871 = vpop.f32.mrb[0].mxu0
      %872 = vmatprep.mubr.f32.mxu0 %v204
      %873 = vmatmul.mubr.f32.gmra.mrb[0].mxu0 %v203
      %v874 = vpop.f32.mrb[0].mxu0
      %v875 = vadd.f32 %v650, %v874
      %v876 = vpop.f32.mrb[0].mxu0
      %877 = vmatprep.mubr.f32.mxu0 %v212
      %878 = vmatmul.mubr.f32.gmra.mrb[0].mxu0 %v211
      %v879 = vpop.f32.mrb[0].mxu0
      %v880 = vadd.f32 %v655, %v879
      %v881 = vpop.f32.mrb[0].mxu0
      %882 = vmatprep.mubr.f32.mxu0 %v220
      %883 = vmatmul.mubr.f32.gmra.mrb[0].mxu0 %v219
      %v884 = vpop.f32.mrb[0].mxu0
      %v885 = vadd.f32 %v660, %v884
      %v886 = vpop.f32.mrb[0].mxu0
      %887 = vmatprep.mubr.f32.mxu0 %v228
      %888 = vmatmul.mubr.f32.gmra.mrb[0].mxu0 %v227
      %v889 = vpop.f32.mrb[0].mxu0
      %v890 = vadd.f32 %v665, %v889
      %v891 = vpop.f32.mrb[0].mxu0
      %892 = vmatprep.mubr.f32.mxu0 %v236
      %893 = vmatmul.mubr.f32.gmra.mrb[0].mxu0 %v235
      %v894 = vpop.f32.mrb[0].mxu0
      %v895 = vadd.f32 %v670, %v894
      %v896 = vpop.f32.mrb[0].mxu0
      %897 = vmatprep.mubr.f32.mxu0 %v244
      %898 = vmatmul.mubr.f32.gmra.mrb[0].mxu0 %v243
      %v899 = vpop.f32.mrb[0].mxu0
      %v900 = vadd.f32 %v675, %v899
      %v901 = vpop.f32.mrb[0].mxu0
      %902 = vmatprep.mubr.f32.mxu0 %v252
      %903 = vmatmul.mubr.f32.gmra.mrb[0].mxu0 %v251
      %v904 = vpop.f32.mrb[0].mxu0
      %v905 = vadd.f32 %v680, %v904
      %v906 = vpop.f32.mrb[0].mxu0
      %907 = vmatprep.mubr.f32.mxu0 %v260
      %908 = vmatmul.mubr.f32.gmra.mrb[0].mxu0 %v259
      %v909 = vpop.f32.mrb[0].mxu0
      %v910 = vadd.f32 %v685, %v909
      %v911 = vpop.f32.mrb[0].mxu0
      %912 = vmatprep.mubr.f32.mxu0 %v268
      %913 = vmatmul.mubr.f32.gmra.mrb[0].mxu0 %v267
      %v914 = vpop.f32.mrb[0].mxu0
      %v915 = vadd.f32 %v690, %v914
      %v916 = vpop.f32.mrb[0].mxu0
      %917 = vmatprep.mubr.f32.mxu0 %v276
      %918 = vmatmul.mubr.f32.gmra.mrb[0].mxu0 %v275
      %v919 = vpop.f32.mrb[0].mxu0
      %v920 = vadd.f32 %v695, %v919
      %v921 = vpop.f32.mrb[0].mxu0
      %922 = vmatprep.mubr.f32.mxu0 %v284
      %923 = vmatmul.mubr.f32.gmra.mrb[0].mxu0 %v283
      %v924 = vpop.f32.mrb[0].mxu0
      %v925 = vadd.f32 %v700, %v924
      %v926 = vpop.f32.mrb[0].mxu0
      %927 = vmatprep.mubr.f32.mxu0 %v292
      %928 = vmatmul.mubr.f32.gmra.mrb[0].mxu0 %v291
      %v929 = vpop.f32.mrb[0].mxu0
      %v930 = vadd.f32 %v705, %v929
      %v931 = vpop.f32.mrb[0].mxu0
      %932 = vmatprep.mubr.f32.mxu0 %v300
      %933 = vmatmul.mubr.f32.gmra.mrb[0].mxu0 %v299
      %v934 = vpop.f32.mrb[0].mxu0
      %v935 = vadd.f32 %v710, %v934
      %v936 = vpop.f32.mrb[0].mxu0
      %937 = vmatprep.mubr.f32.mxu0 %v308
      %938 = vmatmul.mubr.f32.gmra.mrb[0].mxu0 %v307
      %v939 = vpop.f32.mrb[0].mxu0
      %v940 = vadd.f32 %v715, %v939
      %v941 = vpop.f32.mrb[0].mxu0
      %942 = vmatprep.mubr.f32.mxu0 %v316
      %943 = vmatmul.mubr.f32.gmra.mrb[0].mxu0 %v315
      %v944 = vpop.f32.mrb[0].mxu0
      %v945 = vadd.f32 %v720, %v944
      %v946 = vpop.f32.mrb[0].mxu0
      %947 = vmatprep.mubr.f32.mxu0 %v324
      %948 = vmatmul.mubr.f32.gmra.mrb[0].mxu0 %v323
      %v949 = vpop.f32.mrb[0].mxu0
      %v950 = vadd.f32 %v725, %v949
      %v951 = vpop.f32.mrb[0].mxu0
      %952 = vmatprep.mubr.f32.mxu0 %v332
      %953 = vmatmul.mubr.f32.gmra.mrb[0].mxu0 %v331
      %v954 = vpop.f32.mrb[0].mxu0
      %v955 = vadd.f32 %v730, %v954
      %v956 = vpop.f32.mrb[0].mxu0
      %957 = vmatprep.mubr.f32.mxu0 %v340
      %958 = vmatmul.mubr.f32.gmra.mrb[0].mxu0 %v339
      %v959 = vpop.f32.mrb[0].mxu0
      %v960 = vadd.f32 %v735, %v959
      %v961 = vpop.f32.mrb[0].mxu0
      %962 = vmatprep.mubr.f32.mxu0 %v348
      %963 = vmatmul.mubr.f32.gmra.mrb[0].mxu0 %v347
      %v964 = vpop.f32.mrb[0].mxu0
      %v965 = vadd.f32 %v740, %v964
      %v966 = vpop.f32.mrb[0].mxu0
      %967 = vmatprep.mubr.f32.mxu0 %v356
      %968 = vmatmul.mubr.f32.gmra.mrb[0].mxu0 %v355
      %v969 = vpop.f32.mrb[0].mxu0
      %v970 = vadd.f32 %v745, %v969
      %v971 = vpop.f32.mrb[0].mxu0
      %972 = vmatprep.mubr.f32.mxu0 %v364
      %973 = vmatmul.mubr.f32.gmra.mrb[0].mxu0 %v363
      %v974 = vpop.f32.mrb[0].mxu0
      %v975 = vadd.f32 %v750, %v974
      %v976 = vpop.f32.mrb[0].mxu0
      %977 = vmatprep.mubr.f32.mxu0 %v372
      %978 = vmatmul.mubr.f32.gmra.mrb[0].mxu0 %v371
      %v979 = vpop.f32.mrb[0].mxu0
      %v980 = vadd.f32 %v755, %v979
      %v981 = vpop.f32.mrb[0].mxu0
      %982 = vmatprep.mubr.f32.mxu0 %v380
      %983 = vmatmul.mubr.f32.gmra.mrb[0].mxu0 %v379
      %v984 = vpop.f32.mrb[0].mxu0
      %v985 = vadd.f32 %v760, %v984
      %v986 = vpop.f32.mrb[0].mxu0
      %987 = vmatprep.mubr.f32.mxu0 %v388
      %988 = vmatmul.mubr.f32.gmra.mrb[0].mxu0 %v387
      %v989 = vpop.f32.mrb[0].mxu0
      %v990 = vadd.f32 %v765, %v989
      %v991 = vpop.f32.mrb[0].mxu0
      %992 = vmatprep.mubr.f32.mxu0 %v396
      %993 = vmatmul.mubr.f32.gmra.mrb[0].mxu0 %v395
      %v994 = vpop.f32.mrb[0].mxu0
      %v995 = vadd.f32 %v770, %v994
      %v996 = vpop.f32.mrb[0].mxu0
      %997 = vmatprep.mubr.f32.mxu0 %v404
      %998 = vmatmul.mubr.f32.gmra.mrb[0].mxu0 %v403
      %v999 = vpop.f32.mrb[0].mxu0
      %v1000 = vadd.f32 %v775, %v999
      %v1001 = vpop.f32.mrb[0].mxu0
      %1002 = vmatprep.mubr.f32.mxu0 %v412
      %1003 = vmatmul.mubr.f32.gmra.mrb[0].mxu0 %v411
      %v1004 = vpop.f32.mrb[0].mxu0
      %v1005 = vadd.f32 %v780, %v1004
      %v1006 = vpop.f32.mrb[0].mxu0
      %1007 = vmatprep.mubr.f32.mxu0 %v420
      %1008 = vmatmul.mubr.f32.gmra.mrb[0].mxu0 %v419
      %v1009 = vpop.f32.mrb[0].mxu0
      %v1010 = vadd.f32 %v785, %v1009
      %v1011 = vpop.f32.mrb[0].mxu0
      %1012 = vmatprep.mubr.f32.mxu0 %v428
      %1013 = vmatmul.mubr.f32.gmra.mrb[0].mxu0 %v427
      %v1014 = vpop.f32.mrb[0].mxu0
      %v1015 = vadd.f32 %v790, %v1014
      %v1016 = vpop.f32.mrb[0].mxu0
      %1017 = vdwg.mxu0
      %1018 = vmatprep.subr.mxu0 0.0
      %1019 = vmatpush1.msra.mxu0 %v497
      %1020 = vmatprep.subr.mxu0 0.0
      %1021 = vmatpush1.msra.mxu0 %v498
      %1022 = vmatprep.subr.mxu0 0.0
      %1023 = vmatpush1.msra.mxu0 %v499
      %1024 = vmatprep.subr.mxu0 0.0
      %1025 = vmatpush1.msra.mxu0 %v500
      %1026 = vmatprep.subr.mxu0 0.0
      %1027 = vmatpush1.msra.mxu0 %v501
      %1028 = vmatprep.subr.mxu0 0.0
      %1029 = vmatpush1.msra.mxu0 %v502
      %1030 = vmatprep.subr.mxu0 0.0
      %1031 = vmatpush1.msra.mxu0 %v503
      %1032 = vmatprep.subr.mxu0 0.0
      %1033 = vmatpush1.msra.mxu0 %v504
      %1034 = vmatprep.subr.mxu0 0.0
      %1035 = vmatpush1.msra.mxu0 %v505
      %1036 = vmatprep.subr.mxu0 0.0
      %1037 = vmatpush1.msra.mxu0 %v506
      %1038 = vmatprep.subr.mxu0 0.0
      %1039 = vmatpush1.msra.mxu0 %v507
      %1040 = vmatprep.subr.mxu0 0.0
      %1041 = vmatpush1.msra.mxu0 %v508
      %1042 = vmatprep.subr.mxu0 0.0
      %1043 = vmatpush1.msra.mxu0 %v509
      %1044 = vmatprep.subr.mxu0 0.0
      %1045 = vmatpush1.msra.mxu0 %v510
      %1046 = vmatprep.subr.mxu0 0.0
      %1047 = vmatpush1.msra.mxu0 %v511
      %1048 = vmatprep.subr.mxu0 0.0
      %1049 = vmatpush1.msra.mxu0 %v512
      %1050 = vmatprep.subr.mxu0 0.0
      %1051 = vmatpush1.msra.mxu0 %v513
      %1052 = vmatprep.subr.mxu0 0.0
      %1053 = vmatpush1.msra.mxu0 %v514
      %1054 = vmatprep.subr.mxu0 0.0
      %1055 = vmatpush1.msra.mxu0 %v515
      %1056 = vmatprep.subr.mxu0 0.0
      %1057 = vmatpush1.msra.mxu0 %v516
      %1058 = vmatprep.subr.mxu0 0.0
      %1059 = vmatpush1.msra.mxu0 %v517
      %1060 = vmatprep.subr.mxu0 0.0
      %1061 = vmatpush1.msra.mxu0 %v518
      %1062 = vmatprep.subr.mxu0 0.0
      %1063 = vmatpush1.msra.mxu0 %v519
      %1064 = vmatprep.subr.mxu0 0.0
      %1065 = vmatpush1.msra.mxu0 %v520
      %1066 = vmatprep.subr.mxu0 0.0
      %1067 = vmatpush1.msra.mxu0 %v521
      %1068 = vmatprep.subr.mxu0 0.0
      %1069 = vmatpush1.msra.mxu0 %v522
      %1070 = vmatprep.subr.mxu0 0.0
      %1071 = vmatpush1.msra.mxu0 %v523
      %1072 = vmatprep.subr.mxu0 0.0
      %1073 = vmatpush1.msra.mxu0 %v524
      %1074 = vmatprep.subr.mxu0 0.0
      %1075 = vmatpush1.msra.mxu0 %v525
      %1076 = vmatprep.subr.mxu0 0.0
      %1077 = vmatpush1.msra.mxu0 %v526
      %1078 = vmatprep.subr.mxu0 0.0
      %1079 = vmatpush1.msra.mxu0 %v527
      %1080 = vmatprep.subr.mxu0 0.0
      %1081 = vmatpush1.msra.mxu0 %v528
      %1082 = vmatprep.mubr.f32.mxu0 %v182
      %1083 = vmatmul.mubr.f32.gmra.mrb[0].mxu0 %v181
      %v1084 = vpop.f32.mrb[0].mxu0
      %v1085 = vadd.f32 %v860, %v1084
      %v1086 = vpop.f32.mrb[0].mxu0
      %1087 = vmatprep.mubr.f32.mxu0 %v190
      %1088 = vmatmul.mubr.f32.gmra.mrb[0].mxu0 %v189
      %v1089 = vpop.f32.mrb[0].mxu0
      %v1090 = vadd.f32 %v865, %v1089
      %v1091 = vpop.f32.mrb[0].mxu0
      %1092 = vmatprep.mubr.f32.mxu0 %v198
      %1093 = vmatmul.mubr.f32.gmra.mrb[0].mxu0 %v197
      %v1094 = vpop.f32.mrb[0].mxu0
      %v1095 = vadd.f32 %v870, %v1094
      %v1096 = vpop.f32.mrb[0].mxu0
      %1097 = vmatprep.mubr.f32.mxu0 %v206
      %1098 = vmatmul.mubr.f32.gmra.mrb[0].mxu0 %v205
      %v1099 = vpop.f32.mrb[0].mxu0
      %v1100 = vadd.f32 %v875, %v1099
      %v1101 = vpop.f32.mrb[0].mxu0
      %1102 = vmatprep.mubr.f32.mxu0 %v214
      %1103 = vmatmul.mubr.f32.gmra.mrb[0].mxu0 %v213
      %v1104 = vpop.f32.mrb[0].mxu0
      %v1105 = vadd.f32 %v880, %v1104
      %v1106 = vpop.f32.mrb[0].mxu0
      %1107 = vmatprep.mubr.f32.mxu0 %v222
      %1108 = vmatmul.mubr.f32.gmra.mrb[0].mxu0 %v221
      %v1109 = vpop.f32.mrb[0].mxu0
      %v1110 = vadd.f32 %v885, %v1109
      %v1111 = vpop.f32.mrb[0].mxu0
      %1112 = vmatprep.mubr.f32.mxu0 %v230
      %1113 = vmatmul.mubr.f32.gmra.mrb[0].mxu0 %v229
      %v1114 = vpop.f32.mrb[0].mxu0
      %v1115 = vadd.f32 %v890, %v1114
      %v1116 = vpop.f32.mrb[0].mxu0
      %1117 = vmatprep.mubr.f32.mxu0 %v238
      %1118 = vmatmul.mubr.f32.gmra.mrb[0].mxu0 %v237
      %v1119 = vpop.f32.mrb[0].mxu0
      %v1120 = vadd.f32 %v895, %v1119
      %v1121 = vpop.f32.mrb[0].mxu0
      %1122 = vmatprep.mubr.f32.mxu0 %v246
      %1123 = vmatmul.mubr.f32.gmra.mrb[0].mxu0 %v245
      %v1124 = vpop.f32.mrb[0].mxu0
      %v1125 = vadd.f32 %v900, %v1124
      %v1126 = vpop.f32.mrb[0].mxu0
      %1127 = vmatprep.mubr.f32.mxu0 %v254
      %1128 = vmatmul.mubr.f32.gmra.mrb[0].mxu0 %v253
      %v1129 = vpop.f32.mrb[0].mxu0
      %v1130 = vadd.f32 %v905, %v1129
      %v1131 = vpop.f32.mrb[0].mxu0
      %1132 = vmatprep.mubr.f32.mxu0 %v262
      %1133 = vmatmul.mubr.f32.gmra.mrb[0].mxu0 %v261
      %v1134 = vpop.f32.mrb[0].mxu0
      %v1135 = vadd.f32 %v910, %v1134
      %v1136 = vpop.f32.mrb[0].mxu0
      %1137 = vmatprep.mubr.f32.mxu0 %v270
      %1138 = vmatmul.mubr.f32.gmra.mrb[0].mxu0 %v269
      %v1139 = vpop.f32.mrb[0].mxu0
      %v1140 = vadd.f32 %v915, %v1139
      %v1141 = vpop.f32.mrb[0].mxu0
      %1142 = vmatprep.mubr.f32.mxu0 %v278
      %1143 = vmatmul.mubr.f32.gmra.mrb[0].mxu0 %v277
      %v1144 = vpop.f32.mrb[0].mxu0
      %v1145 = vadd.f32 %v920, %v1144
      %v1146 = vpop.f32.mrb[0].mxu0
      %1147 = vmatprep.mubr.f32.mxu0 %v286
      %1148 = vmatmul.mubr.f32.gmra.mrb[0].mxu0 %v285
      %v1149 = vpop.f32.mrb[0].mxu0
      %v1150 = vadd.f32 %v925, %v1149
      %v1151 = vpop.f32.mrb[0].mxu0
      %1152 = vmatprep.mubr.f32.mxu0 %v294
      %1153 = vmatmul.mubr.f32.gmra.mrb[0].mxu0 %v293
      %v1154 = vpop.f32.mrb[0].mxu0
      %v1155 = vadd.f32 %v930, %v1154
      %v1156 = vpop.f32.mrb[0].mxu0
      %1157 = vmatprep.mubr.f32.mxu0 %v302
      %1158 = vmatmul.mubr.f32.gmra.mrb[0].mxu0 %v301
      %v1159 = vpop.f32.mrb[0].mxu0
      %v1160 = vadd.f32 %v935, %v1159
      %v1161 = vpop.f32.mrb[0].mxu0
      %1162 = vmatprep.mubr.f32.mxu0 %v310
      %1163 = vmatmul.mubr.f32.gmra.mrb[0].mxu0 %v309
      %v1164 = vpop.f32.mrb[0].mxu0
      %v1165 = vadd.f32 %v940, %v1164
      %v1166 = vpop.f32.mrb[0].mxu0
      %1167 = vmatprep.mubr.f32.mxu0 %v318
      %1168 = vmatmul.mubr.f32.gmra.mrb[0].mxu0 %v317
      %v1169 = vpop.f32.mrb[0].mxu0
      %v1170 = vadd.f32 %v945, %v1169
      %v1171 = vpop.f32.mrb[0].mxu0
      %1172 = vmatprep.mubr.f32.mxu0 %v326
      %1173 = vmatmul.mubr.f32.gmra.mrb[0].mxu0 %v325
      %v1174 = vpop.f32.mrb[0].mxu0
      %v1175 = vadd.f32 %v950, %v1174
      %v1176 = vpop.f32.mrb[0].mxu0
      %1177 = vmatprep.mubr.f32.mxu0 %v334
      %1178 = vmatmul.mubr.f32.gmra.mrb[0].mxu0 %v333
      %v1179 = vpop.f32.mrb[0].mxu0
      %v1180 = vadd.f32 %v955, %v1179
      %v1181 = vpop.f32.mrb[0].mxu0
      %1182 = vmatprep.mubr.f32.mxu0 %v342
      %1183 = vmatmul.mubr.f32.gmra.mrb[0].mxu0 %v341
      %v1184 = vpop.f32.mrb[0].mxu0
      %v1185 = vadd.f32 %v960, %v1184
      %v1186 = vpop.f32.mrb[0].mxu0
      %1187 = vmatprep.mubr.f32.mxu0 %v350
      %1188 = vmatmul.mubr.f32.gmra.mrb[0].mxu0 %v349
      %v1189 = vpop.f32.mrb[0].mxu0
      %v1190 = vadd.f32 %v965, %v1189
      %v1191 = vpop.f32.mrb[0].mxu0
      %1192 = vmatprep.mubr.f32.mxu0 %v358
      %1193 = vmatmul.mubr.f32.gmra.mrb[0].mxu0 %v357
      %v1194 = vpop.f32.mrb[0].mxu0
      %v1195 = vadd.f32 %v970, %v1194
      %v1196 = vpop.f32.mrb[0].mxu0
      %1197 = vmatprep.mubr.f32.mxu0 %v366
      %1198 = vmatmul.mubr.f32.gmra.mrb[0].mxu0 %v365
      %v1199 = vpop.f32.mrb[0].mxu0
      %v1200 = vadd.f32 %v975, %v1199
      %v1201 = vpop.f32.mrb[0].mxu0
      %1202 = vmatprep.mubr.f32.mxu0 %v374
      %1203 = vmatmul.mubr.f32.gmra.mrb[0].mxu0 %v373
      %v1204 = vpop.f32.mrb[0].mxu0
      %v1205 = vadd.f32 %v980, %v1204
      %v1206 = vpop.f32.mrb[0].mxu0
      %1207 = vmatprep.mubr.f32.mxu0 %v382
      %1208 = vmatmul.mubr.f32.gmra.mrb[0].mxu0 %v381
      %v1209 = vpop.f32.mrb[0].mxu0
      %v1210 = vadd.f32 %v985, %v1209
      %v1211 = vpop.f32.mrb[0].mxu0
      %1212 = vmatprep.mubr.f32.mxu0 %v390
      %1213 = vmatmul.mubr.f32.gmra.mrb[0].mxu0 %v389
      %v1214 = vpop.f32.mrb[0].mxu0
      %v1215 = vadd.f32 %v990, %v1214
      %v1216 = vpop.f32.mrb[0].mxu0
      %1217 = vmatprep.mubr.f32.mxu0 %v398
      %1218 = vmatmul.mubr.f32.gmra.mrb[0].mxu0 %v397
      %v1219 = vpop.f32.mrb[0].mxu0
      %v1220 = vadd.f32 %v995, %v1219
      %v1221 = vpop.f32.mrb[0].mxu0
      %1222 = vmatprep.mubr.f32.mxu0 %v406
      %1223 = vmatmul.mubr.f32.gmra.mrb[0].mxu0 %v405
      %v1224 = vpop.f32.mrb[0].mxu0
      %v1225 = vadd.f32 %v1000, %v1224
      %v1226 = vpop.f32.mrb[0].mxu0
      %1227 = vmatprep.mubr.f32.mxu0 %v414
      %1228 = vmatmul.mubr.f32.gmra.mrb[0].mxu0 %v413
      %v1229 = vpop.f32.mrb[0].mxu0
      %v1230 = vadd.f32 %v1005, %v1229
      %v1231 = vpop.f32.mrb[0].mxu0
      %1232 = vmatprep.mubr.f32.mxu0 %v422
      %1233 = vmatmul.mubr.f32.gmra.mrb[0].mxu0 %v421
      %v1234 = vpop.f32.mrb[0].mxu0
      %v1235 = vadd.f32 %v1010, %v1234
      %v1236 = vpop.f32.mrb[0].mxu0
      %1237 = vmatprep.mubr.f32.mxu0 %v430
      %1238 = vmatmul.mubr.f32.gmra.mrb[0].mxu0 %v429
      %v1239 = vpop.f32.mrb[0].mxu0
      %v1240 = vadd.f32 %v1015, %v1239
      %v1241 = vpop.f32.mrb[0].mxu0
      %1242 = vdwg.mxu0
      %1243 = vmatprep.subr.mxu0 0.0
      %1244 = vmatpush1.msra.mxu0 %v529
      %1245 = vmatprep.subr.mxu0 0.0
      %1246 = vmatpush1.msra.mxu0 %v530
      %1247 = vmatprep.subr.mxu0 0.0
      %1248 = vmatpush1.msra.mxu0 %v531
      %1249 = vmatprep.subr.mxu0 0.0
      %1250 = vmatpush1.msra.mxu0 %v532
      %1251 = vmatprep.subr.mxu0 0.0
      %1252 = vmatpush1.msra.mxu0 %v533
      %1253 = vmatprep.subr.mxu0 0.0
      %1254 = vmatpush1.msra.mxu0 %v534
      %1255 = vmatprep.subr.mxu0 0.0
      %1256 = vmatpush1.msra.mxu0 %v535
      %1257 = vmatprep.subr.mxu0 0.0
      %1258 = vmatpush1.msra.mxu0 %v536
      %1259 = vmatprep.subr.mxu0 0.0
      %1260 = vmatpush1.msra.mxu0 %v537
      %1261 = vmatprep.subr.mxu0 0.0
      %1262 = vmatpush1.msra.mxu0 %v538
      %1263 = vmatprep.subr.mxu0 0.0
      %1264 = vmatpush1.msra.mxu0 %v539
      %1265 = vmatprep.subr.mxu0 0.0
      %1266 = vmatpush1.msra.mxu0 %v540
      %1267 = vmatprep.subr.mxu0 0.0
      %1268 = vmatpush1.msra.mxu0 %v541
      %1269 = vmatprep.subr.mxu0 0.0
      %1270 = vmatpush1.msra.mxu0 %v542
      %1271 = vmatprep.subr.mxu0 0.0
      %1272 = vmatpush1.msra.mxu0 %v543
      %1273 = vmatprep.subr.mxu0 0.0
      %1274 = vmatpush1.msra.mxu0 %v544
      %1275 = vmatprep.subr.mxu0 0.0
      %1276 = vmatpush1.msra.mxu0 %v545
      %1277 = vmatprep.subr.mxu0 0.0
      %1278 = vmatpush1.msra.mxu0 %v546
      %1279 = vmatprep.subr.mxu0 0.0
      %1280 = vmatpush1.msra.mxu0 %v547
      %1281 = vmatprep.subr.mxu0 0.0
      %1282 = vmatpush1.msra.mxu0 %v548
      %1283 = vmatprep.subr.mxu0 0.0
      %1284 = vmatpush1.msra.mxu0 %v549
      %1285 = vmatprep.subr.mxu0 0.0
      %1286 = vmatpush1.msra.mxu0 %v550
      %1287 = vmatprep.subr.mxu0 0.0
      %1288 = vmatpush1.msra.mxu0 %v551
      %1289 = vmatprep.subr.mxu0 0.0
      %1290 = vmatpush1.msra.mxu0 %v552
      %1291 = vmatprep.subr.mxu0 0.0
      %1292 = vmatpush1.msra.mxu0 %v553
      %1293 = vmatprep.subr.mxu0 0.0
      %1294 = vmatpush1.msra.mxu0 %v554
      %1295 = vmatprep.subr.mxu0 0.0
      %1296 = vmatpush1.msra.mxu0 %v555
      %1297 = vmatprep.subr.mxu0 0.0
      %1298 = vmatpush1.msra.mxu0 %v556
      %1299 = vmatprep.subr.mxu0 0.0
      %1300 = vmatpush1.msra.mxu0 %v557
      %1301 = vmatprep.subr.mxu0 0.0
      %1302 = vmatpush1.msra.mxu0 %v558
      %1303 = vmatprep.subr.mxu0 0.0
      %1304 = vmatpush1.msra.mxu0 %v559
      %1305 = vmatprep.subr.mxu0 0.0
      %1306 = vmatpush1.msra.mxu0 %v560
      %1307 = vmatprep.mubr.f32.mxu0 %v184
      %1308 = vmatmul.mubr.f32.gmra.mrb[0].mxu0 %v183
      %v1309 = vpop.f32.mrb[0].mxu0
      %v1310 = vadd.f32 %v1085, %v1309
      %v1311 = vpop.f32.mrb[0].mxu0
      %1312 = vmatprep.mubr.f32.mxu0 %v192
      %1313 = vmatmul.mubr.f32.gmra.mrb[0].mxu0 %v191
      %v1314 = vpop.f32.mrb[0].mxu0
      %v1315 = vadd.f32 %v1090, %v1314
      %v1316 = vpop.f32.mrb[0].mxu0
      %1317 = vmatprep.mubr.f32.mxu0 %v200
      %1318 = vmatmul.mubr.f32.gmra.mrb[0].mxu0 %v199
      %v1319 = vpop.f32.mrb[0].mxu0
      %v1320 = vadd.f32 %v1095, %v1319
      %v1321 = vpop.f32.mrb[0].mxu0
      %1322 = vmatprep.mubr.f32.mxu0 %v208
      %1323 = vmatmul.mubr.f32.gmra.mrb[0].mxu0 %v207
      %v1324 = vpop.f32.mrb[0].mxu0
      %v1325 = vadd.f32 %v1100, %v1324
      %v1326 = vpop.f32.mrb[0].mxu0
      %1327 = vmatprep.mubr.f32.mxu0 %v216
      %1328 = vmatmul.mubr.f32.gmra.mrb[0].mxu0 %v215
      %v1329 = vpop.f32.mrb[0].mxu0
      %v1330 = vadd.f32 %v1105, %v1329
      %v1331 = vpop.f32.mrb[0].mxu0
      %1332 = vmatprep.mubr.f32.mxu0 %v224
      %1333 = vmatmul.mubr.f32.gmra.mrb[0].mxu0 %v223
      %v1334 = vpop.f32.mrb[0].mxu0
      %v1335 = vadd.f32 %v1110, %v1334
      %v1336 = vpop.f32.mrb[0].mxu0
      %1337 = vmatprep.mubr.f32.mxu0 %v232
      %1338 = vmatmul.mubr.f32.gmra.mrb[0].mxu0 %v231
      %v1339 = vpop.f32.mrb[0].mxu0
      %v1340 = vadd.f32 %v1115, %v1339
      %v1341 = vpop.f32.mrb[0].mxu0
      %1342 = vmatprep.mubr.f32.mxu0 %v240
      %1343 = vmatmul.mubr.f32.gmra.mrb[0].mxu0 %v239
      %v1344 = vpop.f32.mrb[0].mxu0
      %v1345 = vadd.f32 %v1120, %v1344
      %v1346 = vpop.f32.mrb[0].mxu0
      %1347 = vmatprep.mubr.f32.mxu0 %v248
      %1348 = vmatmul.mubr.f32.gmra.mrb[0].mxu0 %v247
      %v1349 = vpop.f32.mrb[0].mxu0
      %v1350 = vadd.f32 %v1125, %v1349
      %v1351 = vpop.f32.mrb[0].mxu0
      %1352 = vmatprep.mubr.f32.mxu0 %v256
      %1353 = vmatmul.mubr.f32.gmra.mrb[0].mxu0 %v255
      %v1354 = vpop.f32.mrb[0].mxu0
      %v1355 = vadd.f32 %v1130, %v1354
      %v1356 = vpop.f32.mrb[0].mxu0
      %1357 = vmatprep.mubr.f32.mxu0 %v264
      %1358 = vmatmul.mubr.f32.gmra.mrb[0].mxu0 %v263
      %v1359 = vpop.f32.mrb[0].mxu0
      %v1360 = vadd.f32 %v1135, %v1359
      %v1361 = vpop.f32.mrb[0].mxu0
      %1362 = vmatprep.mubr.f32.mxu0 %v272
      %1363 = vmatmul.mubr.f32.gmra.mrb[0].mxu0 %v271
      %v1364 = vpop.f32.mrb[0].mxu0
      %v1365 = vadd.f32 %v1140, %v1364
      %v1366 = vpop.f32.mrb[0].mxu0
      %1367 = vmatprep.mubr.f32.mxu0 %v280
      %1368 = vmatmul.mubr.f32.gmra.mrb[0].mxu0 %v279
      %v1369 = vpop.f32.mrb[0].mxu0
      %v1370 = vadd.f32 %v1145, %v1369
      %v1371 = vpop.f32.mrb[0].mxu0
      %1372 = vmatprep.mubr.f32.mxu0 %v288
      %1373 = vmatmul.mubr.f32.gmra.mrb[0].mxu0 %v287
      %v1374 = vpop.f32.mrb[0].mxu0
      %v1375 = vadd.f32 %v1150, %v1374
      %v1376 = vpop.f32.mrb[0].mxu0
      %1377 = vmatprep.mubr.f32.mxu0 %v296
      %1378 = vmatmul.mubr.f32.gmra.mrb[0].mxu0 %v295
      %v1379 = vpop.f32.mrb[0].mxu0
      %v1380 = vadd.f32 %v1155, %v1379
      %v1381 = vpop.f32.mrb[0].mxu0
      %1382 = vmatprep.mubr.f32.mxu0 %v304
      %1383 = vmatmul.mubr.f32.gmra.mrb[0].mxu0 %v303
      %v1384 = vpop.f32.mrb[0].mxu0
      %v1385 = vadd.f32 %v1160, %v1384
      %v1386 = vpop.f32.mrb[0].mxu0
      %1387 = vmatprep.mubr.f32.mxu0 %v312
      %1388 = vmatmul.mubr.f32.gmra.mrb[0].mxu0 %v311
      %v1389 = vpop.f32.mrb[0].mxu0
      %v1390 = vadd.f32 %v1165, %v1389
      %v1391 = vpop.f32.mrb[0].mxu0
      %1392 = vmatprep.mubr.f32.mxu0 %v320
      %1393 = vmatmul.mubr.f32.gmra.mrb[0].mxu0 %v319
      %v1394 = vpop.f32.mrb[0].mxu0
      %v1395 = vadd.f32 %v1170, %v1394
      %v1396 = vpop.f32.mrb[0].mxu0
      %1397 = vmatprep.mubr.f32.mxu0 %v328
      %1398 = vmatmul.mubr.f32.gmra.mrb[0].mxu0 %v327
      %v1399 = vpop.f32.mrb[0].mxu0
      %v1400 = vadd.f32 %v1175, %v1399
      %v1401 = vpop.f32.mrb[0].mxu0
      %1402 = vmatprep.mubr.f32.mxu0 %v336
      %1403 = vmatmul.mubr.f32.gmra.mrb[0].mxu0 %v335
      %v1404 = vpop.f32.mrb[0].mxu0
      %v1405 = vadd.f32 %v1180, %v1404
      %v1406 = vpop.f32.mrb[0].mxu0
      %1407 = vmatprep.mubr.f32.mxu0 %v344
      %1408 = vmatmul.mubr.f32.gmra.mrb[0].mxu0 %v343
      %v1409 = vpop.f32.mrb[0].mxu0
      %v1410 = vadd.f32 %v1185, %v1409
      %v1411 = vpop.f32.mrb[0].mxu0
      %1412 = vmatprep.mubr.f32.mxu0 %v352
      %1413 = vmatmul.mubr.f32.gmra.mrb[0].mxu0 %v351
      %v1414 = vpop.f32.mrb[0].mxu0
      %v1415 = vadd.f32 %v1190, %v1414
      %v1416 = vpop.f32.mrb[0].mxu0
      %1417 = vmatprep.mubr.f32.mxu0 %v360
      %1418 = vmatmul.mubr.f32.gmra.mrb[0].mxu0 %v359
      %v1419 = vpop.f32.mrb[0].mxu0
      %v1420 = vadd.f32 %v1195, %v1419
      %v1421 = vpop.f32.mrb[0].mxu0
      %1422 = vmatprep.mubr.f32.mxu0 %v368
      %1423 = vmatmul.mubr.f32.gmra.mrb[0].mxu0 %v367
      %v1424 = vpop.f32.mrb[0].mxu0
      %v1425 = vadd.f32 %v1200, %v1424
      %v1426 = vpop.f32.mrb[0].mxu0
      %1427 = vmatprep.mubr.f32.mxu0 %v376
      %1428 = vmatmul.mubr.f32.gmra.mrb[0].mxu0 %v375
      %v1429 = vpop.f32.mrb[0].mxu0
      %v1430 = vadd.f32 %v1205, %v1429
      %v1431 = vpop.f32.mrb[0].mxu0
      %1432 = vmatprep.mubr.f32.mxu0 %v384
      %1433 = vmatmul.mubr.f32.gmra.mrb[0].mxu0 %v383
      %v1434 = vpop.f32.mrb[0].mxu0
      %v1435 = vadd.f32 %v1210, %v1434
      %v1436 = vpop.f32.mrb[0].mxu0
      %1437 = vmatprep.mubr.f32.mxu0 %v392
      %1438 = vmatmul.mubr.f32.gmra.mrb[0].mxu0 %v391
      %v1439 = vpop.f32.mrb[0].mxu0
      %v1440 = vadd.f32 %v1215, %v1439
      %v1441 = vpop.f32.mrb[0].mxu0
      %1442 = vmatprep.mubr.f32.mxu0 %v400
      %1443 = vmatmul.mubr.f32.gmra.mrb[0].mxu0 %v399
      %v1444 = vpop.f32.mrb[0].mxu0
      %v1445 = vadd.f32 %v1220, %v1444
      %v1446 = vpop.f32.mrb[0].mxu0
      %1447 = vmatprep.mubr.f32.mxu0 %v408
      %1448 = vmatmul.mubr.f32.gmra.mrb[0].mxu0 %v407
      %v1449 = vpop.f32.mrb[0].mxu0
      %v1450 = vadd.f32 %v1225, %v1449
      %v1451 = vpop.f32.mrb[0].mxu0
      %1452 = vmatprep.mubr.f32.mxu0 %v416
      %1453 = vmatmul.mubr.f32.gmra.mrb[0].mxu0 %v415
      %v1454 = vpop.f32.mrb[0].mxu0
      %v1455 = vadd.f32 %v1230, %v1454
      %v1456 = vpop.f32.mrb[0].mxu0
      %1457 = vmatprep.mubr.f32.mxu0 %v424
      %1458 = vmatmul.mubr.f32.gmra.mrb[0].mxu0 %v423
      %v1459 = vpop.f32.mrb[0].mxu0
      %v1460 = vadd.f32 %v1235, %v1459
      %v1461 = vpop.f32.mrb[0].mxu0
      %1462 = vmatprep.mubr.f32.mxu0 %v432
      %1463 = vmatmul.mubr.f32.gmra.mrb[0].mxu0 %v431
      %v1464 = vpop.f32.mrb[0].mxu0
      %v1465 = vadd.f32 %v1240, %v1464
      %v1466 = vpop.f32.mrb[0].mxu0
      %1467 = vdwg.mxu0
      %v1468 = vmul.f32 %v1310, 0.5
      %v1469 = vmul.f32 %v1315, 0.5
      %v1470 = vmul.f32 %v1320, 0.5
      %v1471 = vmul.f32 %v1325, 0.5
      %v1472 = vmul.f32 %v1330, 0.5
      %v1473 = vmul.f32 %v1335, 0.5
      %v1474 = vmul.f32 %v1340, 0.5
      %v1475 = vmul.f32 %v1345, 0.5
      %v1476 = vmul.f32 %v1350, 0.5
      %v1477 = vmul.f32 %v1355, 0.5
      %v1478 = vmul.f32 %v1360, 0.5
      %v1479 = vmul.f32 %v1365, 0.5
      %v1480 = vmul.f32 %v1370, 0.5
      %v1481 = vmul.f32 %v1375, 0.5
      %v1482 = vmul.f32 %v1380, 0.5
      %v1483 = vmul.f32 %v1385, 0.5
      %v1484 = vmul.f32 %v1390, 0.5
      %v1485 = vmul.f32 %v1395, 0.5
      %v1486 = vmul.f32 %v1400, 0.5
      %v1487 = vmul.f32 %v1405, 0.5
      %v1488 = vmul.f32 %v1410, 0.5
      %v1489 = vmul.f32 %v1415, 0.5
      %v1490 = vmul.f32 %v1420, 0.5
      %v1491 = vmul.f32 %v1425, 0.5
      %v1492 = vmul.f32 %v1430, 0.5
      %v1493 = vmul.f32 %v1435, 0.5
      %v1494 = vmul.f32 %v1440, 0.5
      %v1495 = vmul.f32 %v1445, 0.5
      %v1496 = vmul.f32 %v1450, 0.5
      %v1497 = vmul.f32 %v1455, 0.5
      %v1498 = vmul.f32 %v1460, 0.5
      %v1499 = vmul.f32 %v1465, 0.5
      %v1500 = vmul.f32 %v1310, 0.044715
      %v1501 = vmul.f32 %v1315, 0.044715
      %v1502 = vmul.f32 %v1320, 0.044715
      %v1503 = vmul.f32 %v1325, 0.044715
      %v1504 = vmul.f32 %v1330, 0.044715
      %v1505 = vmul.f32 %v1335, 0.044715
      %v1506 = vmul.f32 %v1340, 0.044715
      %v1507 = vmul.f32 %v1345, 0.044715
      %v1508 = vmul.f32 %v1350, 0.044715
      %v1509 = vmul.f32 %v1355, 0.044715
      %v1510 = vmul.f32 %v1360, 0.044715
      %v1511 = vmul.f32 %v1365, 0.044715
      %v1512 = vmul.f32 %v1370, 0.044715
      %v1513 = vmul.f32 %v1375, 0.044715
      %v1514 = vmul.f32 %v1380, 0.044715
      %v1515 = vmul.f32 %v1385, 0.044715
      %v1516 = vmul.f32 %v1390, 0.044715
      %v1517 = vmul.f32 %v1395, 0.044715
      %v1518 = vmul.f32 %v1400, 0.044715
      %v1519 = vmul.f32 %v1405, 0.044715
      %v1520 = vmul.f32 %v1410, 0.044715
      %v1521 = vmul.f32 %v1415, 0.044715
      %v1522 = vmul.f32 %v1420, 0.044715
      %v1523 = vmul.f32 %v1425, 0.044715
      %v1524 = vmul.f32 %v1430, 0.044715
      %v1525 = vmul.f32 %v1435, 0.044715
      %v1526 = vmul.f32 %v1440, 0.044715
      %v1527 = vmul.f32 %v1445, 0.044715
      %v1528 = vmul.f32 %v1450, 0.044715
      %v1529 = vmul.f32 %v1455, 0.044715
      %v1530 = vmul.f32 %v1460, 0.044715
      %v1531 = vmul.f32 %v1465, 0.044715
      %v1532 = vmul.f32 %v1500, %v1310
      %v1533 = vmul.f32 %v1501, %v1315
      %v1534 = vmul.f32 %v1502, %v1320
      %v1535 = vmul.f32 %v1503, %v1325
      %v1536 = vmul.f32 %v1504, %v1330
      %v1537 = vmul.f32 %v1505, %v1335
      %v1538 = vmul.f32 %v1506, %v1340
      %v1539 = vmul.f32 %v1507, %v1345
      %v1540 = vmul.f32 %v1508, %v1350
      %v1541 = vmul.f32 %v1509, %v1355
      %v1542 = vmul.f32 %v1510, %v1360
      %v1543 = vmul.f32 %v1511, %v1365
      %v1544 = vmul.f32 %v1512, %v1370
      %v1545 = vmul.f32 %v1513, %v1375
      %v1546 = vmul.f32 %v1514, %v1380
      %v1547 = vmul.f32 %v1515, %v1385
      %v1548 = vmul.f32 %v1516, %v1390
      %v1549 = vmul.f32 %v1517, %v1395
      %v1550 = vmul.f32 %v1518, %v1400
      %v1551 = vmul.f32 %v1519, %v1405
      %v1552 = vmul.f32 %v1520, %v1410
      %v1553 = vmul.f32 %v1521, %v1415
      %v1554 = vmul.f32 %v1522, %v1420
      %v1555 = vmul.f32 %v1523, %v1425
      %v1556 = vmul.f32 %v1524, %v1430
      %v1557 = vmul.f32 %v1525, %v1435
      %v1558 = vmul.f32 %v1526, %v1440
      %v1559 = vmul.f32 %v1527, %v1445
      %v1560 = vmul.f32 %v1528, %v1450
      %v1561 = vmul.f32 %v1529, %v1455
      %v1562 = vmul.f32 %v1530, %v1460
      %v1563 = vmul.f32 %v1531, %v1465
      %v1564 = vmul.f32 %v1532, %v1310
      %v1565 = vmul.f32 %v1533, %v1315
      %v1566 = vmul.f32 %v1534, %v1320
      %v1567 = vmul.f32 %v1535, %v1325
      %v1568 = vmul.f32 %v1536, %v1330
      %v1569 = vmul.f32 %v1537, %v1335
      %v1570 = vmul.f32 %v1538, %v1340
      %v1571 = vmul.f32 %v1539, %v1345
      %v1572 = vmul.f32 %v1540, %v1350
      %v1573 = vmul.f32 %v1541, %v1355
      %v1574 = vmul.f32 %v1542, %v1360
      %v1575 = vmul.f32 %v1543, %v1365
      %v1576 = vmul.f32 %v1544, %v1370
      %v1577 = vmul.f32 %v1545, %v1375
      %v1578 = vmul.f32 %v1546, %v1380
      %v1579 = vmul.f32 %v1547, %v1385
      %v1580 = vmul.f32 %v1548, %v1390
      %v1581 = vmul.f32 %v1549, %v1395
      %v1582 = vmul.f32 %v1550, %v1400
      %v1583 = vmul.f32 %v1551, %v1405
      %v1584 = vmul.f32 %v1552, %v1410
      %v1585 = vmul.f32 %v1553, %v1415
      %v1586 = vmul.f32 %v1554, %v1420
      %v1587 = vmul.f32 %v1555, %v1425
      %v1588 = vmul.f32 %v1556, %v1430
      %v1589 = vmul.f32 %v1557, %v1435
      %v1590 = vmul.f32 %v1558, %v1440
      %v1591 = vmul.f32 %v1559, %v1445
      %v1592 = vmul.f32 %v1560, %v1450
      %v1593 = vmul.f32 %v1561, %v1455
      %v1594 = vmul.f32 %v1562, %v1460
      %v1595 = vmul.f32 %v1563, %v1465
      %v1596 = vadd.f32 %v1310, %v1564
      %v1597 = vadd.f32 %v1315, %v1565
      %v1598 = vadd.f32 %v1320, %v1566
      %v1599 = vadd.f32 %v1325, %v1567
      %v1600 = vadd.f32 %v1330, %v1568
      %v1601 = vadd.f32 %v1335, %v1569
      %v1602 = vadd.f32 %v1340, %v1570
      %v1603 = vadd.f32 %v1345, %v1571
      %v1604 = vadd.f32 %v1350, %v1572
      %v1605 = vadd.f32 %v1355, %v1573
      %v1606 = vadd.f32 %v1360, %v1574
      %v1607 = vadd.f32 %v1365, %v1575
      %v1608 = vadd.f32 %v1370, %v1576
      %v1609 = vadd.f32 %v1375, %v1577
      %v1610 = vadd.f32 %v1380, %v1578
      %v1611 = vadd.f32 %v1385, %v1579
      %v1612 = vadd.f32 %v1390, %v1580
      %v1613 = vadd.f32 %v1395, %v1581
      %v1614 = vadd.f32 %v1400, %v1582
      %v1615 = vadd.f32 %v1405, %v1583
      %v1616 = vadd.f32 %v1410, %v1584
      %v1617 = vadd.f32 %v1415, %v1585
      %v1618 = vadd.f32 %v1420, %v1586
      %v1619 = vadd.f32 %v1425, %v1587
      %v1620 = vadd.f32 %v1430, %v1588
      %v1621 = vadd.f32 %v1435, %v1589
      %v1622 = vadd.f32 %v1440, %v1590
      %v1623 = vadd.f32 %v1445, %v1591
      %v1624 = vadd.f32 %v1450, %v1592
      %v1625 = vadd.f32 %v1455, %v1593
      %v1626 = vadd.f32 %v1460, %v1594
      %v1627 = vadd.f32 %v1465, %v1595
      %v1628 = vmul.f32 %v1596, 0.7978846
      %v1629 = vmul.f32 %v1597, 0.7978846
      %v1630 = vmul.f32 %v1598, 0.7978846
      %v1631 = vmul.f32 %v1599, 0.7978846
      %v1632 = vmul.f32 %v1600, 0.7978846
      %v1633 = vmul.f32 %v1601, 0.7978846
      %v1634 = vmul.f32 %v1602, 0.7978846
      %v1635 = vmul.f32 %v1603, 0.7978846
      %v1636 = vmul.f32 %v1604, 0.7978846
      %v1637 = vmul.f32 %v1605, 0.7978846
      %v1638 = vmul.f32 %v1606, 0.7978846
      %v1639 = vmul.f32 %v1607, 0.7978846
      %v1640 = vmul.f32 %v1608, 0.7978846
      %v1641 = vmul.f32 %v1609, 0.7978846
      %v1642 = vmul.f32 %v1610, 0.7978846
      %v1643 = vmul.f32 %v1611, 0.7978846
      %v1644 = vmul.f32 %v1612, 0.7978846
      %v1645 = vmul.f32 %v1613, 0.7978846
      %v1646 = vmul.f32 %v1614, 0.7978846
      %v1647 = vmul.f32 %v1615, 0.7978846
      %v1648 = vmul.f32 %v1616, 0.7978846
      %v1649 = vmul.f32 %v1617, 0.7978846
      %v1650 = vmul.f32 %v1618, 0.7978846
      %v1651 = vmul.f32 %v1619, 0.7978846
      %v1652 = vmul.f32 %v1620, 0.7978846
      %v1653 = vmul.f32 %v1621, 0.7978846
      %v1654 = vmul.f32 %v1622, 0.7978846
      %v1655 = vmul.f32 %v1623, 0.7978846
      %v1656 = vmul.f32 %v1624, 0.7978846
      %v1657 = vmul.f32 %v1625, 0.7978846
      %v1658 = vmul.f32 %v1626, 0.7978846
      %v1659 = vmul.f32 %v1627, 0.7978846
      %v1660 = vtanh.pop %v1628
      %v1661 = vtanh.pop %v1629
      %v1662 = vtanh.pop %v1630
      %v1663 = vtanh.pop %v1631
      %v1664 = vtanh.pop %v1632
      %v1665 = vtanh.pop %v1633
      %v1666 = vtanh.pop %v1634
      %v1667 = vtanh.pop %v1635
      %v1668 = vtanh.pop %v1636
      %v1669 = vtanh.pop %v1637
      %v1670 = vtanh.pop %v1638
      %v1671 = vtanh.pop %v1639
      %v1672 = vtanh.pop %v1640
      %v1673 = vtanh.pop %v1641
      %v1674 = vtanh.pop %v1642
      %v1675 = vtanh.pop %v1643
      %v1676 = vtanh.pop %v1644
      %v1677 = vtanh.pop %v1645
      %v1678 = vtanh.pop %v1646
      %v1679 = vtanh.pop %v1647
      %v1680 = vtanh.pop %v1648
      %v1681 = vtanh.pop %v1649
      %v1682 = vtanh.pop %v1650
      %v1683 = vtanh.pop %v1651
      %v1684 = vtanh.pop %v1652
      %v1685 = vtanh.pop %v1653
      %v1686 = vtanh.pop %v1654
      %v1687 = vtanh.pop %v1655
      %v1688 = vtanh.pop %v1656
      %v1689 = vtanh.pop %v1657
      %v1690 = vtanh.pop %v1658
      %v1691 = vtanh.pop %v1659
      %v1692 = vadd.f32 %v1660, 1.0
      %v1693 = vadd.f32 %v1661, 1.0
      %v1694 = vadd.f32 %v1662, 1.0
      %v1695 = vadd.f32 %v1663, 1.0
      %v1696 = vadd.f32 %v1664, 1.0
      %v1697 = vadd.f32 %v1665, 1.0
      %v1698 = vadd.f32 %v1666, 1.0
      %v1699 = vadd.f32 %v1667, 1.0
      %v1700 = vadd.f32 %v1668, 1.0
      %v1701 = vadd.f32 %v1669, 1.0
      %v1702 = vadd.f32 %v1670, 1.0
      %v1703 = vadd.f32 %v1671, 1.0
      %v1704 = vadd.f32 %v1672, 1.0
      %v1705 = vadd.f32 %v1673, 1.0
      %v1706 = vadd.f32 %v1674, 1.0
      %v1707 = vadd.f32 %v1675, 1.0
      %v1708 = vadd.f32 %v1676, 1.0
      %v1709 = vadd.f32 %v1677, 1.0
      %v1710 = vadd.f32 %v1678, 1.0
      %v1711 = vadd.f32 %v1679, 1.0
      %v1712 = vadd.f32 %v1680, 1.0
      %v1713 = vadd.f32 %v1681, 1.0
      %v1714 = vadd.f32 %v1682, 1.0
      %v1715 = vadd.f32 %v1683, 1.0
      %v1716 = vadd.f32 %v1684, 1.0
      %v1717 = vadd.f32 %v1685, 1.0
      %v1718 = vadd.f32 %v1686, 1.0
      %v1719 = vadd.f32 %v1687, 1.0
      %v1720 = vadd.f32 %v1688, 1.0
      %v1721 = vadd.f32 %v1689, 1.0
      %v1722 = vadd.f32 %v1690, 1.0
      %v1723 = vadd.f32 %v1691, 1.0
      %v1724 = vmul.f32 %v1468, %v1692
      %v1725 = vmul.f32 %v1469, %v1693
      %v1726 = vmul.f32 %v1470, %v1694
      %v1727 = vmul.f32 %v1471, %v1695
      %v1728 = vmul.f32 %v1472, %v1696
      %v1729 = vmul.f32 %v1473, %v1697
      %v1730 = vmul.f32 %v1474, %v1698
      %v1731 = vmul.f32 %v1475, %v1699
      %v1732 = vmul.f32 %v1476, %v1700
      %v1733 = vmul.f32 %v1477, %v1701
      %v1734 = vmul.f32 %v1478, %v1702
      %v1735 = vmul.f32 %v1479, %v1703
      %v1736 = vmul.f32 %v1480, %v1704
      %v1737 = vmul.f32 %v1481, %v1705
      %v1738 = vmul.f32 %v1482, %v1706
      %v1739 = vmul.f32 %v1483, %v1707
      %v1740 = vmul.f32 %v1484, %v1708
      %v1741 = vmul.f32 %v1485, %v1709
      %v1742 = vmul.f32 %v1486, %v1710
      %v1743 = vmul.f32 %v1487, %v1711
      %v1744 = vmul.f32 %v1488, %v1712
      %v1745 = vmul.f32 %v1489, %v1713
      %v1746 = vmul.f32 %v1490, %v1714
      %v1747 = vmul.f32 %v1491, %v1715
      %v1748 = vmul.f32 %v1492, %v1716
      %v1749 = vmul.f32 %v1493, %v1717
      %v1750 = vmul.f32 %v1494, %v1718
      %v1751 = vmul.f32 %v1495, %v1719
      %v1752 = vmul.f32 %v1496, %v1720
      %v1753 = vmul.f32 %v1497, %v1721
      %v1754 = vmul.f32 %v1498, %v1722
      %v1755 = vmul.f32 %v1499, %v1723
      %1756 = vst [vmem:[%s175] sm:$0xff] %v1724
      %1757 = vst [vmem:[%s175 + $0x8] sm:$0xff] %v1725
      %1758 = vst [vmem:[%s175 + $0x10] sm:$0xff] %v1726
      %1759 = vst [vmem:[%s175 + $0x18] sm:$0xff] %v1727
      %1760 = vst [vmem:[%s175 + $0x20] sm:$0xff] %v1728
      %1761 = vst [vmem:[%s175 + $0x28] sm:$0xff] %v1729
      %1762 = vst [vmem:[%s175 + $0x30] sm:$0xff] %v1730
      %1763 = vst [vmem:[%s175 + $0x38] sm:$0xff] %v1731
      %1764 = vst [vmem:[%s175 + $0x40] sm:$0xff] %v1732
      %1765 = vst [vmem:[%s175 + $0x48] sm:$0xff] %v1733
      %1766 = vst [vmem:[%s175 + $0x50] sm:$0xff] %v1734
      %1767 = vst [vmem:[%s175 + $0x58] sm:$0xff] %v1735
      %1768 = vst [vmem:[%s175 + $0x60] sm:$0xff] %v1736
      %1769 = vst [vmem:[%s175 + $0x68] sm:$0xff] %v1737
      %1770 = vst [vmem:[%s175 + $0x70] sm:$0xff] %v1738
      %1771 = vst [vmem:[%s175 + $0x78] sm:$0xff] %v1739
      %1772 = vst [vmem:[%s175 + $0x80] sm:$0xff] %v1740
      %1773 = vst [vmem:[%s175 + $0x88] sm:$0xff] %v1741
      %1774 = vst [vmem:[%s175 + $0x90] sm:$0xff] %v1742
      %1775 = vst [vmem:[%s175 + $0x98] sm:$0xff] %v1743
      %1776 = vst [vmem:[%s175 + $0xa0] sm:$0xff] %v1744
      %1777 = vst [vmem:[%s175 + $0xa8] sm:$0xff] %v1745
      %1778 = vst [vmem:[%s175 + $0xb0] sm:$0xff] %v1746
      %1779 = vst [vmem:[%s175 + $0xb8] sm:$0xff] %v1747
      %1780 = vst [vmem:[%s175 + $0xc0] sm:$0xff] %v1748
      %1781 = vst [vmem:[%s175 + $0xc8] sm:$0xff] %v1749
      %1782 = vst [vmem:[%s175 + $0xd0] sm:$0xff] %v1750
      %1783 = vst [vmem:[%s175 + $0xd8] sm:$0xff] %v1751
      %1784 = vst [vmem:[%s175 + $0xe0] sm:$0xff] %v1752
      %1785 = vst [vmem:[%s175 + $0xe8] sm:$0xff] %v1753
      %1786 = vst [vmem:[%s175 + $0xf0] sm:$0xff] %v1754
      %1787 = vst [vmem:[%s175 + $0xf8] sm:$0xff] %v1755
      %s1788 = smul.u32 32, %s14
      %p1789 = scmp.lt.s32.totalorder %s1788, 95
      %s1790 = scalar_select %p1789, %s1788, 95
      %s1791 = smul.addr %s1790, 8
      %s1792 = scalar_lea.vmem %s3, %s1791
      // Predicated region
      $region33: #{mrcnn_shhs_forward.9} parent=31 // pred_check
        %p1793 = pneg %p100
      $region34: #{mrcnn_shhs_forward.9} parent=31 // pred_check_branch
        %1795 = sbr.rel (%p1793) target = $region36
      $region35: #{mrcnn_shhs_forward.9} parent=31 // pred_region
        %s1796 = smul.u32 32, %s14
      $region36: #{mrcnn_shhs_forward.9} parent=31 // pred_fallthru
        _
    $region32: #{mrcnn_shhs_forward.9} parent=5 // pred_fallthru
      _
    %p1797 = scmp.le.s32.totalorder 2, %s9
    // Predicated region
    $region37: #{mrcnn_shhs_forward.9} parent=5 // pred_check
      %p1798 = pneg %p1797
    $region38: #{mrcnn_shhs_forward.9} parent=5 // pred_check_branch
      %1800 = sbr.rel (%p1798) target = $region40
    $region39: #{mrcnn_shhs_forward.9} parent=5 // pred_region
      %s1801 = ssub.s32 %s9, 2
      // Predicated region
      $region41: #{mrcnn_shhs_forward.9} parent=39 // pred_check
        %p1802 = pneg %p106
      $region42: #{mrcnn_shhs_forward.9} parent=39 // pred_check_branch
        %1804 = sbr.rel (%p1802) target = $region44
      $region43: #{mrcnn_shhs_forward.9} parent=39 // pred_region
        %s1805 = smul.u32 32, %s15
        %p1806 = scmp.lt.s32.totalorder %s1805, 95
        %s1807 = scalar_select %p1806, %s1805, 95
        %s1808 = smul.addr %s1807, 8
        %s1809 = scalar_lea.vmem %s3, %s1808
      $region44: #{mrcnn_shhs_forward.9} parent=39 // pred_fallthru
        _
    $region40: #{mrcnn_shhs_forward.9} parent=5 // pred_fallthru
      _
  $region6: #{mrcnn_shhs_forward.9} parent=0 // loop_footer
    %s13 = sadd.s32 1, %s9
  $region7: #{mrcnn_shhs_forward.9} parent=0 // loop_footer_branch
    %8 = sbr.rel target = $region3
  $region8: #{mrcnn_shhs_forward.9} parent=0 // loop_exit
    _

// kernel: mrcnn_shhs_forward.13
$region0: #{mrcnn_shhs_forward.13}
  #allocation0 [shape = 'u32[]', space=smem, size = 0x4, offset = 0x4, fixed_abs, tag = 'smem constant byte address 0x4 - core index']
  #allocation1 [shape = 'u32[144,128]{1,0:T(1,128)}', space=vmem, size = 0x12000, scoped, tag = 'internal scratch']
  %s0 = inlined_call_operand.vmem [shape: f32[200,128], index: 0, kind: input, shape index: {}]
  %s1 = inlined_call_operand.vmem [shape: f32[128,30], index: 1, kind: input, shape index: {}]
  %s2 = inlined_call_operand.vmem [shape: f32[1,30], index: 2, kind: input, shape index: {}]
  %s3 = inlined_call_operand.vmem [shape: f32[30,30], index: 3, kind: input, shape index: {}]
  %s4 = inlined_call_operand.vmem [shape: f32[1,30], index: 4, kind: input, shape index: {}]
  %s5 = inlined_call_operand.vmem [shape: f32[128,30], index: 5, kind: input, shape index: {}]
  %s6 = inlined_call_operand.vmem [shape: f32[1,30], index: 6, kind: input, shape index: {}]
  %s7 = inlined_call_operand.vmem [shape: f32[1,30], index: 7, kind: input, shape index: {}]
  %s8 = inlined_call_operand.vmem [shape: f32[1,30], index: 8, kind: input, shape index: {}]
  %s9 = inlined_call_operand.vmem [shape: f32[2,200], index: 9, kind: input, shape index: {}]
  %s10 = inlined_call_operand.vmem [shape: f32[200,2], index: 10, kind: input, shape index: {}]
  %s11 = inlined_call_operand.vmem [shape: f32[200,30], index: 11, kind: output, shape index: {}]
  %s12 = sld [smem:[#allocation0]]
  $region54: #{mrcnn_shhs_forward.13} parent=0
    _
  %s14 = ssub.s32 1, %s12
  %s15 = scalar_select 0, %s14, %s12
  // Predicated region
  $region2: #{mrcnn_shhs_forward.13} parent=0 // pred_check
    _
  $region3: #{mrcnn_shhs_forward.13} parent=0 // pred_check_branch
    %17 = sbr.rel (0) target = $region5
  $region4: #{mrcnn_shhs_forward.13} parent=0 // pred_region
    _
  $region5: #{mrcnn_shhs_forward.13} parent=0 // pred_fallthru
    _
  // Predicated region
  $region6: #{mrcnn_shhs_forward.13} parent=0 // pred_check
    _
  $region7: #{mrcnn_shhs_forward.13} parent=0 // pred_check_branch
    %19 = sbr.rel (0) target = $region9
  $region8: #{mrcnn_shhs_forward.13} parent=0 // pred_region
    _
  $region9: #{mrcnn_shhs_forward.13} parent=0 // pred_fallthru
    _
  // Predicated region
  $region10: #{mrcnn_shhs_forward.13} parent=0 // pred_check
    _
  $region11: #{mrcnn_shhs_forward.13} parent=0 // pred_check_branch
    %21 = sbr.rel (0) target = $region13
  $region12: #{mrcnn_shhs_forward.13} parent=0 // pred_region
    _
  $region13: #{mrcnn_shhs_forward.13} parent=0 // pred_fallthru
    _
  // Predicated region
  $region14: #{mrcnn_shhs_forward.13} parent=0 // pred_check
    _
  $region15: #{mrcnn_shhs_forward.13} parent=0 // pred_check_branch
    %23 = sbr.rel (0) target = $region17
  $region16: #{mrcnn_shhs_forward.13} parent=0 // pred_region
    _
  $region17: #{mrcnn_shhs_forward.13} parent=0 // pred_fallthru
    _
  // Predicated region
  $region18: #{mrcnn_shhs_forward.13} parent=0 // pred_check
    _
  $region19: #{mrcnn_shhs_forward.13} parent=0 // pred_check_branch
    %25 = sbr.rel (0) target = $region21
  $region20: #{mrcnn_shhs_forward.13} parent=0 // pred_region
    _
  $region21: #{mrcnn_shhs_forward.13} parent=0 // pred_fallthru
    _
  // Predicated region
  $region22: #{mrcnn_shhs_forward.13} parent=0 // pred_check
    _
  $region23: #{mrcnn_shhs_forward.13} parent=0 // pred_check_branch
    %27 = sbr.rel (0) target = $region25
  $region24: #{mrcnn_shhs_forward.13} parent=0 // pred_region
    _
  $region25: #{mrcnn_shhs_forward.13} parent=0 // pred_fallthru
    _
  // Predicated region
  $region26: #{mrcnn_shhs_forward.13} parent=0 // pred_check
    _
  $region27: #{mrcnn_shhs_forward.13} parent=0 // pred_check_branch
    %29 = sbr.rel (0) target = $region29
  $region28: #{mrcnn_shhs_forward.13} parent=0 // pred_region
    _
  $region29: #{mrcnn_shhs_forward.13} parent=0 // pred_fallthru
    _
  // Predicated region
  $region30: #{mrcnn_shhs_forward.13} parent=0 // pred_check
    _
  $region31: #{mrcnn_shhs_forward.13} parent=0 // pred_check_branch
    %31 = sbr.rel (0) target = $region33
  $region32: #{mrcnn_shhs_forward.13} parent=0 // pred_region
    _
  $region33: #{mrcnn_shhs_forward.13} parent=0 // pred_fallthru
    _
  // Predicated region
  $region34: #{mrcnn_shhs_forward.13} parent=0 // pred_check
    _
  $region35: #{mrcnn_shhs_forward.13} parent=0 // pred_check_branch
    %33 = sbr.rel (0) target = $region37
  $region36: #{mrcnn_shhs_forward.13} parent=0 // pred_region
    _
  $region37: #{mrcnn_shhs_forward.13} parent=0 // pred_fallthru
    _
  // Predicated region
  $region38: #{mrcnn_shhs_forward.13} parent=0 // pred_check
    _
  $region39: #{mrcnn_shhs_forward.13} parent=0 // pred_check_branch
    %35 = sbr.rel (0) target = $region41
  $region40: #{mrcnn_shhs_forward.13} parent=0 // pred_region
    _
  $region41: #{mrcnn_shhs_forward.13} parent=0 // pred_fallthru
    _
  // Predicated region
  $region42: #{mrcnn_shhs_forward.13} parent=0 // pred_check
    _
  $region43: #{mrcnn_shhs_forward.13} parent=0 // pred_check_branch
    %37 = sbr.rel (0) target = $region45
  $region44: #{mrcnn_shhs_forward.13} parent=0 // pred_region
    _
  $region45: #{mrcnn_shhs_forward.13} parent=0 // pred_fallthru
    _
  %v38 = vld [vmem:[%s0] sm:$0xff]
  %v39 = vld [vmem:[%s0 + $0x8] sm:$0xff]
  %v40 = vld [vmem:[%s0 + $0x10] sm:$0xff]
  %v41 = vld [vmem:[%s0 + $0x18] sm:$0xff]
  %v42 = vld [vmem:[%s0 + $0x20] sm:$0xff]
  %v43 = vld [vmem:[%s0 + $0x28] sm:$0xff]
  %v44 = vld [vmem:[%s0 + $0x30] sm:$0xff]
  %v45 = vld [vmem:[%s0 + $0x38] sm:$0xff]
  %v46 = vld [vmem:[%s0 + $0x40] sm:$0xff]
  %v47 = vld [vmem:[%s0 + $0x48] sm:$0xff]
  %v48 = vld [vmem:[%s0 + $0x50] sm:$0xff]
  %v49 = vld [vmem:[%s0 + $0x58] sm:$0xff]
  %v50 = vld [vmem:[%s0 + $0x60] sm:$0xff]
  %v51 = vld [vmem:[%s0 + $0x68] sm:$0xff]
  %v52 = vld [vmem:[%s0 + $0x70] sm:$0xff]
  %v53 = vld [vmem:[%s0 + $0x78] sm:$0xff]
  %v54 = vld [vmem:[%s0 + $0x80] sm:$0xff]
  %v55 = vld [vmem:[%s0 + $0x88] sm:$0xff]
  %v56 = vld [vmem:[%s0 + $0x90] sm:$0xff]
  %v57 = vld [vmem:[%s0 + $0x98] sm:$0xff]
  %v58 = vld [vmem:[%s0 + $0xa0] sm:$0xff]
  %v59 = vld [vmem:[%s0 + $0xa8] sm:$0xff]
  %v60 = vld [vmem:[%s0 + $0xb0] sm:$0xff]
  %v61 = vld [vmem:[%s0 + $0xb8] sm:$0xff]
  %v62 = vld [vmem:[%s0 + $0xc0] sm:$0xff]
  %v63 = vld [vmem:[%s1] sm:$0xff]
  %v64 = vld [vmem:[%s1 + $0x8] sm:$0xff]
  %v65 = vld [vmem:[%s1 + $0x10] sm:$0xff]
  %v66 = vld [vmem:[%s1 + $0x18] sm:$0xff]
  %v67 = vld [vmem:[%s1 + $0x20] sm:$0xff]
  %v68 = vld [vmem:[%s1 + $0x28] sm:$0xff]
  %v69 = vld [vmem:[%s1 + $0x30] sm:$0xff]
  %v70 = vld [vmem:[%s1 + $0x38] sm:$0xff]
  %v71 = vld [vmem:[%s1 + $0x40] sm:$0xff]
  %v72 = vld [vmem:[%s1 + $0x48] sm:$0xff]
  %v73 = vld [vmem:[%s1 + $0x50] sm:$0xff]
  %v74 = vld [vmem:[%s1 + $0x58] sm:$0xff]
  %v75 = vld [vmem:[%s1 + $0x60] sm:$0xff]
  %v76 = vld [vmem:[%s1 + $0x68] sm:$0xff]
  %v77 = vld [vmem:[%s1 + $0x70] sm:$0xff]
  %v78 = vld [vmem:[%s1 + $0x78] sm:$0xff]
  %v79 = vld [vmem:[%s2] sm:$0x1]
  %v81 = vlaneseq
  %v82 = vshrl.u32 %v81, 7
  %v83 = vsub.s32 0, %v82
  %v84 = vrot.slane %v79, %v83
  %86 = vmatprep.subr.mxu0 0.0
  %87 = vmatpush1.msra.mxu0 %v63
  %88 = vmatprep.subr.mxu0 0.0
  %89 = vmatpush1.msra.mxu0 %v64
  %90 = vmatprep.subr.mxu0 0.0
  %91 = vmatpush1.msra.mxu0 %v65
  %92 = vmatprep.subr.mxu0 0.0
  %93 = vmatpush1.msra.mxu0 %v66
  %94 = vmatprep.subr.mxu0 0.0
  %95 = vmatpush1.msra.mxu0 %v67
  %96 = vmatprep.subr.mxu0 0.0
  %97 = vmatpush1.msra.mxu0 %v68
  %98 = vmatprep.subr.mxu0 0.0
  %99 = vmatpush1.msra.mxu0 %v69
  %100 = vmatprep.subr.mxu0 0.0
  %101 = vmatpush1.msra.mxu0 %v70
  %102 = vmatprep.subr.mxu0 0.0
  %103 = vmatpush1.msra.mxu0 %v71
  %104 = vmatprep.subr.mxu0 0.0
  %105 = vmatpush1.msra.mxu0 %v72
  %106 = vmatprep.subr.mxu0 0.0
  %107 = vmatpush1.msra.mxu0 %v73
  %108 = vmatprep.subr.mxu0 0.0
  %109 = vmatpush1.msra.mxu0 %v74
  %110 = vmatprep.subr.mxu0 0.0
  %111 = vmatpush1.msra.mxu0 %v75
  %112 = vmatprep.subr.mxu0 0.0
  %113 = vmatpush1.msra.mxu0 %v76
  %114 = vmatprep.subr.mxu0 0.0
  %115 = vmatpush1.msra.mxu0 %v77
  %116 = vmatprep.subr.mxu0 0.0
  %117 = vmatpush1.msra.mxu0 %v78
  %118 = vmatprep.subr.mxu0 0.0
  %119 = vmatpush1.msra.mxu0 0.0
  %120 = vmatprep.subr.mxu0 0.0
  %121 = vmatpush1.msra.mxu0 0.0
  %122 = vmatprep.subr.mxu0 0.0
  %123 = vmatpush1.msra.mxu0 0.0
  %124 = vmatprep.subr.mxu0 0.0
  %125 = vmatpush1.msra.mxu0 0.0
  %126 = vmatprep.subr.mxu0 0.0
  %127 = vmatpush1.msra.mxu0 0.0
  %128 = vmatprep.subr.mxu0 0.0
  %129 = vmatpush1.msra.mxu0 0.0
  %130 = vmatprep.subr.mxu0 0.0
  %131 = vmatpush1.msra.mxu0 0.0
  %132 = vmatprep.subr.mxu0 0.0
  %133 = vmatpush1.msra.mxu0 0.0
  %134 = vmatprep.subr.mxu0 0.0
  %135 = vmatpush1.msra.mxu0 0.0
  %136 = vmatprep.subr.mxu0 0.0
  %137 = vmatpush1.msra.mxu0 0.0
  %138 = vmatprep.subr.mxu0 0.0
  %139 = vmatpush1.msra.mxu0 0.0
  %140 = vmatprep.subr.mxu0 0.0
  %141 = vmatpush1.msra.mxu0 0.0
  %142 = vmatprep.subr.mxu0 0.0
  %143 = vmatpush1.msra.mxu0 0.0
  %144 = vmatprep.subr.mxu0 0.0
  %145 = vmatpush1.msra.mxu0 0.0
  %146 = vmatprep.subr.mxu0 0.0
  %147 = vmatpush1.msra.mxu0 0.0
  %148 = vmatprep.subr.mxu0 0.0
  %149 = vmatpush1.msra.mxu0 0.0
  %150 = vmatprep.mubr.f32.mxu0 0.0
  %151 = vmatmul.mubr.f32.gmra.mrb[0].mxu0 %v38
  %v152 = vpop.f32.mrb[0].mxu0
  %v153 = vadd.f32 %v84, %v152
  %v154 = vpop.f32.mrb[0].mxu0
  %155 = vmatprep.mubr.f32.mxu0 0.0
  %156 = vmatmul.mubr.f32.gmra.mrb[0].mxu0 %v39
  %v157 = vpop.f32.mrb[0].mxu0
  %v158 = vadd.f32 %v84, %v157
  %v159 = vpop.f32.mrb[0].mxu0
  %160 = vmatprep.mubr.f32.mxu0 0.0
  %161 = vmatmul.mubr.f32.gmra.mrb[0].mxu0 %v40
  %v162 = vpop.f32.mrb[0].mxu0
  %v163 = vadd.f32 %v84, %v162
  %v164 = vpop.f32.mrb[0].mxu0
  %165 = vmatprep.mubr.f32.mxu0 0.0
  %166 = vmatmul.mubr.f32.gmra.mrb[0].mxu0 %v41
  %v167 = vpop.f32.mrb[0].mxu0
  %v168 = vadd.f32 %v84, %v167
  %v169 = vpop.f32.mrb[0].mxu0
  %170 = vmatprep.mubr.f32.mxu0 0.0
  %171 = vmatmul.mubr.f32.gmra.mrb[0].mxu0 %v42
  %v172 = vpop.f32.mrb[0].mxu0
  %v173 = vadd.f32 %v84, %v172
  %v174 = vpop.f32.mrb[0].mxu0
  %175 = vmatprep.mubr.f32.mxu0 0.0
  %176 = vmatmul.mubr.f32.gmra.mrb[0].mxu0 %v43
  %v177 = vpop.f32.mrb[0].mxu0
  %v178 = vadd.f32 %v84, %v177
  %v179 = vpop.f32.mrb[0].mxu0
  %180 = vmatprep.mubr.f32.mxu0 0.0
  %181 = vmatmul.mubr.f32.gmra.mrb[0].mxu0 %v44
  %v182 = vpop.f32.mrb[0].mxu0
  %v183 = vadd.f32 %v84, %v182
  %v184 = vpop.f32.mrb[0].mxu0
  %185 = vmatprep.mubr.f32.mxu0 0.0
  %186 = vmatmul.mubr.f32.gmra.mrb[0].mxu0 %v45
  %v187 = vpop.f32.mrb[0].mxu0
  %v188 = vadd.f32 %v84, %v187
  %v189 = vpop.f32.mrb[0].mxu0
  %190 = vmatprep.mubr.f32.mxu0 0.0
  %191 = vmatmul.mubr.f32.gmra.mrb[0].mxu0 %v46
  %v192 = vpop.f32.mrb[0].mxu0
  %v193 = vadd.f32 %v84, %v192
  %v194 = vpop.f32.mrb[0].mxu0
  %195 = vmatprep.mubr.f32.mxu0 0.0
  %196 = vmatmul.mubr.f32.gmra.mrb[0].mxu0 %v47
  %v197 = vpop.f32.mrb[0].mxu0
  %v198 = vadd.f32 %v84, %v197
  %v199 = vpop.f32.mrb[0].mxu0
  %200 = vmatprep.mubr.f32.mxu0 0.0
  %201 = vmatmul.mubr.f32.gmra.mrb[0].mxu0 %v48
  %v202 = vpop.f32.mrb[0].mxu0
  %v203 = vadd.f32 %v84, %v202
  %v204 = vpop.f32.mrb[0].mxu0
  %205 = vmatprep.mubr.f32.mxu0 0.0
  %206 = vmatmul.mubr.f32.gmra.mrb[0].mxu0 %v49
  %v207 = vpop.f32.mrb[0].mxu0
  %v208 = vadd.f32 %v84, %v207
  %v209 = vpop.f32.mrb[0].mxu0
  %210 = vmatprep.mubr.f32.mxu0 0.0
  %211 = vmatmul.mubr.f32.gmra.mrb[0].mxu0 %v50
  %v212 = vpop.f32.mrb[0].mxu0
  %v213 = vadd.f32 %v84, %v212
  %v214 = vpop.f32.mrb[0].mxu0
  %215 = vmatprep.mubr.f32.mxu0 0.0
  %216 = vmatmul.mubr.f32.gmra.mrb[0].mxu0 %v51
  %v217 = vpop.f32.mrb[0].mxu0
  %v218 = vadd.f32 %v84, %v217
  %v219 = vpop.f32.mrb[0].mxu0
  %220 = vmatprep.mubr.f32.mxu0 0.0
  %221 = vmatmul.mubr.f32.gmra.mrb[0].mxu0 %v52
  %v222 = vpop.f32.mrb[0].mxu0
  %v223 = vadd.f32 %v84, %v222
  %v224 = vpop.f32.mrb[0].mxu0
  %225 = vmatprep.mubr.f32.mxu0 0.0
  %226 = vmatmul.mubr.f32.gmra.mrb[0].mxu0 %v53
  %v227 = vpop.f32.mrb[0].mxu0
  %v228 = vadd.f32 %v84, %v227
  %v229 = vpop.f32.mrb[0].mxu0
  %230 = vmatprep.mubr.f32.mxu0 0.0
  %231 = vmatmul.mubr.f32.gmra.mrb[0].mxu0 %v54
  %v232 = vpop.f32.mrb[0].mxu0
  %v233 = vadd.f32 %v84, %v232
  %v234 = vpop.f32.mrb[0].mxu0
  %235 = vmatprep.mubr.f32.mxu0 0.0
  %236 = vmatmul.mubr.f32.gmra.mrb[0].mxu0 %v55
  %v237 = vpop.f32.mrb[0].mxu0
  %v238 = vadd.f32 %v84, %v237
  %v239 = vpop.f32.mrb[0].mxu0
  %240 = vmatprep.mubr.f32.mxu0 0.0
  %241 = vmatmul.mubr.f32.gmra.mrb[0].mxu0 %v56
  %v242 = vpop.f32.mrb[0].mxu0
  %v243 = vadd.f32 %v84, %v242
  %v244 = vpop.f32.mrb[0].mxu0
  %245 = vmatprep.mubr.f32.mxu0 0.0
  %246 = vmatmul.mubr.f32.gmra.mrb[0].mxu0 %v57
  %v247 = vpop.f32.mrb[0].mxu0
  %v248 = vadd.f32 %v84, %v247
  %v249 = vpop.f32.mrb[0].mxu0
  %250 = vmatprep.mubr.f32.mxu0 0.0
  %251 = vmatmul.mubr.f32.gmra.mrb[0].mxu0 %v58
  %v252 = vpop.f32.mrb[0].mxu0
  %v253 = vadd.f32 %v84, %v252
  %v254 = vpop.f32.mrb[0].mxu0
  %255 = vmatprep.mubr.f32.mxu0 0.0
  %256 = vmatmul.mubr.f32.gmra.mrb[0].mxu0 %v59
  %v257 = vpop.f32.mrb[0].mxu0
  %v258 = vadd.f32 %v84, %v257
  %v259 = vpop.f32.mrb[0].mxu0
  %260 = vmatprep.mubr.f32.mxu0 0.0
  %261 = vmatmul.mubr.f32.gmra.mrb[0].mxu0 %v60
  %v262 = vpop.f32.mrb[0].mxu0
  %v263 = vadd.f32 %v84, %v262
  %v264 = vpop.f32.mrb[0].mxu0
  %265 = vmatprep.mubr.f32.mxu0 0.0
  %266 = vmatmul.mubr.f32.gmra.mrb[0].mxu0 %v61
  %v267 = vpop.f32.mrb[0].mxu0
  %v268 = vadd.f32 %v84, %v267
  %v269 = vpop.f32.mrb[0].mxu0
  %270 = vmatprep.mubr.f32.mxu0 0.0
  %271 = vmatmul.mubr.f32.gmra.mrb[0].mxu0 %v62
  %v272 = vpop.f32.mrb[0].mxu0
  %v273 = vadd.f32 %v84, %v272
  %v274 = vpop.f32.mrb[0].mxu0
  %275 = vdwg.mxu0
  %v276 = vmax.f32 %v153, 0.0
  %v277 = vmax.f32 %v158, 0.0
  %v278 = vmax.f32 %v163, 0.0
  %v279 = vmax.f32 %v168, 0.0
  %v280 = vmax.f32 %v173, 0.0
  %v281 = vmax.f32 %v178, 0.0
  %v282 = vmax.f32 %v183, 0.0
  %v283 = vmax.f32 %v188, 0.0
  %v284 = vmax.f32 %v193, 0.0
  %v285 = vmax.f32 %v198, 0.0
  %v286 = vmax.f32 %v203, 0.0
  %v287 = vmax.f32 %v208, 0.0
  %v288 = vmax.f32 %v213, 0.0
  %v289 = vmax.f32 %v218, 0.0
  %v290 = vmax.f32 %v223, 0.0
  %v291 = vmax.f32 %v228, 0.0
  %v292 = vmax.f32 %v233, 0.0
  %v293 = vmax.f32 %v238, 0.0
  %v294 = vmax.f32 %v243, 0.0
  %v295 = vmax.f32 %v248, 0.0
  %v296 = vmax.f32 %v253, 0.0
  %v297 = vmax.f32 %v258, 0.0
  %v298 = vmax.f32 %v263, 0.0
  %v299 = vmax.f32 %v268, 0.0
  %v300 = vmax.f32 %v273, 0.0
  %v301 = vld [vmem:[%s3] sm:$0xff]
  %v302 = vld [vmem:[%s3 + $0x8] sm:$0xff]
  %v303 = vld [vmem:[%s3 + $0x10] sm:$0xff]
  %v304 = vld [vmem:[%s3 + $0x18] sm:$0x3f]
  %v305 = vld [vmem:[%s4] sm:$0x1]
  %v307 = vlaneseq
  %v308 = vshrl.u32 %v307, 7
  %v309 = vsub.s32 0, %v308
  %v310 = vrot.slane %v305, %v309
  %vm312 = vcmask 244736
  %v314 = vsel %vm312, %v276, 0
  %v317 = vsel %vm312, %v277, 0
  %v320 = vsel %vm312, %v278, 0
  %v323 = vsel %vm312, %v279, 0
  %v326 = vsel %vm312, %v280, 0
  %v329 = vsel %vm312, %v281, 0
  %v332 = vsel %vm312, %v282, 0
  %v335 = vsel %vm312, %v283, 0
  %v338 = vsel %vm312, %v284, 0
  %v341 = vsel %vm312, %v285, 0
  %v344 = vsel %vm312, %v286, 0
  %v347 = vsel %vm312, %v287, 0
  %v350 = vsel %vm312, %v288, 0
  %v353 = vsel %vm312, %v289, 0
  %v356 = vsel %vm312, %v290, 0
  %v359 = vsel %vm312, %v291, 0
  %v362 = vsel %vm312, %v292, 0
  %v365 = vsel %vm312, %v293, 0
  %v368 = vsel %vm312, %v294, 0
  %v371 = vsel %vm312, %v295, 0
  %v374 = vsel %vm312, %v296, 0
  %v377 = vsel %vm312, %v297, 0
  %v380 = vsel %vm312, %v298, 0
  %v383 = vsel %vm312, %v299, 0
  %v386 = vsel %vm312, %v300, 0
  %vm388 = vcmask 1045504
  %v390 = vsel %vm388, %v304, 0
  %392 = vmatprep.subr.mxu0 0.0
  %393 = vmatpush1.msra.mxu0 %v301
  %394 = vmatprep.subr.mxu0 0.0
  %395 = vmatpush1.msra.mxu0 %v302
  %396 = vmatprep.subr.mxu0 0.0
  %397 = vmatpush1.msra.mxu0 %v303
  %398 = vmatprep.subr.mxu0 0.0
  %399 = vmatpush1.msra.mxu0 %v390
  %400 = vmatprep.subr.mxu0 0.0
  %401 = vmatpush1.msra.mxu0 0.0
  %402 = vmatprep.subr.mxu0 0.0
  %403 = vmatpush1.msra.mxu0 0.0
  %404 = vmatprep.subr.mxu0 0.0
  %405 = vmatpush1.msra.mxu0 0.0
  %406 = vmatprep.subr.mxu0 0.0
  %407 = vmatpush1.msra.mxu0 0.0
  %408 = vmatprep.subr.mxu0 0.0
  %409 = vmatpush1.msra.mxu0 0.0
  %410 = vmatprep.subr.mxu0 0.0
  %411 = vmatpush1.msra.mxu0 0.0
  %412 = vmatprep.subr.mxu0 0.0
  %413 = vmatpush1.msra.mxu0 0.0
  %414 = vmatprep.subr.mxu0 0.0
  %415 = vmatpush1.msra.mxu0 0.0
  %416 = vmatprep.subr.mxu0 0.0
  %417 = vmatpush1.msra.mxu0 0.0
  %418 = vmatprep.subr.mxu0 0.0
  %419 = vmatpush1.msra.mxu0 0.0
  %420 = vmatprep.subr.mxu0 0.0
  %421 = vmatpush1.msra.mxu0 0.0
  %422 = vmatprep.subr.mxu0 0.0
  %423 = vmatpush1.msra.mxu0 0.0
  %424 = vmatprep.subr.mxu0 0.0
  %425 = vmatpush1.msra.mxu0 0.0
  %426 = vmatprep.subr.mxu0 0.0
  %427 = vmatpush1.msra.mxu0 0.0
  %428 = vmatprep.subr.mxu0 0.0
  %429 = vmatpush1.msra.mxu0 0.0
  %430 = vmatprep.subr.mxu0 0.0
  %431 = vmatpush1.msra.mxu0 0.0
  %432 = vmatprep.subr.mxu0 0.0
  %433 = vmatpush1.msra.mxu0 0.0
  %434 = vmatprep.subr.mxu0 0.0
  %435 = vmatpush1.msra.mxu0 0.0
  %436 = vmatprep.subr.mxu0 0.0
  %437 = vmatpush1.msra.mxu0 0.0
  %438 = vmatprep.subr.mxu0 0.0
  %439 = vmatpush1.msra.mxu0 0.0
  %440 = vmatprep.subr.mxu0 0.0
  %441 = vmatpush1.msra.mxu0 0.0
  %442 = vmatprep.subr.mxu0 0.0
  %443 = vmatpush1.msra.mxu0 0.0
  %444 = vmatprep.subr.mxu0 0.0
  %445 = vmatpush1.msra.mxu0 0.0
  %446 = vmatprep.subr.mxu0 0.0
  %447 = vmatpush1.msra.mxu0 0.0
  %448 = vmatprep.subr.mxu0 0.0
  %449 = vmatpush1.msra.mxu0 0.0
  %450 = vmatprep.subr.mxu0 0.0
  %451 = vmatpush1.msra.mxu0 0.0
  %452 = vmatprep.subr.mxu0 0.0
  %453 = vmatpush1.msra.mxu0 0.0
  %454 = vmatprep.subr.mxu0 0.0
  %455 = vmatpush1.msra.mxu0 0.0
  %456 = vmatprep.mubr.f32.mxu0 0.0
  %457 = vmatmul.mubr.f32.gmra.mrb[0].mxu0 %v314
  %v458 = vpop.f32.mrb[0].mxu0
  %v459 = vadd.f32 %v310, %v458
  %v460 = vpop.f32.mrb[0].mxu0
  %461 = vmatprep.mubr.f32.mxu0 0.0
  %462 = vmatmul.mubr.f32.gmra.mrb[0].mxu0 %v317
  %v463 = vpop.f32.mrb[0].mxu0
  %v464 = vadd.f32 %v310, %v463
  %v465 = vpop.f32.mrb[0].mxu0
  %466 = vmatprep.mubr.f32.mxu0 0.0
  %467 = vmatmul.mubr.f32.gmra.mrb[0].mxu0 %v320
  %v468 = vpop.f32.mrb[0].mxu0
  %v469 = vadd.f32 %v310, %v468
  %v470 = vpop.f32.mrb[0].mxu0
  %471 = vmatprep.mubr.f32.mxu0 0.0
  %472 = vmatmul.mubr.f32.gmra.mrb[0].mxu0 %v323
  %v473 = vpop.f32.mrb[0].mxu0
  %v474 = vadd.f32 %v310, %v473
  %v475 = vpop.f32.mrb[0].mxu0
  %476 = vmatprep.mubr.f32.mxu0 0.0
  %477 = vmatmul.mubr.f32.gmra.mrb[0].mxu0 %v326
  %v478 = vpop.f32.mrb[0].mxu0
  %v479 = vadd.f32 %v310, %v478
  %v480 = vpop.f32.mrb[0].mxu0
  %481 = vmatprep.mubr.f32.mxu0 0.0
  %482 = vmatmul.mubr.f32.gmra.mrb[0].mxu0 %v329
  %v483 = vpop.f32.mrb[0].mxu0
  %v484 = vadd.f32 %v310, %v483
  %v485 = vpop.f32.mrb[0].mxu0
  %486 = vmatprep.mubr.f32.mxu0 0.0
  %487 = vmatmul.mubr.f32.gmra.mrb[0].mxu0 %v332
  %v488 = vpop.f32.mrb[0].mxu0
  %v489 = vadd.f32 %v310, %v488
  %v490 = vpop.f32.mrb[0].mxu0
  %491 = vmatprep.mubr.f32.mxu0 0.0
  %492 = vmatmul.mubr.f32.gmra.mrb[0].mxu0 %v335
  %v493 = vpop.f32.mrb[0].mxu0
  %v494 = vadd.f32 %v310, %v493
  %v495 = vpop.f32.mrb[0].mxu0
  %496 = vmatprep.mubr.f32.mxu0 0.0
  %497 = vmatmul.mubr.f32.gmra.mrb[0].mxu0 %v338
  %v498 = vpop.f32.mrb[0].mxu0
  %v499 = vadd.f32 %v310, %v498
  %v500 = vpop.f32.mrb[0].mxu0
  %501 = vmatprep.mubr.f32.mxu0 0.0
  %502 = vmatmul.mubr.f32.gmra.mrb[0].mxu0 %v341
  %v503 = vpop.f32.mrb[0].mxu0
  %v504 = vadd.f32 %v310, %v503
  %v505 = vpop.f32.mrb[0].mxu0
  %506 = vmatprep.mubr.f32.mxu0 0.0
  %507 = vmatmul.mubr.f32.gmra.mrb[0].mxu0 %v344
  %v508 = vpop.f32.mrb[0].mxu0
  %v509 = vadd.f32 %v310, %v508
  %v510 = vpop.f32.mrb[0].mxu0
  %511 = vmatprep.mubr.f32.mxu0 0.0
  %512 = vmatmul.mubr.f32.gmra.mrb[0].mxu0 %v347
  %v513 = vpop.f32.mrb[0].mxu0
  %v514 = vadd.f32 %v310, %v513
  %v515 = vpop.f32.mrb[0].mxu0
  %516 = vmatprep.mubr.f32.mxu0 0.0
  %517 = vmatmul.mubr.f32.gmra.mrb[0].mxu0 %v350
  %v518 = vpop.f32.mrb[0].mxu0
  %v519 = vadd.f32 %v310, %v518
  %v520 = vpop.f32.mrb[0].mxu0
  %521 = vmatprep.mubr.f32.mxu0 0.0
  %522 = vmatmul.mubr.f32.gmra.mrb[0].mxu0 %v353
  %v523 = vpop.f32.mrb[0].mxu0
  %v524 = vadd.f32 %v310, %v523
  %v525 = vpop.f32.mrb[0].mxu0
  %526 = vmatprep.mubr.f32.mxu0 0.0
  %527 = vmatmul.mubr.f32.gmra.mrb[0].mxu0 %v356
  %v528 = vpop.f32.mrb[0].mxu0
  %v529 = vadd.f32 %v310, %v528
  %v530 = vpop.f32.mrb[0].mxu0
  %531 = vmatprep.mubr.f32.mxu0 0.0
  %532 = vmatmul.mubr.f32.gmra.mrb[0].mxu0 %v359
  %v533 = vpop.f32.mrb[0].mxu0
  %v534 = vadd.f32 %v310, %v533
  %v535 = vpop.f32.mrb[0].mxu0
  %536 = vmatprep.mubr.f32.mxu0 0.0
  %537 = vmatmul.mubr.f32.gmra.mrb[0].mxu0 %v362
  %v538 = vpop.f32.mrb[0].mxu0
  %v539 = vadd.f32 %v310, %v538
  %v540 = vpop.f32.mrb[0].mxu0
  %541 = vmatprep.mubr.f32.mxu0 0.0
  %542 = vmatmul.mubr.f32.gmra.mrb[0].mxu0 %v365
  %v543 = vpop.f32.mrb[0].mxu0
  %v544 = vadd.f32 %v310, %v543
  %v545 = vpop.f32.mrb[0].mxu0
  %546 = vmatprep.mubr.f32.mxu0 0.0
  %547 = vmatmul.mubr.f32.gmra.mrb[0].mxu0 %v368
  %v548 = vpop.f32.mrb[0].mxu0
  %v549 = vadd.f32 %v310, %v548
  %v550 = vpop.f32.mrb[0].mxu0
  %551 = vmatprep.mubr.f32.mxu0 0.0
  %552 = vmatmul.mubr.f32.gmra.mrb[0].mxu0 %v371
  %v553 = vpop.f32.mrb[0].mxu0
  %v554 = vadd.f32 %v310, %v553
  %v555 = vpop.f32.mrb[0].mxu0
  %556 = vmatprep.mubr.f32.mxu0 0.0
  %557 = vmatmul.mubr.f32.gmra.mrb[0].mxu0 %v374
  %v558 = vpop.f32.mrb[0].mxu0
  %v559 = vadd.f32 %v310, %v558
  %v560 = vpop.f32.mrb[0].mxu0
  %561 = vmatprep.mubr.f32.mxu0 0.0
  %562 = vmatmul.mubr.f32.gmra.mrb[0].mxu0 %v377
  %v563 = vpop.f32.mrb[0].mxu0
  %v564 = vadd.f32 %v310, %v563
  %v565 = vpop.f32.mrb[0].mxu0
  %566 = vmatprep.mubr.f32.mxu0 0.0
  %567 = vmatmul.mubr.f32.gmra.mrb[0].mxu0 %v380
  %v568 = vpop.f32.mrb[0].mxu0
  %v569 = vadd.f32 %v310, %v568
  %v570 = vpop.f32.mrb[0].mxu0
  %571 = vmatprep.mubr.f32.mxu0 0.0
  %572 = vmatmul.mubr.f32.gmra.mrb[0].mxu0 %v383
  %v573 = vpop.f32.mrb[0].mxu0
  %v574 = vadd.f32 %v310, %v573
  %v575 = vpop.f32.mrb[0].mxu0
  %576 = vmatprep.mubr.f32.mxu0 0.0
  %577 = vmatmul.mubr.f32.gmra.mrb[0].mxu0 %v386
  %v578 = vpop.f32.mrb[0].mxu0
  %v579 = vadd.f32 %v310, %v578
  %v580 = vpop.f32.mrb[0].mxu0
  %581 = vdwg.mxu0
  %v582 = vld [vmem:[%s9] sm:$0xf]
  %v585 = vunpack.c.l.s4 1983009808
  %v586 = vunpack.c.0.s8 %v585
  %v587 = vlaneseq
  %v588 = vshrl.u32 %v587, 7
  %v589 = vsub.s32 %v586, %v588
  %v590 = vrot.slane %v582, %v589
  %v591 = vcombine.high %v590, %v590
  %vm593 = vcmask 588800
  %v594 = vsel %vm593, %v591, 0
  %596 = vmatprep.subr.mxu0 0.0
  %597 = vmatpush1.msra.mxu0 %v459
  %598 = vmatprep.subr.mxu0 0.0
  %599 = vmatpush1.msra.mxu0 %v464
  %600 = vmatprep.subr.mxu0 0.0
  %601 = vmatpush1.msra.mxu0 %v469
  %602 = vmatprep.subr.mxu0 0.0
  %603 = vmatpush1.msra.mxu0 %v474
  %604 = vmatprep.subr.mxu0 0.0
  %605 = vmatpush1.msra.mxu0 %v479
  %606 = vmatprep.subr.mxu0 0.0
  %607 = vmatpush1.msra.mxu0 %v484
  %608 = vmatprep.subr.mxu0 0.0
  %609 = vmatpush1.msra.mxu0 %v489
  %610 = vmatprep.subr.mxu0 0.0
  %611 = vmatpush1.msra.mxu0 %v494
  %612 = vmatprep.subr.mxu0 0.0
  %613 = vmatpush1.msra.mxu0 %v499
  %614 = vmatprep.subr.mxu0 0.0
  %615 = vmatpush1.msra.mxu0 %v504
  %616 = vmatprep.subr.mxu0 0.0
  %617 = vmatpush1.msra.mxu0 %v509
  %618 = vmatprep.subr.mxu0 0.0
  %619 = vmatpush1.msra.mxu0 %v514
  %620 = vmatprep.subr.mxu0 0.0
  %621 = vmatpush1.msra.mxu0 %v519
  %622 = vmatprep.subr.mxu0 0.0
  %623 = vmatpush1.msra.mxu0 %v524
  %624 = vmatprep.subr.mxu0 0.0
  %625 = vmatpush1.msra.mxu0 %v529
  %626 = vmatprep.subr.mxu0 0.0
  %627 = vmatpush1.msra.mxu0 %v534
  %628 = vmatprep.subr.mxu0 0.0
  %629 = vmatpush1.msra.mxu0 %v539
  %630 = vmatprep.subr.mxu0 0.0
  %631 = vmatpush1.msra.mxu0 %v544
  %632 = vmatprep.subr.mxu0 0.0
  %633 = vmatpush1.msra.mxu0 %v549
  %634 = vmatprep.subr.mxu0 0.0
  %635 = vmatpush1.msra.mxu0 %v554
  %636 = vmatprep.subr.mxu0 0.0
  %637 = vmatpush1.msra.mxu0 %v559
  %638 = vmatprep.subr.mxu0 0.0
  %639 = vmatpush1.msra.mxu0 %v564
  %640 = vmatprep.subr.mxu0 0.0
  %641 = vmatpush1.msra.mxu0 %v569
  %642 = vmatprep.subr.mxu0 0.0
  %643 = vmatpush1.msra.mxu0 %v574
  %644 = vmatprep.subr.mxu0 0.0
  %645 = vmatpush1.msra.mxu0 %v579
  %646 = vmatprep.subr.mxu0 0.0
  %647 = vmatpush1.msra.mxu0 0.0
  %648 = vmatprep.subr.mxu0 0.0
  %649 = vmatpush1.msra.mxu0 0.0
  %650 = vmatprep.subr.mxu0 0.0
  %651 = vmatpush1.msra.mxu0 0.0
  %652 = vmatprep.subr.mxu0 0.0
  %653 = vmatpush1.msra.mxu0 0.0
  %654 = vmatprep.subr.mxu0 0.0
  %655 = vmatpush1.msra.mxu0 0.0
  %656 = vmatprep.subr.mxu0 0.0
  %657 = vmatpush1.msra.mxu0 0.0
  %658 = vmatprep.subr.mxu0 0.0
  %659 = vmatpush1.msra.mxu0 0.0
  %660 = vmatprep.mubr.f32.mxu0 %v594
  %661 = vmatmul.mubr.f32.gmra.mrb[0].mxu0 %v590
  %v662 = vpop.f32.mrb[0].mxu0
  %v663 = vadd.f32 0.0, %v662
  %v664 = vpop.f32.mrb[0].mxu0
  %665 = vdwg.mxu0
  %v666 = vld [vmem:[%s7] sm:$0x1]
  %v668 = vlaneseq
  %v669 = vshrl.u32 %v668, 7
  %v670 = vsub.s32 0, %v669
  %v671 = vrot.slane %v666, %v670
  %v673 = vmul.f32 %v663, %v671
  %vm674 = vcmask 238592
  %v675 = vsel %vm674, %v673, 0.0
  %676 = vadd.xlane.f32.xlu0 %v675
  %v677 = vpop.xlane.xlu0 %676
  %v678 = vmax.f32 %v677, 0.0
  %v679 = vld [vmem:[%s8] sm:$0x1]
  %v681 = vlaneseq
  %v682 = vshrl.u32 %v681, 7
  %v683 = vsub.s32 0, %v682
  %v684 = vrot.slane %v679, %v683
  %v686 = vmul.f32 %v678, %v684
  %v687 = vxor.u32 %v686, 2147483648
  %v688 = vmul.f32 %v687, 1.442695
  %v689 = vpow.pop %v688
  %v690 = vadd.f32 %v689, 1.0
  %v691 = vrcp.pop %v690
  %v692 = vmul.f32 1.0, %v691
  %v693 = vld [vmem:[%s10] sm:$0xff]
  %v694 = vld [vmem:[%s10 + $0x8] sm:$0xff]
  %v695 = vld [vmem:[%s10 + $0x10] sm:$0xff]
  %v696 = vld [vmem:[%s10 + $0x18] sm:$0xff]
  %v697 = vld [vmem:[%s10 + $0x20] sm:$0xff]
  %v698 = vld [vmem:[%s10 + $0x28] sm:$0xff]
  %v699 = vld [vmem:[%s10 + $0x30] sm:$0xff]
  %v700 = vld [vmem:[%s10 + $0x38] sm:$0xff]
  %v701 = vld [vmem:[%s10 + $0x40] sm:$0xff]
  %v702 = vld [vmem:[%s10 + $0x48] sm:$0xff]
  %v703 = vld [vmem:[%s10 + $0x50] sm:$0xff]
  %v704 = vld [vmem:[%s10 + $0x58] sm:$0xff]
  %v705 = vld [vmem:[%s10 + $0x60] sm:$0xff]
  %v706 = vld [vmem:[%s10 + $0x68] sm:$0xff]
  %v707 = vld [vmem:[%s10 + $0x70] sm:$0xff]
  %v708 = vld [vmem:[%s10 + $0x78] sm:$0xff]
  %v709 = vld [vmem:[%s10 + $0x80] sm:$0xff]
  %v710 = vld [vmem:[%s10 + $0x88] sm:$0xff]
  %v711 = vld [vmem:[%s10 + $0x90] sm:$0xff]
  %v712 = vld [vmem:[%s10 + $0x98] sm:$0xff]
  %v713 = vld [vmem:[%s10 + $0xa0] sm:$0xff]
  %v714 = vld [vmem:[%s10 + $0xa8] sm:$0xff]
  %v715 = vld [vmem:[%s10 + $0xb0] sm:$0xff]
  %v716 = vld [vmem:[%s10 + $0xb8] sm:$0xff]
  %v717 = vld [vmem:[%s10 + $0xc0] sm:$0xff]
  %vm718 = vcmask 15360
  %v720 = vsel %vm718, %v693, 0
  %v723 = vsel %vm718, %v694, 0
  %v726 = vsel %vm718, %v695, 0
  %v729 = vsel %vm718, %v696, 0
  %v732 = vsel %vm718, %v697, 0
  %v735 = vsel %vm718, %v698, 0
  %v738 = vsel %vm718, %v699, 0
  %v741 = vsel %vm718, %v700, 0
  %v744 = vsel %vm718, %v701, 0
  %v747 = vsel %vm718, %v702, 0
  %v750 = vsel %vm718, %v703, 0
  %v753 = vsel %vm718, %v704, 0
  %v756 = vsel %vm718, %v705, 0
  %v759 = vsel %vm718, %v706, 0
  %v762 = vsel %vm718, %v707, 0
  %v765 = vsel %vm718, %v708, 0
  %v768 = vsel %vm718, %v709, 0
  %v771 = vsel %vm718, %v710, 0
  %v774 = vsel %vm718, %v711, 0
  %v777 = vsel %vm718, %v712, 0
  %v780 = vsel %vm718, %v713, 0
  %v783 = vsel %vm718, %v714, 0
  %v786 = vsel %vm718, %v715, 0
  %v789 = vsel %vm718, %v716, 0
  %v792 = vsel %vm718, %v717, 0
  %vm794 = vcmask 1041408
  %v796 = vsel %vm794, %v692, 0
  %798 = vmatprep.subr.mxu0 0.0
  %799 = vmatpush1.msra.mxu0 %v796
  %800 = vmatprep.subr.mxu0 0.0
  %801 = vmatpush1.msra.mxu0 0.0
  %802 = vmatprep.subr.mxu0 0.0
  %803 = vmatpush1.msra.mxu0 0.0
  %804 = vmatprep.subr.mxu0 0.0
  %805 = vmatpush1.msra.mxu0 0.0
  %806 = vmatprep.subr.mxu0 0.0
  %807 = vmatpush1.msra.mxu0 0.0
  %808 = vmatprep.subr.mxu0 0.0
  %809 = vmatpush1.msra.mxu0 0.0
  %810 = vmatprep.subr.mxu0 0.0
  %811 = vmatpush1.msra.mxu0 0.0
  %812 = vmatprep.subr.mxu0 0.0
  %813 = vmatpush1.msra.mxu0 0.0
  %814 = vmatprep.subr.mxu0 0.0
  %815 = vmatpush1.msra.mxu0 0.0
  %816 = vmatprep.subr.mxu0 0.0
  %817 = vmatpush1.msra.mxu0 0.0
  %818 = vmatprep.subr.mxu0 0.0
  %819 = vmatpush1.msra.mxu0 0.0
  %820 = vmatprep.subr.mxu0 0.0
  %821 = vmatpush1.msra.mxu0 0.0
  %822 = vmatprep.subr.mxu0 0.0
  %823 = vmatpush1.msra.mxu0 0.0
  %824 = vmatprep.subr.mxu0 0.0
  %825 = vmatpush1.msra.mxu0 0.0
  %826 = vmatprep.subr.mxu0 0.0
  %827 = vmatpush1.msra.mxu0 0.0
  %828 = vmatprep.subr.mxu0 0.0
  %829 = vmatpush1.msra.mxu0 0.0
  %830 = vmatprep.subr.mxu0 0.0
  %831 = vmatpush1.msra.mxu0 0.0
  %832 = vmatprep.subr.mxu0 0.0
  %833 = vmatpush1.msra.mxu0 0.0
  %834 = vmatprep.subr.mxu0 0.0
  %835 = vmatpush1.msra.mxu0 0.0
  %836 = vmatprep.subr.mxu0 0.0
  %837 = vmatpush1.msra.mxu0 0.0
  %838 = vmatprep.subr.mxu0 0.0
  %839 = vmatpush1.msra.mxu0 0.0
  %840 = vmatprep.subr.mxu0 0.0
  %841 = vmatpush1.msra.mxu0 0.0
  %842 = vmatprep.subr.mxu0 0.0
  %843 = vmatpush1.msra.mxu0 0.0
  %844 = vmatprep.subr.mxu0 0.0
  %845 = vmatpush1.msra.mxu0 0.0
  %846 = vmatprep.subr.mxu0 0.0
  %847 = vmatpush1.msra.mxu0 0.0
  %848 = vmatprep.subr.mxu0 0.0
  %849 = vmatpush1.msra.mxu0 0.0
  %850 = vmatprep.subr.mxu0 0.0
  %851 = vmatpush1.msra.mxu0 0.0
  %852 = vmatprep.subr.mxu0 0.0
  %853 = vmatpush1.msra.mxu0 0.0
  %854 = vmatprep.subr.mxu0 0.0
  %855 = vmatpush1.msra.mxu0 0.0
  %856 = vmatprep.subr.mxu0 0.0
  %857 = vmatpush1.msra.mxu0 0.0
  %858 = vmatprep.subr.mxu0 0.0
  %859 = vmatpush1.msra.mxu0 0.0
  %860 = vmatprep.subr.mxu0 0.0
  %861 = vmatpush1.msra.mxu0 0.0
  %862 = vmatprep.mubr.f32.mxu0 0.0
  %863 = vmatmul.mubr.f32.gmra.mrb[0].mxu0 %v720
  %v864 = vpop.f32.mrb[0].mxu0
  %v865 = vadd.f32 0.0, %v864
  %v866 = vpop.f32.mrb[0].mxu0
  %867 = vmatprep.mubr.f32.mxu0 0.0
  %868 = vmatmul.mubr.f32.gmra.mrb[0].mxu0 %v723
  %v869 = vpop.f32.mrb[0].mxu0
  %v870 = vadd.f32 0.0, %v869
  %v871 = vpop.f32.mrb[0].mxu0
  %872 = vmatprep.mubr.f32.mxu0 0.0
  %873 = vmatmul.mubr.f32.gmra.mrb[0].mxu0 %v726
  %v874 = vpop.f32.mrb[0].mxu0
  %v875 = vadd.f32 0.0, %v874
  %v876 = vpop.f32.mrb[0].mxu0
  %877 = vmatprep.mubr.f32.mxu0 0.0
  %878 = vmatmul.mubr.f32.gmra.mrb[0].mxu0 %v729
  %v879 = vpop.f32.mrb[0].mxu0
  %v880 = vadd.f32 0.0, %v879
  %v881 = vpop.f32.mrb[0].mxu0
  %882 = vmatprep.mubr.f32.mxu0 0.0
  %883 = vmatmul.mubr.f32.gmra.mrb[0].mxu0 %v732
  %v884 = vpop.f32.mrb[0].mxu0
  %v885 = vadd.f32 0.0, %v884
  %v886 = vpop.f32.mrb[0].mxu0
  %887 = vmatprep.mubr.f32.mxu0 0.0
  %888 = vmatmul.mubr.f32.gmra.mrb[0].mxu0 %v735
  %v889 = vpop.f32.mrb[0].mxu0
  %v890 = vadd.f32 0.0, %v889
  %v891 = vpop.f32.mrb[0].mxu0
  %892 = vmatprep.mubr.f32.mxu0 0.0
  %893 = vmatmul.mubr.f32.gmra.mrb[0].mxu0 %v738
  %v894 = vpop.f32.mrb[0].mxu0
  %v895 = vadd.f32 0.0, %v894
  %v896 = vpop.f32.mrb[0].mxu0
  %897 = vmatprep.mubr.f32.mxu0 0.0
  %898 = vmatmul.mubr.f32.gmra.mrb[0].mxu0 %v741
  %v899 = vpop.f32.mrb[0].mxu0
  %v900 = vadd.f32 0.0, %v899
  %v901 = vpop.f32.mrb[0].mxu0
  %902 = vmatprep.mubr.f32.mxu0 0.0
  %903 = vmatmul.mubr.f32.gmra.mrb[0].mxu0 %v744
  %v904 = vpop.f32.mrb[0].mxu0
  %v905 = vadd.f32 0.0, %v904
  %v906 = vpop.f32.mrb[0].mxu0
  %907 = vmatprep.mubr.f32.mxu0 0.0
  %908 = vmatmul.mubr.f32.gmra.mrb[0].mxu0 %v747
  %v909 = vpop.f32.mrb[0].mxu0
  %v910 = vadd.f32 0.0, %v909
  %v911 = vpop.f32.mrb[0].mxu0
  %912 = vmatprep.mubr.f32.mxu0 0.0
  %913 = vmatmul.mubr.f32.gmra.mrb[0].mxu0 %v750
  %v914 = vpop.f32.mrb[0].mxu0
  %v915 = vadd.f32 0.0, %v914
  %v916 = vpop.f32.mrb[0].mxu0
  %917 = vmatprep.mubr.f32.mxu0 0.0
  %918 = vmatmul.mubr.f32.gmra.mrb[0].mxu0 %v753
  %v919 = vpop.f32.mrb[0].mxu0
  %v920 = vadd.f32 0.0, %v919
  %v921 = vpop.f32.mrb[0].mxu0
  %922 = vmatprep.mubr.f32.mxu0 0.0
  %923 = vmatmul.mubr.f32.gmra.mrb[0].mxu0 %v756
  %v924 = vpop.f32.mrb[0].mxu0
  %v925 = vadd.f32 0.0, %v924
  %v926 = vpop.f32.mrb[0].mxu0
  %927 = vmatprep.mubr.f32.mxu0 0.0
  %928 = vmatmul.mubr.f32.gmra.mrb[0].mxu0 %v759
  %v929 = vpop.f32.mrb[0].mxu0
  %v930 = vadd.f32 0.0, %v929
  %v931 = vpop.f32.mrb[0].mxu0
  %932 = vmatprep.mubr.f32.mxu0 0.0
  %933 = vmatmul.mubr.f32.gmra.mrb[0].mxu0 %v762
  %v934 = vpop.f32.mrb[0].mxu0
  %v935 = vadd.f32 0.0, %v934
  %v936 = vpop.f32.mrb[0].mxu0
  %937 = vmatprep.mubr.f32.mxu0 0.0
  %938 = vmatmul.mubr.f32.gmra.mrb[0].mxu0 %v765
  %v939 = vpop.f32.mrb[0].mxu0
  %v940 = vadd.f32 0.0, %v939
  %v941 = vpop.f32.mrb[0].mxu0
  %942 = vmatprep.mubr.f32.mxu0 0.0
  %943 = vmatmul.mubr.f32.gmra.mrb[0].mxu0 %v768
  %v944 = vpop.f32.mrb[0].mxu0
  %v945 = vadd.f32 0.0, %v944
  %v946 = vpop.f32.mrb[0].mxu0
  %947 = vmatprep.mubr.f32.mxu0 0.0
  %948 = vmatmul.mubr.f32.gmra.mrb[0].mxu0 %v771
  %v949 = vpop.f32.mrb[0].mxu0
  %v950 = vadd.f32 0.0, %v949
  %v951 = vpop.f32.mrb[0].mxu0
  %952 = vmatprep.mubr.f32.mxu0 0.0
  %953 = vmatmul.mubr.f32.gmra.mrb[0].mxu0 %v774
  %v954 = vpop.f32.mrb[0].mxu0
  %v955 = vadd.f32 0.0, %v954
  %v956 = vpop.f32.mrb[0].mxu0
  %957 = vmatprep.mubr.f32.mxu0 0.0
  %958 = vmatmul.mubr.f32.gmra.mrb[0].mxu0 %v777
  %v959 = vpop.f32.mrb[0].mxu0
  %v960 = vadd.f32 0.0, %v959
  %v961 = vpop.f32.mrb[0].mxu0
  %962 = vmatprep.mubr.f32.mxu0 0.0
  %963 = vmatmul.mubr.f32.gmra.mrb[0].mxu0 %v780
  %v964 = vpop.f32.mrb[0].mxu0
  %v965 = vadd.f32 0.0, %v964
  %v966 = vpop.f32.mrb[0].mxu0
  %967 = vmatprep.mubr.f32.mxu0 0.0
  %968 = vmatmul.mubr.f32.gmra.mrb[0].mxu0 %v783
  %v969 = vpop.f32.mrb[0].mxu0
  %v970 = vadd.f32 0.0, %v969
  %v971 = vpop.f32.mrb[0].mxu0
  %972 = vmatprep.mubr.f32.mxu0 0.0
  %973 = vmatmul.mubr.f32.gmra.mrb[0].mxu0 %v786
  %v974 = vpop.f32.mrb[0].mxu0
  %v975 = vadd.f32 0.0, %v974
  %v976 = vpop.f32.mrb[0].mxu0
  %977 = vmatprep.mubr.f32.mxu0 0.0
  %978 = vmatmul.mubr.f32.gmra.mrb[0].mxu0 %v789
  %v979 = vpop.f32.mrb[0].mxu0
  %v980 = vadd.f32 0.0, %v979
  %v981 = vpop.f32.mrb[0].mxu0
  %982 = vmatprep.mubr.f32.mxu0 0.0
  %983 = vmatmul.mubr.f32.gmra.mrb[0].mxu0 %v792
  %v984 = vpop.f32.mrb[0].mxu0
  %v985 = vadd.f32 0.0, %v984
  %v986 = vpop.f32.mrb[0].mxu0
  %987 = vdwg.mxu0
  %v988 = vld [vmem:[%s5] sm:$0xff]
  %v989 = vld [vmem:[%s5 + $0x8] sm:$0xff]
  %v990 = vld [vmem:[%s5 + $0x10] sm:$0xff]
  %v991 = vld [vmem:[%s5 + $0x18] sm:$0xff]
  %v992 = vld [vmem:[%s5 + $0x20] sm:$0xff]
  %v993 = vld [vmem:[%s5 + $0x28] sm:$0xff]
  %v994 = vld [vmem:[%s5 + $0x30] sm:$0xff]
  %v995 = vld [vmem:[%s5 + $0x38] sm:$0xff]
  %v996 = vld [vmem:[%s5 + $0x40] sm:$0xff]
  %v997 = vld [vmem:[%s5 + $0x48] sm:$0xff]
  %v998 = vld [vmem:[%s5 + $0x50] sm:$0xff]
  %v999 = vld [vmem:[%s5 + $0x58] sm:$0xff]
  %v1000 = vld [vmem:[%s5 + $0x60] sm:$0xff]
  %v1001 = vld [vmem:[%s5 + $0x68] sm:$0xff]
  %v1002 = vld [vmem:[%s5 + $0x70] sm:$0xff]
  %v1003 = vld [vmem:[%s5 + $0x78] sm:$0xff]
  %v1004 = vld [vmem:[%s6] sm:$0x1]
  %v1006 = vlaneseq
  %v1007 = vshrl.u32 %v1006, 7
  %v1008 = vsub.s32 0, %v1007
  %v1009 = vrot.slane %v1004, %v1008
  %1011 = vmatprep.subr.mxu0 0.0
  %1012 = vmatpush1.msra.mxu0 %v988
  %1013 = vmatprep.subr.mxu0 0.0
  %1014 = vmatpush1.msra.mxu0 %v989
  %1015 = vmatprep.subr.mxu0 0.0
  %1016 = vmatpush1.msra.mxu0 %v990
  %1017 = vmatprep.subr.mxu0 0.0
  %1018 = vmatpush1.msra.mxu0 %v991
  %1019 = vmatprep.subr.mxu0 0.0
  %1020 = vmatpush1.msra.mxu0 %v992
  %1021 = vmatprep.subr.mxu0 0.0
  %1022 = vmatpush1.msra.mxu0 %v993
  %1023 = vmatprep.subr.mxu0 0.0
  %1024 = vmatpush1.msra.mxu0 %v994
  %1025 = vmatprep.subr.mxu0 0.0
  %1026 = vmatpush1.msra.mxu0 %v995
  %1027 = vmatprep.subr.mxu0 0.0
  %1028 = vmatpush1.msra.mxu0 %v996
  %1029 = vmatprep.subr.mxu0 0.0
  %1030 = vmatpush1.msra.mxu0 %v997
  %1031 = vmatprep.subr.mxu0 0.0
  %1032 = vmatpush1.msra.mxu0 %v998
  %1033 = vmatprep.subr.mxu0 0.0
  %1034 = vmatpush1.msra.mxu0 %v999
  %1035 = vmatprep.subr.mxu0 0.0
  %1036 = vmatpush1.msra.mxu0 %v1000
  %1037 = vmatprep.subr.mxu0 0.0
  %1038 = vmatpush1.msra.mxu0 %v1001
  %1039 = vmatprep.subr.mxu0 0.0
  %1040 = vmatpush1.msra.mxu0 %v1002
  %1041 = vmatprep.subr.mxu0 0.0
  %1042 = vmatpush1.msra.mxu0 %v1003
  %1043 = vmatprep.subr.mxu0 0.0
  %1044 = vmatpush1.msra.mxu0 0.0
  %1045 = vmatprep.subr.mxu0 0.0
  %1046 = vmatpush1.msra.mxu0 0.0
  %1047 = vmatprep.subr.mxu0 0.0
  %1048 = vmatpush1.msra.mxu0 0.0
  %1049 = vmatprep.subr.mxu0 0.0
  %1050 = vmatpush1.msra.mxu0 0.0
  %1051 = vmatprep.subr.mxu0 0.0
  %1052 = vmatpush1.msra.mxu0 0.0
  %1053 = vmatprep.subr.mxu0 0.0
  %1054 = vmatpush1.msra.mxu0 0.0
  %1055 = vmatprep.subr.mxu0 0.0
  %1056 = vmatpush1.msra.mxu0 0.0
  %1057 = vmatprep.subr.mxu0 0.0
  %1058 = vmatpush1.msra.mxu0 0.0
  %1059 = vmatprep.subr.mxu0 0.0
  %1060 = vmatpush1.msra.mxu0 0.0
  %1061 = vmatprep.subr.mxu0 0.0
  %1062 = vmatpush1.msra.mxu0 0.0
  %1063 = vmatprep.subr.mxu0 0.0
  %1064 = vmatpush1.msra.mxu0 0.0
  %1065 = vmatprep.subr.mxu0 0.0
  %1066 = vmatpush1.msra.mxu0 0.0
  %1067 = vmatprep.subr.mxu0 0.0
  %1068 = vmatpush1.msra.mxu0 0.0
  %1069 = vmatprep.subr.mxu0 0.0
  %1070 = vmatpush1.msra.mxu0 0.0
  %1071 = vmatprep.subr.mxu0 0.0
  %1072 = vmatpush1.msra.mxu0 0.0
  %1073 = vmatprep.subr.mxu0 0.0
  %1074 = vmatpush1.msra.mxu0 0.0
  %1075 = vmatprep.mubr.f32.mxu0 0.0
  %1076 = vmatmul.mubr.f32.gmra.mrb[0].mxu0 %v38
  %v1077 = vpop.f32.mrb[0].mxu0
  %v1078 = vadd.f32 %v1009, %v1077
  %v1079 = vpop.f32.mrb[0].mxu0
  %1080 = vmatprep.mubr.f32.mxu0 0.0
  %1081 = vmatmul.mubr.f32.gmra.mrb[0].mxu0 %v39
  %v1082 = vpop.f32.mrb[0].mxu0
  %v1083 = vadd.f32 %v1009, %v1082
  %v1084 = vpop.f32.mrb[0].mxu0
  %1085 = vmatprep.mubr.f32.mxu0 0.0
  %1086 = vmatmul.mubr.f32.gmra.mrb[0].mxu0 %v40
  %v1087 = vpop.f32.mrb[0].mxu0
  %v1088 = vadd.f32 %v1009, %v1087
  %v1089 = vpop.f32.mrb[0].mxu0
  %1090 = vmatprep.mubr.f32.mxu0 0.0
  %1091 = vmatmul.mubr.f32.gmra.mrb[0].mxu0 %v41
  %v1092 = vpop.f32.mrb[0].mxu0
  %v1093 = vadd.f32 %v1009, %v1092
  %v1094 = vpop.f32.mrb[0].mxu0
  %1095 = vmatprep.mubr.f32.mxu0 0.0
  %1096 = vmatmul.mubr.f32.gmra.mrb[0].mxu0 %v42
  %v1097 = vpop.f32.mrb[0].mxu0
  %v1098 = vadd.f32 %v1009, %v1097
  %v1099 = vpop.f32.mrb[0].mxu0
  %1100 = vmatprep.mubr.f32.mxu0 0.0
  %1101 = vmatmul.mubr.f32.gmra.mrb[0].mxu0 %v43
  %v1102 = vpop.f32.mrb[0].mxu0
  %v1103 = vadd.f32 %v1009, %v1102
  %v1104 = vpop.f32.mrb[0].mxu0
  %1105 = vmatprep.mubr.f32.mxu0 0.0
  %1106 = vmatmul.mubr.f32.gmra.mrb[0].mxu0 %v44
  %v1107 = vpop.f32.mrb[0].mxu0
  %v1108 = vadd.f32 %v1009, %v1107
  %v1109 = vpop.f32.mrb[0].mxu0
  %1110 = vmatprep.mubr.f32.mxu0 0.0
  %1111 = vmatmul.mubr.f32.gmra.mrb[0].mxu0 %v45
  %v1112 = vpop.f32.mrb[0].mxu0
  %v1113 = vadd.f32 %v1009, %v1112
  %v1114 = vpop.f32.mrb[0].mxu0
  %1115 = vmatprep.mubr.f32.mxu0 0.0
  %1116 = vmatmul.mubr.f32.gmra.mrb[0].mxu0 %v46
  %v1117 = vpop.f32.mrb[0].mxu0
  %v1118 = vadd.f32 %v1009, %v1117
  %v1119 = vpop.f32.mrb[0].mxu0
  %1120 = vmatprep.mubr.f32.mxu0 0.0
  %1121 = vmatmul.mubr.f32.gmra.mrb[0].mxu0 %v47
  %v1122 = vpop.f32.mrb[0].mxu0
  %v1123 = vadd.f32 %v1009, %v1122
  %v1124 = vpop.f32.mrb[0].mxu0
  %1125 = vmatprep.mubr.f32.mxu0 0.0
  %1126 = vmatmul.mubr.f32.gmra.mrb[0].mxu0 %v48
  %v1127 = vpop.f32.mrb[0].mxu0
  %v1128 = vadd.f32 %v1009, %v1127
  %v1129 = vpop.f32.mrb[0].mxu0
  %1130 = vmatprep.mubr.f32.mxu0 0.0
  %1131 = vmatmul.mubr.f32.gmra.mrb[0].mxu0 %v49
  %v1132 = vpop.f32.mrb[0].mxu0
  %v1133 = vadd.f32 %v1009, %v1132
  %v1134 = vpop.f32.mrb[0].mxu0
  %1135 = vmatprep.mubr.f32.mxu0 0.0
  %1136 = vmatmul.mubr.f32.gmra.mrb[0].mxu0 %v50
  %v1137 = vpop.f32.mrb[0].mxu0
  %v1138 = vadd.f32 %v1009, %v1137
  %v1139 = vpop.f32.mrb[0].mxu0
  %1140 = vmatprep.mubr.f32.mxu0 0.0
  %1141 = vmatmul.mubr.f32.gmra.mrb[0].mxu0 %v51
  %v1142 = vpop.f32.mrb[0].mxu0
  %v1143 = vadd.f32 %v1009, %v1142
  %v1144 = vpop.f32.mrb[0].mxu0
  %1145 = vmatprep.mubr.f32.mxu0 0.0
  %1146 = vmatmul.mubr.f32.gmra.mrb[0].mxu0 %v52
  %v1147 = vpop.f32.mrb[0].mxu0
  %v1148 = vadd.f32 %v1009, %v1147
  %v1149 = vpop.f32.mrb[0].mxu0
  %1150 = vmatprep.mubr.f32.mxu0 0.0
  %1151 = vmatmul.mubr.f32.gmra.mrb[0].mxu0 %v53
  %v1152 = vpop.f32.mrb[0].mxu0
  %v1153 = vadd.f32 %v1009, %v1152
  %v1154 = vpop.f32.mrb[0].mxu0
  %1155 = vmatprep.mubr.f32.mxu0 0.0
  %1156 = vmatmul.mubr.f32.gmra.mrb[0].mxu0 %v54
  %v1157 = vpop.f32.mrb[0].mxu0
  %v1158 = vadd.f32 %v1009, %v1157
  %v1159 = vpop.f32.mrb[0].mxu0
  %1160 = vmatprep.mubr.f32.mxu0 0.0
  %1161 = vmatmul.mubr.f32.gmra.mrb[0].mxu0 %v55
  %v1162 = vpop.f32.mrb[0].mxu0
  %v1163 = vadd.f32 %v1009, %v1162
  %v1164 = vpop.f32.mrb[0].mxu0
  %1165 = vmatprep.mubr.f32.mxu0 0.0
  %1166 = vmatmul.mubr.f32.gmra.mrb[0].mxu0 %v56
  %v1167 = vpop.f32.mrb[0].mxu0
  %v1168 = vadd.f32 %v1009, %v1167
  %v1169 = vpop.f32.mrb[0].mxu0
  %1170 = vmatprep.mubr.f32.mxu0 0.0
  %1171 = vmatmul.mubr.f32.gmra.mrb[0].mxu0 %v57
  %v1172 = vpop.f32.mrb[0].mxu0
  %v1173 = vadd.f32 %v1009, %v1172
  %v1174 = vpop.f32.mrb[0].mxu0
  %1175 = vmatprep.mubr.f32.mxu0 0.0
  %1176 = vmatmul.mubr.f32.gmra.mrb[0].mxu0 %v58
  %v1177 = vpop.f32.mrb[0].mxu0
  %v1178 = vadd.f32 %v1009, %v1177
  %v1179 = vpop.f32.mrb[0].mxu0
  %1180 = vmatprep.mubr.f32.mxu0 0.0
  %1181 = vmatmul.mubr.f32.gmra.mrb[0].mxu0 %v59
  %v1182 = vpop.f32.mrb[0].mxu0
  %v1183 = vadd.f32 %v1009, %v1182
  %v1184 = vpop.f32.mrb[0].mxu0
  %1185 = vmatprep.mubr.f32.mxu0 0.0
  %1186 = vmatmul.mubr.f32.gmra.mrb[0].mxu0 %v60
  %v1187 = vpop.f32.mrb[0].mxu0
  %v1188 = vadd.f32 %v1009, %v1187
  %v1189 = vpop.f32.mrb[0].mxu0
  %1190 = vmatprep.mubr.f32.mxu0 0.0
  %1191 = vmatmul.mubr.f32.gmra.mrb[0].mxu0 %v61
  %v1192 = vpop.f32.mrb[0].mxu0
  %v1193 = vadd.f32 %v1009, %v1192
  %v1194 = vpop.f32.mrb[0].mxu0
  %1195 = vmatprep.mubr.f32.mxu0 0.0
  %1196 = vmatmul.mubr.f32.gmra.mrb[0].mxu0 %v62
  %v1197 = vpop.f32.mrb[0].mxu0
  %v1198 = vadd.f32 %v1009, %v1197
  %v1199 = vpop.f32.mrb[0].mxu0
  %1200 = vdwg.mxu0
  %v1201 = vmul.f32 %v459, %v865
  %v1202 = vmul.f32 %v464, %v870
  %v1203 = vmul.f32 %v469, %v875
  %v1204 = vmul.f32 %v474, %v880
  %v1205 = vmul.f32 %v479, %v885
  %v1206 = vmul.f32 %v484, %v890
  %v1207 = vmul.f32 %v489, %v895
  %v1208 = vmul.f32 %v494, %v900
  %v1209 = vmul.f32 %v499, %v905
  %v1210 = vmul.f32 %v504, %v910
  %v1211 = vmul.f32 %v509, %v915
  %v1212 = vmul.f32 %v514, %v920
  %v1213 = vmul.f32 %v519, %v925
  %v1214 = vmul.f32 %v524, %v930
  %v1215 = vmul.f32 %v529, %v935
  %v1216 = vmul.f32 %v534, %v940
  %v1217 = vmul.f32 %v539, %v945
  %v1218 = vmul.f32 %v544, %v950
  %v1219 = vmul.f32 %v549, %v955
  %v1220 = vmul.f32 %v554, %v960
  %v1221 = vmul.f32 %v559, %v965
  %v1222 = vmul.f32 %v564, %v970
  %v1223 = vmul.f32 %v569, %v975
  %v1224 = vmul.f32 %v574, %v980
  %v1225 = vmul.f32 %v579, %v985
  %v1226 = vadd.f32 %v1201, %v1078
  %v1227 = vadd.f32 %v1202, %v1083
  %v1228 = vadd.f32 %v1203, %v1088
  %v1229 = vadd.f32 %v1204, %v1093
  %v1230 = vadd.f32 %v1205, %v1098
  %v1231 = vadd.f32 %v1206, %v1103
  %v1232 = vadd.f32 %v1207, %v1108
  %v1233 = vadd.f32 %v1208, %v1113
  %v1234 = vadd.f32 %v1209, %v1118
  %v1235 = vadd.f32 %v1210, %v1123
  %v1236 = vadd.f32 %v1211, %v1128
  %v1237 = vadd.f32 %v1212, %v1133
  %v1238 = vadd.f32 %v1213, %v1138
  %v1239 = vadd.f32 %v1214, %v1143
  %v1240 = vadd.f32 %v1215, %v1148
  %v1241 = vadd.f32 %v1216, %v1153
  %v1242 = vadd.f32 %v1217, %v1158
  %v1243 = vadd.f32 %v1218, %v1163
  %v1244 = vadd.f32 %v1219, %v1168
  %v1245 = vadd.f32 %v1220, %v1173
  %v1246 = vadd.f32 %v1221, %v1178
  %v1247 = vadd.f32 %v1222, %v1183
  %v1248 = vadd.f32 %v1223, %v1188
  %v1249 = vadd.f32 %v1224, %v1193
  %v1250 = vadd.f32 %v1225, %v1198
  %v1251 = vmax.f32 %v1226, 0.0
  %v1252 = vmax.f32 %v1227, 0.0
  %v1253 = vmax.f32 %v1228, 0.0
  %v1254 = vmax.f32 %v1229, 0.0
  %v1255 = vmax.f32 %v1230, 0.0
  %v1256 = vmax.f32 %v1231, 0.0
  %v1257 = vmax.f32 %v1232, 0.0
  %v1258 = vmax.f32 %v1233, 0.0
  %v1259 = vmax.f32 %v1234, 0.0
  %v1260 = vmax.f32 %v1235, 0.0
  %v1261 = vmax.f32 %v1236, 0.0
  %v1262 = vmax.f32 %v1237, 0.0
  %v1263 = vmax.f32 %v1238, 0.0
  %v1264 = vmax.f32 %v1239, 0.0
  %v1265 = vmax.f32 %v1240, 0.0
  %v1266 = vmax.f32 %v1241, 0.0
  %v1267 = vmax.f32 %v1242, 0.0
  %v1268 = vmax.f32 %v1243, 0.0
  %v1269 = vmax.f32 %v1244, 0.0
  %v1270 = vmax.f32 %v1245, 0.0
  %v1271 = vmax.f32 %v1246, 0.0
  %v1272 = vmax.f32 %v1247, 0.0
  %v1273 = vmax.f32 %v1248, 0.0
  %v1274 = vmax.f32 %v1249, 0.0
  %v1275 = vmax.f32 %v1250, 0.0
  %1276 = vst.msk [vmem:[%s11] sm:$0xff] %vm312, %v1251
  %1277 = vst.msk [vmem:[%s11 + $0x8] sm:$0xff] %vm312, %v1252
  %1278 = vst.msk [vmem:[%s11 + $0x10] sm:$0xff] %vm312, %v1253
  %1279 = vst.msk [vmem:[%s11 + $0x18] sm:$0xff] %vm312, %v1254
  %1280 = vst.msk [vmem:[%s11 + $0x20] sm:$0xff] %vm312, %v1255
  %1281 = vst.msk [vmem:[%s11 + $0x28] sm:$0xff] %vm312, %v1256
  %1282 = vst.msk [vmem:[%s11 + $0x30] sm:$0xff] %vm312, %v1257
  %1283 = vst.msk [vmem:[%s11 + $0x38] sm:$0xff] %vm312, %v1258
  %1284 = vst.msk [vmem:[%s11 + $0x40] sm:$0xff] %vm312, %v1259
  %1285 = vst.msk [vmem:[%s11 + $0x48] sm:$0xff] %vm312, %v1260
  %1286 = vst.msk [vmem:[%s11 + $0x50] sm:$0xff] %vm312, %v1261
  %1287 = vst.msk [vmem:[%s11 + $0x58] sm:$0xff] %vm312, %v1262
  %1288 = vst.msk [vmem:[%s11 + $0x60] sm:$0xff] %vm312, %v1263
  %1289 = vst.msk [vmem:[%s11 + $0x68] sm:$0xff] %vm312, %v1264
  %1290 = vst.msk [vmem:[%s11 + $0x70] sm:$0xff] %vm312, %v1265
  %1291 = vst.msk [vmem:[%s11 + $0x78] sm:$0xff] %vm312, %v1266
  %1292 = vst.msk [vmem:[%s11 + $0x80] sm:$0xff] %vm312, %v1267
  %1293 = vst.msk [vmem:[%s11 + $0x88] sm:$0xff] %vm312, %v1268
  %1294 = vst.msk [vmem:[%s11 + $0x90] sm:$0xff] %vm312, %v1269
  %1295 = vst.msk [vmem:[%s11 + $0x98] sm:$0xff] %vm312, %v1270
  %1296 = vst.msk [vmem:[%s11 + $0xa0] sm:$0xff] %vm312, %v1271
  %1297 = vst.msk [vmem:[%s11 + $0xa8] sm:$0xff] %vm312, %v1272
  %1298 = vst.msk [vmem:[%s11 + $0xb0] sm:$0xff] %vm312, %v1273
  %1299 = vst.msk [vmem:[%s11 + $0xb8] sm:$0xff] %vm312, %v1274
  %1300 = vst.msk [vmem:[%s11 + $0xc0] sm:$0xff] %vm312, %v1275
  // Predicated region
  $region46: #{mrcnn_shhs_forward.13} parent=0 // pred_check
    _
  $region47: #{mrcnn_shhs_forward.13} parent=0 // pred_check_branch
    %1302 = sbr.rel (0) target = $region49
  $region48: #{mrcnn_shhs_forward.13} parent=0 // pred_region
    _
  $region49: #{mrcnn_shhs_forward.13} parent=0 // pred_fallthru
    _
  // Predicated region
  $region50: #{mrcnn_shhs_forward.13} parent=0 // pred_check
    _
  $region51: #{mrcnn_shhs_forward.13} parent=0 // pred_check_branch
    %1304 = sbr.rel (0) target = $region53
  $region52: #{mrcnn_shhs_forward.13} parent=0 // pred_region
    _
  $region53: #{mrcnn_shhs_forward.13} parent=0 // pred_fallthru
    _

</llo_original>
